<compile_context>
chip_gen: v7x
topology: tpu7x:2x2x1
jax: 0.10.0
libtpu: 0.0.40
codegen_flags: <defaults>
</compile_context>

<pallas_src>
import jax
import jax.numpy as jnp
from jax import lax
from jax.experimental import pallas as pl
from jax.experimental.pallas import tpu as pltpu


def _pick_strip_rows(h, target=8):
    """Largest divisor of H that is <= target (strip height for pass 1/2)."""
    best = 1
    for d in range(1, min(h, target) + 1):
        if h % d == 0:
            best = d
    return best


def bottleneck_kernel(x_ref, w1_ref, s1_ref, b1_ref,
                      w2_ref, s2_ref, b2_ref,
                      w3_ref, s3_ref, b3_ref,
                      o_ref, pad_ref):
    """One grid step processes a block of B images (NHWC), strip-by-strip.

    x_ref  : (B, H, W, Cin)      bf16  activations
    w1_ref : (Cin, width)        bf16  conv1 1x1
    w2_ref : (9, width, width)   bf16  conv2 3x3, index k = kh*3 + kw (HWIO)
    w3_ref : (width, Cout)       bf16  conv3 1x1
    s*/b*  : (1, C)              f32   folded inference-BN scale / bias
    o_ref  : (B, H, W, Cout)     bf16  output
    pad_ref: VMEM scratch (B, H+2, W+2, width) bf16: zero-padded bn1/relu out
    """
    B, H, W, Cin = x_ref.shape
    width = w1_ref.shape[1]
    Cout = w3_ref.shape[1]
    TH = _pick_strip_rows(H)
    n_strips = H // TH
    Ms = B * TH * W  # rows per strip matmul

    # --- zero only the 1-px border of the padded scratch (interior is fully
    # overwritten each grid step, so this stays correct when the "parallel"
    # grid axis is split across TensorCores). -------------------------------
    zrow = jnp.zeros((B, 1, W + 2, width), jnp.bfloat16)
    pad_ref[:, 0:1, :, :] = zrow
    pad_ref[:, H + 1:H + 2, :, :] = zrow
    zcol = jnp.zeros((B, H + 2, 1, width), jnp.bfloat16)
    pad_ref[:, :, 0:1, :] = zcol
    pad_ref[:, :, W + 1:W + 2, :] = zcol

    # Hoist small constants out of the loops (JAX doesn't CSE broadcasts).
    w1 = w1_ref[...]
    w3 = w3_ref[...]
    s1 = s1_ref[...]; b1 = b1_ref[...]
    s2 = s2_ref[...]; b2 = b2_ref[...]
    s3 = s3_ref[...]; b3 = b3_ref[...]

    # --- pass 1: conv1 (1x1) + bn1 + relu, strip-wise into pad interior ----
    @pl.loop(0, n_strips)
    def _fill(s):
        r0 = pl.multiple_of(s * TH, TH)
        xs = x_ref[:, pl.ds(r0, TH), :, :].reshape(Ms, Cin)
        h1 = jnp.dot(xs, w1, preferred_element_type=jnp.float32)
        h1 = jnp.maximum(h1 * s1 + b1, 0.0)
        pad_ref[:, pl.ds(r0 + 1, TH), 1:W + 1, :] = (
            h1.astype(jnp.bfloat16).reshape(B, TH, W, width))

    # --- pass 2: conv2 (3x3, 9 accumulating dots) + bn2 + relu,
    #             conv3 (1x1) + bn3 + residual + relu, strip-wise -----------
    @pl.loop(0, n_strips)
    def _compute(s):
        r0 = pl.multiple_of(s * TH, TH)
        acc = jnp.zeros((Ms, width), jnp.float32)
        for kh in range(3):          # unrolled at trace time (9 taps)
            for kw in range(3):
                tap = pad_ref[:, pl.ds(r0 + kh, TH), kw:kw + W, :]
                acc = acc + jnp.dot(tap.reshape(Ms, width),
                                    w2_ref[kh * 3 + kw],
                                    preferred_element_type=jnp.float32)
        h2 = jnp.maximum(acc * s2 + b2, 0.0)

        h3 = jnp.dot(h2.astype(jnp.bfloat16), w3,
                     preferred_element_type=jnp.float32)
        h3 = h3 * s3 + b3

        # Residual: re-read the resident x strip (bf16 -> f32 for the add).
        # Requires Cin == Cout, stride=1, downsample=None (module defaults).
        identity = x_ref[:, pl.ds(r0, TH), :, :].astype(
            jnp.float32).reshape(Ms, Cout)
        out = jnp.maximum(h3 + identity, 0.0)
        o_ref[:, pl.ds(r0, TH), :, :] = (
            out.astype(o_ref.dtype).reshape(B, TH, W, Cout))


def _vmem_limit_bytes():
    """Generation-aware VMEM limit: ~80% of physical, capped at 100 MiB."""
    try:
        cap = int(pltpu.get_tpu_info().vmem_capacity_bytes)
        if cap <= 0:
            raise ValueError
    except Exception:
        cap = 64 * 1024 * 1024  # conservative default (v7x-sized)
    return min(int(cap * 0.8), 100 * 1024 * 1024)


def _pick_block_n(n, per_image_bytes, fixed_bytes, budget_bytes, max_block=8):
    """Images per grid step: largest divisor of N whose double-buffered I/O +
    scratch fits the byte budget, while keeping >= 2 grid steps (both
    TensorCores on v7x get work, and the pipeline has >1 stage)."""
    best = 1
    for d in range(1, min(n, max_block) + 1):
        if n % d != 0:
            continue
        if n >= 2 and (n // d) < 2:
            continue
        if fixed_bytes + d * per_image_bytes > budget_bytes:
            continue
        best = d
    return best


def _const_spec(arr, single_buffer):
    """BlockSpec for a constant (weight / BN) input: whole array every step.
    Single-buffered when supported (constant index_map -> one resident copy)."""
    nd = arr.ndim
    imap = (lambda n: (0, 0)) if nd == 2 else (lambda n: (0, 0, 0))
    if single_buffer and hasattr(pl, "Buffered"):
        return pl.BlockSpec(arr.shape, imap, pipeline_mode=pl.Buffered(1))
    return pl.BlockSpec(arr.shape, imap)


def bottleneck_forward_nhwc(x_nhwc, params, *, block_n=None):
    """x_nhwc: (N, H, W, Cin) float; returns (N, H, W, Cout) bfloat16.

    Preferred entry point: keeps the whole network NHWC/bf16 (no per-block
    NCHW<->NHWC HBM transpose passes, half the activation HBM traffic).
    """
    w1, s1, b1, w2, s2, b2, w3, s3, b3 = params
    N, H, W, Cin = x_nhwc.shape
    width = w1.shape[1]
    Cout = w3.shape[1]
    assert Cin == Cout, "identity path requires Cin == Cout (downsample=None)"
    # TODO(synk): stride>1 / downsample branch not implemented (module defaults).

    x_b = x_nhwc.astype(jnp.bfloat16)
    w1b = w1.astype(jnp.bfloat16)
    w2b = w2.reshape(9, width, width).astype(jnp.bfloat16)  # k = kh*3+kw
    w3b = w3.astype(jnp.bfloat16)

    vmem_limit = _vmem_limit_bytes()
    # Per-image VMEM (bf16): double-buffered x + out blocks and pad scratch.
    per_image = (2 * H * W * Cin * 2 + 2 * H * W * Cout * 2
                 + (H + 2) * (W + 2) * width * 2)
    # Weights / BN consts (worst case double-buffered) + slack.
    fixed = 2 * 2 * (w1b.size + w2b.size + w3b.size) + 64 * 1024
    budget = int(0.6 * vmem_limit)
    if block_n is None:
        block_n = _pick_block_n(N, per_image, fixed, budget)
    assert N % block_n == 0
    grid = (N // block_n,)

    args = (x_b, w1b, s1, b1, w2b, s2, b2, w3b, s3, b3)

    def build(single_buffer_weights):
        const_specs = [_const_spec(a, single_buffer_weights)
                       for a in (w1b, s1, b1, w2b, s2, b2, w3b, s3, b3)]
        return pl.pallas_call(
            bottleneck_kernel,
            out_shape=jax.ShapeDtypeStruct((N, H, W, Cout), jnp.bfloat16),
            grid_spec=pltpu.PrefetchScalarGridSpec(
                num_scalar_prefetch=0,
                grid=grid,
                in_specs=[pl.BlockSpec((block_n, H, W, Cin),
                                       lambda n: (n, 0, 0, 0))] + const_specs,
                out_specs=pl.BlockSpec((block_n, H, W, Cout),
                                       lambda n: (n, 0, 0, 0)),
                scratch_shapes=[
                    pltpu.VMEM((block_n, H + 2, W + 2, width), jnp.bfloat16),
                ],
            ),
            compiler_params=pltpu.CompilerParams(
                dimension_semantics=("parallel",),
                vmem_limit_bytes=vmem_limit),
        )

    try:
        return build(True)(*args)
    except Exception:
        # Fallback: default (double) buffering if Buffered(1) is rejected.
        return build(False)(*args)


def bottleneck_forward(x_nchw, params, *, block_n=None):
    """nn.Module-compatible interface: (N, Cin, H, W) f32 -> (N, Cout, H, W) f32.

    Note: the transposes/casts below are extra HBM passes; steady-state
    networks should call bottleneck_forward_nhwc directly and stay NHWC/bf16.
    """
    x = jnp.transpose(x_nchw, (0, 2, 3, 1))
    out = bottleneck_forward_nhwc(x, params, block_n=block_n)
    return jnp.transpose(out, (0, 3, 1, 2)).astype(jnp.float32)


def init_params(key, inplanes, planes, base_width=64):
    """Deterministic synthetic parameters matching Bottleneck.__init__ shapes."""
    expansion = 4
    width = int(planes * (base_width / 64.0))
    cout = planes * expansion
    eps = 1e-5
    keys = jax.random.split(key, 15)

    def bn_fold(kg, kb, km, kv, c):
        gamma = 1.0 + 0.1 * jax.random.normal(kg, (c,), jnp.float32)
        beta = 0.1 * jax.random.normal(kb, (c,), jnp.float32)
        mean = 0.1 * jax.random.normal(km, (c,), jnp.float32)
        var = jnp.abs(jax.random.normal(kv, (c,), jnp.float32)) + 0.5
        scale = gamma / jnp.sqrt(var + eps)
        bias = beta - mean * scale
        return scale.reshape(1, c), bias.reshape(1, c)

    # conv weights in matmul-friendly layouts:
    #   conv1x1: (Cin, Cout_of_that_conv);  conv3x3: HWIO (3, 3, in, out)
    w1 = 0.1 * jax.random.normal(keys[0], (inplanes, width), jnp.float32)
    s1, b1 = bn_fold(keys[1], keys[2], keys[3], keys[4], width)
    w2 = 0.1 * jax.random.normal(keys[5], (3, 3, width, width), jnp.float32)
    s2, b2 = bn_fold(keys[6], keys[7], keys[8], keys[9], width)
    w3 = 0.1 * jax.random.normal(keys[10], (width, cout), jnp.float32)
    s3, b3 = bn_fold(keys[11], keys[12], keys[13], keys[14], cout)
    return (w1, s1, b1, w2, s2, b2, w3, s3, b3)


def bottleneck_ref(x_nchw, params):
    """Pure-JAX f32 reference (XLA convs) for correctness checking."""
    w1, s1, b1, w2, s2, b2, w3, s3, b3 = params
    x = jnp.transpose(x_nchw, (0, 2, 3, 1))
    dn = ('NHWC', 'HWIO', 'NHWC')

    def bn(h, s, b):
        return h * s.reshape(1, 1, 1, -1) + b.reshape(1, 1, 1, -1)

    h = lax.conv_general_dilated(x, w1.reshape(1, 1, *w1.shape), (1, 1),
                                 'VALID', dimension_numbers=dn)
    h = jnp.maximum(bn(h, s1, b1), 0.0)
    h = lax.conv_general_dilated(h, w2, (1, 1), 'SAME', dimension_numbers=dn)
    h = jnp.maximum(bn(h, s2, b2), 0.0)
    h = lax.conv_general_dilated(h, w3.reshape(1, 1, *w3.shape), (1, 1),
                                 'VALID', dimension_numbers=dn)
    h = bn(h, s3, b3)
    out = jnp.maximum(h + x, 0.0)
    return jnp.transpose(out, (0, 3, 1, 2))


if __name__ == "__main__":
    # Small shapes consistent with the module: inplanes = planes * expansion so
    # the identity add is valid with downsample=None (ResNet-152 inner blocks).
    N, inplanes, planes, H, W = 2, 16, 4, 16, 16

    key = jax.random.PRNGKey(0)
    kx, kp = jax.random.split(key)
    x = jax.random.normal(kx, (N, inplanes, H, W), jnp.float32)
    params = init_params(kp, inplanes, planes)

    out = jax.block_until_ready(bottleneck_forward(x, params))
    ref = bottleneck_ref(x, params)

    assert out.shape == ref.shape == (N, planes * 4, H, W)
    max_err = float(jnp.max(jnp.abs(out - ref)))
    # bf16 activation I/O + bf16 MXU inputs (f32 accumulation) vs f32 ref.
    assert jnp.allclose(out, ref, atol=1e-1, rtol=5e-2), \
        f"max abs err {max_err}"

    print("KERNEL_OK")
</pallas_src>

<mosaic_0001>
module attributes {stable_mosaic.version = 11 : i64} {
  func.func @bottleneck_kernel(%arg0: i32, %arg1: memref<1x16x16x16xbf16, #tpu.memory_space<vmem>>, %arg2: memref<16x4xbf16, #tpu.memory_space<vmem>>, %arg3: memref<1x4xf32, #tpu.memory_space<vmem>>, %arg4: memref<1x4xf32, #tpu.memory_space<vmem>>, %arg5: memref<9x4x4xbf16, #tpu.memory_space<vmem>>, %arg6: memref<1x4xf32, #tpu.memory_space<vmem>>, %arg7: memref<1x4xf32, #tpu.memory_space<vmem>>, %arg8: memref<4x16xbf16, #tpu.memory_space<vmem>>, %arg9: memref<1x16xf32, #tpu.memory_space<vmem>>, %arg10: memref<1x16xf32, #tpu.memory_space<vmem>>, %arg11: memref<1x16x16x16xbf16, #tpu.memory_space<vmem>>, %arg12: memref<1x18x18x4xbf16, #tpu.memory_space<vmem>>) attributes {dimension_semantics = [#tpu.dimension_semantics<parallel>], iteration_bounds = array<i64: 2>, scalar_prefetch = 0 : i64, scratch_operands = 1 : i64, tpu.core_type = #tpu.core_type<tc>, window_params = [{transform_indices = @transform_0, window_bounds = array<i64: 1, 16, 16, 16>}, {pipeline_mode = #tpu.pipeline_mode<synchronous>, transform_indices = @transform_1, window_bounds = array<i64: 16, 4>}, {pipeline_mode = #tpu.pipeline_mode<synchronous>, transform_indices = @transform_2, window_bounds = array<i64: 1, 4>}, {pipeline_mode = #tpu.pipeline_mode<synchronous>, transform_indices = @transform_3, window_bounds = array<i64: 1, 4>}, {pipeline_mode = #tpu.pipeline_mode<synchronous>, transform_indices = @transform_4, window_bounds = array<i64: 9, 4, 4>}, {pipeline_mode = #tpu.pipeline_mode<synchronous>, transform_indices = @transform_5, window_bounds = array<i64: 1, 4>}, {pipeline_mode = #tpu.pipeline_mode<synchronous>, transform_indices = @transform_6, window_bounds = array<i64: 1, 4>}, {pipeline_mode = #tpu.pipeline_mode<synchronous>, transform_indices = @transform_7, window_bounds = array<i64: 4, 16>}, {pipeline_mode = #tpu.pipeline_mode<synchronous>, transform_indices = @transform_8, window_bounds = array<i64: 1, 16>}, {pipeline_mode = #tpu.pipeline_mode<synchronous>, transform_indices = @transform_9, window_bounds = array<i64: 1, 16>}, {transform_indices = @transform_10, window_bounds = array<i64: 1, 16, 16, 16>}]} {
    %cst = arith.constant 0.000000e+00 : bf16
    %0 = vector.broadcast %cst : bf16 to vector<1x1x18x4xbf16>
    %c0 = arith.constant 0 : index
    %c0_0 = arith.constant 0 : index
    %c0_1 = arith.constant 0 : index
    %c0_2 = arith.constant 0 : index
    %1 = vector.load %arg12[%c0, %c0_0, %c0_1, %c0_2] : memref<1x18x18x4xbf16, #tpu.memory_space<vmem>>, vector<1x1x18x4xbf16>
    tpu.vector_store %arg12[%c0, %c0_0, %c0_1, %c0_2], %0 {strides = array<i32>} : memref<1x18x18x4xbf16, #tpu.memory_space<vmem>>, vector<1x1x18x4xbf16>,
    %c0_3 = arith.constant 0 : index
    %c17 = arith.constant 17 : index
    %c0_4 = arith.constant 0 : index
    %c0_5 = arith.constant 0 : index
    %2 = vector.load %arg12[%c0_3, %c17, %c0_4, %c0_5] : memref<1x18x18x4xbf16, #tpu.memory_space<vmem>>, vector<1x1x18x4xbf16>
    tpu.vector_store %arg12[%c0_3, %c17, %c0_4, %c0_5], %0 {strides = array<i32>} : memref<1x18x18x4xbf16, #tpu.memory_space<vmem>>, vector<1x1x18x4xbf16>,
    %cst_6 = arith.constant 0.000000e+00 : bf16
    %3 = vector.broadcast %cst_6 : bf16 to vector<1x18x1x4xbf16>
    %c0_7 = arith.constant 0 : index
    %c0_8 = arith.constant 0 : index
    %c0_9 = arith.constant 0 : index
    %c0_10 = arith.constant 0 : index
    %4 = vector.load %arg12[%c0_7, %c0_8, %c0_9, %c0_10] : memref<1x18x18x4xbf16, #tpu.memory_space<vmem>>, vector<1x18x1x4xbf16>
    tpu.vector_store %arg12[%c0_7, %c0_8, %c0_9, %c0_10], %3 {strides = array<i32>} : memref<1x18x18x4xbf16, #tpu.memory_space<vmem>>, vector<1x18x1x4xbf16>,
    %c0_11 = arith.constant 0 : index
    %c0_12 = arith.constant 0 : index
    %c17_13 = arith.constant 17 : index
    %c0_14 = arith.constant 0 : index
    %5 = vector.load %arg12[%c0_11, %c0_12, %c17_13, %c0_14] : memref<1x18x18x4xbf16, #tpu.memory_space<vmem>>, vector<1x18x1x4xbf16>
    tpu.vector_store %arg12[%c0_11, %c0_12, %c17_13, %c0_14], %3 {strides = array<i32>} : memref<1x18x18x4xbf16, #tpu.memory_space<vmem>>, vector<1x18x1x4xbf16>,
    %c0_15 = arith.constant 0 : index
    %c0_16 = arith.constant 0 : index
    %6 = vector.load %arg2[%c0_15, %c0_16] : memref<16x4xbf16, #tpu.memory_space<vmem>>, vector<16x4xbf16>
    %c0_17 = arith.constant 0 : index
    %c0_18 = arith.constant 0 : index
    %7 = vector.load %arg8[%c0_17, %c0_18] : memref<4x16xbf16, #tpu.memory_space<vmem>>, vector<4x16xbf16>
    %c0_19 = arith.constant 0 : index
    %c0_20 = arith.constant 0 : index
    %8 = vector.load %arg3[%c0_19, %c0_20] : memref<1x4xf32, #tpu.memory_space<vmem>>, vector<1x4xf32>
    %c0_21 = arith.constant 0 : index
    %c0_22 = arith.constant 0 : index
    %9 = vector.load %arg4[%c0_21, %c0_22] : memref<1x4xf32, #tpu.memory_space<vmem>>, vector<1x4xf32>
    %c0_23 = arith.constant 0 : index
    %c0_24 = arith.constant 0 : index
    %10 = vector.load %arg6[%c0_23, %c0_24] : memref<1x4xf32, #tpu.memory_space<vmem>>, vector<1x4xf32>
    %c0_25 = arith.constant 0 : index
    %c0_26 = arith.constant 0 : index
    %11 = vector.load %arg7[%c0_25, %c0_26] : memref<1x4xf32, #tpu.memory_space<vmem>>, vector<1x4xf32>
    %c0_27 = arith.constant 0 : index
    %c0_28 = arith.constant 0 : index
    %12 = vector.load %arg9[%c0_27, %c0_28] : memref<1x16xf32, #tpu.memory_space<vmem>>, vector<1x16xf32>
    %c0_29 = arith.constant 0 : index
    %c0_30 = arith.constant 0 : index
    %13 = vector.load %arg10[%c0_29, %c0_30] : memref<1x16xf32, #tpu.memory_space<vmem>>, vector<1x16xf32>
    %c0_i32 = arith.constant 0 : i32
    %c2_i32 = arith.constant 2 : i32
    %14 = arith.addi %c0_i32, %c2_i32 : i32
    %c1_i32 = arith.constant 1 : i32
    scf.for %arg13 = %c0_i32 to %14 step %c1_i32  : i32 {
      %c1_i32_36 = arith.constant 1 : i32
      %16 = arith.muli %arg13, %c1_i32_36 : i32
      %c0_i32_37 = arith.constant 0 : i32
      %17 = arith.addi %c0_i32_37, %16 : i32
      %c8_i32 = arith.constant 8 : i32
      %18 = arith.muli %17, %c8_i32 : i32
      %19 = tpu.assume_multiple %18, 8 : i32
      %c0_38 = arith.constant 0 : index
      %20 = arith.index_cast %19 : i32 to index
      %c0_39 = arith.constant 0 : index
      %c0_40 = arith.constant 0 : index
      %21 = vector.load %arg1[%c0_38, %20, %c0_39, %c0_40] : memref<1x16x16x16xbf16, #tpu.memory_space<vmem>>, vector<1x8x16x16xbf16>
      %22 = vector.shape_cast %21 : vector<1x8x16x16xbf16> to vector<128x16xbf16>
      %cst_41 = arith.constant dense<0.000000e+00> : vector<128x4xf32>
      %23 = tpu.matmul %22, %6, %cst_41 {dimension_numbers = #tpu.dot_dimension_numbers<[1], [0], [0], [1], [0, 0, 1, 1], [], []>} : vector<128x16xbf16>, vector<16x4xbf16>, vector<128x4xf32> -> vector<128x4xf32>
      %24 = vector.broadcast %8 : vector<1x4xf32> to vector<128x4xf32>
      %25 = arith.mulf %23, %24 : vector<128x4xf32>
      %26 = vector.broadcast %9 : vector<1x4xf32> to vector<128x4xf32>
      %27 = arith.addf %25, %26 : vector<128x4xf32>
      %cst_42 = arith.constant 0.000000e+00 : f32
      %28 = vector.broadcast %cst_42 : f32 to vector<128x4xf32>
      %29 = arith.maximumf %27, %28 : vector<128x4xf32>
      %30 = arith.truncf %29 : vector<128x4xf32> to vector<128x4xbf16>
      %31 = vector.shape_cast %30 : vector<128x4xbf16> to vector<1x8x16x4xbf16>
      %c1_i32_43 = arith.constant 1 : i32
      %32 = arith.addi %19, %c1_i32_43 : i32
      %c0_44 = arith.constant 0 : index
      %33 = arith.index_cast %32 : i32 to index
      %c1 = arith.constant 1 : index
      %c0_45 = arith.constant 0 : index
      %34 = vector.load %arg12[%c0_44, %33, %c1, %c0_45] : memref<1x18x18x4xbf16, #tpu.memory_space<vmem>>, vector<1x8x16x4xbf16>
      tpu.vector_store %arg12[%c0_44, %33, %c1, %c0_45], %31 {strides = array<i32>} : memref<1x18x18x4xbf16, #tpu.memory_space<vmem>>, vector<1x8x16x4xbf16>,
    }
    %c2_i32_31 = arith.constant 2 : i32
    %c0_i32_32 = arith.constant 0 : i32
    %c2_i32_33 = arith.constant 2 : i32
    %15 = arith.addi %c0_i32_32, %c2_i32_33 : i32
    %c1_i32_34 = arith.constant 1 : i32
    scf.for %arg13 = %c0_i32_32 to %15 step %c1_i32_34  : i32 {
      %c1_i32_36 = arith.constant 1 : i32
      %16 = arith.muli %arg13, %c1_i32_36 : i32
      %c0_i32_37 = arith.constant 0 : i32
      %17 = arith.addi %c0_i32_37, %16 : i32
      %c8_i32 = arith.constant 8 : i32
      %18 = arith.muli %17, %c8_i32 : i32
      %19 = tpu.assume_multiple %18, 8 : i32
      %cst_38 = arith.constant 0.000000e+00 : f32
      %20 = vector.broadcast %cst_38 : f32 to vector<128x4xf32>
      %c0_i32_39 = arith.constant 0 : i32
      %21 = arith.addi %19, %c0_i32_39 : i32
      %c0_40 = arith.constant 0 : index
      %22 = arith.index_cast %21 : i32 to index
      %c0_41 = arith.constant 0 : index
      %c0_42 = arith.constant 0 : index
      %23 = vector.load %arg12[%c0_40, %22, %c0_41, %c0_42] : memref<1x18x18x4xbf16, #tpu.memory_space<vmem>>, vector<1x8x16x4xbf16>
      %24 = vector.shape_cast %23 : vector<1x8x16x4xbf16> to vector<128x4xbf16>
      %c0_43 = arith.constant 0 : index
      %c0_44 = arith.constant 0 : index
      %c0_45 = arith.constant 0 : index
      %25 = vector.load %arg5[%c0_43, %c0_44, %c0_45] : memref<9x4x4xbf16, #tpu.memory_space<vmem>>, vector<1x4x4xbf16>
      %26 = vector.shape_cast %25 : vector<1x4x4xbf16> to vector<4x4xbf16>
      %cst_46 = arith.constant dense<0.000000e+00> : vector<128x4xf32>
      %27 = tpu.matmul %24, %26, %cst_46 {dimension_numbers = #tpu.dot_dimension_numbers<[1], [0], [0], [1], [0, 0, 1, 1], [], []>} : vector<128x4xbf16>, vector<4x4xbf16>, vector<128x4xf32> -> vector<128x4xf32>
      %28 = arith.addf %20, %27 : vector<128x4xf32>
      %c0_i32_47 = arith.constant 0 : i32
      %29 = arith.addi %19, %c0_i32_47 : i32
      %c0_48 = arith.constant 0 : index
      %30 = arith.index_cast %29 : i32 to index
      %c1 = arith.constant 1 : index
      %c0_49 = arith.constant 0 : index
      %31 = vector.load %arg12[%c0_48, %30, %c1, %c0_49] : memref<1x18x18x4xbf16, #tpu.memory_space<vmem>>, vector<1x8x16x4xbf16>
      %32 = vector.shape_cast %31 : vector<1x8x16x4xbf16> to vector<128x4xbf16>
      %c1_50 = arith.constant 1 : index
      %c0_51 = arith.constant 0 : index
      %c0_52 = arith.constant 0 : index
      %33 = vector.load %arg5[%c1_50, %c0_51, %c0_52] : memref<9x4x4xbf16, #tpu.memory_space<vmem>>, vector<1x4x4xbf16>
      %34 = vector.shape_cast %33 : vector<1x4x4xbf16> to vector<4x4xbf16>
      %cst_53 = arith.constant dense<0.000000e+00> : vector<128x4xf32>
      %35 = tpu.matmul %32, %34, %cst_53 {dimension_numbers = #tpu.dot_dimension_numbers<[1], [0], [0], [1], [0, 0, 1, 1], [], []>} : vector<128x4xbf16>, vector<4x4xbf16>, vector<128x4xf32> -> vector<128x4xf32>
      %36 = arith.addf %28, %35 : vector<128x4xf32>
      %c0_i32_54 = arith.constant 0 : i32
      %37 = arith.addi %19, %c0_i32_54 : i32
      %c0_55 = arith.constant 0 : index
      %38 = arith.index_cast %37 : i32 to index
      %c2 = arith.constant 2 : index
      %c0_56 = arith.constant 0 : index
      %39 = vector.load %arg12[%c0_55, %38, %c2, %c0_56] : memref<1x18x18x4xbf16, #tpu.memory_space<vmem>>, vector<1x8x16x4xbf16>
      %40 = vector.shape_cast %39 : vector<1x8x16x4xbf16> to vector<128x4xbf16>
      %c2_57 = arith.constant 2 : index
      %c0_58 = arith.constant 0 : index
      %c0_59 = arith.constant 0 : index
      %41 = vector.load %arg5[%c2_57, %c0_58, %c0_59] : memref<9x4x4xbf16, #tpu.memory_space<vmem>>, vector<1x4x4xbf16>
      %42 = vector.shape_cast %41 : vector<1x4x4xbf16> to vector<4x4xbf16>
      %cst_60 = arith.constant dense<0.000000e+00> : vector<128x4xf32>
      %43 = tpu.matmul %40, %42, %cst_60 {dimension_numbers = #tpu.dot_dimension_numbers<[1], [0], [0], [1], [0, 0, 1, 1], [], []>} : vector<128x4xbf16>, vector<4x4xbf16>, vector<128x4xf32> -> vector<128x4xf32>
      %44 = arith.addf %36, %43 : vector<128x4xf32>
      %c1_i32_61 = arith.constant 1 : i32
      %45 = arith.addi %19, %c1_i32_61 : i32
      %c0_62 = arith.constant 0 : index
      %46 = arith.index_cast %45 : i32 to index
      %c0_63 = arith.constant 0 : index
      %c0_64 = arith.constant 0 : index
      %47 = vector.load %arg12[%c0_62, %46, %c0_63, %c0_64] : memref<1x18x18x4xbf16, #tpu.memory_space<vmem>>, vector<1x8x16x4xbf16>
      %48 = vector.shape_cast %47 : vector<1x8x16x4xbf16> to vector<128x4xbf16>
      %c3 = arith.constant 3 : index
      %c0_65 = arith.constant 0 : index
      %c0_66 = arith.constant 0 : index
      %49 = vector.load %arg5[%c3, %c0_65, %c0_66] : memref<9x4x4xbf16, #tpu.memory_space<vmem>>, vector<1x4x4xbf16>
      %50 = vector.shape_cast %49 : vector<1x4x4xbf16> to vector<4x4xbf16>
      %cst_67 = arith.constant dense<0.000000e+00> : vector<128x4xf32>
      %51 = tpu.matmul %48, %50, %cst_67 {dimension_numbers = #tpu.dot_dimension_numbers<[1], [0], [0], [1], [0, 0, 1, 1], [], []>} : vector<128x4xbf16>, vector<4x4xbf16>, vector<128x4xf32> -> vector<128x4xf32>
      %52 = arith.addf %44, %51 : vector<128x4xf32>
      %c1_i32_68 = arith.constant 1 : i32
      %53 = arith.addi %19, %c1_i32_68 : i32
      %c0_69 = arith.constant 0 : index
      %54 = arith.index_cast %53 : i32 to index
      %c1_70 = arith.constant 1 : index
      %c0_71 = arith.constant 0 : index
      %55 = vector.load %arg12[%c0_69, %54, %c1_70, %c0_71] : memref<1x18x18x4xbf16, #tpu.memory_space<vmem>>, vector<1x8x16x4xbf16>
      %56 = vector.shape_cast %55 : vector<1x8x16x4xbf16> to vector<128x4xbf16>
      %c4 = arith.constant 4 : index
      %c0_72 = arith.constant 0 : index
      %c0_73 = arith.constant 0 : index
      %57 = vector.load %arg5[%c4, %c0_72, %c0_73] : memref<9x4x4xbf16, #tpu.memory_space<vmem>>, vector<1x4x4xbf16>
      %58 = vector.shape_cast %57 : vector<1x4x4xbf16> to vector<4x4xbf16>
      %cst_74 = arith.constant dense<0.000000e+00> : vector<128x4xf32>
      %59 = tpu.matmul %56, %58, %cst_74 {dimension_numbers = #tpu.dot_dimension_numbers<[1], [0], [0], [1], [0, 0, 1, 1], [], []>} : vector<128x4xbf16>, vector<4x4xbf16>, vector<128x4xf32> -> vector<128x4xf32>
      %60 = arith.addf %52, %59 : vector<128x4xf32>
      %c1_i32_75 = arith.constant 1 : i32
      %61 = arith.addi %19, %c1_i32_75 : i32
      %c0_76 = arith.constant 0 : index
      %62 = arith.index_cast %61 : i32 to index
      %c2_77 = arith.constant 2 : index
      %c0_78 = arith.constant 0 : index
      %63 = vector.load %arg12[%c0_76, %62, %c2_77, %c0_78] : memref<1x18x18x4xbf16, #tpu.memory_space<vmem>>, vector<1x8x16x4xbf16>
      %64 = vector.shape_cast %63 : vector<1x8x16x4xbf16> to vector<128x4xbf16>
      %c5 = arith.constant 5 : index
      %c0_79 = arith.constant 0 : index
      %c0_80 = arith.constant 0 : index
      %65 = vector.load %arg5[%c5, %c0_79, %c0_80] : memref<9x4x4xbf16, #tpu.memory_space<vmem>>, vector<1x4x4xbf16>
      %66 = vector.shape_cast %65 : vector<1x4x4xbf16> to vector<4x4xbf16>
      %cst_81 = arith.constant dense<0.000000e+00> : vector<128x4xf32>
      %67 = tpu.matmul %64, %66, %cst_81 {dimension_numbers = #tpu.dot_dimension_numbers<[1], [0], [0], [1], [0, 0, 1, 1], [], []>} : vector<128x4xbf16>, vector<4x4xbf16>, vector<128x4xf32> -> vector<128x4xf32>
      %68 = arith.addf %60, %67 : vector<128x4xf32>
      %c2_i32_82 = arith.constant 2 : i32
      %69 = arith.addi %19, %c2_i32_82 : i32
      %c0_83 = arith.constant 0 : index
      %70 = arith.index_cast %69 : i32 to index
      %c0_84 = arith.constant 0 : index
      %c0_85 = arith.constant 0 : index
      %71 = vector.load %arg12[%c0_83, %70, %c0_84, %c0_85] : memref<1x18x18x4xbf16, #tpu.memory_space<vmem>>, vector<1x8x16x4xbf16>
      %72 = vector.shape_cast %71 : vector<1x8x16x4xbf16> to vector<128x4xbf16>
      %c6 = arith.constant 6 : index
      %c0_86 = arith.constant 0 : index
      %c0_87 = arith.constant 0 : index
      %73 = vector.load %arg5[%c6, %c0_86, %c0_87] : memref<9x4x4xbf16, #tpu.memory_space<vmem>>, vector<1x4x4xbf16>
      %74 = vector.shape_cast %73 : vector<1x4x4xbf16> to vector<4x4xbf16>
      %cst_88 = arith.constant dense<0.000000e+00> : vector<128x4xf32>
      %75 = tpu.matmul %72, %74, %cst_88 {dimension_numbers = #tpu.dot_dimension_numbers<[1], [0], [0], [1], [0, 0, 1, 1], [], []>} : vector<128x4xbf16>, vector<4x4xbf16>, vector<128x4xf32> -> vector<128x4xf32>
      %76 = arith.addf %68, %75 : vector<128x4xf32>
      %c2_i32_89 = arith.constant 2 : i32
      %77 = arith.addi %19, %c2_i32_89 : i32
      %c0_90 = arith.constant 0 : index
      %78 = arith.index_cast %77 : i32 to index
      %c1_91 = arith.constant 1 : index
      %c0_92 = arith.constant 0 : index
      %79 = vector.load %arg12[%c0_90, %78, %c1_91, %c0_92] : memref<1x18x18x4xbf16, #tpu.memory_space<vmem>>, vector<1x8x16x4xbf16>
      %80 = vector.shape_cast %79 : vector<1x8x16x4xbf16> to vector<128x4xbf16>
      %c7 = arith.constant 7 : index
      %c0_93 = arith.constant 0 : index
      %c0_94 = arith.constant 0 : index
      %81 = vector.load %arg5[%c7, %c0_93, %c0_94] : memref<9x4x4xbf16, #tpu.memory_space<vmem>>, vector<1x4x4xbf16>
      %82 = vector.shape_cast %81 : vector<1x4x4xbf16> to vector<4x4xbf16>
      %cst_95 = arith.constant dense<0.000000e+00> : vector<128x4xf32>
      %83 = tpu.matmul %80, %82, %cst_95 {dimension_numbers = #tpu.dot_dimension_numbers<[1], [0], [0], [1], [0, 0, 1, 1], [], []>} : vector<128x4xbf16>, vector<4x4xbf16>, vector<128x4xf32> -> vector<128x4xf32>
      %84 = arith.addf %76, %83 : vector<128x4xf32>
      %c2_i32_96 = arith.constant 2 : i32
      %85 = arith.addi %19, %c2_i32_96 : i32
      %c0_97 = arith.constant 0 : index
      %86 = arith.index_cast %85 : i32 to index
      %c2_98 = arith.constant 2 : index
      %c0_99 = arith.constant 0 : index
      %87 = vector.load %arg12[%c0_97, %86, %c2_98, %c0_99] : memref<1x18x18x4xbf16, #tpu.memory_space<vmem>>, vector<1x8x16x4xbf16>
      %88 = vector.shape_cast %87 : vector<1x8x16x4xbf16> to vector<128x4xbf16>
      %c8 = arith.constant 8 : index
      %c0_100 = arith.constant 0 : index
      %c0_101 = arith.constant 0 : index
      %89 = vector.load %arg5[%c8, %c0_100, %c0_101] : memref<9x4x4xbf16, #tpu.memory_space<vmem>>, vector<1x4x4xbf16>
      %90 = vector.shape_cast %89 : vector<1x4x4xbf16> to vector<4x4xbf16>
      %cst_102 = arith.constant dense<0.000000e+00> : vector<128x4xf32>
      %91 = tpu.matmul %88, %90, %cst_102 {dimension_numbers = #tpu.dot_dimension_numbers<[1], [0], [0], [1], [0, 0, 1, 1], [], []>} : vector<128x4xbf16>, vector<4x4xbf16>, vector<128x4xf32> -> vector<128x4xf32>
      %92 = arith.addf %84, %91 : vector<128x4xf32>
      %93 = vector.broadcast %10 : vector<1x4xf32> to vector<128x4xf32>
      %94 = arith.mulf %92, %93 : vector<128x4xf32>
      %95 = vector.broadcast %11 : vector<1x4xf32> to vector<128x4xf32>
      %96 = arith.addf %94, %95 : vector<128x4xf32>
      %cst_103 = arith.constant 0.000000e+00 : f32
      %97 = vector.broadcast %cst_103 : f32 to vector<128x4xf32>
      %98 = arith.maximumf %96, %97 : vector<128x4xf32>
      %99 = arith.truncf %98 : vector<128x4xf32> to vector<128x4xbf16>
      %cst_104 = arith.constant dense<0.000000e+00> : vector<128x16xf32>
      %100 = tpu.matmul %99, %7, %cst_104 {dimension_numbers = #tpu.dot_dimension_numbers<[1], [0], [0], [1], [0, 0, 1, 1], [], []>} : vector<128x4xbf16>, vector<4x16xbf16>, vector<128x16xf32> -> vector<128x16xf32>
      %101 = vector.broadcast %12 : vector<1x16xf32> to vector<128x16xf32>
      %102 = arith.mulf %100, %101 : vector<128x16xf32>
      %103 = vector.broadcast %13 : vector<1x16xf32> to vector<128x16xf32>
      %104 = arith.addf %102, %103 : vector<128x16xf32>
      %c0_105 = arith.constant 0 : index
      %105 = arith.index_cast %19 : i32 to index
      %c0_106 = arith.constant 0 : index
      %c0_107 = arith.constant 0 : index
      %106 = vector.load %arg1[%c0_105, %105, %c0_106, %c0_107] : memref<1x16x16x16xbf16, #tpu.memory_space<vmem>>, vector<1x8x16x16xbf16>
      %107 = arith.extf %106 : vector<1x8x16x16xbf16> to vector<1x8x16x16xf32>
      %108 = vector.shape_cast %107 : vector<1x8x16x16xf32> to vector<128x16xf32>
      %109 = arith.addf %104, %108 : vector<128x16xf32>
      %cst_108 = arith.constant 0.000000e+00 : f32
      %110 = vector.broadcast %cst_108 : f32 to vector<128x16xf32>
      %111 = arith.maximumf %109, %110 : vector<128x16xf32>
      %112 = arith.truncf %111 : vector<128x16xf32> to vector<128x16xbf16>
      %113 = vector.shape_cast %112 : vector<128x16xbf16> to vector<1x8x16x16xbf16>
      %c0_109 = arith.constant 0 : index
      %114 = arith.index_cast %19 : i32 to index
      %c0_110 = arith.constant 0 : index
      %c0_111 = arith.constant 0 : index
      %115 = vector.load %arg11[%c0_109, %114, %c0_110, %c0_111] : memref<1x16x16x16xbf16, #tpu.memory_space<vmem>>, vector<1x8x16x16xbf16>
      tpu.vector_store %arg11[%c0_109, %114, %c0_110, %c0_111], %113 {strides = array<i32>} : memref<1x16x16x16xbf16, #tpu.memory_space<vmem>>, vector<1x8x16x16xbf16>,
    }
    %c2_i32_35 = arith.constant 2 : i32
    return
  }
  func.func @transform_0(%arg0: i32) -> (i32, i32, i32, i32) {
    %c0_i32 = arith.constant 0 : i32
    %c0_i32_0 = arith.constant 0 : i32
    %c0_i32_1 = arith.constant 0 : i32
    %c0_i32_2 = arith.constant 0 : i32
    return %arg0, %c0_i32, %c0_i32_0, %c0_i32_1 : i32, i32, i32, i32
  }
  func.func @transform_1(%arg0: i32) -> (i32, i32) {
    %c0_i32 = arith.constant 0 : i32
    %c0_i32_0 = arith.constant 0 : i32
    %c0_i32_1 = arith.constant 0 : i32
    return %c0_i32, %c0_i32_0 : i32, i32
  }
  func.func @transform_2(%arg0: i32) -> (i32, i32) {
    %c0_i32 = arith.constant 0 : i32
    %c0_i32_0 = arith.constant 0 : i32
    %c0_i32_1 = arith.constant 0 : i32
    return %c0_i32, %c0_i32_0 : i32, i32
  }
  func.func @transform_3(%arg0: i32) -> (i32, i32) {
    %c0_i32 = arith.constant 0 : i32
    %c0_i32_0 = arith.constant 0 : i32
    %c0_i32_1 = arith.constant 0 : i32
    return %c0_i32, %c0_i32_0 : i32, i32
  }
  func.func @transform_4(%arg0: i32) -> (i32, i32, i32) {
    %c0_i32 = arith.constant 0 : i32
    %c0_i32_0 = arith.constant 0 : i32
    %c0_i32_1 = arith.constant 0 : i32
    %c0_i32_2 = arith.constant 0 : i32
    return %c0_i32, %c0_i32_0, %c0_i32_1 : i32, i32, i32
  }
  func.func @transform_5(%arg0: i32) -> (i32, i32) {
    %c0_i32 = arith.constant 0 : i32
    %c0_i32_0 = arith.constant 0 : i32
    %c0_i32_1 = arith.constant 0 : i32
    return %c0_i32, %c0_i32_0 : i32, i32
  }
  func.func @transform_6(%arg0: i32) -> (i32, i32) {
    %c0_i32 = arith.constant 0 : i32
    %c0_i32_0 = arith.constant 0 : i32
    %c0_i32_1 = arith.constant 0 : i32
    return %c0_i32, %c0_i32_0 : i32, i32
  }
  func.func @transform_7(%arg0: i32) -> (i32, i32) {
    %c0_i32 = arith.constant 0 : i32
    %c0_i32_0 = arith.constant 0 : i32
    %c0_i32_1 = arith.constant 0 : i32
    return %c0_i32, %c0_i32_0 : i32, i32
  }
  func.func @transform_8(%arg0: i32) -> (i32, i32) {
    %c0_i32 = arith.constant 0 : i32
    %c0_i32_0 = arith.constant 0 : i32
    %c0_i32_1 = arith.constant 0 : i32
    return %c0_i32, %c0_i32_0 : i32, i32
  }
  func.func @transform_9(%arg0: i32) -> (i32, i32) {
    %c0_i32 = arith.constant 0 : i32
    %c0_i32_0 = arith.constant 0 : i32
    %c0_i32_1 = arith.constant 0 : i32
    return %c0_i32, %c0_i32_0 : i32, i32
  }
  func.func @transform_10(%arg0: i32) -> (i32, i32, i32, i32) {
    %c0_i32 = arith.constant 0 : i32
    %c0_i32_0 = arith.constant 0 : i32
    %c0_i32_1 = arith.constant 0 : i32
    %c0_i32_2 = arith.constant 0 : i32
    return %arg0, %c0_i32, %c0_i32_0, %c0_i32_1 : i32, i32, i32, i32
  }
}

module attributes {stable_mosaic.version = 11 : i64} {
  func.func @bottleneck_kernel(%arg0: i32, %arg1: memref<1x16x16x16xbf16, #tpu.memory_space<vmem>>, %arg2: memref<16x4xbf16, #tpu.memory_space<vmem>>, %arg3: memref<1x4xf32, #tpu.memory_space<vmem>>, %arg4: memref<1x4xf32, #tpu.memory_space<vmem>>, %arg5: memref<9x4x4xbf16, #tpu.memory_space<vmem>>, %arg6: memref<1x4xf32, #tpu.memory_space<vmem>>, %arg7: memref<1x4xf32, #tpu.memory_space<vmem>>, %arg8: memref<4x16xbf16, #tpu.memory_space<vmem>>, %arg9: memref<1x16xf32, #tpu.memory_space<vmem>>, %arg10: memref<1x16xf32, #tpu.memory_space<vmem>>, %arg11: memref<1x16x16x16xbf16, #tpu.memory_space<vmem>>, %arg12: memref<1x18x18x4xbf16, #tpu.memory_space<vmem>>) attributes {dimension_semantics = [#tpu.dimension_semantics<parallel>], iteration_bounds = array<i64: 2>, scalar_prefetch = 0 : i64, scratch_operands = 1 : i64, tpu.core_type = #tpu.core_type<tc>, window_params = [{transform_indices = @transform_0, window_bounds = array<i64: 1, 16, 16, 16>}, {pipeline_mode = #tpu.pipeline_mode<synchronous>, transform_indices = @transform_1, window_bounds = array<i64: 16, 4>}, {pipeline_mode = #tpu.pipeline_mode<synchronous>, transform_indices = @transform_2, window_bounds = array<i64: 1, 4>}, {pipeline_mode = #tpu.pipeline_mode<synchronous>, transform_indices = @transform_3, window_bounds = array<i64: 1, 4>}, {pipeline_mode = #tpu.pipeline_mode<synchronous>, transform_indices = @transform_4, window_bounds = array<i64: 9, 4, 4>}, {pipeline_mode = #tpu.pipeline_mode<synchronous>, transform_indices = @transform_5, window_bounds = array<i64: 1, 4>}, {pipeline_mode = #tpu.pipeline_mode<synchronous>, transform_indices = @transform_6, window_bounds = array<i64: 1, 4>}, {pipeline_mode = #tpu.pipeline_mode<synchronous>, transform_indices = @transform_7, window_bounds = array<i64: 4, 16>}, {pipeline_mode = #tpu.pipeline_mode<synchronous>, transform_indices = @transform_8, window_bounds = array<i64: 1, 16>}, {pipeline_mode = #tpu.pipeline_mode<synchronous>, transform_indices = @transform_9, window_bounds = array<i64: 1, 16>}, {transform_indices = @transform_10, window_bounds = array<i64: 1, 16, 16, 16>}]} {
    %cst = arith.constant 0.000000e+00 : bf16
    %0 = vector.broadcast %cst : bf16 to vector<1x1x18x4xbf16>
    %c0 = arith.constant 0 : index
    %c0_0 = arith.constant 0 : index
    %c0_1 = arith.constant 0 : index
    %c0_2 = arith.constant 0 : index
    %1 = vector.load %arg12[%c0, %c0_0, %c0_1, %c0_2] : memref<1x18x18x4xbf16, #tpu.memory_space<vmem>>, vector<1x1x18x4xbf16>
    tpu.vector_store %arg12[%c0, %c0_0, %c0_1, %c0_2], %0 {strides = array<i32>} : memref<1x18x18x4xbf16, #tpu.memory_space<vmem>>, vector<1x1x18x4xbf16>,
    %c0_3 = arith.constant 0 : index
    %c17 = arith.constant 17 : index
    %c0_4 = arith.constant 0 : index
    %c0_5 = arith.constant 0 : index
    %2 = vector.load %arg12[%c0_3, %c17, %c0_4, %c0_5] : memref<1x18x18x4xbf16, #tpu.memory_space<vmem>>, vector<1x1x18x4xbf16>
    tpu.vector_store %arg12[%c0_3, %c17, %c0_4, %c0_5], %0 {strides = array<i32>} : memref<1x18x18x4xbf16, #tpu.memory_space<vmem>>, vector<1x1x18x4xbf16>,
    %cst_6 = arith.constant 0.000000e+00 : bf16
    %3 = vector.broadcast %cst_6 : bf16 to vector<1x18x1x4xbf16>
    %c0_7 = arith.constant 0 : index
    %c0_8 = arith.constant 0 : index
    %c0_9 = arith.constant 0 : index
    %c0_10 = arith.constant 0 : index
    %4 = vector.load %arg12[%c0_7, %c0_8, %c0_9, %c0_10] : memref<1x18x18x4xbf16, #tpu.memory_space<vmem>>, vector<1x18x1x4xbf16>
    tpu.vector_store %arg12[%c0_7, %c0_8, %c0_9, %c0_10], %3 {strides = array<i32>} : memref<1x18x18x4xbf16, #tpu.memory_space<vmem>>, vector<1x18x1x4xbf16>,
    %c0_11 = arith.constant 0 : index
    %c0_12 = arith.constant 0 : index
    %c17_13 = arith.constant 17 : index
    %c0_14 = arith.constant 0 : index
    %5 = vector.load %arg12[%c0_11, %c0_12, %c17_13, %c0_14] : memref<1x18x18x4xbf16, #tpu.memory_space<vmem>>, vector<1x18x1x4xbf16>
    tpu.vector_store %arg12[%c0_11, %c0_12, %c17_13, %c0_14], %3 {strides = array<i32>} : memref<1x18x18x4xbf16, #tpu.memory_space<vmem>>, vector<1x18x1x4xbf16>,
    %c0_15 = arith.constant 0 : index
    %c0_16 = arith.constant 0 : index
    %6 = vector.load %arg2[%c0_15, %c0_16] : memref<16x4xbf16, #tpu.memory_space<vmem>>, vector<16x4xbf16>
    %c0_17 = arith.constant 0 : index
    %c0_18 = arith.constant 0 : index
    %7 = vector.load %arg8[%c0_17, %c0_18] : memref<4x16xbf16, #tpu.memory_space<vmem>>, vector<4x16xbf16>
    %c0_19 = arith.constant 0 : index
    %c0_20 = arith.constant 0 : index
    %8 = vector.load %arg3[%c0_19, %c0_20] : memref<1x4xf32, #tpu.memory_space<vmem>>, vector<1x4xf32>
    %c0_21 = arith.constant 0 : index
    %c0_22 = arith.constant 0 : index
    %9 = vector.load %arg4[%c0_21, %c0_22] : memref<1x4xf32, #tpu.memory_space<vmem>>, vector<1x4xf32>
    %c0_23 = arith.constant 0 : index
    %c0_24 = arith.constant 0 : index
    %10 = vector.load %arg6[%c0_23, %c0_24] : memref<1x4xf32, #tpu.memory_space<vmem>>, vector<1x4xf32>
    %c0_25 = arith.constant 0 : index
    %c0_26 = arith.constant 0 : index
    %11 = vector.load %arg7[%c0_25, %c0_26] : memref<1x4xf32, #tpu.memory_space<vmem>>, vector<1x4xf32>
    %c0_27 = arith.constant 0 : index
    %c0_28 = arith.constant 0 : index
    %12 = vector.load %arg9[%c0_27, %c0_28] : memref<1x16xf32, #tpu.memory_space<vmem>>, vector<1x16xf32>
    %c0_29 = arith.constant 0 : index
    %c0_30 = arith.constant 0 : index
    %13 = vector.load %arg10[%c0_29, %c0_30] : memref<1x16xf32, #tpu.memory_space<vmem>>, vector<1x16xf32>
    %c0_i32 = arith.constant 0 : i32
    %c2_i32 = arith.constant 2 : i32
    %14 = arith.addi %c0_i32, %c2_i32 : i32
    %c1_i32 = arith.constant 1 : i32
    scf.for %arg13 = %c0_i32 to %14 step %c1_i32  : i32 {
      %c1_i32_36 = arith.constant 1 : i32
      %16 = arith.muli %arg13, %c1_i32_36 : i32
      %c0_i32_37 = arith.constant 0 : i32
      %17 = arith.addi %c0_i32_37, %16 : i32
      %c8_i32 = arith.constant 8 : i32
      %18 = arith.muli %17, %c8_i32 : i32
      %19 = tpu.assume_multiple %18, 8 : i32
      %c0_38 = arith.constant 0 : index
      %20 = arith.index_cast %19 : i32 to index
      %c0_39 = arith.constant 0 : index
      %c0_40 = arith.constant 0 : index
      %21 = vector.load %arg1[%c0_38, %20, %c0_39, %c0_40] : memref<1x16x16x16xbf16, #tpu.memory_space<vmem>>, vector<1x8x16x16xbf16>
      %22 = vector.shape_cast %21 : vector<1x8x16x16xbf16> to vector<128x16xbf16>
      %cst_41 = arith.constant dense<0.000000e+00> : vector<128x4xf32>
      %23 = tpu.matmul %22, %6, %cst_41 {dimension_numbers = #tpu.dot_dimension_numbers<[1], [0], [0], [1], [0, 0, 1, 1], [], []>} : vector<128x16xbf16>, vector<16x4xbf16>, vector<128x4xf32> -> vector<128x4xf32>
      %24 = vector.broadcast %8 : vector<1x4xf32> to vector<128x4xf32>
      %25 = arith.mulf %23, %24 : vector<128x4xf32>
      %26 = vector.broadcast %9 : vector<1x4xf32> to vector<128x4xf32>
      %27 = arith.addf %25, %26 : vector<128x4xf32>
      %cst_42 = arith.constant 0.000000e+00 : f32
      %28 = vector.broadcast %cst_42 : f32 to vector<128x4xf32>
      %29 = arith.maximumf %27, %28 : vector<128x4xf32>
      %30 = arith.truncf %29 : vector<128x4xf32> to vector<128x4xbf16>
      %31 = vector.shape_cast %30 : vector<128x4xbf16> to vector<1x8x16x4xbf16>
      %c1_i32_43 = arith.constant 1 : i32
      %32 = arith.addi %19, %c1_i32_43 : i32
      %c0_44 = arith.constant 0 : index
      %33 = arith.index_cast %32 : i32 to index
      %c1 = arith.constant 1 : index
      %c0_45 = arith.constant 0 : index
      %34 = vector.load %arg12[%c0_44, %33, %c1, %c0_45] : memref<1x18x18x4xbf16, #tpu.memory_space<vmem>>, vector<1x8x16x4xbf16>
      tpu.vector_store %arg12[%c0_44, %33, %c1, %c0_45], %31 {strides = array<i32>} : memref<1x18x18x4xbf16, #tpu.memory_space<vmem>>, vector<1x8x16x4xbf16>,
    }
    %c2_i32_31 = arith.constant 2 : i32
    %c0_i32_32 = arith.constant 0 : i32
    %c2_i32_33 = arith.constant 2 : i32
    %15 = arith.addi %c0_i32_32, %c2_i32_33 : i32
    %c1_i32_34 = arith.constant 1 : i32
    scf.for %arg13 = %c0_i32_32 to %15 step %c1_i32_34  : i32 {
      %c1_i32_36 = arith.constant 1 : i32
      %16 = arith.muli %arg13, %c1_i32_36 : i32
      %c0_i32_37 = arith.constant 0 : i32
      %17 = arith.addi %c0_i32_37, %16 : i32
      %c8_i32 = arith.constant 8 : i32
      %18 = arith.muli %17, %c8_i32 : i32
      %19 = tpu.assume_multiple %18, 8 : i32
      %cst_38 = arith.constant 0.000000e+00 : f32
      %20 = vector.broadcast %cst_38 : f32 to vector<128x4xf32>
      %c0_i32_39 = arith.constant 0 : i32
      %21 = arith.addi %19, %c0_i32_39 : i32
      %c0_40 = arith.constant 0 : index
      %22 = arith.index_cast %21 : i32 to index
      %c0_41 = arith.constant 0 : index
      %c0_42 = arith.constant 0 : index
      %23 = vector.load %arg12[%c0_40, %22, %c0_41, %c0_42] : memref<1x18x18x4xbf16, #tpu.memory_space<vmem>>, vector<1x8x16x4xbf16>
      %24 = vector.shape_cast %23 : vector<1x8x16x4xbf16> to vector<128x4xbf16>
      %c0_43 = arith.constant 0 : index
      %c0_44 = arith.constant 0 : index
      %c0_45 = arith.constant 0 : index
      %25 = vector.load %arg5[%c0_43, %c0_44, %c0_45] : memref<9x4x4xbf16, #tpu.memory_space<vmem>>, vector<1x4x4xbf16>
      %26 = vector.shape_cast %25 : vector<1x4x4xbf16> to vector<4x4xbf16>
      %cst_46 = arith.constant dense<0.000000e+00> : vector<128x4xf32>
      %27 = tpu.matmul %24, %26, %cst_46 {dimension_numbers = #tpu.dot_dimension_numbers<[1], [0], [0], [1], [0, 0, 1, 1], [], []>} : vector<128x4xbf16>, vector<4x4xbf16>, vector<128x4xf32> -> vector<128x4xf32>
      %28 = arith.addf %20, %27 : vector<128x4xf32>
      %c0_i32_47 = arith.constant 0 : i32
      %29 = arith.addi %19, %c0_i32_47 : i32
      %c0_48 = arith.constant 0 : index
      %30 = arith.index_cast %29 : i32 to index
      %c1 = arith.constant 1 : index
      %c0_49 = arith.constant 0 : index
      %31 = vector.load %arg12[%c0_48, %30, %c1, %c0_49] : memref<1x18x18x4xbf16, #tpu.memory_space<vmem>>, vector<1x8x16x4xbf16>
      %32 = vector.shape_cast %31 : vector<1x8x16x4xbf16> to vector<128x4xbf16>
      %c1_50 = arith.constant 1 : index
      %c0_51 = arith.constant 0 : index
      %c0_52 = arith.constant 0 : index
      %33 = vector.load %arg5[%c1_50, %c0_51, %c0_52] : memref<9x4x4xbf16, #tpu.memory_space<vmem>>, vector<1x4x4xbf16>
      %34 = vector.shape_cast %33 : vector<1x4x4xbf16> to vector<4x4xbf16>
      %cst_53 = arith.constant dense<0.000000e+00> : vector<128x4xf32>
      %35 = tpu.matmul %32, %34, %cst_53 {dimension_numbers = #tpu.dot_dimension_numbers<[1], [0], [0], [1], [0, 0, 1, 1], [], []>} : vector<128x4xbf16>, vector<4x4xbf16>, vector<128x4xf32> -> vector<128x4xf32>
      %36 = arith.addf %28, %35 : vector<128x4xf32>
      %c0_i32_54 = arith.constant 0 : i32
      %37 = arith.addi %19, %c0_i32_54 : i32
      %c0_55 = arith.constant 0 : index
      %38 = arith.index_cast %37 : i32 to index
      %c2 = arith.constant 2 : index
      %c0_56 = arith.constant 0 : index
      %39 = vector.load %arg12[%c0_55, %38, %c2, %c0_56] : memref<1x18x18x4xbf16, #tpu.memory_space<vmem>>, vector<1x8x16x4xbf16>
      %40 = vector.shape_cast %39 : vector<1x8x16x4xbf16> to vector<128x4xbf16>
      %c2_57 = arith.constant 2 : index
      %c0_58 = arith.constant 0 : index
      %c0_59 = arith.constant 0 : index
      %41 = vector.load %arg5[%c2_57, %c0_58, %c0_59] : memref<9x4x4xbf16, #tpu.memory_space<vmem>>, vector<1x4x4xbf16>
      %42 = vector.shape_cast %41 : vector<1x4x4xbf16> to vector<4x4xbf16>
      %cst_60 = arith.constant dense<0.000000e+00> : vector<128x4xf32>
      %43 = tpu.matmul %40, %42, %cst_60 {dimension_numbers = #tpu.dot_dimension_numbers<[1], [0], [0], [1], [0, 0, 1, 1], [], []>} : vector<128x4xbf16>, vector<4x4xbf16>, vector<128x4xf32> -> vector<128x4xf32>
      %44 = arith.addf %36, %43 : vector<128x4xf32>
      %c1_i32_61 = arith.constant 1 : i32
      %45 = arith.addi %19, %c1_i32_61 : i32
      %c0_62 = arith.constant 0 : index
      %46 = arith.index_cast %45 : i32 to index
      %c0_63 = arith.constant 0 : index
      %c0_64 = arith.constant 0 : index
      %47 = vector.load %arg12[%c0_62, %46, %c0_63, %c0_64] : memref<1x18x18x4xbf16, #tpu.memory_space<vmem>>, vector<1x8x16x4xbf16>
      %48 = vector.shape_cast %47 : vector<1x8x16x4xbf16> to vector<128x4xbf16>
      %c3 = arith.constant 3 : index
      %c0_65 = arith.constant 0 : index
      %c0_66 = arith.constant 0 : index
      %49 = vector.load %arg5[%c3, %c0_65, %c0_66] : memref<9x4x4xbf16, #tpu.memory_space<vmem>>, vector<1x4x4xbf16>
      %50 = vector.shape_cast %49 : vector<1x4x4xbf16> to vector<4x4xbf16>
      %cst_67 = arith.constant dense<0.000000e+00> : vector<128x4xf32>
      %51 = tpu.matmul %48, %50, %cst_67 {dimension_numbers = #tpu.dot_dimension_numbers<[1], [0], [0], [1], [0, 0, 1, 1], [], []>} : vector<128x4xbf16>, vector<4x4xbf16>, vector<128x4xf32> -> vector<128x4xf32>
      %52 = arith.addf %44, %51 : vector<128x4xf32>
      %c1_i32_68 = arith.constant 1 : i32
      %53 = arith.addi %19, %c1_i32_68 : i32
      %c0_69 = arith.constant 0 : index
      %54 = arith.index_cast %53 : i32 to index
      %c1_70 = arith.constant 1 : index
      %c0_71 = arith.constant 0 : index
      %55 = vector.load %arg12[%c0_69, %54, %c1_70, %c0_71] : memref<1x18x18x4xbf16, #tpu.memory_space<vmem>>, vector<1x8x16x4xbf16>
      %56 = vector.shape_cast %55 : vector<1x8x16x4xbf16> to vector<128x4xbf16>
      %c4 = arith.constant 4 : index
      %c0_72 = arith.constant 0 : index
      %c0_73 = arith.constant 0 : index
      %57 = vector.load %arg5[%c4, %c0_72, %c0_73] : memref<9x4x4xbf16, #tpu.memory_space<vmem>>, vector<1x4x4xbf16>
      %58 = vector.shape_cast %57 : vector<1x4x4xbf16> to vector<4x4xbf16>
      %cst_74 = arith.constant dense<0.000000e+00> : vector<128x4xf32>
      %59 = tpu.matmul %56, %58, %cst_74 {dimension_numbers = #tpu.dot_dimension_numbers<[1], [0], [0], [1], [0, 0, 1, 1], [], []>} : vector<128x4xbf16>, vector<4x4xbf16>, vector<128x4xf32> -> vector<128x4xf32>
      %60 = arith.addf %52, %59 : vector<128x4xf32>
      %c1_i32_75 = arith.constant 1 : i32
      %61 = arith.addi %19, %c1_i32_75 : i32
      %c0_76 = arith.constant 0 : index
      %62 = arith.index_cast %61 : i32 to index
      %c2_77 = arith.constant 2 : index
      %c0_78 = arith.constant 0 : index
      %63 = vector.load %arg12[%c0_76, %62, %c2_77, %c0_78] : memref<1x18x18x4xbf16, #tpu.memory_space<vmem>>, vector<1x8x16x4xbf16>
      %64 = vector.shape_cast %63 : vector<1x8x16x4xbf16> to vector<128x4xbf16>
      %c5 = arith.constant 5 : index
      %c0_79 = arith.constant 0 : index
      %c0_80 = arith.constant 0 : index
      %65 = vector.load %arg5[%c5, %c0_79, %c0_80] : memref<9x4x4xbf16, #tpu.memory_space<vmem>>, vector<1x4x4xbf16>
      %66 = vector.shape_cast %65 : vector<1x4x4xbf16> to vector<4x4xbf16>
      %cst_81 = arith.constant dense<0.000000e+00> : vector<128x4xf32>
      %67 = tpu.matmul %64, %66, %cst_81 {dimension_numbers = #tpu.dot_dimension_numbers<[1], [0], [0], [1], [0, 0, 1, 1], [], []>} : vector<128x4xbf16>, vector<4x4xbf16>, vector<128x4xf32> -> vector<128x4xf32>
      %68 = arith.addf %60, %67 : vector<128x4xf32>
      %c2_i32_82 = arith.constant 2 : i32
      %69 = arith.addi %19, %c2_i32_82 : i32
      %c0_83 = arith.constant 0 : index
      %70 = arith.index_cast %69 : i32 to index
      %c0_84 = arith.constant 0 : index
      %c0_85 = arith.constant 0 : index
      %71 = vector.load %arg12[%c0_83, %70, %c0_84, %c0_85] : memref<1x18x18x4xbf16, #tpu.memory_space<vmem>>, vector<1x8x16x4xbf16>
      %72 = vector.shape_cast %71 : vector<1x8x16x4xbf16> to vector<128x4xbf16>
      %c6 = arith.constant 6 : index
      %c0_86 = arith.constant 0 : index
      %c0_87 = arith.constant 0 : index
      %73 = vector.load %arg5[%c6, %c0_86, %c0_87] : memref<9x4x4xbf16, #tpu.memory_space<vmem>>, vector<1x4x4xbf16>
      %74 = vector.shape_cast %73 : vector<1x4x4xbf16> to vector<4x4xbf16>
      %cst_88 = arith.constant dense<0.000000e+00> : vector<128x4xf32>
      %75 = tpu.matmul %72, %74, %cst_88 {dimension_numbers = #tpu.dot_dimension_numbers<[1], [0], [0], [1], [0, 0, 1, 1], [], []>} : vector<128x4xbf16>, vector<4x4xbf16>, vector<128x4xf32> -> vector<128x4xf32>
      %76 = arith.addf %68, %75 : vector<128x4xf32>
      %c2_i32_89 = arith.constant 2 : i32
      %77 = arith.addi %19, %c2_i32_89 : i32
      %c0_90 = arith.constant 0 : index
      %78 = arith.index_cast %77 : i32 to index
      %c1_91 = arith.constant 1 : index
      %c0_92 = arith.constant 0 : index
      %79 = vector.load %arg12[%c0_90, %78, %c1_91, %c0_92] : memref<1x18x18x4xbf16, #tpu.memory_space<vmem>>, vector<1x8x16x4xbf16>
      %80 = vector.shape_cast %79 : vector<1x8x16x4xbf16> to vector<128x4xbf16>
      %c7 = arith.constant 7 : index
      %c0_93 = arith.constant 0 : index
      %c0_94 = arith.constant 0 : index
      %81 = vector.load %arg5[%c7, %c0_93, %c0_94] : memref<9x4x4xbf16, #tpu.memory_space<vmem>>, vector<1x4x4xbf16>
      %82 = vector.shape_cast %81 : vector<1x4x4xbf16> to vector<4x4xbf16>
      %cst_95 = arith.constant dense<0.000000e+00> : vector<128x4xf32>
      %83 = tpu.matmul %80, %82, %cst_95 {dimension_numbers = #tpu.dot_dimension_numbers<[1], [0], [0], [1], [0, 0, 1, 1], [], []>} : vector<128x4xbf16>, vector<4x4xbf16>, vector<128x4xf32> -> vector<128x4xf32>
      %84 = arith.addf %76, %83 : vector<128x4xf32>
      %c2_i32_96 = arith.constant 2 : i32
      %85 = arith.addi %19, %c2_i32_96 : i32
      %c0_97 = arith.constant 0 : index
      %86 = arith.index_cast %85 : i32 to index
      %c2_98 = arith.constant 2 : index
      %c0_99 = arith.constant 0 : index
      %87 = vector.load %arg12[%c0_97, %86, %c2_98, %c0_99] : memref<1x18x18x4xbf16, #tpu.memory_space<vmem>>, vector<1x8x16x4xbf16>
      %88 = vector.shape_cast %87 : vector<1x8x16x4xbf16> to vector<128x4xbf16>
      %c8 = arith.constant 8 : index
      %c0_100 = arith.constant 0 : index
      %c0_101 = arith.constant 0 : index
      %89 = vector.load %arg5[%c8, %c0_100, %c0_101] : memref<9x4x4xbf16, #tpu.memory_space<vmem>>, vector<1x4x4xbf16>
      %90 = vector.shape_cast %89 : vector<1x4x4xbf16> to vector<4x4xbf16>
      %cst_102 = arith.constant dense<0.000000e+00> : vector<128x4xf32>
      %91 = tpu.matmul %88, %90, %cst_102 {dimension_numbers = #tpu.dot_dimension_numbers<[1], [0], [0], [1], [0, 0, 1, 1], [], []>} : vector<128x4xbf16>, vector<4x4xbf16>, vector<128x4xf32> -> vector<128x4xf32>
      %92 = arith.addf %84, %91 : vector<128x4xf32>
      %93 = vector.broadcast %10 : vector<1x4xf32> to vector<128x4xf32>
      %94 = arith.mulf %92, %93 : vector<128x4xf32>
      %95 = vector.broadcast %11 : vector<1x4xf32> to vector<128x4xf32>
      %96 = arith.addf %94, %95 : vector<128x4xf32>
      %cst_103 = arith.constant 0.000000e+00 : f32
      %97 = vector.broadcast %cst_103 : f32 to vector<128x4xf32>
      %98 = arith.maximumf %96, %97 : vector<128x4xf32>
      %99 = arith.truncf %98 : vector<128x4xf32> to vector<128x4xbf16>
      %cst_104 = arith.constant dense<0.000000e+00> : vector<128x16xf32>
      %100 = tpu.matmul %99, %7, %cst_104 {dimension_numbers = #tpu.dot_dimension_numbers<[1], [0], [0], [1], [0, 0, 1, 1], [], []>} : vector<128x4xbf16>, vector<4x16xbf16>, vector<128x16xf32> -> vector<128x16xf32>
      %101 = vector.broadcast %12 : vector<1x16xf32> to vector<128x16xf32>
      %102 = arith.mulf %100, %101 : vector<128x16xf32>
      %103 = vector.broadcast %13 : vector<1x16xf32> to vector<128x16xf32>
      %104 = arith.addf %102, %103 : vector<128x16xf32>
      %c0_105 = arith.constant 0 : index
      %105 = arith.index_cast %19 : i32 to index
      %c0_106 = arith.constant 0 : index
      %c0_107 = arith.constant 0 : index
      %106 = vector.load %arg1[%c0_105, %105, %c0_106, %c0_107] : memref<1x16x16x16xbf16, #tpu.memory_space<vmem>>, vector<1x8x16x16xbf16>
      %107 = arith.extf %106 : vector<1x8x16x16xbf16> to vector<1x8x16x16xf32>
      %108 = vector.shape_cast %107 : vector<1x8x16x16xf32> to vector<128x16xf32>
      %109 = arith.addf %104, %108 : vector<128x16xf32>
      %cst_108 = arith.constant 0.000000e+00 : f32
      %110 = vector.broadcast %cst_108 : f32 to vector<128x16xf32>
      %111 = arith.maximumf %109, %110 : vector<128x16xf32>
      %112 = arith.truncf %111 : vector<128x16xf32> to vector<128x16xbf16>
      %113 = vector.shape_cast %112 : vector<128x16xbf16> to vector<1x8x16x16xbf16>
      %c0_109 = arith.constant 0 : index
      %114 = arith.index_cast %19 : i32 to index
      %c0_110 = arith.constant 0 : index
      %c0_111 = arith.constant 0 : index
      %115 = vector.load %arg11[%c0_109, %114, %c0_110, %c0_111] : memref<1x16x16x16xbf16, #tpu.memory_space<vmem>>, vector<1x8x16x16xbf16>
      tpu.vector_store %arg11[%c0_109, %114, %c0_110, %c0_111], %113 {strides = array<i32>} : memref<1x16x16x16xbf16, #tpu.memory_space<vmem>>, vector<1x8x16x16xbf16>,
    }
    %c2_i32_35 = arith.constant 2 : i32
    return
  }
  func.func @transform_0(%arg0: i32) -> (i32, i32, i32, i32) {
    %c0_i32 = arith.constant 0 : i32
    %c0_i32_0 = arith.constant 0 : i32
    %c0_i32_1 = arith.constant 0 : i32
    %c0_i32_2 = arith.constant 0 : i32
    return %arg0, %c0_i32, %c0_i32_0, %c0_i32_1 : i32, i32, i32, i32
  }
  func.func @transform_1(%arg0: i32) -> (i32, i32) {
    %c0_i32 = arith.constant 0 : i32
    %c0_i32_0 = arith.constant 0 : i32
    %c0_i32_1 = arith.constant 0 : i32
    return %c0_i32, %c0_i32_0 : i32, i32
  }
  func.func @transform_2(%arg0: i32) -> (i32, i32) {
    %c0_i32 = arith.constant 0 : i32
    %c0_i32_0 = arith.constant 0 : i32
    %c0_i32_1 = arith.constant 0 : i32
    return %c0_i32, %c0_i32_0 : i32, i32
  }
  func.func @transform_3(%arg0: i32) -> (i32, i32) {
    %c0_i32 = arith.constant 0 : i32
    %c0_i32_0 = arith.constant 0 : i32
    %c0_i32_1 = arith.constant 0 : i32
    return %c0_i32, %c0_i32_0 : i32, i32
  }
  func.func @transform_4(%arg0: i32) -> (i32, i32, i32) {
    %c0_i32 = arith.constant 0 : i32
    %c0_i32_0 = arith.constant 0 : i32
    %c0_i32_1 = arith.constant 0 : i32
    %c0_i32_2 = arith.constant 0 : i32
    return %c0_i32, %c0_i32_0, %c0_i32_1 : i32, i32, i32
  }
  func.func @transform_5(%arg0: i32) -> (i32, i32) {
    %c0_i32 = arith.constant 0 : i32
    %c0_i32_0 = arith.constant 0 : i32
    %c0_i32_1 = arith.constant 0 : i32
    return %c0_i32, %c0_i32_0 : i32, i32
  }
  func.func @transform_6(%arg0: i32) -> (i32, i32) {
    %c0_i32 = arith.constant 0 : i32
    %c0_i32_0 = arith.constant 0 : i32
    %c0_i32_1 = arith.constant 0 : i32
    return %c0_i32, %c0_i32_0 : i32, i32
  }
  func.func @transform_7(%arg0: i32) -> (i32, i32) {
    %c0_i32 = arith.constant 0 : i32
    %c0_i32_0 = arith.constant 0 : i32
    %c0_i32_1 = arith.constant 0 : i32
    return %c0_i32, %c0_i32_0 : i32, i32
  }
  func.func @transform_8(%arg0: i32) -> (i32, i32) {
    %c0_i32 = arith.constant 0 : i32
    %c0_i32_0 = arith.constant 0 : i32
    %c0_i32_1 = arith.constant 0 : i32
    return %c0_i32, %c0_i32_0 : i32, i32
  }
  func.func @transform_9(%arg0: i32) -> (i32, i32) {
    %c0_i32 = arith.constant 0 : i32
    %c0_i32_0 = arith.constant 0 : i32
    %c0_i32_1 = arith.constant 0 : i32
    return %c0_i32, %c0_i32_0 : i32, i32
  }
  func.func @transform_10(%arg0: i32) -> (i32, i32, i32, i32) {
    %c0_i32 = arith.constant 0 : i32
    %c0_i32_0 = arith.constant 0 : i32
    %c0_i32_1 = arith.constant 0 : i32
    %c0_i32_2 = arith.constant 0 : i32
    return %arg0, %c0_i32, %c0_i32_0, %c0_i32_1 : i32, i32, i32, i32
  }
}

</mosaic_0001>

<llo_original>
// kernel: tpu_custom_call.1
$region0: #{tpu_custom_call.1}
  #allocation0 [shape = 'u32[]', space=smem, size = 0x4, offset = 0x4, fixed_abs, tag = 'smem constant byte address 0x4 - core index']
  #allocation1 [shape = 'u32[144,128]{1,0:T(1,128)}', space=vmem, size = 0x12000, scoped, tag = 'internal scratch']
  #allocation2 [shape = 'bf16[1,18,18,4]{3,2,1,0:T(8,128)(2,1)}', space=vmem, size = 0x1b000, scoped, tag = 'scratch operand']
  %s0 = inlined_call_operand.hbm [shape: bf16[2,16,16,16], index: 0, kind: input, shape index: {}]
  %s1 = inlined_call_operand.vmem [shape: bf16[16,4], index: 1, kind: input, shape index: {}]
  %s2 = inlined_call_operand.vmem [shape: f32[1,4], index: 2, kind: input, shape index: {}]
  %s3 = inlined_call_operand.vmem [shape: f32[1,4], index: 3, kind: input, shape index: {}]
  %s4 = inlined_call_operand.vmem [shape: bf16[9,4,4], index: 4, kind: input, shape index: {}]
  %s5 = inlined_call_operand.vmem [shape: f32[1,4], index: 5, kind: input, shape index: {}]
  %s6 = inlined_call_operand.vmem [shape: f32[1,4], index: 6, kind: input, shape index: {}]
  %s7 = inlined_call_operand.vmem [shape: bf16[4,16], index: 7, kind: input, shape index: {}]
  %s8 = inlined_call_operand.vmem [shape: f32[1,16], index: 8, kind: input, shape index: {}]
  %s9 = inlined_call_operand.vmem [shape: f32[1,16], index: 9, kind: input, shape index: {}]
  %s10 = inlined_call_operand.hbm [shape: bf16[2,16,16,16], index: 10, kind: output, shape index: {}]
  %s11 = sld [smem:[#allocation0]]
  $region91: #{tpu_custom_call.1} parent=0
    _
  %s13 = ssub.s32 1, %s11
  %s14 = scalar_select 0, %s13, %s11
  $region1: #{tpu_custom_call.1} parent=0
    #allocation3 [shape = 'u8[131072]{0}', space=vmem, size = 0x20000, scoped, tag = 'input window, operand 0']
    #allocation4 [shape = 's32[2]{0}', space=sflag, size = 0x8, scoped, tag = 'scoped memory for tpu_custom_call.1']
    #allocation5 [shape = 's32[2]{0}', space=sflag, size = 0x8, scoped, tag = 'scoped memory for tpu_custom_call.1']
    #allocation6 [shape = 'u8[131072]{0}', space=vmem, size = 0x20000, scoped, tag = 'output window, operand 0']
    %15 = vsyncpa [#allocation4], 0
    %s16 = scalar_lea.sflag [#allocation4], 1
    %17 = vsyncpa %s16, 0
    %18 = vsyncpa [#allocation5], 0
    %s19 = scalar_lea.sflag [#allocation5], 1
    %20 = vsyncpa %s19, 0
    loop: start=0, step=1, limit=4
    $region2: #{tpu_custom_call.1} parent=1 // loop_pre_header
      _
    $region3: #{tpu_custom_call.1} parent=1 // loop_header
      %s22 = sphi 0, %s26
      %p23 = scmp.ge.s32.totalorder %s22, 4
      %s32 = sphi 0, %s34
      %s35 = sphi 0, %s32
      %s36 = sphi 0, %s35
      %s52 = sphi 0, %s36
      %s56 = sphi 0, %s56
      %s58 = sphi 0, %s56
      %s59 = sphi 0, %s58
      %s73 = sphi 0, %s59
      %s77 = sphi 0, %s77
      %s79 = sphi 0, %s77
      %s80 = sphi 0, %s79
      %s94 = sphi 0, %s80
      %s98 = sphi 0, %s98
      %s100 = sphi 0, %s98
      %s101 = sphi 0, %s100
      %s115 = sphi 0, %s101
      %s119 = sphi 0, %s119
      %s121 = sphi 0, %s119
      %s122 = sphi 0, %s121
      %s136 = sphi 0, %s122
      %s140 = sphi 0, %s140
      %s142 = sphi 0, %s140
      %s143 = sphi 0, %s142
      %s157 = sphi 0, %s143
      %s161 = sphi 0, %s161
      %s163 = sphi 0, %s161
      %s164 = sphi 0, %s163
      %s178 = sphi 0, %s164
      %s182 = sphi 0, %s182
      %s184 = sphi 0, %s182
      %s185 = sphi 0, %s184
      %s199 = sphi 0, %s185
      %s203 = sphi 0, %s203
      %s205 = sphi 0, %s203
      %s206 = sphi 0, %s205
      %s220 = sphi 0, %s206
      %s224 = sphi 0, %s224
      %s226 = sphi 0, %s224
      %s227 = sphi 0, %s226
      %s241 = sphi 0, %s227
      %s247 = sphi 0, %s249
      %s250 = sphi 0, %s247
      %s251 = sphi 0, %s250
      %s267 = sphi 0, %s251
    $region4: #{tpu_custom_call.1} parent=1 // loop_header_branch
      %25 = sbr.rel (%p23) target = $region8
    $region5: #{tpu_custom_call.1} parent=1 // loop_body
      %s27 = ssub.s32 %s22, 1
      %s28 = ssub.s32 %s22, 2
      %s29 = sadd.s32 %s22, 1
      %s30 = ssub.s32 %s22, %s29
      %p31 = scmp.eq.s32.totalorder %s30, 0
      %s33 = sadd.s32 %s32, 1
      %s34 = scalar_select %p31, %s32, %s33
      %p37 = pneg %p31
      %p38 = scmp.eq.s32.totalorder %s22, 1
      %p39 = por %p37, %p38
      %p40 = scmp.ne.s32.totalorder %s32, %s35
      %p41 = scmp.eq.s32.totalorder %s22, 0
      %p42 = por %p40, %p41
      %p43 = scmp.ne.s32.totalorder %s32, %s35
      %p44 = scmp.eq.s32.totalorder %s27, 1
      %p45 = por %p43, %p44
      %p46 = scmp.ne.s32.totalorder %s35, %s36
      %p47 = scmp.eq.s32.totalorder %s27, 0
      %p48 = por %p46, %p47
      %p49 = scmp.ne.s32.totalorder %s35, %s36
      %p50 = scmp.eq.s32.totalorder %s28, 1
      %p51 = por %p49, %p50
      %p53 = scmp.ne.s32.totalorder %s36, %s52
      %p54 = scmp.eq.s32.totalorder %s28, 0
      %p55 = por %p53, %p54
      %s57 = sadd.s32 %s56, 1
      %p60 = scmp.eq.s32.totalorder %s22, 1
      %p61 = scmp.ne.s32.totalorder %s56, %s58
      %p62 = scmp.eq.s32.totalorder %s22, 0
      %p63 = por %p61, %p62
      %p64 = scmp.ne.s32.totalorder %s56, %s58
      %p65 = scmp.eq.s32.totalorder %s27, 1
      %p66 = por %p64, %p65
      %p67 = scmp.ne.s32.totalorder %s58, %s59
      %p68 = scmp.eq.s32.totalorder %s27, 0
      %p69 = por %p67, %p68
      %p70 = scmp.ne.s32.totalorder %s58, %s59
      %p71 = scmp.eq.s32.totalorder %s28, 1
      %p72 = por %p70, %p71
      %p74 = scmp.ne.s32.totalorder %s59, %s73
      %p75 = scmp.eq.s32.totalorder %s28, 0
      %p76 = por %p74, %p75
      %s78 = sadd.s32 %s77, 1
      %p81 = scmp.eq.s32.totalorder %s22, 1
      %p82 = scmp.ne.s32.totalorder %s77, %s79
      %p83 = scmp.eq.s32.totalorder %s22, 0
      %p84 = por %p82, %p83
      %p85 = scmp.ne.s32.totalorder %s77, %s79
      %p86 = scmp.eq.s32.totalorder %s27, 1
      %p87 = por %p85, %p86
      %p88 = scmp.ne.s32.totalorder %s79, %s80
      %p89 = scmp.eq.s32.totalorder %s27, 0
      %p90 = por %p88, %p89
      %p91 = scmp.ne.s32.totalorder %s79, %s80
      %p92 = scmp.eq.s32.totalorder %s28, 1
      %p93 = por %p91, %p92
      %p95 = scmp.ne.s32.totalorder %s80, %s94
      %p96 = scmp.eq.s32.totalorder %s28, 0
      %p97 = por %p95, %p96
      %s99 = sadd.s32 %s98, 1
      %p102 = scmp.eq.s32.totalorder %s22, 1
      %p103 = scmp.ne.s32.totalorder %s98, %s100
      %p104 = scmp.eq.s32.totalorder %s22, 0
      %p105 = por %p103, %p104
      %p106 = scmp.ne.s32.totalorder %s98, %s100
      %p107 = scmp.eq.s32.totalorder %s27, 1
      %p108 = por %p106, %p107
      %p109 = scmp.ne.s32.totalorder %s100, %s101
      %p110 = scmp.eq.s32.totalorder %s27, 0
      %p111 = por %p109, %p110
      %p112 = scmp.ne.s32.totalorder %s100, %s101
      %p113 = scmp.eq.s32.totalorder %s28, 1
      %p114 = por %p112, %p113
      %p116 = scmp.ne.s32.totalorder %s101, %s115
      %p117 = scmp.eq.s32.totalorder %s28, 0
      %p118 = por %p116, %p117
      %s120 = sadd.s32 %s119, 1
      %p123 = scmp.eq.s32.totalorder %s22, 1
      %p124 = scmp.ne.s32.totalorder %s119, %s121
      %p125 = scmp.eq.s32.totalorder %s22, 0
      %p126 = por %p124, %p125
      %p127 = scmp.ne.s32.totalorder %s119, %s121
      %p128 = scmp.eq.s32.totalorder %s27, 1
      %p129 = por %p127, %p128
      %p130 = scmp.ne.s32.totalorder %s121, %s122
      %p131 = scmp.eq.s32.totalorder %s27, 0
      %p132 = por %p130, %p131
      %p133 = scmp.ne.s32.totalorder %s121, %s122
      %p134 = scmp.eq.s32.totalorder %s28, 1
      %p135 = por %p133, %p134
      %p137 = scmp.ne.s32.totalorder %s122, %s136
      %p138 = scmp.eq.s32.totalorder %s28, 0
      %p139 = por %p137, %p138
      %s141 = sadd.s32 %s140, 1
      %p144 = scmp.eq.s32.totalorder %s22, 1
      %p145 = scmp.ne.s32.totalorder %s140, %s142
      %p146 = scmp.eq.s32.totalorder %s22, 0
      %p147 = por %p145, %p146
      %p148 = scmp.ne.s32.totalorder %s140, %s142
      %p149 = scmp.eq.s32.totalorder %s27, 1
      %p150 = por %p148, %p149
      %p151 = scmp.ne.s32.totalorder %s142, %s143
      %p152 = scmp.eq.s32.totalorder %s27, 0
      %p153 = por %p151, %p152
      %p154 = scmp.ne.s32.totalorder %s142, %s143
      %p155 = scmp.eq.s32.totalorder %s28, 1
      %p156 = por %p154, %p155
      %p158 = scmp.ne.s32.totalorder %s143, %s157
      %p159 = scmp.eq.s32.totalorder %s28, 0
      %p160 = por %p158, %p159
      %s162 = sadd.s32 %s161, 1
      %p165 = scmp.eq.s32.totalorder %s22, 1
      %p166 = scmp.ne.s32.totalorder %s161, %s163
      %p167 = scmp.eq.s32.totalorder %s22, 0
      %p168 = por %p166, %p167
      %p169 = scmp.ne.s32.totalorder %s161, %s163
      %p170 = scmp.eq.s32.totalorder %s27, 1
      %p171 = por %p169, %p170
      %p172 = scmp.ne.s32.totalorder %s163, %s164
      %p173 = scmp.eq.s32.totalorder %s27, 0
      %p174 = por %p172, %p173
      %p175 = scmp.ne.s32.totalorder %s163, %s164
      %p176 = scmp.eq.s32.totalorder %s28, 1
      %p177 = por %p175, %p176
      %p179 = scmp.ne.s32.totalorder %s164, %s178
      %p180 = scmp.eq.s32.totalorder %s28, 0
      %p181 = por %p179, %p180
      %s183 = sadd.s32 %s182, 1
      %p186 = scmp.eq.s32.totalorder %s22, 1
      %p187 = scmp.ne.s32.totalorder %s182, %s184
      %p188 = scmp.eq.s32.totalorder %s22, 0
      %p189 = por %p187, %p188
      %p190 = scmp.ne.s32.totalorder %s182, %s184
      %p191 = scmp.eq.s32.totalorder %s27, 1
      %p192 = por %p190, %p191
      %p193 = scmp.ne.s32.totalorder %s184, %s185
      %p194 = scmp.eq.s32.totalorder %s27, 0
      %p195 = por %p193, %p194
      %p196 = scmp.ne.s32.totalorder %s184, %s185
      %p197 = scmp.eq.s32.totalorder %s28, 1
      %p198 = por %p196, %p197
      %p200 = scmp.ne.s32.totalorder %s185, %s199
      %p201 = scmp.eq.s32.totalorder %s28, 0
      %p202 = por %p200, %p201
      %s204 = sadd.s32 %s203, 1
      %p207 = scmp.eq.s32.totalorder %s22, 1
      %p208 = scmp.ne.s32.totalorder %s203, %s205
      %p209 = scmp.eq.s32.totalorder %s22, 0
      %p210 = por %p208, %p209
      %p211 = scmp.ne.s32.totalorder %s203, %s205
      %p212 = scmp.eq.s32.totalorder %s27, 1
      %p213 = por %p211, %p212
      %p214 = scmp.ne.s32.totalorder %s205, %s206
      %p215 = scmp.eq.s32.totalorder %s27, 0
      %p216 = por %p214, %p215
      %p217 = scmp.ne.s32.totalorder %s205, %s206
      %p218 = scmp.eq.s32.totalorder %s28, 1
      %p219 = por %p217, %p218
      %p221 = scmp.ne.s32.totalorder %s206, %s220
      %p222 = scmp.eq.s32.totalorder %s28, 0
      %p223 = por %p221, %p222
      %s225 = sadd.s32 %s224, 1
      %p228 = scmp.eq.s32.totalorder %s22, 1
      %p229 = scmp.ne.s32.totalorder %s224, %s226
      %p230 = scmp.eq.s32.totalorder %s22, 0
      %p231 = por %p229, %p230
      %p232 = scmp.ne.s32.totalorder %s224, %s226
      %p233 = scmp.eq.s32.totalorder %s27, 1
      %p234 = por %p232, %p233
      %p235 = scmp.ne.s32.totalorder %s226, %s227
      %p236 = scmp.eq.s32.totalorder %s27, 0
      %p237 = por %p235, %p236
      %p238 = scmp.ne.s32.totalorder %s226, %s227
      %p239 = scmp.eq.s32.totalorder %s28, 1
      %p240 = por %p238, %p239
      %p242 = scmp.ne.s32.totalorder %s227, %s241
      %p243 = scmp.eq.s32.totalorder %s28, 0
      %p244 = por %p242, %p243
      %s245 = ssub.s32 %s22, %s29
      %p246 = scmp.eq.s32.totalorder %s245, 0
      %s248 = sadd.s32 %s247, 1
      %s249 = scalar_select %p246, %s247, %s248
      %p252 = pneg %p246
      %p253 = scmp.eq.s32.totalorder %s22, 1
      %p254 = por %p252, %p253
      %p255 = scmp.ne.s32.totalorder %s247, %s250
      %p256 = scmp.eq.s32.totalorder %s22, 0
      %p257 = por %p255, %p256
      %p258 = scmp.ne.s32.totalorder %s247, %s250
      %p259 = scmp.eq.s32.totalorder %s27, 1
      %p260 = por %p258, %p259
      %p261 = scmp.ne.s32.totalorder %s250, %s251
      %p262 = scmp.eq.s32.totalorder %s27, 0
      %p263 = por %p261, %p262
      %p264 = scmp.ne.s32.totalorder %s250, %s251
      %p265 = scmp.eq.s32.totalorder %s28, 1
      %p266 = por %p264, %p265
      %p268 = scmp.ne.s32.totalorder %s251, %s267
      %p269 = scmp.eq.s32.totalorder %s28, 0
      %p270 = por %p268, %p269
      %p271 = scmp.le.s32.totalorder 1, %s22
      %p272 = scmp.lt.s32.totalorder %s22, 3
      %p273 = pnand %p271, %p272
      %p274 = pneg %p273
      // Predicated region
      $region9: #{tpu_custom_call.1} parent=5 // pred_check
        _
      $region10: #{tpu_custom_call.1} parent=5 // pred_check_branch
        %276 = sbr.rel (%p273) target = $region12
      $region11: #{tpu_custom_call.1} parent=5 // pred_region
        %s277 = ssub.s32 %s22, 1
        // Predicated region
        $region13: #{tpu_custom_call.1} parent=11 // pred_check
          %p278 = pneg %p69
        $region14: #{tpu_custom_call.1} parent=11 // pred_check_branch
          %280 = sbr.rel (%p278) target = $region16
        $region15: #{tpu_custom_call.1} parent=11 // pred_region
          _
        $region16: #{tpu_custom_call.1} parent=11 // pred_fallthru
          _
        // Predicated region
        $region17: #{tpu_custom_call.1} parent=11 // pred_check
          %p281 = pneg %p90
        $region18: #{tpu_custom_call.1} parent=11 // pred_check_branch
          %283 = sbr.rel (%p281) target = $region20
        $region19: #{tpu_custom_call.1} parent=11 // pred_region
          _
        $region20: #{tpu_custom_call.1} parent=11 // pred_fallthru
          _
        // Predicated region
        $region21: #{tpu_custom_call.1} parent=11 // pred_check
          %p284 = pneg %p111
        $region22: #{tpu_custom_call.1} parent=11 // pred_check_branch
          %286 = sbr.rel (%p284) target = $region24
        $region23: #{tpu_custom_call.1} parent=11 // pred_region
          _
        $region24: #{tpu_custom_call.1} parent=11 // pred_fallthru
          _
        // Predicated region
        $region25: #{tpu_custom_call.1} parent=11 // pred_check
          %p287 = pneg %p132
        $region26: #{tpu_custom_call.1} parent=11 // pred_check_branch
          %289 = sbr.rel (%p287) target = $region28
        $region27: #{tpu_custom_call.1} parent=11 // pred_region
          _
        $region28: #{tpu_custom_call.1} parent=11 // pred_fallthru
          _
        // Predicated region
        $region29: #{tpu_custom_call.1} parent=11 // pred_check
          %p290 = pneg %p153
        $region30: #{tpu_custom_call.1} parent=11 // pred_check_branch
          %292 = sbr.rel (%p290) target = $region32
        $region31: #{tpu_custom_call.1} parent=11 // pred_region
          _
        $region32: #{tpu_custom_call.1} parent=11 // pred_fallthru
          _
        // Predicated region
        $region33: #{tpu_custom_call.1} parent=11 // pred_check
          %p293 = pneg %p174
        $region34: #{tpu_custom_call.1} parent=11 // pred_check_branch
          %295 = sbr.rel (%p293) target = $region36
        $region35: #{tpu_custom_call.1} parent=11 // pred_region
          _
        $region36: #{tpu_custom_call.1} parent=11 // pred_fallthru
          _
        // Predicated region
        $region37: #{tpu_custom_call.1} parent=11 // pred_check
          %p296 = pneg %p195
        $region38: #{tpu_custom_call.1} parent=11 // pred_check_branch
          %298 = sbr.rel (%p296) target = $region40
        $region39: #{tpu_custom_call.1} parent=11 // pred_region
          _
        $region40: #{tpu_custom_call.1} parent=11 // pred_fallthru
          _
        // Predicated region
        $region41: #{tpu_custom_call.1} parent=11 // pred_check
          %p299 = pneg %p216
        $region42: #{tpu_custom_call.1} parent=11 // pred_check_branch
          %301 = sbr.rel (%p299) target = $region44
        $region43: #{tpu_custom_call.1} parent=11 // pred_region
          _
        $region44: #{tpu_custom_call.1} parent=11 // pred_fallthru
          _
        // Predicated region
        $region45: #{tpu_custom_call.1} parent=11 // pred_check
          %p302 = pneg %p237
        $region46: #{tpu_custom_call.1} parent=11 // pred_check_branch
          %304 = sbr.rel (%p302) target = $region48
        $region47: #{tpu_custom_call.1} parent=11 // pred_region
          _
        $region48: #{tpu_custom_call.1} parent=11 // pred_fallthru
          _
      $region12: #{tpu_custom_call.1} parent=5 // pred_fallthru
        _
      %p305 = scmp.lt.s32.totalorder %s22, 2
      // Predicated region
      $region49: #{tpu_custom_call.1} parent=5 // pred_check
        %p306 = pneg %p305
      $region50: #{tpu_custom_call.1} parent=5 // pred_check_branch
        %308 = sbr.rel (%p306) target = $region52
      $region51: #{tpu_custom_call.1} parent=5 // pred_region
        // Predicated region
        $region53: #{tpu_custom_call.1} parent=51 // pred_check
          %p309 = pneg %p42
        $region54: #{tpu_custom_call.1} parent=51 // pred_check_branch
          %311 = sbr.rel (%p309) target = $region56
        $region55: #{tpu_custom_call.1} parent=51 // pred_region
          %s312 = sand.u32 %s32, 1
          %s313 = scalar_lea.sflag [#allocation4], %s312
          %s314 = sand.u32 %s32, 1
          %s315 = smul.addr %s314, 128
          %s316 = scalar_lea.vmem [#allocation3], %s315
          %s318 = ssub.s32 2048, 2048
          %319 = vsyncadd %s313, %s318
          %s320 = smul.addr %s22, 32
          %s321 = smul.addr %s320, 64
          %s322 = scalar_lea.hbm %s0, %s321
          %s323 = sshll.u32 %s316, 4
          %s324 = int_to_ptr.vmem [resolvable:$true] %s323
          %329 = dma.hbm_to_vmem [thread:$0]  %s322, 2048, %s324, %s313, 64, 64, 4
        $region56: #{tpu_custom_call.1} parent=51 // pred_fallthru
          _
      $region52: #{tpu_custom_call.1} parent=5 // pred_fallthru
        _
      %p330 = scmp.le.s32.totalorder 1, %s22
      %p331 = scmp.lt.s32.totalorder %s22, 3
      %p332 = pnand %p330, %p331
      %p333 = pneg %p332
      // Predicated region
      $region57: #{tpu_custom_call.1} parent=5 // pred_check
        _
      $region58: #{tpu_custom_call.1} parent=5 // pred_check_branch
        %335 = sbr.rel (%p332) target = $region60
      $region59: #{tpu_custom_call.1} parent=5 // pred_region
        %s336 = ssub.s32 %s22, 1
        %s337 = sand.u32 %s35, 1
        %s338 = scalar_lea.sflag [#allocation4], %s337
        %s339 = sand.u32 %s35, 1
        %s340 = smul.addr %s339, 128
        %s341 = scalar_lea.vmem [#allocation3], %s340
        // Predicated region
        $region61: #{tpu_custom_call.1} parent=59 // pred_check
          %p342 = pneg %p48
        $region62: #{tpu_custom_call.1} parent=59 // pred_check_branch
          %344 = sbr.rel (%p342) target = $region64
        $region63: #{tpu_custom_call.1} parent=59 // pred_region
          %345 = dma.done %s338, 2048
        $region64: #{tpu_custom_call.1} parent=59 // pred_fallthru
          _
        %s346 = sand.u32 %s35, 1
        %s347 = scalar_lea.sflag [#allocation4], %s346
        %s348 = sand.u32 %s35, 1
        %s349 = smul.addr %s348, 128
        %s350 = scalar_lea.vmem [#allocation3], %s349
        %p351 = pneg %p48
        %p352 = pneg %p45
        %p353 = pneg %p69
        %p354 = pneg %p66
        %p355 = pneg %p90
        %p356 = pneg %p87
        %p357 = pneg %p111
        %p358 = pneg %p108
        %p359 = pneg %p132
        %p360 = pneg %p129
        %p361 = pneg %p153
        %p362 = pneg %p150
        %p363 = pneg %p174
        %p364 = pneg %p171
        %p365 = pneg %p195
        %p366 = pneg %p192
        %p367 = pneg %p216
        %p368 = pneg %p213
        %p369 = pneg %p237
        %p370 = pneg %p234
        %p371 = pneg %p263
        %p372 = pneg %p260
        %s373 = sand.u32 %s250, 1
        %s374 = scalar_lea.sflag [#allocation5], %s373
        %s375 = sand.u32 %s250, 1
        %s376 = smul.addr %s375, 128
        %s377 = scalar_lea.vmem [#allocation6], %s376
        %vm379 = vcmask 27648
        %380 = vst.msk [vmem:[#allocation2] sm:$0xf] %vm379, 0
        %381 = vst.msk [vmem:[#allocation2 + $0x4] sm:$0xf] %vm379, 0
        %vm382 = vcmask 24576
        %383 = vst.msk [vmem:[#allocation2 + $0x8] sm:$0x1] %vm382, 0
        %s384 = scalar_lea.vmem [#allocation2], 204
        %385 = vst.msk [vmem:[%s384] sm:$0xf] %vm379, 0
        %386 = vst.msk [vmem:[%s384 + $0x4] sm:$0xf] %vm379, 0
        %387 = vst.msk [vmem:[%s384 + $0x8] sm:$0x1] %vm382, 0
        %vm388 = vcmask 24576
        %vm389 = vsmask.f32 256
        %vm390 = vmand %vm388, %vm389
        %v391 = vld [vmem:[#allocation2] sm:$0x1]
        %v392 = vsel %vm390, 0, %v391
        %393 = vst [vmem:[#allocation2] sm:$0x1] %v392
        %v394 = vld [vmem:[#allocation2 + $0xc] sm:$0x1]
        %v395 = vsel %vm390, 0, %v394
        %396 = vst [vmem:[#allocation2 + $0xc] sm:$0x1] %v395
        %v397 = vld [vmem:[#allocation2 + $0x18] sm:$0x1]
        %v398 = vsel %vm390, 0, %v397
        %399 = vst [vmem:[#allocation2 + $0x18] sm:$0x1] %v398
        %v400 = vld [vmem:[#allocation2 + $0x24] sm:$0x1]
        %v401 = vsel %vm390, 0, %v400
        %402 = vst [vmem:[#allocation2 + $0x24] sm:$0x1] %v401
        %v403 = vld [vmem:[#allocation2 + $0x30] sm:$0x1]
        %v404 = vsel %vm390, 0, %v403
        %405 = vst [vmem:[#allocation2 + $0x30] sm:$0x1] %v404
        %v406 = vld [vmem:[#allocation2 + $0x3c] sm:$0x1]
        %v407 = vsel %vm390, 0, %v406
        %408 = vst [vmem:[#allocation2 + $0x3c] sm:$0x1] %v407
        %v409 = vld [vmem:[#allocation2 + $0x48] sm:$0x1]
        %v410 = vsel %vm390, 0, %v409
        %411 = vst [vmem:[#allocation2 + $0x48] sm:$0x1] %v410
        %v412 = vld [vmem:[#allocation2 + $0x54] sm:$0x1]
        %v413 = vsel %vm390, 0, %v412
        %414 = vst [vmem:[#allocation2 + $0x54] sm:$0x1] %v413
        %v415 = vld [vmem:[#allocation2 + $0x60] sm:$0x1]
        %v416 = vsel %vm390, 0, %v415
        %417 = vst [vmem:[#allocation2 + $0x60] sm:$0x1] %v416
        %v418 = vld [vmem:[#allocation2 + $0x6c] sm:$0x1]
        %v419 = vsel %vm390, 0, %v418
        %420 = vst [vmem:[#allocation2 + $0x6c] sm:$0x1] %v419
        %v421 = vld [vmem:[#allocation2 + $0x78] sm:$0x1]
        %v422 = vsel %vm390, 0, %v421
        %423 = vst [vmem:[#allocation2 + $0x78] sm:$0x1] %v422
        %v424 = vld [vmem:[#allocation2 + $0x84] sm:$0x1]
        %v425 = vsel %vm390, 0, %v424
        %426 = vst [vmem:[#allocation2 + $0x84] sm:$0x1] %v425
        %v427 = vld [vmem:[#allocation2 + $0x90] sm:$0x1]
        %v428 = vsel %vm390, 0, %v427
        %429 = vst [vmem:[#allocation2 + $0x90] sm:$0x1] %v428
        %v430 = vld [vmem:[#allocation2 + $0x9c] sm:$0x1]
        %v431 = vsel %vm390, 0, %v430
        %432 = vst [vmem:[#allocation2 + $0x9c] sm:$0x1] %v431
        %v433 = vld [vmem:[#allocation2 + $0xa8] sm:$0x1]
        %v434 = vsel %vm390, 0, %v433
        %435 = vst [vmem:[#allocation2 + $0xa8] sm:$0x1] %v434
        %v436 = vld [vmem:[#allocation2 + $0xb4] sm:$0x1]
        %v437 = vsel %vm390, 0, %v436
        %438 = vst [vmem:[#allocation2 + $0xb4] sm:$0x1] %v437
        %v439 = vld [vmem:[#allocation2 + $0xc0] sm:$0x1]
        %v440 = vsel %vm390, 0, %v439
        %441 = vst [vmem:[#allocation2 + $0xc0] sm:$0x1] %v440
        %v442 = vld [vmem:[#allocation2 + $0xcc] sm:$0x1]
        %v443 = vsel %vm390, 0, %v442
        %444 = vst [vmem:[#allocation2 + $0xcc] sm:$0x1] %v443
        %vm445 = vsmask.f32 7938
        %vm446 = vmand %vm388, %vm445
        %v447 = vld [vmem:[#allocation2 + $0x8] sm:$0x1]
        %v448 = vsel %vm446, 0, %v447
        %449 = vst [vmem:[#allocation2 + $0x8] sm:$0x1] %v448
        %v450 = vld [vmem:[#allocation2 + $0x14] sm:$0x1]
        %v451 = vsel %vm446, 0, %v450
        %452 = vst [vmem:[#allocation2 + $0x14] sm:$0x1] %v451
        %v453 = vld [vmem:[#allocation2 + $0x20] sm:$0x1]
        %v454 = vsel %vm446, 0, %v453
        %455 = vst [vmem:[#allocation2 + $0x20] sm:$0x1] %v454
        %v456 = vld [vmem:[#allocation2 + $0x2c] sm:$0x1]
        %v457 = vsel %vm446, 0, %v456
        %458 = vst [vmem:[#allocation2 + $0x2c] sm:$0x1] %v457
        %v459 = vld [vmem:[#allocation2 + $0x38] sm:$0x1]
        %v460 = vsel %vm446, 0, %v459
        %461 = vst [vmem:[#allocation2 + $0x38] sm:$0x1] %v460
        %v462 = vld [vmem:[#allocation2 + $0x44] sm:$0x1]
        %v463 = vsel %vm446, 0, %v462
        %464 = vst [vmem:[#allocation2 + $0x44] sm:$0x1] %v463
        %v465 = vld [vmem:[#allocation2 + $0x50] sm:$0x1]
        %v466 = vsel %vm446, 0, %v465
        %467 = vst [vmem:[#allocation2 + $0x50] sm:$0x1] %v466
        %v468 = vld [vmem:[#allocation2 + $0x5c] sm:$0x1]
        %v469 = vsel %vm446, 0, %v468
        %470 = vst [vmem:[#allocation2 + $0x5c] sm:$0x1] %v469
        %v471 = vld [vmem:[#allocation2 + $0x68] sm:$0x1]
        %v472 = vsel %vm446, 0, %v471
        %473 = vst [vmem:[#allocation2 + $0x68] sm:$0x1] %v472
        %v474 = vld [vmem:[#allocation2 + $0x74] sm:$0x1]
        %v475 = vsel %vm446, 0, %v474
        %476 = vst [vmem:[#allocation2 + $0x74] sm:$0x1] %v475
        %v477 = vld [vmem:[#allocation2 + $0x80] sm:$0x1]
        %v478 = vsel %vm446, 0, %v477
        %479 = vst [vmem:[#allocation2 + $0x80] sm:$0x1] %v478
        %v480 = vld [vmem:[#allocation2 + $0x8c] sm:$0x1]
        %v481 = vsel %vm446, 0, %v480
        %482 = vst [vmem:[#allocation2 + $0x8c] sm:$0x1] %v481
        %v483 = vld [vmem:[#allocation2 + $0x98] sm:$0x1]
        %v484 = vsel %vm446, 0, %v483
        %485 = vst [vmem:[#allocation2 + $0x98] sm:$0x1] %v484
        %v486 = vld [vmem:[#allocation2 + $0xa4] sm:$0x1]
        %v487 = vsel %vm446, 0, %v486
        %488 = vst [vmem:[#allocation2 + $0xa4] sm:$0x1] %v487
        %v489 = vld [vmem:[#allocation2 + $0xb0] sm:$0x1]
        %v490 = vsel %vm446, 0, %v489
        %491 = vst [vmem:[#allocation2 + $0xb0] sm:$0x1] %v490
        %v492 = vld [vmem:[#allocation2 + $0xbc] sm:$0x1]
        %v493 = vsel %vm446, 0, %v492
        %494 = vst [vmem:[#allocation2 + $0xbc] sm:$0x1] %v493
        %v495 = vld [vmem:[#allocation2 + $0xc8] sm:$0x1]
        %v496 = vsel %vm446, 0, %v495
        %497 = vst [vmem:[#allocation2 + $0xc8] sm:$0x1] %v496
        %v498 = vld [vmem:[#allocation2 + $0xd4] sm:$0x1]
        %v499 = vsel %vm446, 0, %v498
        %500 = vst [vmem:[#allocation2 + $0xd4] sm:$0x1] %v499
        %v501 = vld [vmem:[%s1] sm:$0xf]
        %v502 = vld [vmem:[%s1 + $0x4] sm:$0xf]
        %v503 = vld [vmem:[%s7] sm:$0x3]
        %v504 = vld [vmem:[%s2] sm:$0x1]
        %v505 = vld [vmem:[%s3] sm:$0x1]
        %v506 = vld [vmem:[%s5] sm:$0x1]
        %v507 = vld [vmem:[%s6] sm:$0x1]
        %v508 = vld [vmem:[%s8] sm:$0x1]
        %v509 = vld [vmem:[%s9] sm:$0x1]
        loop: start=0, step=1, limit=2
        $region65: #{tpu_custom_call.1} parent=59 // loop_pre_header
          _
        $region66: #{tpu_custom_call.1} parent=59 // loop_header
          %s511 = sphi 0, %s515
          %p512 = scmp.ge.s32.totalorder %s511, 2
        $region67: #{tpu_custom_call.1} parent=59 // loop_header_branch
          %514 = sbr.rel (%p512) target = $region71
        $region68: #{tpu_custom_call.1} parent=59 // loop_body
          %s516 = smul.u32 %s511, 8
          %s517 = smul.u32 %s516, 2
          %s518 = smul.addr %s517, 4
          %s519 = scalar_lea.vmem %s341, %s518 [#allocation3]
          %v520 = vld [vmem:[%s519] sm:$0xf]
          %v521 = vld [vmem:[%s519 + $0x4] sm:$0xf]
          %v522 = vld [vmem:[%s519 + $0x8] sm:$0xf]
          %v523 = vld [vmem:[%s519 + $0xc] sm:$0xf]
          %v524 = vld [vmem:[%s519 + $0x10] sm:$0xf]
          %v525 = vld [vmem:[%s519 + $0x14] sm:$0xf]
          %v526 = vld [vmem:[%s519 + $0x18] sm:$0xf]
          %v527 = vld [vmem:[%s519 + $0x1c] sm:$0xf]
          %v528 = vld [vmem:[%s519 + $0x20] sm:$0xf]
          %v529 = vld [vmem:[%s519 + $0x24] sm:$0xf]
          %v530 = vld [vmem:[%s519 + $0x28] sm:$0xf]
          %v531 = vld [vmem:[%s519 + $0x2c] sm:$0xf]
          %v532 = vld [vmem:[%s519 + $0x30] sm:$0xf]
          %v533 = vld [vmem:[%s519 + $0x34] sm:$0xf]
          %v534 = vld [vmem:[%s519 + $0x38] sm:$0xf]
          %v535 = vld [vmem:[%s519 + $0x3c] sm:$0xf]
          %v552 = vunpack.c.l.b16 %v520
          %v553 = vunpack.c.l.b16 %v521
          %v554 = vunpack.c.l.b16 %v522
          %v555 = vunpack.c.l.b16 %v523
          %v556 = vunpack.c.l.b16 %v524
          %v557 = vunpack.c.l.b16 %v525
          %v558 = vunpack.c.l.b16 %v526
          %v559 = vunpack.c.l.b16 %v527
          %v560 = vunpack.c.l.b16 %v528
          %v561 = vunpack.c.l.b16 %v529
          %v562 = vunpack.c.l.b16 %v530
          %v563 = vunpack.c.l.b16 %v531
          %v564 = vunpack.c.l.b16 %v532
          %v565 = vunpack.c.l.b16 %v533
          %v566 = vunpack.c.l.b16 %v534
          %v567 = vunpack.c.l.b16 %v535
          %v568 = vpack.c.b16 %v553, %v552
          %v569 = vpack.c.b16 %v555, %v554
          %v570 = vpack.c.b16 %v557, %v556
          %v571 = vpack.c.b16 %v559, %v558
          %v572 = vpack.c.b16 %v561, %v560
          %v573 = vpack.c.b16 %v563, %v562
          %v574 = vpack.c.b16 %v565, %v564
          %v575 = vpack.c.b16 %v567, %v566
          %v578 = vunpack.c.l.b16 %v501
          %v579 = vunpack.c.l.b16 %v502
          %v580 = vpack.c.b16 %v579, %v578
          %vm582 = vcmask 130048
          %v584 = vsel %vm582, %v568, 0
          %v587 = vsel %vm582, %v569, 0
          %v590 = vsel %vm582, %v570, 0
          %v593 = vsel %vm582, %v571, 0
          %v596 = vsel %vm582, %v572, 0
          %v599 = vsel %vm582, %v573, 0
          %v602 = vsel %vm582, %v574, 0
          %v605 = vsel %vm582, %v575, 0
          %607 = vmatprep.subr.bf16.mxu0 0
          %608 = vmatpush1.bf16.msra.mxu0 %v580
          %609 = vmatprep.subr.bf16.mxu0 0
          %610 = vmatpush1.bf16.msra.mxu0 0
          %611 = vmatprep.subr.bf16.mxu0 0
          %612 = vmatpush1.bf16.msra.mxu0 0
          %613 = vmatprep.subr.bf16.mxu0 0
          %614 = vmatpush1.bf16.msra.mxu0 0
          %615 = vmatprep.subr.bf16.mxu0 0
          %616 = vmatpush1.bf16.msra.mxu0 0
          %617 = vmatprep.subr.bf16.mxu0 0
          %618 = vmatpush1.bf16.msra.mxu0 0
          %619 = vmatprep.subr.bf16.mxu0 0
          %620 = vmatpush1.bf16.msra.mxu0 0
          %621 = vmatprep.subr.bf16.mxu0 0
          %622 = vmatpush1.bf16.msra.mxu0 0
          %623 = vmatprep.subr.bf16.mxu0 0
          %624 = vmatpush1.bf16.msra.mxu0 0
          %625 = vmatprep.subr.bf16.mxu0 0
          %626 = vmatpush1.bf16.msra.mxu0 0
          %627 = vmatprep.subr.bf16.mxu0 0
          %628 = vmatpush1.bf16.msra.mxu0 0
          %629 = vmatprep.subr.bf16.mxu0 0
          %630 = vmatpush1.bf16.msra.mxu0 0
          %631 = vmatprep.subr.bf16.mxu0 0
          %632 = vmatpush1.bf16.msra.mxu0 0
          %633 = vmatprep.subr.bf16.mxu0 0
          %634 = vmatpush1.bf16.msra.mxu0 0
          %635 = vmatprep.subr.bf16.mxu0 0
          %636 = vmatpush1.bf16.msra.mxu0 0
          %637 = vmatprep.subr.bf16.mxu0 0
          %638 = vmatpush1.bf16.msra.mxu0 0
          %639 = vmatprep.mubr.bf16.mxu0 0
          %640 = vmatmul.mubr.bf16.gmra.mrb[0].mxu0 %v584
          %v641 = vpop.f32.mrb[0].mxu0
          %v642 = vadd.f32 0.0, %v641
          %v643 = vpop.f32.mrb[0].mxu0
          %v644 = vpop.f32.mrb[0].mxu0
          %v645 = vadd.f32 0.0, %v644
          %v646 = vpop.f32.mrb[0].mxu0
          %647 = vmatprep.mubr.bf16.mxu0 0
          %648 = vmatmul.mubr.bf16.gmra.mrb[0].mxu0 %v587
          %v649 = vpop.f32.mrb[0].mxu0
          %v650 = vadd.f32 0.0, %v649
          %v651 = vpop.f32.mrb[0].mxu0
          %v652 = vpop.f32.mrb[0].mxu0
          %v653 = vadd.f32 0.0, %v652
          %v654 = vpop.f32.mrb[0].mxu0
          %655 = vmatprep.mubr.bf16.mxu0 0
          %656 = vmatmul.mubr.bf16.gmra.mrb[0].mxu0 %v590
          %v657 = vpop.f32.mrb[0].mxu0
          %v658 = vadd.f32 0.0, %v657
          %v659 = vpop.f32.mrb[0].mxu0
          %v660 = vpop.f32.mrb[0].mxu0
          %v661 = vadd.f32 0.0, %v660
          %v662 = vpop.f32.mrb[0].mxu0
          %663 = vmatprep.mubr.bf16.mxu0 0
          %664 = vmatmul.mubr.bf16.gmra.mrb[0].mxu0 %v593
          %v665 = vpop.f32.mrb[0].mxu0
          %v666 = vadd.f32 0.0, %v665
          %v667 = vpop.f32.mrb[0].mxu0
          %v668 = vpop.f32.mrb[0].mxu0
          %v669 = vadd.f32 0.0, %v668
          %v670 = vpop.f32.mrb[0].mxu0
          %671 = vmatprep.mubr.bf16.mxu0 0
          %672 = vmatmul.mubr.bf16.gmra.mrb[0].mxu0 %v596
          %v673 = vpop.f32.mrb[0].mxu0
          %v674 = vadd.f32 0.0, %v673
          %v675 = vpop.f32.mrb[0].mxu0
          %v676 = vpop.f32.mrb[0].mxu0
          %v677 = vadd.f32 0.0, %v676
          %v678 = vpop.f32.mrb[0].mxu0
          %679 = vmatprep.mubr.bf16.mxu0 0
          %680 = vmatmul.mubr.bf16.gmra.mrb[0].mxu0 %v599
          %v681 = vpop.f32.mrb[0].mxu0
          %v682 = vadd.f32 0.0, %v681
          %v683 = vpop.f32.mrb[0].mxu0
          %v684 = vpop.f32.mrb[0].mxu0
          %v685 = vadd.f32 0.0, %v684
          %v686 = vpop.f32.mrb[0].mxu0
          %687 = vmatprep.mubr.bf16.mxu0 0
          %688 = vmatmul.mubr.bf16.gmra.mrb[0].mxu0 %v602
          %v689 = vpop.f32.mrb[0].mxu0
          %v690 = vadd.f32 0.0, %v689
          %v691 = vpop.f32.mrb[0].mxu0
          %v692 = vpop.f32.mrb[0].mxu0
          %v693 = vadd.f32 0.0, %v692
          %v694 = vpop.f32.mrb[0].mxu0
          %695 = vmatprep.mubr.bf16.mxu0 0
          %696 = vmatmul.mubr.bf16.gmra.mrb[0].mxu0 %v605
          %v697 = vpop.f32.mrb[0].mxu0
          %v698 = vadd.f32 0.0, %v697
          %v699 = vpop.f32.mrb[0].mxu0
          %v700 = vpop.f32.mrb[0].mxu0
          %v701 = vadd.f32 0.0, %v700
          %v702 = vpop.f32.mrb[0].mxu0
          %703 = vdwg.mxu0
          %v705 = vlaneseq
          %v706 = vshrl.u32 %v705, 7
          %v707 = vsub.s32 0, %v706
          %v708 = vrot.slane %v504, %v707
          %v710 = vmul.f32 %v642, %v708
          %v711 = vmul.f32 %v645, %v708
          %v712 = vmul.f32 %v650, %v708
          %v713 = vmul.f32 %v653, %v708
          %v714 = vmul.f32 %v658, %v708
          %v715 = vmul.f32 %v661, %v708
          %v716 = vmul.f32 %v666, %v708
          %v717 = vmul.f32 %v669, %v708
          %v718 = vmul.f32 %v674, %v708
          %v719 = vmul.f32 %v677, %v708
          %v720 = vmul.f32 %v682, %v708
          %v721 = vmul.f32 %v685, %v708
          %v722 = vmul.f32 %v690, %v708
          %v723 = vmul.f32 %v693, %v708
          %v724 = vmul.f32 %v698, %v708
          %v725 = vmul.f32 %v701, %v708
          %v727 = vlaneseq
          %v728 = vshrl.u32 %v727, 7
          %v729 = vsub.s32 0, %v728
          %v730 = vrot.slane %v505, %v729
          %v732 = vadd.f32 %v710, %v730
          %v733 = vadd.f32 %v711, %v730
          %v734 = vadd.f32 %v712, %v730
          %v735 = vadd.f32 %v713, %v730
          %v736 = vadd.f32 %v714, %v730
          %v737 = vadd.f32 %v715, %v730
          %v738 = vadd.f32 %v716, %v730
          %v739 = vadd.f32 %v717, %v730
          %v740 = vadd.f32 %v718, %v730
          %v741 = vadd.f32 %v719, %v730
          %v742 = vadd.f32 %v720, %v730
          %v743 = vadd.f32 %v721, %v730
          %v744 = vadd.f32 %v722, %v730
          %v745 = vadd.f32 %v723, %v730
          %v746 = vadd.f32 %v724, %v730
          %v747 = vadd.f32 %v725, %v730
          %v748 = vmax.f32 %v732, 0.0
          %v749 = vmax.f32 %v733, 0.0
          %v750 = vmax.f32 %v734, 0.0
          %v751 = vmax.f32 %v735, 0.0
          %v752 = vmax.f32 %v736, 0.0
          %v753 = vmax.f32 %v737, 0.0
          %v754 = vmax.f32 %v738, 0.0
          %v755 = vmax.f32 %v739, 0.0
          %v756 = vmax.f32 %v740, 0.0
          %v757 = vmax.f32 %v741, 0.0
          %v758 = vmax.f32 %v742, 0.0
          %v759 = vmax.f32 %v743, 0.0
          %v760 = vmax.f32 %v744, 0.0
          %v761 = vmax.f32 %v745, 0.0
          %v762 = vmax.f32 %v746, 0.0
          %v763 = vmax.f32 %v747, 0.0
          %v764 = vpack.c.bf16 %v749, %v748
          %v765 = vpack.c.bf16 %v751, %v750
          %v766 = vpack.c.bf16 %v753, %v752
          %v767 = vpack.c.bf16 %v755, %v754
          %v768 = vpack.c.bf16 %v757, %v756
          %v769 = vpack.c.bf16 %v759, %v758
          %v770 = vpack.c.bf16 %v761, %v760
          %v771 = vpack.c.bf16 %v763, %v762
          %s772 = sadd.s32 %s516, 1
          %v781 = vunpack.c.l.b16 %v764
          %v782 = vunpack.c.h.b16 %v764
          %v783 = vunpack.c.l.b16 %v765
          %v784 = vunpack.c.h.b16 %v765
          %v785 = vunpack.c.l.b16 %v766
          %v786 = vunpack.c.h.b16 %v766
          %v787 = vunpack.c.l.b16 %v767
          %v788 = vunpack.c.h.b16 %v767
          %v789 = vunpack.c.l.b16 %v768
          %v790 = vunpack.c.h.b16 %v768
          %v791 = vunpack.c.l.b16 %v769
          %v792 = vunpack.c.h.b16 %v769
          %v793 = vunpack.c.l.b16 %v770
          %v794 = vunpack.c.h.b16 %v770
          %v795 = vunpack.c.l.b16 %v771
          %v796 = vunpack.c.h.b16 %v771
          %v797 = vpack.c.b16 %v781, %v781
          %v798 = vpack.c.b16 %v782, %v782
          %v799 = vpack.c.b16 %v783, %v783
          %v800 = vpack.c.b16 %v784, %v784
          %v801 = vpack.c.b16 %v785, %v785
          %v802 = vpack.c.b16 %v786, %v786
          %v803 = vpack.c.b16 %v787, %v787
          %v804 = vpack.c.b16 %v788, %v788
          %v805 = vpack.c.b16 %v789, %v789
          %v806 = vpack.c.b16 %v790, %v790
          %v807 = vpack.c.b16 %v791, %v791
          %v808 = vpack.c.b16 %v792, %v792
          %v809 = vpack.c.b16 %v793, %v793
          %v810 = vpack.c.b16 %v794, %v794
          %v811 = vpack.c.b16 %v795, %v795
          %v812 = vpack.c.b16 %v796, %v796
          %vm813 = vsmask.f32 4368
          %vm814 = vmor %vm389, %vm813
          %v816 = vshrl.u32 %v797, 16
          %v818 = vrot.slane %v816, 7
          %v819 = vshll.u32 %v797, 16
          %v821 = vor.u32 %v818, %v819
          %v822 = vrot.slane %v818, 4
          %v824 = vshrl.u32 %v798, 16
          %v826 = vrot.slane %v824, 7
          %v827 = vshll.u32 %v798, 16
          %v829 = vor.u32 %v826, %v827
          %v830 = vsel %vm814, %v822, %v829
          %v831 = vrot.slane %v826, 4
          %v833 = vshrl.u32 %v799, 16
          %v835 = vrot.slane %v833, 7
          %v836 = vshll.u32 %v799, 16
          %v838 = vor.u32 %v835, %v836
          %v839 = vrot.slane %v835, 4
          %v841 = vshrl.u32 %v800, 16
          %v843 = vrot.slane %v841, 7
          %v844 = vshll.u32 %v800, 16
          %v846 = vor.u32 %v843, %v844
          %v847 = vsel %vm814, %v839, %v846
          %v848 = vrot.slane %v843, 4
          %v850 = vshrl.u32 %v801, 16
          %v852 = vrot.slane %v850, 7
          %v853 = vshll.u32 %v801, 16
          %v855 = vor.u32 %v852, %v853
          %v856 = vrot.slane %v852, 4
          %v858 = vshrl.u32 %v802, 16
          %v860 = vrot.slane %v858, 7
          %v861 = vshll.u32 %v802, 16
          %v863 = vor.u32 %v860, %v861
          %v864 = vsel %vm814, %v856, %v863
          %v865 = vrot.slane %v860, 4
          %v867 = vshrl.u32 %v803, 16
          %v869 = vrot.slane %v867, 7
          %v870 = vshll.u32 %v803, 16
          %v872 = vor.u32 %v869, %v870
          %v873 = vrot.slane %v869, 4
          %v875 = vshrl.u32 %v804, 16
          %v877 = vrot.slane %v875, 7
          %v878 = vshll.u32 %v804, 16
          %v880 = vor.u32 %v877, %v878
          %v881 = vsel %vm814, %v873, %v880
          %v882 = vrot.slane %v877, 4
          %v884 = vshrl.u32 %v805, 16
          %v886 = vrot.slane %v884, 7
          %v887 = vshll.u32 %v805, 16
          %v889 = vor.u32 %v886, %v887
          %v890 = vrot.slane %v886, 4
          %v892 = vshrl.u32 %v806, 16
          %v894 = vrot.slane %v892, 7
          %v895 = vshll.u32 %v806, 16
          %v897 = vor.u32 %v894, %v895
          %v898 = vsel %vm814, %v890, %v897
          %v899 = vrot.slane %v894, 4
          %v901 = vshrl.u32 %v807, 16
          %v903 = vrot.slane %v901, 7
          %v904 = vshll.u32 %v807, 16
          %v906 = vor.u32 %v903, %v904
          %v907 = vrot.slane %v903, 4
          %v909 = vshrl.u32 %v808, 16
          %v911 = vrot.slane %v909, 7
          %v912 = vshll.u32 %v808, 16
          %v914 = vor.u32 %v911, %v912
          %v915 = vsel %vm814, %v907, %v914
          %v916 = vrot.slane %v911, 4
          %v918 = vshrl.u32 %v809, 16
          %v920 = vrot.slane %v918, 7
          %v921 = vshll.u32 %v809, 16
          %v923 = vor.u32 %v920, %v921
          %v924 = vrot.slane %v920, 4
          %v926 = vshrl.u32 %v810, 16
          %v928 = vrot.slane %v926, 7
          %v929 = vshll.u32 %v810, 16
          %v931 = vor.u32 %v928, %v929
          %v932 = vsel %vm814, %v924, %v931
          %v933 = vrot.slane %v928, 4
          %v935 = vshrl.u32 %v811, 16
          %v937 = vrot.slane %v935, 7
          %v938 = vshll.u32 %v811, 16
          %v940 = vor.u32 %v937, %v938
          %v941 = vrot.slane %v937, 4
          %v943 = vshrl.u32 %v812, 16
          %v945 = vrot.slane %v943, 7
          %v946 = vshll.u32 %v812, 16
          %v948 = vor.u32 %v945, %v946
          %v949 = vsel %vm814, %v941, %v948
          %v950 = vrot.slane %v945, 4
          %s975 = smul.u32 %s772, 3
          %s976 = smul.addr %s975, 4
          %s977 = scalar_lea.vmem [#allocation2], %s976
          %vm978 = vcmask 27648
          %vm979 = vmand %vm978, %vm445
          %v980 = vld [vmem:[%s977] sm:$0xf]
          %v981 = vsel %vm979, %v821, %v980
          %982 = vst [vmem:[%s977] sm:$0xf] %v981
          %983 = vst.msk [vmem:[%s977 + $0x4] sm:$0xf] %vm379, %v830
          %v984 = vld [vmem:[%s977 + $0x8] sm:$0x1]
          %v985 = vsel %vm390, %v831, %v984
          %986 = vst [vmem:[%s977 + $0x8] sm:$0x1] %v985
          %v987 = vld [vmem:[%s977 + $0xc] sm:$0xf]
          %v988 = vsel %vm979, %v838, %v987
          %989 = vst [vmem:[%s977 + $0xc] sm:$0xf] %v988
          %990 = vst.msk [vmem:[%s977 + $0x10] sm:$0xf] %vm379, %v847
          %v991 = vld [vmem:[%s977 + $0x14] sm:$0x1]
          %v992 = vsel %vm390, %v848, %v991
          %993 = vst [vmem:[%s977 + $0x14] sm:$0x1] %v992
          %v994 = vld [vmem:[%s977 + $0x18] sm:$0xf]
          %v995 = vsel %vm979, %v855, %v994
          %996 = vst [vmem:[%s977 + $0x18] sm:$0xf] %v995
          %997 = vst.msk [vmem:[%s977 + $0x1c] sm:$0xf] %vm379, %v864
          %v998 = vld [vmem:[%s977 + $0x20] sm:$0x1]
          %v999 = vsel %vm390, %v865, %v998
          %1000 = vst [vmem:[%s977 + $0x20] sm:$0x1] %v999
          %v1001 = vld [vmem:[%s977 + $0x24] sm:$0xf]
          %v1002 = vsel %vm979, %v872, %v1001
          %1003 = vst [vmem:[%s977 + $0x24] sm:$0xf] %v1002
          %1004 = vst.msk [vmem:[%s977 + $0x28] sm:$0xf] %vm379, %v881
          %v1005 = vld [vmem:[%s977 + $0x2c] sm:$0x1]
          %v1006 = vsel %vm390, %v882, %v1005
          %1007 = vst [vmem:[%s977 + $0x2c] sm:$0x1] %v1006
          %v1008 = vld [vmem:[%s977 + $0x30] sm:$0xf]
          %v1009 = vsel %vm979, %v889, %v1008
          %1010 = vst [vmem:[%s977 + $0x30] sm:$0xf] %v1009
          %1011 = vst.msk [vmem:[%s977 + $0x34] sm:$0xf] %vm379, %v898
          %v1012 = vld [vmem:[%s977 + $0x38] sm:$0x1]
          %v1013 = vsel %vm390, %v899, %v1012
          %1014 = vst [vmem:[%s977 + $0x38] sm:$0x1] %v1013
          %v1015 = vld [vmem:[%s977 + $0x3c] sm:$0xf]
          %v1016 = vsel %vm979, %v906, %v1015
          %1017 = vst [vmem:[%s977 + $0x3c] sm:$0xf] %v1016
          %1018 = vst.msk [vmem:[%s977 + $0x40] sm:$0xf] %vm379, %v915
          %v1019 = vld [vmem:[%s977 + $0x44] sm:$0x1]
          %v1020 = vsel %vm390, %v916, %v1019
          %1021 = vst [vmem:[%s977 + $0x44] sm:$0x1] %v1020
          %v1022 = vld [vmem:[%s977 + $0x48] sm:$0xf]
          %v1023 = vsel %vm979, %v923, %v1022
          %1024 = vst [vmem:[%s977 + $0x48] sm:$0xf] %v1023
          %1025 = vst.msk [vmem:[%s977 + $0x4c] sm:$0xf] %vm379, %v932
          %v1026 = vld [vmem:[%s977 + $0x50] sm:$0x1]
          %v1027 = vsel %vm390, %v933, %v1026
          %1028 = vst [vmem:[%s977 + $0x50] sm:$0x1] %v1027
          %v1029 = vld [vmem:[%s977 + $0x54] sm:$0xf]
          %v1030 = vsel %vm979, %v940, %v1029
          %1031 = vst [vmem:[%s977 + $0x54] sm:$0xf] %v1030
          %1032 = vst.msk [vmem:[%s977 + $0x58] sm:$0xf] %vm379, %v949
          %v1033 = vld [vmem:[%s977 + $0x5c] sm:$0x1]
          %v1034 = vsel %vm390, %v950, %v1033
          %1035 = vst [vmem:[%s977 + $0x5c] sm:$0x1] %v1034
        $region69: #{tpu_custom_call.1} parent=59 // loop_footer
          %s515 = sadd.s32 1, %s511
        $region70: #{tpu_custom_call.1} parent=59 // loop_footer_branch
          %510 = sbr.rel target = $region66
        $region71: #{tpu_custom_call.1} parent=59 // loop_exit
          _
        loop: start=0, step=1, limit=2
        $region72: #{tpu_custom_call.1} parent=59 // loop_pre_header
          _
        $region73: #{tpu_custom_call.1} parent=59 // loop_header
          %s1037 = sphi 0, %s1041
          %p1038 = scmp.ge.s32.totalorder %s1037, 2
        $region74: #{tpu_custom_call.1} parent=59 // loop_header_branch
          %1040 = sbr.rel (%p1038) target = $region78
        $region75: #{tpu_custom_call.1} parent=59 // loop_body
          %s1042 = smul.u32 %s1037, 8
          %s1043 = smul.u32 %s1042, 3
          %s1044 = smul.addr %s1043, 4
          %s1045 = scalar_lea.vmem [#allocation2], %s1044
          %v1046 = vld [vmem:[%s1045] sm:$0xf]
          %v1047 = vld [vmem:[%s1045 + $0x4] sm:$0xf]
          %v1048 = vld [vmem:[%s1045 + $0xc] sm:$0xf]
          %v1049 = vld [vmem:[%s1045 + $0x10] sm:$0xf]
          %v1050 = vld [vmem:[%s1045 + $0x18] sm:$0xf]
          %v1051 = vld [vmem:[%s1045 + $0x1c] sm:$0xf]
          %v1052 = vld [vmem:[%s1045 + $0x24] sm:$0xf]
          %v1053 = vld [vmem:[%s1045 + $0x28] sm:$0xf]
          %v1054 = vld [vmem:[%s1045 + $0x30] sm:$0xf]
          %v1055 = vld [vmem:[%s1045 + $0x34] sm:$0xf]
          %v1056 = vld [vmem:[%s1045 + $0x3c] sm:$0xf]
          %v1057 = vld [vmem:[%s1045 + $0x40] sm:$0xf]
          %v1058 = vld [vmem:[%s1045 + $0x48] sm:$0xf]
          %v1059 = vld [vmem:[%s1045 + $0x4c] sm:$0xf]
          %v1060 = vld [vmem:[%s1045 + $0x54] sm:$0xf]
          %v1061 = vld [vmem:[%s1045 + $0x58] sm:$0xf]
          %v1062 = vld [vmem:[%s4] sm:$0x3]
          %v1063 = vld [vmem:[%s1045 + $0x8] sm:$0x1]
          %v1064 = vld [vmem:[%s1045 + $0x14] sm:$0x1]
          %v1065 = vld [vmem:[%s1045 + $0x20] sm:$0x1]
          %v1066 = vld [vmem:[%s1045 + $0x2c] sm:$0x1]
          %v1067 = vld [vmem:[%s1045 + $0x38] sm:$0x1]
          %v1068 = vld [vmem:[%s1045 + $0x44] sm:$0x1]
          %v1069 = vld [vmem:[%s1045 + $0x50] sm:$0x1]
          %v1070 = vld [vmem:[%s1045 + $0x5c] sm:$0x1]
          %vm1071 = vsmask.f32 3328
          %vm1072 = vsmask.f32 7440
          %vm1073 = vmor %vm1071, %vm1072
          %v1075 = vshrl.u32 %v1046, 16
          %v1077 = vrot.slane %v1075, 4
          %v1078 = vshll.u32 %v1046, 16
          %v1080 = vrot.slane %v1078, 5
          %v1081 = vor.u32 %v1077, %v1080
          %v1082 = vrot.slane %v1081, 4
          %v1084 = vshll.u32 %v1047, 16
          %v1086 = vrot.slane %v1084, 5
          %v1087 = vsel %vm1073, %v1082, %v1086
          %v1088 = vshrl.u32 %v1047, 16
          %v1090 = vrot.slane %v1088, 4
          %v1091 = vor.u32 %v1090, %v1086
          %v1092 = vrot.slane %v1091, 4
          %v1094 = vshll.u32 %v1063, 16
          %v1096 = vrot.slane %v1094, 5
          %v1097 = vsel %vm1073, %v1092, %v1096
          %v1099 = vshrl.u32 %v1048, 16
          %v1101 = vrot.slane %v1099, 4
          %v1102 = vshll.u32 %v1048, 16
          %v1104 = vrot.slane %v1102, 5
          %v1105 = vor.u32 %v1101, %v1104
          %v1106 = vrot.slane %v1105, 4
          %v1108 = vshll.u32 %v1049, 16
          %v1110 = vrot.slane %v1108, 5
          %v1111 = vsel %vm1073, %v1106, %v1110
          %v1112 = vshrl.u32 %v1049, 16
          %v1114 = vrot.slane %v1112, 4
          %v1115 = vor.u32 %v1114, %v1110
          %v1116 = vrot.slane %v1115, 4
          %v1118 = vshll.u32 %v1064, 16
          %v1120 = vrot.slane %v1118, 5
          %v1121 = vsel %vm1073, %v1116, %v1120
          %v1123 = vshrl.u32 %v1050, 16
          %v1125 = vrot.slane %v1123, 4
          %v1126 = vshll.u32 %v1050, 16
          %v1128 = vrot.slane %v1126, 5
          %v1129 = vor.u32 %v1125, %v1128
          %v1130 = vrot.slane %v1129, 4
          %v1132 = vshll.u32 %v1051, 16
          %v1134 = vrot.slane %v1132, 5
          %v1135 = vsel %vm1073, %v1130, %v1134
          %v1136 = vshrl.u32 %v1051, 16
          %v1138 = vrot.slane %v1136, 4
          %v1139 = vor.u32 %v1138, %v1134
          %v1140 = vrot.slane %v1139, 4
          %v1142 = vshll.u32 %v1065, 16
          %v1144 = vrot.slane %v1142, 5
          %v1145 = vsel %vm1073, %v1140, %v1144
          %v1147 = vshrl.u32 %v1052, 16
          %v1149 = vrot.slane %v1147, 4
          %v1150 = vshll.u32 %v1052, 16
          %v1152 = vrot.slane %v1150, 5
          %v1153 = vor.u32 %v1149, %v1152
          %v1154 = vrot.slane %v1153, 4
          %v1156 = vshll.u32 %v1053, 16
          %v1158 = vrot.slane %v1156, 5
          %v1159 = vsel %vm1073, %v1154, %v1158
          %v1160 = vshrl.u32 %v1053, 16
          %v1162 = vrot.slane %v1160, 4
          %v1163 = vor.u32 %v1162, %v1158
          %v1164 = vrot.slane %v1163, 4
          %v1166 = vshll.u32 %v1066, 16
          %v1168 = vrot.slane %v1166, 5
          %v1169 = vsel %vm1073, %v1164, %v1168
          %v1171 = vshrl.u32 %v1054, 16
          %v1173 = vrot.slane %v1171, 4
          %v1174 = vshll.u32 %v1054, 16
          %v1176 = vrot.slane %v1174, 5
          %v1177 = vor.u32 %v1173, %v1176
          %v1178 = vrot.slane %v1177, 4
          %v1180 = vshll.u32 %v1055, 16
          %v1182 = vrot.slane %v1180, 5
          %v1183 = vsel %vm1073, %v1178, %v1182
          %v1184 = vshrl.u32 %v1055, 16
          %v1186 = vrot.slane %v1184, 4
          %v1187 = vor.u32 %v1186, %v1182
          %v1188 = vrot.slane %v1187, 4
          %v1190 = vshll.u32 %v1067, 16
          %v1192 = vrot.slane %v1190, 5
          %v1193 = vsel %vm1073, %v1188, %v1192
          %v1195 = vshrl.u32 %v1056, 16
          %v1197 = vrot.slane %v1195, 4
          %v1198 = vshll.u32 %v1056, 16
          %v1200 = vrot.slane %v1198, 5
          %v1201 = vor.u32 %v1197, %v1200
          %v1202 = vrot.slane %v1201, 4
          %v1204 = vshll.u32 %v1057, 16
          %v1206 = vrot.slane %v1204, 5
          %v1207 = vsel %vm1073, %v1202, %v1206
          %v1208 = vshrl.u32 %v1057, 16
          %v1210 = vrot.slane %v1208, 4
          %v1211 = vor.u32 %v1210, %v1206
          %v1212 = vrot.slane %v1211, 4
          %v1214 = vshll.u32 %v1068, 16
          %v1216 = vrot.slane %v1214, 5
          %v1217 = vsel %vm1073, %v1212, %v1216
          %v1219 = vshrl.u32 %v1058, 16
          %v1221 = vrot.slane %v1219, 4
          %v1222 = vshll.u32 %v1058, 16
          %v1224 = vrot.slane %v1222, 5
          %v1225 = vor.u32 %v1221, %v1224
          %v1226 = vrot.slane %v1225, 4
          %v1228 = vshll.u32 %v1059, 16
          %v1230 = vrot.slane %v1228, 5
          %v1231 = vsel %vm1073, %v1226, %v1230
          %v1232 = vshrl.u32 %v1059, 16
          %v1234 = vrot.slane %v1232, 4
          %v1235 = vor.u32 %v1234, %v1230
          %v1236 = vrot.slane %v1235, 4
          %v1238 = vshll.u32 %v1069, 16
          %v1240 = vrot.slane %v1238, 5
          %v1241 = vsel %vm1073, %v1236, %v1240
          %v1243 = vshrl.u32 %v1060, 16
          %v1245 = vrot.slane %v1243, 4
          %v1246 = vshll.u32 %v1060, 16
          %v1248 = vrot.slane %v1246, 5
          %v1249 = vor.u32 %v1245, %v1248
          %v1250 = vrot.slane %v1249, 4
          %v1252 = vshll.u32 %v1061, 16
          %v1254 = vrot.slane %v1252, 5
          %v1255 = vsel %vm1073, %v1250, %v1254
          %v1256 = vshrl.u32 %v1061, 16
          %v1258 = vrot.slane %v1256, 4
          %v1259 = vor.u32 %v1258, %v1254
          %v1260 = vrot.slane %v1259, 4
          %v1262 = vshll.u32 %v1070, 16
          %v1264 = vrot.slane %v1262, 5
          %v1265 = vsel %vm1073, %v1260, %v1264
          %s1266 = scalar_lea.vmem %s4, 2
          %v1267 = vld [vmem:[%s1266] sm:$0x3]
          %v1268 = vunpack.c.l.b16 %v1087
          %v1269 = vunpack.c.l.b16 %v1097
          %v1270 = vunpack.c.l.b16 %v1111
          %v1271 = vunpack.c.l.b16 %v1121
          %v1272 = vunpack.c.l.b16 %v1135
          %v1273 = vunpack.c.l.b16 %v1145
          %v1274 = vunpack.c.l.b16 %v1159
          %v1275 = vunpack.c.l.b16 %v1169
          %v1276 = vunpack.c.l.b16 %v1183
          %v1277 = vunpack.c.l.b16 %v1193
          %v1278 = vunpack.c.l.b16 %v1207
          %v1279 = vunpack.c.l.b16 %v1217
          %v1280 = vunpack.c.l.b16 %v1231
          %v1281 = vunpack.c.l.b16 %v1241
          %v1282 = vunpack.c.l.b16 %v1255
          %v1283 = vunpack.c.l.b16 %v1265
          %v1284 = vpack.c.b16 %v1269, %v1268
          %v1285 = vpack.c.b16 %v1271, %v1270
          %v1286 = vpack.c.b16 %v1273, %v1272
          %v1287 = vpack.c.b16 %v1275, %v1274
          %v1288 = vpack.c.b16 %v1277, %v1276
          %v1289 = vpack.c.b16 %v1279, %v1278
          %v1290 = vpack.c.b16 %v1281, %v1280
          %v1291 = vpack.c.b16 %v1283, %v1282
          %vm1292 = vcmask 31744
          %v1294 = vsel %vm1292, %v1284, 0
          %v1297 = vsel %vm1292, %v1285, 0
          %v1300 = vsel %vm1292, %v1286, 0
          %v1303 = vsel %vm1292, %v1287, 0
          %v1306 = vsel %vm1292, %v1288, 0
          %v1309 = vsel %vm1292, %v1289, 0
          %v1312 = vsel %vm1292, %v1290, 0
          %v1315 = vsel %vm1292, %v1291, 0
          %vm1317 = vcmask 1041408
          %v1319 = vsel %vm1317, %v1267, 0
          %1321 = vmatprep.subr.bf16.mxu0 0
          %1322 = vmatpush1.bf16.msra.mxu0 %v1319
          %1323 = vmatprep.subr.bf16.mxu0 0
          %1324 = vmatpush1.bf16.msra.mxu0 0
          %1325 = vmatprep.subr.bf16.mxu0 0
          %1326 = vmatpush1.bf16.msra.mxu0 0
          %1327 = vmatprep.subr.bf16.mxu0 0
          %1328 = vmatpush1.bf16.msra.mxu0 0
          %1329 = vmatprep.subr.bf16.mxu0 0
          %1330 = vmatpush1.bf16.msra.mxu0 0
          %1331 = vmatprep.subr.bf16.mxu0 0
          %1332 = vmatpush1.bf16.msra.mxu0 0
          %1333 = vmatprep.subr.bf16.mxu0 0
          %1334 = vmatpush1.bf16.msra.mxu0 0
          %1335 = vmatprep.subr.bf16.mxu0 0
          %1336 = vmatpush1.bf16.msra.mxu0 0
          %1337 = vmatprep.subr.bf16.mxu0 0
          %1338 = vmatpush1.bf16.msra.mxu0 0
          %1339 = vmatprep.subr.bf16.mxu0 0
          %1340 = vmatpush1.bf16.msra.mxu0 0
          %1341 = vmatprep.subr.bf16.mxu0 0
          %1342 = vmatpush1.bf16.msra.mxu0 0
          %1343 = vmatprep.subr.bf16.mxu0 0
          %1344 = vmatpush1.bf16.msra.mxu0 0
          %1345 = vmatprep.subr.bf16.mxu0 0
          %1346 = vmatpush1.bf16.msra.mxu0 0
          %1347 = vmatprep.subr.bf16.mxu0 0
          %1348 = vmatpush1.bf16.msra.mxu0 0
          %1349 = vmatprep.subr.bf16.mxu0 0
          %1350 = vmatpush1.bf16.msra.mxu0 0
          %1351 = vmatprep.subr.bf16.mxu0 0
          %1352 = vmatpush1.bf16.msra.mxu0 0
          %1353 = vmatprep.mubr.bf16.mxu0 0
          %1354 = vmatmul.mubr.bf16.gmra.mrb[0].mxu0 %v1294
          %v1355 = vpop.f32.mrb[0].mxu0
          %v1356 = vadd.f32 0.0, %v1355
          %v1357 = vpop.f32.mrb[0].mxu0
          %v1358 = vpop.f32.mrb[0].mxu0
          %v1359 = vadd.f32 0.0, %v1358
          %v1360 = vpop.f32.mrb[0].mxu0
          %1361 = vmatprep.mubr.bf16.mxu0 0
          %1362 = vmatmul.mubr.bf16.gmra.mrb[0].mxu0 %v1297
          %v1363 = vpop.f32.mrb[0].mxu0
          %v1364 = vadd.f32 0.0, %v1363
          %v1365 = vpop.f32.mrb[0].mxu0
          %v1366 = vpop.f32.mrb[0].mxu0
          %v1367 = vadd.f32 0.0, %v1366
          %v1368 = vpop.f32.mrb[0].mxu0
          %1369 = vmatprep.mubr.bf16.mxu0 0
          %1370 = vmatmul.mubr.bf16.gmra.mrb[0].mxu0 %v1300
          %v1371 = vpop.f32.mrb[0].mxu0
          %v1372 = vadd.f32 0.0, %v1371
          %v1373 = vpop.f32.mrb[0].mxu0
          %v1374 = vpop.f32.mrb[0].mxu0
          %v1375 = vadd.f32 0.0, %v1374
          %v1376 = vpop.f32.mrb[0].mxu0
          %1377 = vmatprep.mubr.bf16.mxu0 0
          %1378 = vmatmul.mubr.bf16.gmra.mrb[0].mxu0 %v1303
          %v1379 = vpop.f32.mrb[0].mxu0
          %v1380 = vadd.f32 0.0, %v1379
          %v1381 = vpop.f32.mrb[0].mxu0
          %v1382 = vpop.f32.mrb[0].mxu0
          %v1383 = vadd.f32 0.0, %v1382
          %v1384 = vpop.f32.mrb[0].mxu0
          %1385 = vmatprep.mubr.bf16.mxu0 0
          %1386 = vmatmul.mubr.bf16.gmra.mrb[0].mxu0 %v1306
          %v1387 = vpop.f32.mrb[0].mxu0
          %v1388 = vadd.f32 0.0, %v1387
          %v1389 = vpop.f32.mrb[0].mxu0
          %v1390 = vpop.f32.mrb[0].mxu0
          %v1391 = vadd.f32 0.0, %v1390
          %v1392 = vpop.f32.mrb[0].mxu0
          %1393 = vmatprep.mubr.bf16.mxu0 0
          %1394 = vmatmul.mubr.bf16.gmra.mrb[0].mxu0 %v1309
          %v1395 = vpop.f32.mrb[0].mxu0
          %v1396 = vadd.f32 0.0, %v1395
          %v1397 = vpop.f32.mrb[0].mxu0
          %v1398 = vpop.f32.mrb[0].mxu0
          %v1399 = vadd.f32 0.0, %v1398
          %v1400 = vpop.f32.mrb[0].mxu0
          %1401 = vmatprep.mubr.bf16.mxu0 0
          %1402 = vmatmul.mubr.bf16.gmra.mrb[0].mxu0 %v1312
          %v1403 = vpop.f32.mrb[0].mxu0
          %v1404 = vadd.f32 0.0, %v1403
          %v1405 = vpop.f32.mrb[0].mxu0
          %v1406 = vpop.f32.mrb[0].mxu0
          %v1407 = vadd.f32 0.0, %v1406
          %v1408 = vpop.f32.mrb[0].mxu0
          %1409 = vmatprep.mubr.bf16.mxu0 0
          %1410 = vmatmul.mubr.bf16.gmra.mrb[0].mxu0 %v1315
          %v1411 = vpop.f32.mrb[0].mxu0
          %v1412 = vadd.f32 0.0, %v1411
          %v1413 = vpop.f32.mrb[0].mxu0
          %v1414 = vpop.f32.mrb[0].mxu0
          %v1415 = vadd.f32 0.0, %v1414
          %v1416 = vpop.f32.mrb[0].mxu0
          %1417 = vdwg.mxu0
          %v1434 = vunpack.c.l.b16 %v1046
          %v1435 = vunpack.c.l.b16 %v1047
          %v1436 = vunpack.c.l.b16 %v1048
          %v1437 = vunpack.c.l.b16 %v1049
          %v1438 = vunpack.c.l.b16 %v1050
          %v1439 = vunpack.c.l.b16 %v1051
          %v1440 = vunpack.c.l.b16 %v1052
          %v1441 = vunpack.c.l.b16 %v1053
          %v1442 = vunpack.c.l.b16 %v1054
          %v1443 = vunpack.c.l.b16 %v1055
          %v1444 = vunpack.c.l.b16 %v1056
          %v1445 = vunpack.c.l.b16 %v1057
          %v1446 = vunpack.c.l.b16 %v1058
          %v1447 = vunpack.c.l.b16 %v1059
          %v1448 = vunpack.c.l.b16 %v1060
          %v1449 = vunpack.c.l.b16 %v1061
          %v1450 = vpack.c.b16 %v1435, %v1434
          %v1451 = vpack.c.b16 %v1437, %v1436
          %v1452 = vpack.c.b16 %v1439, %v1438
          %v1453 = vpack.c.b16 %v1441, %v1440
          %v1454 = vpack.c.b16 %v1443, %v1442
          %v1455 = vpack.c.b16 %v1445, %v1444
          %v1456 = vpack.c.b16 %v1447, %v1446
          %v1457 = vpack.c.b16 %v1449, %v1448
          %v1459 = vsel %vm1292, %v1450, 0
          %v1462 = vsel %vm1292, %v1451, 0
          %v1465 = vsel %vm1292, %v1452, 0
          %v1468 = vsel %vm1292, %v1453, 0
          %v1471 = vsel %vm1292, %v1454, 0
          %v1474 = vsel %vm1292, %v1455, 0
          %v1477 = vsel %vm1292, %v1456, 0
          %v1480 = vsel %vm1292, %v1457, 0
          %v1483 = vsel %vm1317, %v1062, 0
          %1485 = vmatprep.subr.bf16.mxu0 0
          %1486 = vmatpush1.bf16.msra.mxu0 %v1483
          %1487 = vmatprep.subr.bf16.mxu0 0
          %1488 = vmatpush1.bf16.msra.mxu0 0
          %1489 = vmatprep.subr.bf16.mxu0 0
          %1490 = vmatpush1.bf16.msra.mxu0 0
          %1491 = vmatprep.subr.bf16.mxu0 0
          %1492 = vmatpush1.bf16.msra.mxu0 0
          %1493 = vmatprep.subr.bf16.mxu0 0
          %1494 = vmatpush1.bf16.msra.mxu0 0
          %1495 = vmatprep.subr.bf16.mxu0 0
          %1496 = vmatpush1.bf16.msra.mxu0 0
          %1497 = vmatprep.subr.bf16.mxu0 0
          %1498 = vmatpush1.bf16.msra.mxu0 0
          %1499 = vmatprep.subr.bf16.mxu0 0
          %1500 = vmatpush1.bf16.msra.mxu0 0
          %1501 = vmatprep.subr.bf16.mxu0 0
          %1502 = vmatpush1.bf16.msra.mxu0 0
          %1503 = vmatprep.subr.bf16.mxu0 0
          %1504 = vmatpush1.bf16.msra.mxu0 0
          %1505 = vmatprep.subr.bf16.mxu0 0
          %1506 = vmatpush1.bf16.msra.mxu0 0
          %1507 = vmatprep.subr.bf16.mxu0 0
          %1508 = vmatpush1.bf16.msra.mxu0 0
          %1509 = vmatprep.subr.bf16.mxu0 0
          %1510 = vmatpush1.bf16.msra.mxu0 0
          %1511 = vmatprep.subr.bf16.mxu0 0
          %1512 = vmatpush1.bf16.msra.mxu0 0
          %1513 = vmatprep.subr.bf16.mxu0 0
          %1514 = vmatpush1.bf16.msra.mxu0 0
          %1515 = vmatprep.subr.bf16.mxu0 0
          %1516 = vmatpush1.bf16.msra.mxu0 0
          %1517 = vmatprep.mubr.bf16.mxu0 0
          %1518 = vmatmul.mubr.bf16.gmra.mrb[0].mxu0 %v1459
          %v1519 = vpop.f32.mrb[0].mxu0
          %v1520 = vadd.f32 %v1356, %v1519
          %v1521 = vpop.f32.mrb[0].mxu0
          %v1522 = vpop.f32.mrb[0].mxu0
          %v1523 = vadd.f32 %v1359, %v1522
          %v1524 = vpop.f32.mrb[0].mxu0
          %1525 = vmatprep.mubr.bf16.mxu0 0
          %1526 = vmatmul.mubr.bf16.gmra.mrb[0].mxu0 %v1462
          %v1527 = vpop.f32.mrb[0].mxu0
          %v1528 = vadd.f32 %v1364, %v1527
          %v1529 = vpop.f32.mrb[0].mxu0
          %v1530 = vpop.f32.mrb[0].mxu0
          %v1531 = vadd.f32 %v1367, %v1530
          %v1532 = vpop.f32.mrb[0].mxu0
          %1533 = vmatprep.mubr.bf16.mxu0 0
          %1534 = vmatmul.mubr.bf16.gmra.mrb[0].mxu0 %v1465
          %v1535 = vpop.f32.mrb[0].mxu0
          %v1536 = vadd.f32 %v1372, %v1535
          %v1537 = vpop.f32.mrb[0].mxu0
          %v1538 = vpop.f32.mrb[0].mxu0
          %v1539 = vadd.f32 %v1375, %v1538
          %v1540 = vpop.f32.mrb[0].mxu0
          %1541 = vmatprep.mubr.bf16.mxu0 0
          %1542 = vmatmul.mubr.bf16.gmra.mrb[0].mxu0 %v1468
          %v1543 = vpop.f32.mrb[0].mxu0
          %v1544 = vadd.f32 %v1380, %v1543
          %v1545 = vpop.f32.mrb[0].mxu0
          %v1546 = vpop.f32.mrb[0].mxu0
          %v1547 = vadd.f32 %v1383, %v1546
          %v1548 = vpop.f32.mrb[0].mxu0
          %1549 = vmatprep.mubr.bf16.mxu0 0
          %1550 = vmatmul.mubr.bf16.gmra.mrb[0].mxu0 %v1471
          %v1551 = vpop.f32.mrb[0].mxu0
          %v1552 = vadd.f32 %v1388, %v1551
          %v1553 = vpop.f32.mrb[0].mxu0
          %v1554 = vpop.f32.mrb[0].mxu0
          %v1555 = vadd.f32 %v1391, %v1554
          %v1556 = vpop.f32.mrb[0].mxu0
          %1557 = vmatprep.mubr.bf16.mxu0 0
          %1558 = vmatmul.mubr.bf16.gmra.mrb[0].mxu0 %v1474
          %v1559 = vpop.f32.mrb[0].mxu0
          %v1560 = vadd.f32 %v1396, %v1559
          %v1561 = vpop.f32.mrb[0].mxu0
          %v1562 = vpop.f32.mrb[0].mxu0
          %v1563 = vadd.f32 %v1399, %v1562
          %v1564 = vpop.f32.mrb[0].mxu0
          %1565 = vmatprep.mubr.bf16.mxu0 0
          %1566 = vmatmul.mubr.bf16.gmra.mrb[0].mxu0 %v1477
          %v1567 = vpop.f32.mrb[0].mxu0
          %v1568 = vadd.f32 %v1404, %v1567
          %v1569 = vpop.f32.mrb[0].mxu0
          %v1570 = vpop.f32.mrb[0].mxu0
          %v1571 = vadd.f32 %v1407, %v1570
          %v1572 = vpop.f32.mrb[0].mxu0
          %1573 = vmatprep.mubr.bf16.mxu0 0
          %1574 = vmatmul.mubr.bf16.gmra.mrb[0].mxu0 %v1480
          %v1575 = vpop.f32.mrb[0].mxu0
          %v1576 = vadd.f32 %v1412, %v1575
          %v1577 = vpop.f32.mrb[0].mxu0
          %v1578 = vpop.f32.mrb[0].mxu0
          %v1579 = vadd.f32 %v1415, %v1578
          %v1580 = vpop.f32.mrb[0].mxu0
          %1581 = vdwg.mxu0
          %v1582 = vld [vmem:[%s1045] sm:$0xe]
          %v1583 = vld [vmem:[%s1045 + $0xc] sm:$0xe]
          %v1584 = vld [vmem:[%s1045 + $0x18] sm:$0xe]
          %v1585 = vld [vmem:[%s1045 + $0x24] sm:$0xe]
          %v1586 = vld [vmem:[%s1045 + $0x30] sm:$0xe]
          %v1587 = vld [vmem:[%s1045 + $0x3c] sm:$0xe]
          %v1588 = vld [vmem:[%s1045 + $0x48] sm:$0xe]
          %v1589 = vld [vmem:[%s1045 + $0x54] sm:$0xe]
          %vm1606 = vcmask 1042432
          %vm1607 = vcmask 1046532
          %vm1608 = vmor %vm1606, %vm1607
          %v1609 = vrot.slane %v1582, 5
          %v1610 = vrot.slane %v1609, 4
          %v1611 = vrot.slane %v1047, 5
          %v1612 = vsel %vm1608, %v1610, %v1611
          %v1613 = vrot.slane %v1611, 4
          %v1614 = vrot.slane %v1063, 5
          %v1615 = vsel %vm1608, %v1613, %v1614
          %v1616 = vrot.slane %v1583, 5
          %v1617 = vrot.slane %v1616, 4
          %v1618 = vrot.slane %v1049, 5
          %v1619 = vsel %vm1608, %v1617, %v1618
          %v1620 = vrot.slane %v1618, 4
          %v1621 = vrot.slane %v1064, 5
          %v1622 = vsel %vm1608, %v1620, %v1621
          %v1623 = vrot.slane %v1584, 5
          %v1624 = vrot.slane %v1623, 4
          %v1625 = vrot.slane %v1051, 5
          %v1626 = vsel %vm1608, %v1624, %v1625
          %v1627 = vrot.slane %v1625, 4
          %v1628 = vrot.slane %v1065, 5
          %v1629 = vsel %vm1608, %v1627, %v1628
          %v1630 = vrot.slane %v1585, 5
          %v1631 = vrot.slane %v1630, 4
          %v1632 = vrot.slane %v1053, 5
          %v1633 = vsel %vm1608, %v1631, %v1632
          %v1634 = vrot.slane %v1632, 4
          %v1635 = vrot.slane %v1066, 5
          %v1636 = vsel %vm1608, %v1634, %v1635
          %v1637 = vrot.slane %v1586, 5
          %v1638 = vrot.slane %v1637, 4
          %v1639 = vrot.slane %v1055, 5
          %v1640 = vsel %vm1608, %v1638, %v1639
          %v1641 = vrot.slane %v1639, 4
          %v1642 = vrot.slane %v1067, 5
          %v1643 = vsel %vm1608, %v1641, %v1642
          %v1644 = vrot.slane %v1587, 5
          %v1645 = vrot.slane %v1644, 4
          %v1646 = vrot.slane %v1057, 5
          %v1647 = vsel %vm1608, %v1645, %v1646
          %v1648 = vrot.slane %v1646, 4
          %v1649 = vrot.slane %v1068, 5
          %v1650 = vsel %vm1608, %v1648, %v1649
          %v1651 = vrot.slane %v1588, 5
          %v1652 = vrot.slane %v1651, 4
          %v1653 = vrot.slane %v1059, 5
          %v1654 = vsel %vm1608, %v1652, %v1653
          %v1655 = vrot.slane %v1653, 4
          %v1656 = vrot.slane %v1069, 5
          %v1657 = vsel %vm1608, %v1655, %v1656
          %v1658 = vrot.slane %v1589, 5
          %v1659 = vrot.slane %v1658, 4
          %v1660 = vrot.slane %v1061, 5
          %v1661 = vsel %vm1608, %v1659, %v1660
          %v1662 = vrot.slane %v1660, 4
          %v1663 = vrot.slane %v1070, 5
          %v1664 = vsel %vm1608, %v1662, %v1663
          %s1665 = scalar_lea.vmem %s4, 4
          %v1666 = vld [vmem:[%s1665] sm:$0x3]
          %v1667 = vunpack.c.l.b16 %v1612
          %v1668 = vunpack.c.l.b16 %v1615
          %v1669 = vunpack.c.l.b16 %v1619
          %v1670 = vunpack.c.l.b16 %v1622
          %v1671 = vunpack.c.l.b16 %v1626
          %v1672 = vunpack.c.l.b16 %v1629
          %v1673 = vunpack.c.l.b16 %v1633
          %v1674 = vunpack.c.l.b16 %v1636
          %v1675 = vunpack.c.l.b16 %v1640
          %v1676 = vunpack.c.l.b16 %v1643
          %v1677 = vunpack.c.l.b16 %v1647
          %v1678 = vunpack.c.l.b16 %v1650
          %v1679 = vunpack.c.l.b16 %v1654
          %v1680 = vunpack.c.l.b16 %v1657
          %v1681 = vunpack.c.l.b16 %v1661
          %v1682 = vunpack.c.l.b16 %v1664
          %v1683 = vpack.c.b16 %v1668, %v1667
          %v1684 = vpack.c.b16 %v1670, %v1669
          %v1685 = vpack.c.b16 %v1672, %v1671
          %v1686 = vpack.c.b16 %v1674, %v1673
          %v1687 = vpack.c.b16 %v1676, %v1675
          %v1688 = vpack.c.b16 %v1678, %v1677
          %v1689 = vpack.c.b16 %v1680, %v1679
          %v1690 = vpack.c.b16 %v1682, %v1681
          %v1692 = vsel %vm1292, %v1683, 0
          %v1695 = vsel %vm1292, %v1684, 0
          %v1698 = vsel %vm1292, %v1685, 0
          %v1701 = vsel %vm1292, %v1686, 0
          %v1704 = vsel %vm1292, %v1687, 0
          %v1707 = vsel %vm1292, %v1688, 0
          %v1710 = vsel %vm1292, %v1689, 0
          %v1713 = vsel %vm1292, %v1690, 0
          %v1716 = vsel %vm1317, %v1666, 0
          %1718 = vmatprep.subr.bf16.mxu0 0
          %1719 = vmatpush1.bf16.msra.mxu0 %v1716
          %1720 = vmatprep.subr.bf16.mxu0 0
          %1721 = vmatpush1.bf16.msra.mxu0 0
          %1722 = vmatprep.subr.bf16.mxu0 0
          %1723 = vmatpush1.bf16.msra.mxu0 0
          %1724 = vmatprep.subr.bf16.mxu0 0
          %1725 = vmatpush1.bf16.msra.mxu0 0
          %1726 = vmatprep.subr.bf16.mxu0 0
          %1727 = vmatpush1.bf16.msra.mxu0 0
          %1728 = vmatprep.subr.bf16.mxu0 0
          %1729 = vmatpush1.bf16.msra.mxu0 0
          %1730 = vmatprep.subr.bf16.mxu0 0
          %1731 = vmatpush1.bf16.msra.mxu0 0
          %1732 = vmatprep.subr.bf16.mxu0 0
          %1733 = vmatpush1.bf16.msra.mxu0 0
          %1734 = vmatprep.subr.bf16.mxu0 0
          %1735 = vmatpush1.bf16.msra.mxu0 0
          %1736 = vmatprep.subr.bf16.mxu0 0
          %1737 = vmatpush1.bf16.msra.mxu0 0
          %1738 = vmatprep.subr.bf16.mxu0 0
          %1739 = vmatpush1.bf16.msra.mxu0 0
          %1740 = vmatprep.subr.bf16.mxu0 0
          %1741 = vmatpush1.bf16.msra.mxu0 0
          %1742 = vmatprep.subr.bf16.mxu0 0
          %1743 = vmatpush1.bf16.msra.mxu0 0
          %1744 = vmatprep.subr.bf16.mxu0 0
          %1745 = vmatpush1.bf16.msra.mxu0 0
          %1746 = vmatprep.subr.bf16.mxu0 0
          %1747 = vmatpush1.bf16.msra.mxu0 0
          %1748 = vmatprep.subr.bf16.mxu0 0
          %1749 = vmatpush1.bf16.msra.mxu0 0
          %1750 = vmatprep.mubr.bf16.mxu0 0
          %1751 = vmatmul.mubr.bf16.gmra.mrb[0].mxu0 %v1692
          %v1752 = vpop.f32.mrb[0].mxu0
          %v1753 = vadd.f32 0.0, %v1752
          %v1754 = vpop.f32.mrb[0].mxu0
          %v1755 = vpop.f32.mrb[0].mxu0
          %v1756 = vadd.f32 0.0, %v1755
          %v1757 = vpop.f32.mrb[0].mxu0
          %1758 = vmatprep.mubr.bf16.mxu0 0
          %1759 = vmatmul.mubr.bf16.gmra.mrb[0].mxu0 %v1695
          %v1760 = vpop.f32.mrb[0].mxu0
          %v1761 = vadd.f32 0.0, %v1760
          %v1762 = vpop.f32.mrb[0].mxu0
          %v1763 = vpop.f32.mrb[0].mxu0
          %v1764 = vadd.f32 0.0, %v1763
          %v1765 = vpop.f32.mrb[0].mxu0
          %1766 = vmatprep.mubr.bf16.mxu0 0
          %1767 = vmatmul.mubr.bf16.gmra.mrb[0].mxu0 %v1698
          %v1768 = vpop.f32.mrb[0].mxu0
          %v1769 = vadd.f32 0.0, %v1768
          %v1770 = vpop.f32.mrb[0].mxu0
          %v1771 = vpop.f32.mrb[0].mxu0
          %v1772 = vadd.f32 0.0, %v1771
          %v1773 = vpop.f32.mrb[0].mxu0
          %1774 = vmatprep.mubr.bf16.mxu0 0
          %1775 = vmatmul.mubr.bf16.gmra.mrb[0].mxu0 %v1701
          %v1776 = vpop.f32.mrb[0].mxu0
          %v1777 = vadd.f32 0.0, %v1776
          %v1778 = vpop.f32.mrb[0].mxu0
          %v1779 = vpop.f32.mrb[0].mxu0
          %v1780 = vadd.f32 0.0, %v1779
          %v1781 = vpop.f32.mrb[0].mxu0
          %1782 = vmatprep.mubr.bf16.mxu0 0
          %1783 = vmatmul.mubr.bf16.gmra.mrb[0].mxu0 %v1704
          %v1784 = vpop.f32.mrb[0].mxu0
          %v1785 = vadd.f32 0.0, %v1784
          %v1786 = vpop.f32.mrb[0].mxu0
          %v1787 = vpop.f32.mrb[0].mxu0
          %v1788 = vadd.f32 0.0, %v1787
          %v1789 = vpop.f32.mrb[0].mxu0
          %1790 = vmatprep.mubr.bf16.mxu0 0
          %1791 = vmatmul.mubr.bf16.gmra.mrb[0].mxu0 %v1707
          %v1792 = vpop.f32.mrb[0].mxu0
          %v1793 = vadd.f32 0.0, %v1792
          %v1794 = vpop.f32.mrb[0].mxu0
          %v1795 = vpop.f32.mrb[0].mxu0
          %v1796 = vadd.f32 0.0, %v1795
          %v1797 = vpop.f32.mrb[0].mxu0
          %1798 = vmatprep.mubr.bf16.mxu0 0
          %1799 = vmatmul.mubr.bf16.gmra.mrb[0].mxu0 %v1710
          %v1800 = vpop.f32.mrb[0].mxu0
          %v1801 = vadd.f32 0.0, %v1800
          %v1802 = vpop.f32.mrb[0].mxu0
          %v1803 = vpop.f32.mrb[0].mxu0
          %v1804 = vadd.f32 0.0, %v1803
          %v1805 = vpop.f32.mrb[0].mxu0
          %1806 = vmatprep.mubr.bf16.mxu0 0
          %1807 = vmatmul.mubr.bf16.gmra.mrb[0].mxu0 %v1713
          %v1808 = vpop.f32.mrb[0].mxu0
          %v1809 = vadd.f32 0.0, %v1808
          %v1810 = vpop.f32.mrb[0].mxu0
          %v1811 = vpop.f32.mrb[0].mxu0
          %v1812 = vadd.f32 0.0, %v1811
          %v1813 = vpop.f32.mrb[0].mxu0
          %1814 = vdwg.mxu0
          %v1815 = vadd.f32 %v1520, %v1753
          %v1816 = vadd.f32 %v1523, %v1756
          %v1817 = vadd.f32 %v1528, %v1761
          %v1818 = vadd.f32 %v1531, %v1764
          %v1819 = vadd.f32 %v1536, %v1769
          %v1820 = vadd.f32 %v1539, %v1772
          %v1821 = vadd.f32 %v1544, %v1777
          %v1822 = vadd.f32 %v1547, %v1780
          %v1823 = vadd.f32 %v1552, %v1785
          %v1824 = vadd.f32 %v1555, %v1788
          %v1825 = vadd.f32 %v1560, %v1793
          %v1826 = vadd.f32 %v1563, %v1796
          %v1827 = vadd.f32 %v1568, %v1801
          %v1828 = vadd.f32 %v1571, %v1804
          %v1829 = vadd.f32 %v1576, %v1809
          %v1830 = vadd.f32 %v1579, %v1812
          %s1831 = sadd.s32 %s1042, 1
          %s1832 = smul.u32 %s1831, 3
          %s1833 = smul.addr %s1832, 4
          %s1834 = scalar_lea.vmem [#allocation2], %s1833
          %v1835 = vld [vmem:[%s1834] sm:$0xf]
          %v1836 = vld [vmem:[%s1834 + $0x4] sm:$0xf]
          %v1837 = vld [vmem:[%s1834 + $0xc] sm:$0xf]
          %v1838 = vld [vmem:[%s1834 + $0x10] sm:$0xf]
          %v1839 = vld [vmem:[%s1834 + $0x18] sm:$0xf]
          %v1840 = vld [vmem:[%s1834 + $0x1c] sm:$0xf]
          %v1841 = vld [vmem:[%s1834 + $0x24] sm:$0xf]
          %v1842 = vld [vmem:[%s1834 + $0x28] sm:$0xf]
          %v1843 = vld [vmem:[%s1834 + $0x30] sm:$0xf]
          %v1844 = vld [vmem:[%s1834 + $0x34] sm:$0xf]
          %v1845 = vld [vmem:[%s1834 + $0x3c] sm:$0xf]
          %v1846 = vld [vmem:[%s1834 + $0x40] sm:$0xf]
          %v1847 = vld [vmem:[%s1834 + $0x48] sm:$0xf]
          %v1848 = vld [vmem:[%s1834 + $0x4c] sm:$0xf]
          %v1849 = vld [vmem:[%s1834 + $0x54] sm:$0xf]
          %v1850 = vld [vmem:[%s1834 + $0x58] sm:$0xf]
          %s1851 = scalar_lea.vmem %s4, 6
          %v1852 = vld [vmem:[%s1851] sm:$0x3]
          %v1869 = vunpack.c.l.b16 %v1835
          %v1870 = vunpack.c.l.b16 %v1836
          %v1871 = vunpack.c.l.b16 %v1837
          %v1872 = vunpack.c.l.b16 %v1838
          %v1873 = vunpack.c.l.b16 %v1839
          %v1874 = vunpack.c.l.b16 %v1840
          %v1875 = vunpack.c.l.b16 %v1841
          %v1876 = vunpack.c.l.b16 %v1842
          %v1877 = vunpack.c.l.b16 %v1843
          %v1878 = vunpack.c.l.b16 %v1844
          %v1879 = vunpack.c.l.b16 %v1845
          %v1880 = vunpack.c.l.b16 %v1846
          %v1881 = vunpack.c.l.b16 %v1847
          %v1882 = vunpack.c.l.b16 %v1848
          %v1883 = vunpack.c.l.b16 %v1849
          %v1884 = vunpack.c.l.b16 %v1850
          %v1885 = vpack.c.b16 %v1870, %v1869
          %v1886 = vpack.c.b16 %v1872, %v1871
          %v1887 = vpack.c.b16 %v1874, %v1873
          %v1888 = vpack.c.b16 %v1876, %v1875
          %v1889 = vpack.c.b16 %v1878, %v1877
          %v1890 = vpack.c.b16 %v1880, %v1879
          %v1891 = vpack.c.b16 %v1882, %v1881
          %v1892 = vpack.c.b16 %v1884, %v1883
          %v1894 = vsel %vm1292, %v1885, 0
          %v1897 = vsel %vm1292, %v1886, 0
          %v1900 = vsel %vm1292, %v1887, 0
          %v1903 = vsel %vm1292, %v1888, 0
          %v1906 = vsel %vm1292, %v1889, 0
          %v1909 = vsel %vm1292, %v1890, 0
          %v1912 = vsel %vm1292, %v1891, 0
          %v1915 = vsel %vm1292, %v1892, 0
          %v1918 = vsel %vm1317, %v1852, 0
          %1920 = vmatprep.subr.bf16.mxu0 0
          %1921 = vmatpush1.bf16.msra.mxu0 %v1918
          %1922 = vmatprep.subr.bf16.mxu0 0
          %1923 = vmatpush1.bf16.msra.mxu0 0
          %1924 = vmatprep.subr.bf16.mxu0 0
          %1925 = vmatpush1.bf16.msra.mxu0 0
          %1926 = vmatprep.subr.bf16.mxu0 0
          %1927 = vmatpush1.bf16.msra.mxu0 0
          %1928 = vmatprep.subr.bf16.mxu0 0
          %1929 = vmatpush1.bf16.msra.mxu0 0
          %1930 = vmatprep.subr.bf16.mxu0 0
          %1931 = vmatpush1.bf16.msra.mxu0 0
          %1932 = vmatprep.subr.bf16.mxu0 0
          %1933 = vmatpush1.bf16.msra.mxu0 0
          %1934 = vmatprep.subr.bf16.mxu0 0
          %1935 = vmatpush1.bf16.msra.mxu0 0
          %1936 = vmatprep.subr.bf16.mxu0 0
          %1937 = vmatpush1.bf16.msra.mxu0 0
          %1938 = vmatprep.subr.bf16.mxu0 0
          %1939 = vmatpush1.bf16.msra.mxu0 0
          %1940 = vmatprep.subr.bf16.mxu0 0
          %1941 = vmatpush1.bf16.msra.mxu0 0
          %1942 = vmatprep.subr.bf16.mxu0 0
          %1943 = vmatpush1.bf16.msra.mxu0 0
          %1944 = vmatprep.subr.bf16.mxu0 0
          %1945 = vmatpush1.bf16.msra.mxu0 0
          %1946 = vmatprep.subr.bf16.mxu0 0
          %1947 = vmatpush1.bf16.msra.mxu0 0
          %1948 = vmatprep.subr.bf16.mxu0 0
          %1949 = vmatpush1.bf16.msra.mxu0 0
          %1950 = vmatprep.subr.bf16.mxu0 0
          %1951 = vmatpush1.bf16.msra.mxu0 0
          %1952 = vmatprep.mubr.bf16.mxu0 0
          %1953 = vmatmul.mubr.bf16.gmra.mrb[0].mxu0 %v1894
          %v1954 = vpop.f32.mrb[0].mxu0
          %v1955 = vadd.f32 0.0, %v1954
          %v1956 = vpop.f32.mrb[0].mxu0
          %v1957 = vpop.f32.mrb[0].mxu0
          %v1958 = vadd.f32 0.0, %v1957
          %v1959 = vpop.f32.mrb[0].mxu0
          %1960 = vmatprep.mubr.bf16.mxu0 0
          %1961 = vmatmul.mubr.bf16.gmra.mrb[0].mxu0 %v1897
          %v1962 = vpop.f32.mrb[0].mxu0
          %v1963 = vadd.f32 0.0, %v1962
          %v1964 = vpop.f32.mrb[0].mxu0
          %v1965 = vpop.f32.mrb[0].mxu0
          %v1966 = vadd.f32 0.0, %v1965
          %v1967 = vpop.f32.mrb[0].mxu0
          %1968 = vmatprep.mubr.bf16.mxu0 0
          %1969 = vmatmul.mubr.bf16.gmra.mrb[0].mxu0 %v1900
          %v1970 = vpop.f32.mrb[0].mxu0
          %v1971 = vadd.f32 0.0, %v1970
          %v1972 = vpop.f32.mrb[0].mxu0
          %v1973 = vpop.f32.mrb[0].mxu0
          %v1974 = vadd.f32 0.0, %v1973
          %v1975 = vpop.f32.mrb[0].mxu0
          %1976 = vmatprep.mubr.bf16.mxu0 0
          %1977 = vmatmul.mubr.bf16.gmra.mrb[0].mxu0 %v1903
          %v1978 = vpop.f32.mrb[0].mxu0
          %v1979 = vadd.f32 0.0, %v1978
          %v1980 = vpop.f32.mrb[0].mxu0
          %v1981 = vpop.f32.mrb[0].mxu0
          %v1982 = vadd.f32 0.0, %v1981
          %v1983 = vpop.f32.mrb[0].mxu0
          %1984 = vmatprep.mubr.bf16.mxu0 0
          %1985 = vmatmul.mubr.bf16.gmra.mrb[0].mxu0 %v1906
          %v1986 = vpop.f32.mrb[0].mxu0
          %v1987 = vadd.f32 0.0, %v1986
          %v1988 = vpop.f32.mrb[0].mxu0
          %v1989 = vpop.f32.mrb[0].mxu0
          %v1990 = vadd.f32 0.0, %v1989
          %v1991 = vpop.f32.mrb[0].mxu0
          %1992 = vmatprep.mubr.bf16.mxu0 0
          %1993 = vmatmul.mubr.bf16.gmra.mrb[0].mxu0 %v1909
          %v1994 = vpop.f32.mrb[0].mxu0
          %v1995 = vadd.f32 0.0, %v1994
          %v1996 = vpop.f32.mrb[0].mxu0
          %v1997 = vpop.f32.mrb[0].mxu0
          %v1998 = vadd.f32 0.0, %v1997
          %v1999 = vpop.f32.mrb[0].mxu0
          %2000 = vmatprep.mubr.bf16.mxu0 0
          %2001 = vmatmul.mubr.bf16.gmra.mrb[0].mxu0 %v1912
          %v2002 = vpop.f32.mrb[0].mxu0
          %v2003 = vadd.f32 0.0, %v2002
          %v2004 = vpop.f32.mrb[0].mxu0
          %v2005 = vpop.f32.mrb[0].mxu0
          %v2006 = vadd.f32 0.0, %v2005
          %v2007 = vpop.f32.mrb[0].mxu0
          %2008 = vmatprep.mubr.bf16.mxu0 0
          %2009 = vmatmul.mubr.bf16.gmra.mrb[0].mxu0 %v1915
          %v2010 = vpop.f32.mrb[0].mxu0
          %v2011 = vadd.f32 0.0, %v2010
          %v2012 = vpop.f32.mrb[0].mxu0
          %v2013 = vpop.f32.mrb[0].mxu0
          %v2014 = vadd.f32 0.0, %v2013
          %v2015 = vpop.f32.mrb[0].mxu0
          %2016 = vdwg.mxu0
          %v2017 = vadd.f32 %v1815, %v1955
          %v2018 = vadd.f32 %v1816, %v1958
          %v2019 = vadd.f32 %v1817, %v1963
          %v2020 = vadd.f32 %v1818, %v1966
          %v2021 = vadd.f32 %v1819, %v1971
          %v2022 = vadd.f32 %v1820, %v1974
          %v2023 = vadd.f32 %v1821, %v1979
          %v2024 = vadd.f32 %v1822, %v1982
          %v2025 = vadd.f32 %v1823, %v1987
          %v2026 = vadd.f32 %v1824, %v1990
          %v2027 = vadd.f32 %v1825, %v1995
          %v2028 = vadd.f32 %v1826, %v1998
          %v2029 = vadd.f32 %v1827, %v2003
          %v2030 = vadd.f32 %v1828, %v2006
          %v2031 = vadd.f32 %v1829, %v2011
          %v2032 = vadd.f32 %v1830, %v2014
          %v2033 = vld [vmem:[%s1834] sm:$0xf]
          %v2034 = vld [vmem:[%s1834 + $0x4] sm:$0xf]
          %v2035 = vld [vmem:[%s1834 + $0x8] sm:$0x1]
          %v2036 = vld [vmem:[%s1834 + $0xc] sm:$0xf]
          %v2037 = vld [vmem:[%s1834 + $0x10] sm:$0xf]
          %v2038 = vld [vmem:[%s1834 + $0x14] sm:$0x1]
          %v2039 = vld [vmem:[%s1834 + $0x18] sm:$0xf]
          %v2040 = vld [vmem:[%s1834 + $0x1c] sm:$0xf]
          %v2041 = vld [vmem:[%s1834 + $0x20] sm:$0x1]
          %v2042 = vld [vmem:[%s1834 + $0x24] sm:$0xf]
          %v2043 = vld [vmem:[%s1834 + $0x28] sm:$0xf]
          %v2044 = vld [vmem:[%s1834 + $0x2c] sm:$0x1]
          %v2045 = vld [vmem:[%s1834 + $0x30] sm:$0xf]
          %v2046 = vld [vmem:[%s1834 + $0x34] sm:$0xf]
          %v2047 = vld [vmem:[%s1834 + $0x38] sm:$0x1]
          %v2048 = vld [vmem:[%s1834 + $0x3c] sm:$0xf]
          %v2049 = vld [vmem:[%s1834 + $0x40] sm:$0xf]
          %v2050 = vld [vmem:[%s1834 + $0x44] sm:$0x1]
          %v2051 = vld [vmem:[%s1834 + $0x48] sm:$0xf]
          %v2052 = vld [vmem:[%s1834 + $0x4c] sm:$0xf]
          %v2053 = vld [vmem:[%s1834 + $0x50] sm:$0x1]
          %v2054 = vld [vmem:[%s1834 + $0x54] sm:$0xf]
          %v2055 = vld [vmem:[%s1834 + $0x58] sm:$0xf]
          %v2056 = vld [vmem:[%s1834 + $0x5c] sm:$0x1]
          %v2058 = vshrl.u32 %v2033, 16
          %v2060 = vrot.slane %v2058, 4
          %v2061 = vshll.u32 %v2033, 16
          %v2063 = vrot.slane %v2061, 5
          %v2064 = vor.u32 %v2060, %v2063
          %v2065 = vrot.slane %v2064, 4
          %v2067 = vshll.u32 %v2034, 16
          %v2069 = vrot.slane %v2067, 5
          %v2070 = vsel %vm1073, %v2065, %v2069
          %v2071 = vshrl.u32 %v2034, 16
          %v2073 = vrot.slane %v2071, 4
          %v2074 = vor.u32 %v2073, %v2069
          %v2075 = vrot.slane %v2074, 4
          %v2077 = vshll.u32 %v2035, 16
          %v2079 = vrot.slane %v2077, 5
          %v2080 = vsel %vm1073, %v2075, %v2079
          %v2082 = vshrl.u32 %v2036, 16
          %v2084 = vrot.slane %v2082, 4
          %v2085 = vshll.u32 %v2036, 16
          %v2087 = vrot.slane %v2085, 5
          %v2088 = vor.u32 %v2084, %v2087
          %v2089 = vrot.slane %v2088, 4
          %v2091 = vshll.u32 %v2037, 16
          %v2093 = vrot.slane %v2091, 5
          %v2094 = vsel %vm1073, %v2089, %v2093
          %v2095 = vshrl.u32 %v2037, 16
          %v2097 = vrot.slane %v2095, 4
          %v2098 = vor.u32 %v2097, %v2093
          %v2099 = vrot.slane %v2098, 4
          %v2101 = vshll.u32 %v2038, 16
          %v2103 = vrot.slane %v2101, 5
          %v2104 = vsel %vm1073, %v2099, %v2103
          %v2106 = vshrl.u32 %v2039, 16
          %v2108 = vrot.slane %v2106, 4
          %v2109 = vshll.u32 %v2039, 16
          %v2111 = vrot.slane %v2109, 5
          %v2112 = vor.u32 %v2108, %v2111
          %v2113 = vrot.slane %v2112, 4
          %v2115 = vshll.u32 %v2040, 16
          %v2117 = vrot.slane %v2115, 5
          %v2118 = vsel %vm1073, %v2113, %v2117
          %v2119 = vshrl.u32 %v2040, 16
          %v2121 = vrot.slane %v2119, 4
          %v2122 = vor.u32 %v2121, %v2117
          %v2123 = vrot.slane %v2122, 4
          %v2125 = vshll.u32 %v2041, 16
          %v2127 = vrot.slane %v2125, 5
          %v2128 = vsel %vm1073, %v2123, %v2127
          %v2130 = vshrl.u32 %v2042, 16
          %v2132 = vrot.slane %v2130, 4
          %v2133 = vshll.u32 %v2042, 16
          %v2135 = vrot.slane %v2133, 5
          %v2136 = vor.u32 %v2132, %v2135
          %v2137 = vrot.slane %v2136, 4
          %v2139 = vshll.u32 %v2043, 16
          %v2141 = vrot.slane %v2139, 5
          %v2142 = vsel %vm1073, %v2137, %v2141
          %v2143 = vshrl.u32 %v2043, 16
          %v2145 = vrot.slane %v2143, 4
          %v2146 = vor.u32 %v2145, %v2141
          %v2147 = vrot.slane %v2146, 4
          %v2149 = vshll.u32 %v2044, 16
          %v2151 = vrot.slane %v2149, 5
          %v2152 = vsel %vm1073, %v2147, %v2151
          %v2154 = vshrl.u32 %v2045, 16
          %v2156 = vrot.slane %v2154, 4
          %v2157 = vshll.u32 %v2045, 16
          %v2159 = vrot.slane %v2157, 5
          %v2160 = vor.u32 %v2156, %v2159
          %v2161 = vrot.slane %v2160, 4
          %v2163 = vshll.u32 %v2046, 16
          %v2165 = vrot.slane %v2163, 5
          %v2166 = vsel %vm1073, %v2161, %v2165
          %v2167 = vshrl.u32 %v2046, 16
          %v2169 = vrot.slane %v2167, 4
          %v2170 = vor.u32 %v2169, %v2165
          %v2171 = vrot.slane %v2170, 4
          %v2173 = vshll.u32 %v2047, 16
          %v2175 = vrot.slane %v2173, 5
          %v2176 = vsel %vm1073, %v2171, %v2175
          %v2178 = vshrl.u32 %v2048, 16
          %v2180 = vrot.slane %v2178, 4
          %v2181 = vshll.u32 %v2048, 16
          %v2183 = vrot.slane %v2181, 5
          %v2184 = vor.u32 %v2180, %v2183
          %v2185 = vrot.slane %v2184, 4
          %v2187 = vshll.u32 %v2049, 16
          %v2189 = vrot.slane %v2187, 5
          %v2190 = vsel %vm1073, %v2185, %v2189
          %v2191 = vshrl.u32 %v2049, 16
          %v2193 = vrot.slane %v2191, 4
          %v2194 = vor.u32 %v2193, %v2189
          %v2195 = vrot.slane %v2194, 4
          %v2197 = vshll.u32 %v2050, 16
          %v2199 = vrot.slane %v2197, 5
          %v2200 = vsel %vm1073, %v2195, %v2199
          %v2202 = vshrl.u32 %v2051, 16
          %v2204 = vrot.slane %v2202, 4
          %v2205 = vshll.u32 %v2051, 16
          %v2207 = vrot.slane %v2205, 5
          %v2208 = vor.u32 %v2204, %v2207
          %v2209 = vrot.slane %v2208, 4
          %v2211 = vshll.u32 %v2052, 16
          %v2213 = vrot.slane %v2211, 5
          %v2214 = vsel %vm1073, %v2209, %v2213
          %v2215 = vshrl.u32 %v2052, 16
          %v2217 = vrot.slane %v2215, 4
          %v2218 = vor.u32 %v2217, %v2213
          %v2219 = vrot.slane %v2218, 4
          %v2221 = vshll.u32 %v2053, 16
          %v2223 = vrot.slane %v2221, 5
          %v2224 = vsel %vm1073, %v2219, %v2223
          %v2226 = vshrl.u32 %v2054, 16
          %v2228 = vrot.slane %v2226, 4
          %v2229 = vshll.u32 %v2054, 16
          %v2231 = vrot.slane %v2229, 5
          %v2232 = vor.u32 %v2228, %v2231
          %v2233 = vrot.slane %v2232, 4
          %v2235 = vshll.u32 %v2055, 16
          %v2237 = vrot.slane %v2235, 5
          %v2238 = vsel %vm1073, %v2233, %v2237
          %v2239 = vshrl.u32 %v2055, 16
          %v2241 = vrot.slane %v2239, 4
          %v2242 = vor.u32 %v2241, %v2237
          %v2243 = vrot.slane %v2242, 4
          %v2245 = vshll.u32 %v2056, 16
          %v2247 = vrot.slane %v2245, 5
          %v2248 = vsel %vm1073, %v2243, %v2247
          %s2249 = scalar_lea.vmem %s4, 8
          %v2250 = vld [vmem:[%s2249] sm:$0x3]
          %v2251 = vunpack.c.l.b16 %v2070
          %v2252 = vunpack.c.l.b16 %v2080
          %v2253 = vunpack.c.l.b16 %v2094
          %v2254 = vunpack.c.l.b16 %v2104
          %v2255 = vunpack.c.l.b16 %v2118
          %v2256 = vunpack.c.l.b16 %v2128
          %v2257 = vunpack.c.l.b16 %v2142
          %v2258 = vunpack.c.l.b16 %v2152
          %v2259 = vunpack.c.l.b16 %v2166
          %v2260 = vunpack.c.l.b16 %v2176
          %v2261 = vunpack.c.l.b16 %v2190
          %v2262 = vunpack.c.l.b16 %v2200
          %v2263 = vunpack.c.l.b16 %v2214
          %v2264 = vunpack.c.l.b16 %v2224
          %v2265 = vunpack.c.l.b16 %v2238
          %v2266 = vunpack.c.l.b16 %v2248
          %v2267 = vpack.c.b16 %v2252, %v2251
          %v2268 = vpack.c.b16 %v2254, %v2253
          %v2269 = vpack.c.b16 %v2256, %v2255
          %v2270 = vpack.c.b16 %v2258, %v2257
          %v2271 = vpack.c.b16 %v2260, %v2259
          %v2272 = vpack.c.b16 %v2262, %v2261
          %v2273 = vpack.c.b16 %v2264, %v2263
          %v2274 = vpack.c.b16 %v2266, %v2265
          %v2276 = vsel %vm1292, %v2267, 0
          %v2279 = vsel %vm1292, %v2268, 0
          %v2282 = vsel %vm1292, %v2269, 0
          %v2285 = vsel %vm1292, %v2270, 0
          %v2288 = vsel %vm1292, %v2271, 0
          %v2291 = vsel %vm1292, %v2272, 0
          %v2294 = vsel %vm1292, %v2273, 0
          %v2297 = vsel %vm1292, %v2274, 0
          %v2300 = vsel %vm1317, %v2250, 0
          %2302 = vmatprep.subr.bf16.mxu0 0
          %2303 = vmatpush1.bf16.msra.mxu0 %v2300
          %2304 = vmatprep.subr.bf16.mxu0 0
          %2305 = vmatpush1.bf16.msra.mxu0 0
          %2306 = vmatprep.subr.bf16.mxu0 0
          %2307 = vmatpush1.bf16.msra.mxu0 0
          %2308 = vmatprep.subr.bf16.mxu0 0
          %2309 = vmatpush1.bf16.msra.mxu0 0
          %2310 = vmatprep.subr.bf16.mxu0 0
          %2311 = vmatpush1.bf16.msra.mxu0 0
          %2312 = vmatprep.subr.bf16.mxu0 0
          %2313 = vmatpush1.bf16.msra.mxu0 0
          %2314 = vmatprep.subr.bf16.mxu0 0
          %2315 = vmatpush1.bf16.msra.mxu0 0
          %2316 = vmatprep.subr.bf16.mxu0 0
          %2317 = vmatpush1.bf16.msra.mxu0 0
          %2318 = vmatprep.subr.bf16.mxu0 0
          %2319 = vmatpush1.bf16.msra.mxu0 0
          %2320 = vmatprep.subr.bf16.mxu0 0
          %2321 = vmatpush1.bf16.msra.mxu0 0
          %2322 = vmatprep.subr.bf16.mxu0 0
          %2323 = vmatpush1.bf16.msra.mxu0 0
          %2324 = vmatprep.subr.bf16.mxu0 0
          %2325 = vmatpush1.bf16.msra.mxu0 0
          %2326 = vmatprep.subr.bf16.mxu0 0
          %2327 = vmatpush1.bf16.msra.mxu0 0
          %2328 = vmatprep.subr.bf16.mxu0 0
          %2329 = vmatpush1.bf16.msra.mxu0 0
          %2330 = vmatprep.subr.bf16.mxu0 0
          %2331 = vmatpush1.bf16.msra.mxu0 0
          %2332 = vmatprep.subr.bf16.mxu0 0
          %2333 = vmatpush1.bf16.msra.mxu0 0
          %2334 = vmatprep.mubr.bf16.mxu0 0
          %2335 = vmatmul.mubr.bf16.gmra.mrb[0].mxu0 %v2276
          %v2336 = vpop.f32.mrb[0].mxu0
          %v2337 = vadd.f32 0.0, %v2336
          %v2338 = vpop.f32.mrb[0].mxu0
          %v2339 = vpop.f32.mrb[0].mxu0
          %v2340 = vadd.f32 0.0, %v2339
          %v2341 = vpop.f32.mrb[0].mxu0
          %2342 = vmatprep.mubr.bf16.mxu0 0
          %2343 = vmatmul.mubr.bf16.gmra.mrb[0].mxu0 %v2279
          %v2344 = vpop.f32.mrb[0].mxu0
          %v2345 = vadd.f32 0.0, %v2344
          %v2346 = vpop.f32.mrb[0].mxu0
          %v2347 = vpop.f32.mrb[0].mxu0
          %v2348 = vadd.f32 0.0, %v2347
          %v2349 = vpop.f32.mrb[0].mxu0
          %2350 = vmatprep.mubr.bf16.mxu0 0
          %2351 = vmatmul.mubr.bf16.gmra.mrb[0].mxu0 %v2282
          %v2352 = vpop.f32.mrb[0].mxu0
          %v2353 = vadd.f32 0.0, %v2352
          %v2354 = vpop.f32.mrb[0].mxu0
          %v2355 = vpop.f32.mrb[0].mxu0
          %v2356 = vadd.f32 0.0, %v2355
          %v2357 = vpop.f32.mrb[0].mxu0
          %2358 = vmatprep.mubr.bf16.mxu0 0
          %2359 = vmatmul.mubr.bf16.gmra.mrb[0].mxu0 %v2285
          %v2360 = vpop.f32.mrb[0].mxu0
          %v2361 = vadd.f32 0.0, %v2360
          %v2362 = vpop.f32.mrb[0].mxu0
          %v2363 = vpop.f32.mrb[0].mxu0
          %v2364 = vadd.f32 0.0, %v2363
          %v2365 = vpop.f32.mrb[0].mxu0
          %2366 = vmatprep.mubr.bf16.mxu0 0
          %2367 = vmatmul.mubr.bf16.gmra.mrb[0].mxu0 %v2288
          %v2368 = vpop.f32.mrb[0].mxu0
          %v2369 = vadd.f32 0.0, %v2368
          %v2370 = vpop.f32.mrb[0].mxu0
          %v2371 = vpop.f32.mrb[0].mxu0
          %v2372 = vadd.f32 0.0, %v2371
          %v2373 = vpop.f32.mrb[0].mxu0
          %2374 = vmatprep.mubr.bf16.mxu0 0
          %2375 = vmatmul.mubr.bf16.gmra.mrb[0].mxu0 %v2291
          %v2376 = vpop.f32.mrb[0].mxu0
          %v2377 = vadd.f32 0.0, %v2376
          %v2378 = vpop.f32.mrb[0].mxu0
          %v2379 = vpop.f32.mrb[0].mxu0
          %v2380 = vadd.f32 0.0, %v2379
          %v2381 = vpop.f32.mrb[0].mxu0
          %2382 = vmatprep.mubr.bf16.mxu0 0
          %2383 = vmatmul.mubr.bf16.gmra.mrb[0].mxu0 %v2294
          %v2384 = vpop.f32.mrb[0].mxu0
          %v2385 = vadd.f32 0.0, %v2384
          %v2386 = vpop.f32.mrb[0].mxu0
          %v2387 = vpop.f32.mrb[0].mxu0
          %v2388 = vadd.f32 0.0, %v2387
          %v2389 = vpop.f32.mrb[0].mxu0
          %2390 = vmatprep.mubr.bf16.mxu0 0
          %2391 = vmatmul.mubr.bf16.gmra.mrb[0].mxu0 %v2297
          %v2392 = vpop.f32.mrb[0].mxu0
          %v2393 = vadd.f32 0.0, %v2392
          %v2394 = vpop.f32.mrb[0].mxu0
          %v2395 = vpop.f32.mrb[0].mxu0
          %v2396 = vadd.f32 0.0, %v2395
          %v2397 = vpop.f32.mrb[0].mxu0
          %2398 = vdwg.mxu0
          %v2399 = vadd.f32 %v2017, %v2337
          %v2400 = vadd.f32 %v2018, %v2340
          %v2401 = vadd.f32 %v2019, %v2345
          %v2402 = vadd.f32 %v2020, %v2348
          %v2403 = vadd.f32 %v2021, %v2353
          %v2404 = vadd.f32 %v2022, %v2356
          %v2405 = vadd.f32 %v2023, %v2361
          %v2406 = vadd.f32 %v2024, %v2364
          %v2407 = vadd.f32 %v2025, %v2369
          %v2408 = vadd.f32 %v2026, %v2372
          %v2409 = vadd.f32 %v2027, %v2377
          %v2410 = vadd.f32 %v2028, %v2380
          %v2411 = vadd.f32 %v2029, %v2385
          %v2412 = vadd.f32 %v2030, %v2388
          %v2413 = vadd.f32 %v2031, %v2393
          %v2414 = vadd.f32 %v2032, %v2396
          %v2415 = vld [vmem:[%s1834] sm:$0xe]
          %v2416 = vld [vmem:[%s1834 + $0xc] sm:$0xe]
          %v2417 = vld [vmem:[%s1834 + $0x18] sm:$0xe]
          %v2418 = vld [vmem:[%s1834 + $0x24] sm:$0xe]
          %v2419 = vld [vmem:[%s1834 + $0x30] sm:$0xe]
          %v2420 = vld [vmem:[%s1834 + $0x3c] sm:$0xe]
          %v2421 = vld [vmem:[%s1834 + $0x48] sm:$0xe]
          %v2422 = vld [vmem:[%s1834 + $0x54] sm:$0xe]
          %v2447 = vrot.slane %v2415, 5
          %v2448 = vrot.slane %v2447, 4
          %v2449 = vrot.slane %v2034, 5
          %v2450 = vsel %vm1608, %v2448, %v2449
          %v2451 = vrot.slane %v2449, 4
          %v2452 = vrot.slane %v2035, 5
          %v2453 = vsel %vm1608, %v2451, %v2452
          %v2454 = vrot.slane %v2416, 5
          %v2455 = vrot.slane %v2454, 4
          %v2456 = vrot.slane %v2037, 5
          %v2457 = vsel %vm1608, %v2455, %v2456
          %v2458 = vrot.slane %v2456, 4
          %v2459 = vrot.slane %v2038, 5
          %v2460 = vsel %vm1608, %v2458, %v2459
          %v2461 = vrot.slane %v2417, 5
          %v2462 = vrot.slane %v2461, 4
          %v2463 = vrot.slane %v2040, 5
          %v2464 = vsel %vm1608, %v2462, %v2463
          %v2465 = vrot.slane %v2463, 4
          %v2466 = vrot.slane %v2041, 5
          %v2467 = vsel %vm1608, %v2465, %v2466
          %v2468 = vrot.slane %v2418, 5
          %v2469 = vrot.slane %v2468, 4
          %v2470 = vrot.slane %v2043, 5
          %v2471 = vsel %vm1608, %v2469, %v2470
          %v2472 = vrot.slane %v2470, 4
          %v2473 = vrot.slane %v2044, 5
          %v2474 = vsel %vm1608, %v2472, %v2473
          %v2475 = vrot.slane %v2419, 5
          %v2476 = vrot.slane %v2475, 4
          %v2477 = vrot.slane %v2046, 5
          %v2478 = vsel %vm1608, %v2476, %v2477
          %v2479 = vrot.slane %v2477, 4
          %v2480 = vrot.slane %v2047, 5
          %v2481 = vsel %vm1608, %v2479, %v2480
          %v2482 = vrot.slane %v2420, 5
          %v2483 = vrot.slane %v2482, 4
          %v2484 = vrot.slane %v2049, 5
          %v2485 = vsel %vm1608, %v2483, %v2484
          %v2486 = vrot.slane %v2484, 4
          %v2487 = vrot.slane %v2050, 5
          %v2488 = vsel %vm1608, %v2486, %v2487
          %v2489 = vrot.slane %v2421, 5
          %v2490 = vrot.slane %v2489, 4
          %v2491 = vrot.slane %v2052, 5
          %v2492 = vsel %vm1608, %v2490, %v2491
          %v2493 = vrot.slane %v2491, 4
          %v2494 = vrot.slane %v2053, 5
          %v2495 = vsel %vm1608, %v2493, %v2494
          %v2496 = vrot.slane %v2422, 5
          %v2497 = vrot.slane %v2496, 4
          %v2498 = vrot.slane %v2055, 5
          %v2499 = vsel %vm1608, %v2497, %v2498
          %v2500 = vrot.slane %v2498, 4
          %v2501 = vrot.slane %v2056, 5
          %v2502 = vsel %vm1608, %v2500, %v2501
          %s2503 = scalar_lea.vmem %s4, 10
          %v2504 = vld [vmem:[%s2503] sm:$0x3]
          %v2505 = vunpack.c.l.b16 %v2450
          %v2506 = vunpack.c.l.b16 %v2453
          %v2507 = vunpack.c.l.b16 %v2457
          %v2508 = vunpack.c.l.b16 %v2460
          %v2509 = vunpack.c.l.b16 %v2464
          %v2510 = vunpack.c.l.b16 %v2467
          %v2511 = vunpack.c.l.b16 %v2471
          %v2512 = vunpack.c.l.b16 %v2474
          %v2513 = vunpack.c.l.b16 %v2478
          %v2514 = vunpack.c.l.b16 %v2481
          %v2515 = vunpack.c.l.b16 %v2485
          %v2516 = vunpack.c.l.b16 %v2488
          %v2517 = vunpack.c.l.b16 %v2492
          %v2518 = vunpack.c.l.b16 %v2495
          %v2519 = vunpack.c.l.b16 %v2499
          %v2520 = vunpack.c.l.b16 %v2502
          %v2521 = vpack.c.b16 %v2506, %v2505
          %v2522 = vpack.c.b16 %v2508, %v2507
          %v2523 = vpack.c.b16 %v2510, %v2509
          %v2524 = vpack.c.b16 %v2512, %v2511
          %v2525 = vpack.c.b16 %v2514, %v2513
          %v2526 = vpack.c.b16 %v2516, %v2515
          %v2527 = vpack.c.b16 %v2518, %v2517
          %v2528 = vpack.c.b16 %v2520, %v2519
          %v2530 = vsel %vm1292, %v2521, 0
          %v2533 = vsel %vm1292, %v2522, 0
          %v2536 = vsel %vm1292, %v2523, 0
          %v2539 = vsel %vm1292, %v2524, 0
          %v2542 = vsel %vm1292, %v2525, 0
          %v2545 = vsel %vm1292, %v2526, 0
          %v2548 = vsel %vm1292, %v2527, 0
          %v2551 = vsel %vm1292, %v2528, 0
          %v2554 = vsel %vm1317, %v2504, 0
          %2556 = vmatprep.subr.bf16.mxu0 0
          %2557 = vmatpush1.bf16.msra.mxu0 %v2554
          %2558 = vmatprep.subr.bf16.mxu0 0
          %2559 = vmatpush1.bf16.msra.mxu0 0
          %2560 = vmatprep.subr.bf16.mxu0 0
          %2561 = vmatpush1.bf16.msra.mxu0 0
          %2562 = vmatprep.subr.bf16.mxu0 0
          %2563 = vmatpush1.bf16.msra.mxu0 0
          %2564 = vmatprep.subr.bf16.mxu0 0
          %2565 = vmatpush1.bf16.msra.mxu0 0
          %2566 = vmatprep.subr.bf16.mxu0 0
          %2567 = vmatpush1.bf16.msra.mxu0 0
          %2568 = vmatprep.subr.bf16.mxu0 0
          %2569 = vmatpush1.bf16.msra.mxu0 0
          %2570 = vmatprep.subr.bf16.mxu0 0
          %2571 = vmatpush1.bf16.msra.mxu0 0
          %2572 = vmatprep.subr.bf16.mxu0 0
          %2573 = vmatpush1.bf16.msra.mxu0 0
          %2574 = vmatprep.subr.bf16.mxu0 0
          %2575 = vmatpush1.bf16.msra.mxu0 0
          %2576 = vmatprep.subr.bf16.mxu0 0
          %2577 = vmatpush1.bf16.msra.mxu0 0
          %2578 = vmatprep.subr.bf16.mxu0 0
          %2579 = vmatpush1.bf16.msra.mxu0 0
          %2580 = vmatprep.subr.bf16.mxu0 0
          %2581 = vmatpush1.bf16.msra.mxu0 0
          %2582 = vmatprep.subr.bf16.mxu0 0
          %2583 = vmatpush1.bf16.msra.mxu0 0
          %2584 = vmatprep.subr.bf16.mxu0 0
          %2585 = vmatpush1.bf16.msra.mxu0 0
          %2586 = vmatprep.subr.bf16.mxu0 0
          %2587 = vmatpush1.bf16.msra.mxu0 0
          %2588 = vmatprep.mubr.bf16.mxu0 0
          %2589 = vmatmul.mubr.bf16.gmra.mrb[0].mxu0 %v2530
          %v2590 = vpop.f32.mrb[0].mxu0
          %v2591 = vadd.f32 0.0, %v2590
          %v2592 = vpop.f32.mrb[0].mxu0
          %v2593 = vpop.f32.mrb[0].mxu0
          %v2594 = vadd.f32 0.0, %v2593
          %v2595 = vpop.f32.mrb[0].mxu0
          %2596 = vmatprep.mubr.bf16.mxu0 0
          %2597 = vmatmul.mubr.bf16.gmra.mrb[0].mxu0 %v2533
          %v2598 = vpop.f32.mrb[0].mxu0
          %v2599 = vadd.f32 0.0, %v2598
          %v2600 = vpop.f32.mrb[0].mxu0
          %v2601 = vpop.f32.mrb[0].mxu0
          %v2602 = vadd.f32 0.0, %v2601
          %v2603 = vpop.f32.mrb[0].mxu0
          %2604 = vmatprep.mubr.bf16.mxu0 0
          %2605 = vmatmul.mubr.bf16.gmra.mrb[0].mxu0 %v2536
          %v2606 = vpop.f32.mrb[0].mxu0
          %v2607 = vadd.f32 0.0, %v2606
          %v2608 = vpop.f32.mrb[0].mxu0
          %v2609 = vpop.f32.mrb[0].mxu0
          %v2610 = vadd.f32 0.0, %v2609
          %v2611 = vpop.f32.mrb[0].mxu0
          %2612 = vmatprep.mubr.bf16.mxu0 0
          %2613 = vmatmul.mubr.bf16.gmra.mrb[0].mxu0 %v2539
          %v2614 = vpop.f32.mrb[0].mxu0
          %v2615 = vadd.f32 0.0, %v2614
          %v2616 = vpop.f32.mrb[0].mxu0
          %v2617 = vpop.f32.mrb[0].mxu0
          %v2618 = vadd.f32 0.0, %v2617
          %v2619 = vpop.f32.mrb[0].mxu0
          %2620 = vmatprep.mubr.bf16.mxu0 0
          %2621 = vmatmul.mubr.bf16.gmra.mrb[0].mxu0 %v2542
          %v2622 = vpop.f32.mrb[0].mxu0
          %v2623 = vadd.f32 0.0, %v2622
          %v2624 = vpop.f32.mrb[0].mxu0
          %v2625 = vpop.f32.mrb[0].mxu0
          %v2626 = vadd.f32 0.0, %v2625
          %v2627 = vpop.f32.mrb[0].mxu0
          %2628 = vmatprep.mubr.bf16.mxu0 0
          %2629 = vmatmul.mubr.bf16.gmra.mrb[0].mxu0 %v2545
          %v2630 = vpop.f32.mrb[0].mxu0
          %v2631 = vadd.f32 0.0, %v2630
          %v2632 = vpop.f32.mrb[0].mxu0
          %v2633 = vpop.f32.mrb[0].mxu0
          %v2634 = vadd.f32 0.0, %v2633
          %v2635 = vpop.f32.mrb[0].mxu0
          %2636 = vmatprep.mubr.bf16.mxu0 0
          %2637 = vmatmul.mubr.bf16.gmra.mrb[0].mxu0 %v2548
          %v2638 = vpop.f32.mrb[0].mxu0
          %v2639 = vadd.f32 0.0, %v2638
          %v2640 = vpop.f32.mrb[0].mxu0
          %v2641 = vpop.f32.mrb[0].mxu0
          %v2642 = vadd.f32 0.0, %v2641
          %v2643 = vpop.f32.mrb[0].mxu0
          %2644 = vmatprep.mubr.bf16.mxu0 0
          %2645 = vmatmul.mubr.bf16.gmra.mrb[0].mxu0 %v2551
          %v2646 = vpop.f32.mrb[0].mxu0
          %v2647 = vadd.f32 0.0, %v2646
          %v2648 = vpop.f32.mrb[0].mxu0
          %v2649 = vpop.f32.mrb[0].mxu0
          %v2650 = vadd.f32 0.0, %v2649
          %v2651 = vpop.f32.mrb[0].mxu0
          %2652 = vdwg.mxu0
          %v2653 = vadd.f32 %v2399, %v2591
          %v2654 = vadd.f32 %v2400, %v2594
          %v2655 = vadd.f32 %v2401, %v2599
          %v2656 = vadd.f32 %v2402, %v2602
          %v2657 = vadd.f32 %v2403, %v2607
          %v2658 = vadd.f32 %v2404, %v2610
          %v2659 = vadd.f32 %v2405, %v2615
          %v2660 = vadd.f32 %v2406, %v2618
          %v2661 = vadd.f32 %v2407, %v2623
          %v2662 = vadd.f32 %v2408, %v2626
          %v2663 = vadd.f32 %v2409, %v2631
          %v2664 = vadd.f32 %v2410, %v2634
          %v2665 = vadd.f32 %v2411, %v2639
          %v2666 = vadd.f32 %v2412, %v2642
          %v2667 = vadd.f32 %v2413, %v2647
          %v2668 = vadd.f32 %v2414, %v2650
          %s2669 = sadd.s32 %s1042, 2
          %s2670 = smul.u32 %s2669, 3
          %s2671 = smul.addr %s2670, 4
          %s2672 = scalar_lea.vmem [#allocation2], %s2671
          %v2673 = vld [vmem:[%s2672] sm:$0xf]
          %v2674 = vld [vmem:[%s2672 + $0x4] sm:$0xf]
          %v2675 = vld [vmem:[%s2672 + $0xc] sm:$0xf]
          %v2676 = vld [vmem:[%s2672 + $0x10] sm:$0xf]
          %v2677 = vld [vmem:[%s2672 + $0x18] sm:$0xf]
          %v2678 = vld [vmem:[%s2672 + $0x1c] sm:$0xf]
          %v2679 = vld [vmem:[%s2672 + $0x24] sm:$0xf]
          %v2680 = vld [vmem:[%s2672 + $0x28] sm:$0xf]
          %v2681 = vld [vmem:[%s2672 + $0x30] sm:$0xf]
          %v2682 = vld [vmem:[%s2672 + $0x34] sm:$0xf]
          %v2683 = vld [vmem:[%s2672 + $0x3c] sm:$0xf]
          %v2684 = vld [vmem:[%s2672 + $0x40] sm:$0xf]
          %v2685 = vld [vmem:[%s2672 + $0x48] sm:$0xf]
          %v2686 = vld [vmem:[%s2672 + $0x4c] sm:$0xf]
          %v2687 = vld [vmem:[%s2672 + $0x54] sm:$0xf]
          %v2688 = vld [vmem:[%s2672 + $0x58] sm:$0xf]
          %s2689 = scalar_lea.vmem %s4, 12
          %v2690 = vld [vmem:[%s2689] sm:$0x3]
          %v2707 = vunpack.c.l.b16 %v2673
          %v2708 = vunpack.c.l.b16 %v2674
          %v2709 = vunpack.c.l.b16 %v2675
          %v2710 = vunpack.c.l.b16 %v2676
          %v2711 = vunpack.c.l.b16 %v2677
          %v2712 = vunpack.c.l.b16 %v2678
          %v2713 = vunpack.c.l.b16 %v2679
          %v2714 = vunpack.c.l.b16 %v2680
          %v2715 = vunpack.c.l.b16 %v2681
          %v2716 = vunpack.c.l.b16 %v2682
          %v2717 = vunpack.c.l.b16 %v2683
          %v2718 = vunpack.c.l.b16 %v2684
          %v2719 = vunpack.c.l.b16 %v2685
          %v2720 = vunpack.c.l.b16 %v2686
          %v2721 = vunpack.c.l.b16 %v2687
          %v2722 = vunpack.c.l.b16 %v2688
          %v2723 = vpack.c.b16 %v2708, %v2707
          %v2724 = vpack.c.b16 %v2710, %v2709
          %v2725 = vpack.c.b16 %v2712, %v2711
          %v2726 = vpack.c.b16 %v2714, %v2713
          %v2727 = vpack.c.b16 %v2716, %v2715
          %v2728 = vpack.c.b16 %v2718, %v2717
          %v2729 = vpack.c.b16 %v2720, %v2719
          %v2730 = vpack.c.b16 %v2722, %v2721
          %v2732 = vsel %vm1292, %v2723, 0
          %v2735 = vsel %vm1292, %v2724, 0
          %v2738 = vsel %vm1292, %v2725, 0
          %v2741 = vsel %vm1292, %v2726, 0
          %v2744 = vsel %vm1292, %v2727, 0
          %v2747 = vsel %vm1292, %v2728, 0
          %v2750 = vsel %vm1292, %v2729, 0
          %v2753 = vsel %vm1292, %v2730, 0
          %v2756 = vsel %vm1317, %v2690, 0
          %2758 = vmatprep.subr.bf16.mxu0 0
          %2759 = vmatpush1.bf16.msra.mxu0 %v2756
          %2760 = vmatprep.subr.bf16.mxu0 0
          %2761 = vmatpush1.bf16.msra.mxu0 0
          %2762 = vmatprep.subr.bf16.mxu0 0
          %2763 = vmatpush1.bf16.msra.mxu0 0
          %2764 = vmatprep.subr.bf16.mxu0 0
          %2765 = vmatpush1.bf16.msra.mxu0 0
          %2766 = vmatprep.subr.bf16.mxu0 0
          %2767 = vmatpush1.bf16.msra.mxu0 0
          %2768 = vmatprep.subr.bf16.mxu0 0
          %2769 = vmatpush1.bf16.msra.mxu0 0
          %2770 = vmatprep.subr.bf16.mxu0 0
          %2771 = vmatpush1.bf16.msra.mxu0 0
          %2772 = vmatprep.subr.bf16.mxu0 0
          %2773 = vmatpush1.bf16.msra.mxu0 0
          %2774 = vmatprep.subr.bf16.mxu0 0
          %2775 = vmatpush1.bf16.msra.mxu0 0
          %2776 = vmatprep.subr.bf16.mxu0 0
          %2777 = vmatpush1.bf16.msra.mxu0 0
          %2778 = vmatprep.subr.bf16.mxu0 0
          %2779 = vmatpush1.bf16.msra.mxu0 0
          %2780 = vmatprep.subr.bf16.mxu0 0
          %2781 = vmatpush1.bf16.msra.mxu0 0
          %2782 = vmatprep.subr.bf16.mxu0 0
          %2783 = vmatpush1.bf16.msra.mxu0 0
          %2784 = vmatprep.subr.bf16.mxu0 0
          %2785 = vmatpush1.bf16.msra.mxu0 0
          %2786 = vmatprep.subr.bf16.mxu0 0
          %2787 = vmatpush1.bf16.msra.mxu0 0
          %2788 = vmatprep.subr.bf16.mxu0 0
          %2789 = vmatpush1.bf16.msra.mxu0 0
          %2790 = vmatprep.mubr.bf16.mxu0 0
          %2791 = vmatmul.mubr.bf16.gmra.mrb[0].mxu0 %v2732
          %v2792 = vpop.f32.mrb[0].mxu0
          %v2793 = vadd.f32 0.0, %v2792
          %v2794 = vpop.f32.mrb[0].mxu0
          %v2795 = vpop.f32.mrb[0].mxu0
          %v2796 = vadd.f32 0.0, %v2795
          %v2797 = vpop.f32.mrb[0].mxu0
          %2798 = vmatprep.mubr.bf16.mxu0 0
          %2799 = vmatmul.mubr.bf16.gmra.mrb[0].mxu0 %v2735
          %v2800 = vpop.f32.mrb[0].mxu0
          %v2801 = vadd.f32 0.0, %v2800
          %v2802 = vpop.f32.mrb[0].mxu0
          %v2803 = vpop.f32.mrb[0].mxu0
          %v2804 = vadd.f32 0.0, %v2803
          %v2805 = vpop.f32.mrb[0].mxu0
          %2806 = vmatprep.mubr.bf16.mxu0 0
          %2807 = vmatmul.mubr.bf16.gmra.mrb[0].mxu0 %v2738
          %v2808 = vpop.f32.mrb[0].mxu0
          %v2809 = vadd.f32 0.0, %v2808
          %v2810 = vpop.f32.mrb[0].mxu0
          %v2811 = vpop.f32.mrb[0].mxu0
          %v2812 = vadd.f32 0.0, %v2811
          %v2813 = vpop.f32.mrb[0].mxu0
          %2814 = vmatprep.mubr.bf16.mxu0 0
          %2815 = vmatmul.mubr.bf16.gmra.mrb[0].mxu0 %v2741
          %v2816 = vpop.f32.mrb[0].mxu0
          %v2817 = vadd.f32 0.0, %v2816
          %v2818 = vpop.f32.mrb[0].mxu0
          %v2819 = vpop.f32.mrb[0].mxu0
          %v2820 = vadd.f32 0.0, %v2819
          %v2821 = vpop.f32.mrb[0].mxu0
          %2822 = vmatprep.mubr.bf16.mxu0 0
          %2823 = vmatmul.mubr.bf16.gmra.mrb[0].mxu0 %v2744
          %v2824 = vpop.f32.mrb[0].mxu0
          %v2825 = vadd.f32 0.0, %v2824
          %v2826 = vpop.f32.mrb[0].mxu0
          %v2827 = vpop.f32.mrb[0].mxu0
          %v2828 = vadd.f32 0.0, %v2827
          %v2829 = vpop.f32.mrb[0].mxu0
          %2830 = vmatprep.mubr.bf16.mxu0 0
          %2831 = vmatmul.mubr.bf16.gmra.mrb[0].mxu0 %v2747
          %v2832 = vpop.f32.mrb[0].mxu0
          %v2833 = vadd.f32 0.0, %v2832
          %v2834 = vpop.f32.mrb[0].mxu0
          %v2835 = vpop.f32.mrb[0].mxu0
          %v2836 = vadd.f32 0.0, %v2835
          %v2837 = vpop.f32.mrb[0].mxu0
          %2838 = vmatprep.mubr.bf16.mxu0 0
          %2839 = vmatmul.mubr.bf16.gmra.mrb[0].mxu0 %v2750
          %v2840 = vpop.f32.mrb[0].mxu0
          %v2841 = vadd.f32 0.0, %v2840
          %v2842 = vpop.f32.mrb[0].mxu0
          %v2843 = vpop.f32.mrb[0].mxu0
          %v2844 = vadd.f32 0.0, %v2843
          %v2845 = vpop.f32.mrb[0].mxu0
          %2846 = vmatprep.mubr.bf16.mxu0 0
          %2847 = vmatmul.mubr.bf16.gmra.mrb[0].mxu0 %v2753
          %v2848 = vpop.f32.mrb[0].mxu0
          %v2849 = vadd.f32 0.0, %v2848
          %v2850 = vpop.f32.mrb[0].mxu0
          %v2851 = vpop.f32.mrb[0].mxu0
          %v2852 = vadd.f32 0.0, %v2851
          %v2853 = vpop.f32.mrb[0].mxu0
          %2854 = vdwg.mxu0
          %v2855 = vadd.f32 %v2653, %v2793
          %v2856 = vadd.f32 %v2654, %v2796
          %v2857 = vadd.f32 %v2655, %v2801
          %v2858 = vadd.f32 %v2656, %v2804
          %v2859 = vadd.f32 %v2657, %v2809
          %v2860 = vadd.f32 %v2658, %v2812
          %v2861 = vadd.f32 %v2659, %v2817
          %v2862 = vadd.f32 %v2660, %v2820
          %v2863 = vadd.f32 %v2661, %v2825
          %v2864 = vadd.f32 %v2662, %v2828
          %v2865 = vadd.f32 %v2663, %v2833
          %v2866 = vadd.f32 %v2664, %v2836
          %v2867 = vadd.f32 %v2665, %v2841
          %v2868 = vadd.f32 %v2666, %v2844
          %v2869 = vadd.f32 %v2667, %v2849
          %v2870 = vadd.f32 %v2668, %v2852
          %v2871 = vld [vmem:[%s2672] sm:$0xf]
          %v2872 = vld [vmem:[%s2672 + $0x4] sm:$0xf]
          %v2873 = vld [vmem:[%s2672 + $0x8] sm:$0x1]
          %v2874 = vld [vmem:[%s2672 + $0xc] sm:$0xf]
          %v2875 = vld [vmem:[%s2672 + $0x10] sm:$0xf]
          %v2876 = vld [vmem:[%s2672 + $0x14] sm:$0x1]
          %v2877 = vld [vmem:[%s2672 + $0x18] sm:$0xf]
          %v2878 = vld [vmem:[%s2672 + $0x1c] sm:$0xf]
          %v2879 = vld [vmem:[%s2672 + $0x20] sm:$0x1]
          %v2880 = vld [vmem:[%s2672 + $0x24] sm:$0xf]
          %v2881 = vld [vmem:[%s2672 + $0x28] sm:$0xf]
          %v2882 = vld [vmem:[%s2672 + $0x2c] sm:$0x1]
          %v2883 = vld [vmem:[%s2672 + $0x30] sm:$0xf]
          %v2884 = vld [vmem:[%s2672 + $0x34] sm:$0xf]
          %v2885 = vld [vmem:[%s2672 + $0x38] sm:$0x1]
          %v2886 = vld [vmem:[%s2672 + $0x3c] sm:$0xf]
          %v2887 = vld [vmem:[%s2672 + $0x40] sm:$0xf]
          %v2888 = vld [vmem:[%s2672 + $0x44] sm:$0x1]
          %v2889 = vld [vmem:[%s2672 + $0x48] sm:$0xf]
          %v2890 = vld [vmem:[%s2672 + $0x4c] sm:$0xf]
          %v2891 = vld [vmem:[%s2672 + $0x50] sm:$0x1]
          %v2892 = vld [vmem:[%s2672 + $0x54] sm:$0xf]
          %v2893 = vld [vmem:[%s2672 + $0x58] sm:$0xf]
          %v2894 = vld [vmem:[%s2672 + $0x5c] sm:$0x1]
          %v2896 = vshrl.u32 %v2871, 16
          %v2898 = vrot.slane %v2896, 4
          %v2899 = vshll.u32 %v2871, 16
          %v2901 = vrot.slane %v2899, 5
          %v2902 = vor.u32 %v2898, %v2901
          %v2903 = vrot.slane %v2902, 4
          %v2905 = vshll.u32 %v2872, 16
          %v2907 = vrot.slane %v2905, 5
          %v2908 = vsel %vm1073, %v2903, %v2907
          %v2909 = vshrl.u32 %v2872, 16
          %v2911 = vrot.slane %v2909, 4
          %v2912 = vor.u32 %v2911, %v2907
          %v2913 = vrot.slane %v2912, 4
          %v2915 = vshll.u32 %v2873, 16
          %v2917 = vrot.slane %v2915, 5
          %v2918 = vsel %vm1073, %v2913, %v2917
          %v2920 = vshrl.u32 %v2874, 16
          %v2922 = vrot.slane %v2920, 4
          %v2923 = vshll.u32 %v2874, 16
          %v2925 = vrot.slane %v2923, 5
          %v2926 = vor.u32 %v2922, %v2925
          %v2927 = vrot.slane %v2926, 4
          %v2929 = vshll.u32 %v2875, 16
          %v2931 = vrot.slane %v2929, 5
          %v2932 = vsel %vm1073, %v2927, %v2931
          %v2933 = vshrl.u32 %v2875, 16
          %v2935 = vrot.slane %v2933, 4
          %v2936 = vor.u32 %v2935, %v2931
          %v2937 = vrot.slane %v2936, 4
          %v2939 = vshll.u32 %v2876, 16
          %v2941 = vrot.slane %v2939, 5
          %v2942 = vsel %vm1073, %v2937, %v2941
          %v2944 = vshrl.u32 %v2877, 16
          %v2946 = vrot.slane %v2944, 4
          %v2947 = vshll.u32 %v2877, 16
          %v2949 = vrot.slane %v2947, 5
          %v2950 = vor.u32 %v2946, %v2949
          %v2951 = vrot.slane %v2950, 4
          %v2953 = vshll.u32 %v2878, 16
          %v2955 = vrot.slane %v2953, 5
          %v2956 = vsel %vm1073, %v2951, %v2955
          %v2957 = vshrl.u32 %v2878, 16
          %v2959 = vrot.slane %v2957, 4
          %v2960 = vor.u32 %v2959, %v2955
          %v2961 = vrot.slane %v2960, 4
          %v2963 = vshll.u32 %v2879, 16
          %v2965 = vrot.slane %v2963, 5
          %v2966 = vsel %vm1073, %v2961, %v2965
          %v2968 = vshrl.u32 %v2880, 16
          %v2970 = vrot.slane %v2968, 4
          %v2971 = vshll.u32 %v2880, 16
          %v2973 = vrot.slane %v2971, 5
          %v2974 = vor.u32 %v2970, %v2973
          %v2975 = vrot.slane %v2974, 4
          %v2977 = vshll.u32 %v2881, 16
          %v2979 = vrot.slane %v2977, 5
          %v2980 = vsel %vm1073, %v2975, %v2979
          %v2981 = vshrl.u32 %v2881, 16
          %v2983 = vrot.slane %v2981, 4
          %v2984 = vor.u32 %v2983, %v2979
          %v2985 = vrot.slane %v2984, 4
          %v2987 = vshll.u32 %v2882, 16
          %v2989 = vrot.slane %v2987, 5
          %v2990 = vsel %vm1073, %v2985, %v2989
          %v2992 = vshrl.u32 %v2883, 16
          %v2994 = vrot.slane %v2992, 4
          %v2995 = vshll.u32 %v2883, 16
          %v2997 = vrot.slane %v2995, 5
          %v2998 = vor.u32 %v2994, %v2997
          %v2999 = vrot.slane %v2998, 4
          %v3001 = vshll.u32 %v2884, 16
          %v3003 = vrot.slane %v3001, 5
          %v3004 = vsel %vm1073, %v2999, %v3003
          %v3005 = vshrl.u32 %v2884, 16
          %v3007 = vrot.slane %v3005, 4
          %v3008 = vor.u32 %v3007, %v3003
          %v3009 = vrot.slane %v3008, 4
          %v3011 = vshll.u32 %v2885, 16
          %v3013 = vrot.slane %v3011, 5
          %v3014 = vsel %vm1073, %v3009, %v3013
          %v3016 = vshrl.u32 %v2886, 16
          %v3018 = vrot.slane %v3016, 4
          %v3019 = vshll.u32 %v2886, 16
          %v3021 = vrot.slane %v3019, 5
          %v3022 = vor.u32 %v3018, %v3021
          %v3023 = vrot.slane %v3022, 4
          %v3025 = vshll.u32 %v2887, 16
          %v3027 = vrot.slane %v3025, 5
          %v3028 = vsel %vm1073, %v3023, %v3027
          %v3029 = vshrl.u32 %v2887, 16
          %v3031 = vrot.slane %v3029, 4
          %v3032 = vor.u32 %v3031, %v3027
          %v3033 = vrot.slane %v3032, 4
          %v3035 = vshll.u32 %v2888, 16
          %v3037 = vrot.slane %v3035, 5
          %v3038 = vsel %vm1073, %v3033, %v3037
          %v3040 = vshrl.u32 %v2889, 16
          %v3042 = vrot.slane %v3040, 4
          %v3043 = vshll.u32 %v2889, 16
          %v3045 = vrot.slane %v3043, 5
          %v3046 = vor.u32 %v3042, %v3045
          %v3047 = vrot.slane %v3046, 4
          %v3049 = vshll.u32 %v2890, 16
          %v3051 = vrot.slane %v3049, 5
          %v3052 = vsel %vm1073, %v3047, %v3051
          %v3053 = vshrl.u32 %v2890, 16
          %v3055 = vrot.slane %v3053, 4
          %v3056 = vor.u32 %v3055, %v3051
          %v3057 = vrot.slane %v3056, 4
          %v3059 = vshll.u32 %v2891, 16
          %v3061 = vrot.slane %v3059, 5
          %v3062 = vsel %vm1073, %v3057, %v3061
          %v3064 = vshrl.u32 %v2892, 16
          %v3066 = vrot.slane %v3064, 4
          %v3067 = vshll.u32 %v2892, 16
          %v3069 = vrot.slane %v3067, 5
          %v3070 = vor.u32 %v3066, %v3069
          %v3071 = vrot.slane %v3070, 4
          %v3073 = vshll.u32 %v2893, 16
          %v3075 = vrot.slane %v3073, 5
          %v3076 = vsel %vm1073, %v3071, %v3075
          %v3077 = vshrl.u32 %v2893, 16
          %v3079 = vrot.slane %v3077, 4
          %v3080 = vor.u32 %v3079, %v3075
          %v3081 = vrot.slane %v3080, 4
          %v3083 = vshll.u32 %v2894, 16
          %v3085 = vrot.slane %v3083, 5
          %v3086 = vsel %vm1073, %v3081, %v3085
          %s3087 = scalar_lea.vmem %s4, 14
          %v3088 = vld [vmem:[%s3087] sm:$0x3]
          %v3089 = vunpack.c.l.b16 %v2908
          %v3090 = vunpack.c.l.b16 %v2918
          %v3091 = vunpack.c.l.b16 %v2932
          %v3092 = vunpack.c.l.b16 %v2942
          %v3093 = vunpack.c.l.b16 %v2956
          %v3094 = vunpack.c.l.b16 %v2966
          %v3095 = vunpack.c.l.b16 %v2980
          %v3096 = vunpack.c.l.b16 %v2990
          %v3097 = vunpack.c.l.b16 %v3004
          %v3098 = vunpack.c.l.b16 %v3014
          %v3099 = vunpack.c.l.b16 %v3028
          %v3100 = vunpack.c.l.b16 %v3038
          %v3101 = vunpack.c.l.b16 %v3052
          %v3102 = vunpack.c.l.b16 %v3062
          %v3103 = vunpack.c.l.b16 %v3076
          %v3104 = vunpack.c.l.b16 %v3086
          %v3105 = vpack.c.b16 %v3090, %v3089
          %v3106 = vpack.c.b16 %v3092, %v3091
          %v3107 = vpack.c.b16 %v3094, %v3093
          %v3108 = vpack.c.b16 %v3096, %v3095
          %v3109 = vpack.c.b16 %v3098, %v3097
          %v3110 = vpack.c.b16 %v3100, %v3099
          %v3111 = vpack.c.b16 %v3102, %v3101
          %v3112 = vpack.c.b16 %v3104, %v3103
          %v3114 = vsel %vm1292, %v3105, 0
          %v3117 = vsel %vm1292, %v3106, 0
          %v3120 = vsel %vm1292, %v3107, 0
          %v3123 = vsel %vm1292, %v3108, 0
          %v3126 = vsel %vm1292, %v3109, 0
          %v3129 = vsel %vm1292, %v3110, 0
          %v3132 = vsel %vm1292, %v3111, 0
          %v3135 = vsel %vm1292, %v3112, 0
          %v3138 = vsel %vm1317, %v3088, 0
          %3140 = vmatprep.subr.bf16.mxu0 0
          %3141 = vmatpush1.bf16.msra.mxu0 %v3138
          %3142 = vmatprep.subr.bf16.mxu0 0
          %3143 = vmatpush1.bf16.msra.mxu0 0
          %3144 = vmatprep.subr.bf16.mxu0 0
          %3145 = vmatpush1.bf16.msra.mxu0 0
          %3146 = vmatprep.subr.bf16.mxu0 0
          %3147 = vmatpush1.bf16.msra.mxu0 0
          %3148 = vmatprep.subr.bf16.mxu0 0
          %3149 = vmatpush1.bf16.msra.mxu0 0
          %3150 = vmatprep.subr.bf16.mxu0 0
          %3151 = vmatpush1.bf16.msra.mxu0 0
          %3152 = vmatprep.subr.bf16.mxu0 0
          %3153 = vmatpush1.bf16.msra.mxu0 0
          %3154 = vmatprep.subr.bf16.mxu0 0
          %3155 = vmatpush1.bf16.msra.mxu0 0
          %3156 = vmatprep.subr.bf16.mxu0 0
          %3157 = vmatpush1.bf16.msra.mxu0 0
          %3158 = vmatprep.subr.bf16.mxu0 0
          %3159 = vmatpush1.bf16.msra.mxu0 0
          %3160 = vmatprep.subr.bf16.mxu0 0
          %3161 = vmatpush1.bf16.msra.mxu0 0
          %3162 = vmatprep.subr.bf16.mxu0 0
          %3163 = vmatpush1.bf16.msra.mxu0 0
          %3164 = vmatprep.subr.bf16.mxu0 0
          %3165 = vmatpush1.bf16.msra.mxu0 0
          %3166 = vmatprep.subr.bf16.mxu0 0
          %3167 = vmatpush1.bf16.msra.mxu0 0
          %3168 = vmatprep.subr.bf16.mxu0 0
          %3169 = vmatpush1.bf16.msra.mxu0 0
          %3170 = vmatprep.subr.bf16.mxu0 0
          %3171 = vmatpush1.bf16.msra.mxu0 0
          %3172 = vmatprep.mubr.bf16.mxu0 0
          %3173 = vmatmul.mubr.bf16.gmra.mrb[0].mxu0 %v3114
          %v3174 = vpop.f32.mrb[0].mxu0
          %v3175 = vadd.f32 0.0, %v3174
          %v3176 = vpop.f32.mrb[0].mxu0
          %v3177 = vpop.f32.mrb[0].mxu0
          %v3178 = vadd.f32 0.0, %v3177
          %v3179 = vpop.f32.mrb[0].mxu0
          %3180 = vmatprep.mubr.bf16.mxu0 0
          %3181 = vmatmul.mubr.bf16.gmra.mrb[0].mxu0 %v3117
          %v3182 = vpop.f32.mrb[0].mxu0
          %v3183 = vadd.f32 0.0, %v3182
          %v3184 = vpop.f32.mrb[0].mxu0
          %v3185 = vpop.f32.mrb[0].mxu0
          %v3186 = vadd.f32 0.0, %v3185
          %v3187 = vpop.f32.mrb[0].mxu0
          %3188 = vmatprep.mubr.bf16.mxu0 0
          %3189 = vmatmul.mubr.bf16.gmra.mrb[0].mxu0 %v3120
          %v3190 = vpop.f32.mrb[0].mxu0
          %v3191 = vadd.f32 0.0, %v3190
          %v3192 = vpop.f32.mrb[0].mxu0
          %v3193 = vpop.f32.mrb[0].mxu0
          %v3194 = vadd.f32 0.0, %v3193
          %v3195 = vpop.f32.mrb[0].mxu0
          %3196 = vmatprep.mubr.bf16.mxu0 0
          %3197 = vmatmul.mubr.bf16.gmra.mrb[0].mxu0 %v3123
          %v3198 = vpop.f32.mrb[0].mxu0
          %v3199 = vadd.f32 0.0, %v3198
          %v3200 = vpop.f32.mrb[0].mxu0
          %v3201 = vpop.f32.mrb[0].mxu0
          %v3202 = vadd.f32 0.0, %v3201
          %v3203 = vpop.f32.mrb[0].mxu0
          %3204 = vmatprep.mubr.bf16.mxu0 0
          %3205 = vmatmul.mubr.bf16.gmra.mrb[0].mxu0 %v3126
          %v3206 = vpop.f32.mrb[0].mxu0
          %v3207 = vadd.f32 0.0, %v3206
          %v3208 = vpop.f32.mrb[0].mxu0
          %v3209 = vpop.f32.mrb[0].mxu0
          %v3210 = vadd.f32 0.0, %v3209
          %v3211 = vpop.f32.mrb[0].mxu0
          %3212 = vmatprep.mubr.bf16.mxu0 0
          %3213 = vmatmul.mubr.bf16.gmra.mrb[0].mxu0 %v3129
          %v3214 = vpop.f32.mrb[0].mxu0
          %v3215 = vadd.f32 0.0, %v3214
          %v3216 = vpop.f32.mrb[0].mxu0
          %v3217 = vpop.f32.mrb[0].mxu0
          %v3218 = vadd.f32 0.0, %v3217
          %v3219 = vpop.f32.mrb[0].mxu0
          %3220 = vmatprep.mubr.bf16.mxu0 0
          %3221 = vmatmul.mubr.bf16.gmra.mrb[0].mxu0 %v3132
          %v3222 = vpop.f32.mrb[0].mxu0
          %v3223 = vadd.f32 0.0, %v3222
          %v3224 = vpop.f32.mrb[0].mxu0
          %v3225 = vpop.f32.mrb[0].mxu0
          %v3226 = vadd.f32 0.0, %v3225
          %v3227 = vpop.f32.mrb[0].mxu0
          %3228 = vmatprep.mubr.bf16.mxu0 0
          %3229 = vmatmul.mubr.bf16.gmra.mrb[0].mxu0 %v3135
          %v3230 = vpop.f32.mrb[0].mxu0
          %v3231 = vadd.f32 0.0, %v3230
          %v3232 = vpop.f32.mrb[0].mxu0
          %v3233 = vpop.f32.mrb[0].mxu0
          %v3234 = vadd.f32 0.0, %v3233
          %v3235 = vpop.f32.mrb[0].mxu0
          %3236 = vdwg.mxu0
          %v3237 = vadd.f32 %v2855, %v3175
          %v3238 = vadd.f32 %v2856, %v3178
          %v3239 = vadd.f32 %v2857, %v3183
          %v3240 = vadd.f32 %v2858, %v3186
          %v3241 = vadd.f32 %v2859, %v3191
          %v3242 = vadd.f32 %v2860, %v3194
          %v3243 = vadd.f32 %v2861, %v3199
          %v3244 = vadd.f32 %v2862, %v3202
          %v3245 = vadd.f32 %v2863, %v3207
          %v3246 = vadd.f32 %v2864, %v3210
          %v3247 = vadd.f32 %v2865, %v3215
          %v3248 = vadd.f32 %v2866, %v3218
          %v3249 = vadd.f32 %v2867, %v3223
          %v3250 = vadd.f32 %v2868, %v3226
          %v3251 = vadd.f32 %v2869, %v3231
          %v3252 = vadd.f32 %v2870, %v3234
          %v3253 = vld [vmem:[%s2672] sm:$0xe]
          %v3254 = vld [vmem:[%s2672 + $0xc] sm:$0xe]
          %v3255 = vld [vmem:[%s2672 + $0x18] sm:$0xe]
          %v3256 = vld [vmem:[%s2672 + $0x24] sm:$0xe]
          %v3257 = vld [vmem:[%s2672 + $0x30] sm:$0xe]
          %v3258 = vld [vmem:[%s2672 + $0x3c] sm:$0xe]
          %v3259 = vld [vmem:[%s2672 + $0x48] sm:$0xe]
          %v3260 = vld [vmem:[%s2672 + $0x54] sm:$0xe]
          %v3285 = vrot.slane %v3253, 5
          %v3286 = vrot.slane %v3285, 4
          %v3287 = vrot.slane %v2872, 5
          %v3288 = vsel %vm1608, %v3286, %v3287
          %v3289 = vrot.slane %v3287, 4
          %v3290 = vrot.slane %v2873, 5
          %v3291 = vsel %vm1608, %v3289, %v3290
          %v3292 = vrot.slane %v3254, 5
          %v3293 = vrot.slane %v3292, 4
          %v3294 = vrot.slane %v2875, 5
          %v3295 = vsel %vm1608, %v3293, %v3294
          %v3296 = vrot.slane %v3294, 4
          %v3297 = vrot.slane %v2876, 5
          %v3298 = vsel %vm1608, %v3296, %v3297
          %v3299 = vrot.slane %v3255, 5
          %v3300 = vrot.slane %v3299, 4
          %v3301 = vrot.slane %v2878, 5
          %v3302 = vsel %vm1608, %v3300, %v3301
          %v3303 = vrot.slane %v3301, 4
          %v3304 = vrot.slane %v2879, 5
          %v3305 = vsel %vm1608, %v3303, %v3304
          %v3306 = vrot.slane %v3256, 5
          %v3307 = vrot.slane %v3306, 4
          %v3308 = vrot.slane %v2881, 5
          %v3309 = vsel %vm1608, %v3307, %v3308
          %v3310 = vrot.slane %v3308, 4
          %v3311 = vrot.slane %v2882, 5
          %v3312 = vsel %vm1608, %v3310, %v3311
          %v3313 = vrot.slane %v3257, 5
          %v3314 = vrot.slane %v3313, 4
          %v3315 = vrot.slane %v2884, 5
          %v3316 = vsel %vm1608, %v3314, %v3315
          %v3317 = vrot.slane %v3315, 4
          %v3318 = vrot.slane %v2885, 5
          %v3319 = vsel %vm1608, %v3317, %v3318
          %v3320 = vrot.slane %v3258, 5
          %v3321 = vrot.slane %v3320, 4
          %v3322 = vrot.slane %v2887, 5
          %v3323 = vsel %vm1608, %v3321, %v3322
          %v3324 = vrot.slane %v3322, 4
          %v3325 = vrot.slane %v2888, 5
          %v3326 = vsel %vm1608, %v3324, %v3325
          %v3327 = vrot.slane %v3259, 5
          %v3328 = vrot.slane %v3327, 4
          %v3329 = vrot.slane %v2890, 5
          %v3330 = vsel %vm1608, %v3328, %v3329
          %v3331 = vrot.slane %v3329, 4
          %v3332 = vrot.slane %v2891, 5
          %v3333 = vsel %vm1608, %v3331, %v3332
          %v3334 = vrot.slane %v3260, 5
          %v3335 = vrot.slane %v3334, 4
          %v3336 = vrot.slane %v2893, 5
          %v3337 = vsel %vm1608, %v3335, %v3336
          %v3338 = vrot.slane %v3336, 4
          %v3339 = vrot.slane %v2894, 5
          %v3340 = vsel %vm1608, %v3338, %v3339
          %s3341 = scalar_lea.vmem %s4, 16
          %v3342 = vld [vmem:[%s3341] sm:$0x3]
          %v3343 = vunpack.c.l.b16 %v3288
          %v3344 = vunpack.c.l.b16 %v3291
          %v3345 = vunpack.c.l.b16 %v3295
          %v3346 = vunpack.c.l.b16 %v3298
          %v3347 = vunpack.c.l.b16 %v3302
          %v3348 = vunpack.c.l.b16 %v3305
          %v3349 = vunpack.c.l.b16 %v3309
          %v3350 = vunpack.c.l.b16 %v3312
          %v3351 = vunpack.c.l.b16 %v3316
          %v3352 = vunpack.c.l.b16 %v3319
          %v3353 = vunpack.c.l.b16 %v3323
          %v3354 = vunpack.c.l.b16 %v3326
          %v3355 = vunpack.c.l.b16 %v3330
          %v3356 = vunpack.c.l.b16 %v3333
          %v3357 = vunpack.c.l.b16 %v3337
          %v3358 = vunpack.c.l.b16 %v3340
          %v3359 = vpack.c.b16 %v3344, %v3343
          %v3360 = vpack.c.b16 %v3346, %v3345
          %v3361 = vpack.c.b16 %v3348, %v3347
          %v3362 = vpack.c.b16 %v3350, %v3349
          %v3363 = vpack.c.b16 %v3352, %v3351
          %v3364 = vpack.c.b16 %v3354, %v3353
          %v3365 = vpack.c.b16 %v3356, %v3355
          %v3366 = vpack.c.b16 %v3358, %v3357
          %v3368 = vsel %vm1292, %v3359, 0
          %v3371 = vsel %vm1292, %v3360, 0
          %v3374 = vsel %vm1292, %v3361, 0
          %v3377 = vsel %vm1292, %v3362, 0
          %v3380 = vsel %vm1292, %v3363, 0
          %v3383 = vsel %vm1292, %v3364, 0
          %v3386 = vsel %vm1292, %v3365, 0
          %v3389 = vsel %vm1292, %v3366, 0
          %v3392 = vsel %vm1317, %v3342, 0
          %3394 = vmatprep.subr.bf16.mxu0 0
          %3395 = vmatpush1.bf16.msra.mxu0 %v3392
          %3396 = vmatprep.subr.bf16.mxu0 0
          %3397 = vmatpush1.bf16.msra.mxu0 0
          %3398 = vmatprep.subr.bf16.mxu0 0
          %3399 = vmatpush1.bf16.msra.mxu0 0
          %3400 = vmatprep.subr.bf16.mxu0 0
          %3401 = vmatpush1.bf16.msra.mxu0 0
          %3402 = vmatprep.subr.bf16.mxu0 0
          %3403 = vmatpush1.bf16.msra.mxu0 0
          %3404 = vmatprep.subr.bf16.mxu0 0
          %3405 = vmatpush1.bf16.msra.mxu0 0
          %3406 = vmatprep.subr.bf16.mxu0 0
          %3407 = vmatpush1.bf16.msra.mxu0 0
          %3408 = vmatprep.subr.bf16.mxu0 0
          %3409 = vmatpush1.bf16.msra.mxu0 0
          %3410 = vmatprep.subr.bf16.mxu0 0
          %3411 = vmatpush1.bf16.msra.mxu0 0
          %3412 = vmatprep.subr.bf16.mxu0 0
          %3413 = vmatpush1.bf16.msra.mxu0 0
          %3414 = vmatprep.subr.bf16.mxu0 0
          %3415 = vmatpush1.bf16.msra.mxu0 0
          %3416 = vmatprep.subr.bf16.mxu0 0
          %3417 = vmatpush1.bf16.msra.mxu0 0
          %3418 = vmatprep.subr.bf16.mxu0 0
          %3419 = vmatpush1.bf16.msra.mxu0 0
          %3420 = vmatprep.subr.bf16.mxu0 0
          %3421 = vmatpush1.bf16.msra.mxu0 0
          %3422 = vmatprep.subr.bf16.mxu0 0
          %3423 = vmatpush1.bf16.msra.mxu0 0
          %3424 = vmatprep.subr.bf16.mxu0 0
          %3425 = vmatpush1.bf16.msra.mxu0 0
          %3426 = vmatprep.mubr.bf16.mxu0 0
          %3427 = vmatmul.mubr.bf16.gmra.mrb[0].mxu0 %v3368
          %v3428 = vpop.f32.mrb[0].mxu0
          %v3429 = vadd.f32 0.0, %v3428
          %v3430 = vpop.f32.mrb[0].mxu0
          %v3431 = vpop.f32.mrb[0].mxu0
          %v3432 = vadd.f32 0.0, %v3431
          %v3433 = vpop.f32.mrb[0].mxu0
          %3434 = vmatprep.mubr.bf16.mxu0 0
          %3435 = vmatmul.mubr.bf16.gmra.mrb[0].mxu0 %v3371
          %v3436 = vpop.f32.mrb[0].mxu0
          %v3437 = vadd.f32 0.0, %v3436
          %v3438 = vpop.f32.mrb[0].mxu0
          %v3439 = vpop.f32.mrb[0].mxu0
          %v3440 = vadd.f32 0.0, %v3439
          %v3441 = vpop.f32.mrb[0].mxu0
          %3442 = vmatprep.mubr.bf16.mxu0 0
          %3443 = vmatmul.mubr.bf16.gmra.mrb[0].mxu0 %v3374
          %v3444 = vpop.f32.mrb[0].mxu0
          %v3445 = vadd.f32 0.0, %v3444
          %v3446 = vpop.f32.mrb[0].mxu0
          %v3447 = vpop.f32.mrb[0].mxu0
          %v3448 = vadd.f32 0.0, %v3447
          %v3449 = vpop.f32.mrb[0].mxu0
          %3450 = vmatprep.mubr.bf16.mxu0 0
          %3451 = vmatmul.mubr.bf16.gmra.mrb[0].mxu0 %v3377
          %v3452 = vpop.f32.mrb[0].mxu0
          %v3453 = vadd.f32 0.0, %v3452
          %v3454 = vpop.f32.mrb[0].mxu0
          %v3455 = vpop.f32.mrb[0].mxu0
          %v3456 = vadd.f32 0.0, %v3455
          %v3457 = vpop.f32.mrb[0].mxu0
          %3458 = vmatprep.mubr.bf16.mxu0 0
          %3459 = vmatmul.mubr.bf16.gmra.mrb[0].mxu0 %v3380
          %v3460 = vpop.f32.mrb[0].mxu0
          %v3461 = vadd.f32 0.0, %v3460
          %v3462 = vpop.f32.mrb[0].mxu0
          %v3463 = vpop.f32.mrb[0].mxu0
          %v3464 = vadd.f32 0.0, %v3463
          %v3465 = vpop.f32.mrb[0].mxu0
          %3466 = vmatprep.mubr.bf16.mxu0 0
          %3467 = vmatmul.mubr.bf16.gmra.mrb[0].mxu0 %v3383
          %v3468 = vpop.f32.mrb[0].mxu0
          %v3469 = vadd.f32 0.0, %v3468
          %v3470 = vpop.f32.mrb[0].mxu0
          %v3471 = vpop.f32.mrb[0].mxu0
          %v3472 = vadd.f32 0.0, %v3471
          %v3473 = vpop.f32.mrb[0].mxu0
          %3474 = vmatprep.mubr.bf16.mxu0 0
          %3475 = vmatmul.mubr.bf16.gmra.mrb[0].mxu0 %v3386
          %v3476 = vpop.f32.mrb[0].mxu0
          %v3477 = vadd.f32 0.0, %v3476
          %v3478 = vpop.f32.mrb[0].mxu0
          %v3479 = vpop.f32.mrb[0].mxu0
          %v3480 = vadd.f32 0.0, %v3479
          %v3481 = vpop.f32.mrb[0].mxu0
          %3482 = vmatprep.mubr.bf16.mxu0 0
          %3483 = vmatmul.mubr.bf16.gmra.mrb[0].mxu0 %v3389
          %v3484 = vpop.f32.mrb[0].mxu0
          %v3485 = vadd.f32 0.0, %v3484
          %v3486 = vpop.f32.mrb[0].mxu0
          %v3487 = vpop.f32.mrb[0].mxu0
          %v3488 = vadd.f32 0.0, %v3487
          %v3489 = vpop.f32.mrb[0].mxu0
          %3490 = vdwg.mxu0
          %v3491 = vadd.f32 %v3237, %v3429
          %v3492 = vadd.f32 %v3238, %v3432
          %v3493 = vadd.f32 %v3239, %v3437
          %v3494 = vadd.f32 %v3240, %v3440
          %v3495 = vadd.f32 %v3241, %v3445
          %v3496 = vadd.f32 %v3242, %v3448
          %v3497 = vadd.f32 %v3243, %v3453
          %v3498 = vadd.f32 %v3244, %v3456
          %v3499 = vadd.f32 %v3245, %v3461
          %v3500 = vadd.f32 %v3246, %v3464
          %v3501 = vadd.f32 %v3247, %v3469
          %v3502 = vadd.f32 %v3248, %v3472
          %v3503 = vadd.f32 %v3249, %v3477
          %v3504 = vadd.f32 %v3250, %v3480
          %v3505 = vadd.f32 %v3251, %v3485
          %v3506 = vadd.f32 %v3252, %v3488
          %v3508 = vlaneseq
          %v3509 = vshrl.u32 %v3508, 7
          %v3510 = vsub.s32 0, %v3509
          %v3511 = vrot.slane %v506, %v3510
          %v3513 = vmul.f32 %v3491, %v3511
          %v3514 = vmul.f32 %v3492, %v3511
          %v3515 = vmul.f32 %v3493, %v3511
          %v3516 = vmul.f32 %v3494, %v3511
          %v3517 = vmul.f32 %v3495, %v3511
          %v3518 = vmul.f32 %v3496, %v3511
          %v3519 = vmul.f32 %v3497, %v3511
          %v3520 = vmul.f32 %v3498, %v3511
          %v3521 = vmul.f32 %v3499, %v3511
          %v3522 = vmul.f32 %v3500, %v3511
          %v3523 = vmul.f32 %v3501, %v3511
          %v3524 = vmul.f32 %v3502, %v3511
          %v3525 = vmul.f32 %v3503, %v3511
          %v3526 = vmul.f32 %v3504, %v3511
          %v3527 = vmul.f32 %v3505, %v3511
          %v3528 = vmul.f32 %v3506, %v3511
          %v3530 = vlaneseq
          %v3531 = vshrl.u32 %v3530, 7
          %v3532 = vsub.s32 0, %v3531
          %v3533 = vrot.slane %v507, %v3532
          %v3535 = vadd.f32 %v3513, %v3533
          %v3536 = vadd.f32 %v3514, %v3533
          %v3537 = vadd.f32 %v3515, %v3533
          %v3538 = vadd.f32 %v3516, %v3533
          %v3539 = vadd.f32 %v3517, %v3533
          %v3540 = vadd.f32 %v3518, %v3533
          %v3541 = vadd.f32 %v3519, %v3533
          %v3542 = vadd.f32 %v3520, %v3533
          %v3543 = vadd.f32 %v3521, %v3533
          %v3544 = vadd.f32 %v3522, %v3533
          %v3545 = vadd.f32 %v3523, %v3533
          %v3546 = vadd.f32 %v3524, %v3533
          %v3547 = vadd.f32 %v3525, %v3533
          %v3548 = vadd.f32 %v3526, %v3533
          %v3549 = vadd.f32 %v3527, %v3533
          %v3550 = vadd.f32 %v3528, %v3533
          %v3551 = vmax.f32 %v3535, 0.0
          %v3552 = vmax.f32 %v3536, 0.0
          %v3553 = vmax.f32 %v3537, 0.0
          %v3554 = vmax.f32 %v3538, 0.0
          %v3555 = vmax.f32 %v3539, 0.0
          %v3556 = vmax.f32 %v3540, 0.0
          %v3557 = vmax.f32 %v3541, 0.0
          %v3558 = vmax.f32 %v3542, 0.0
          %v3559 = vmax.f32 %v3543, 0.0
          %v3560 = vmax.f32 %v3544, 0.0
          %v3561 = vmax.f32 %v3545, 0.0
          %v3562 = vmax.f32 %v3546, 0.0
          %v3563 = vmax.f32 %v3547, 0.0
          %v3564 = vmax.f32 %v3548, 0.0
          %v3565 = vmax.f32 %v3549, 0.0
          %v3566 = vmax.f32 %v3550, 0.0
          %v3567 = vpack.c.bf16 %v3552, %v3551
          %v3568 = vpack.c.bf16 %v3554, %v3553
          %v3569 = vpack.c.bf16 %v3556, %v3555
          %v3570 = vpack.c.bf16 %v3558, %v3557
          %v3571 = vpack.c.bf16 %v3560, %v3559
          %v3572 = vpack.c.bf16 %v3562, %v3561
          %v3573 = vpack.c.bf16 %v3564, %v3563
          %v3574 = vpack.c.bf16 %v3566, %v3565
          %v3576 = vsel %vm1292, %v3567, 0
          %v3579 = vsel %vm1292, %v3568, 0
          %v3582 = vsel %vm1292, %v3569, 0
          %v3585 = vsel %vm1292, %v3570, 0
          %v3588 = vsel %vm1292, %v3571, 0
          %v3591 = vsel %vm1292, %v3572, 0
          %v3594 = vsel %vm1292, %v3573, 0
          %v3597 = vsel %vm1292, %v3574, 0
          %v3600 = vsel %vm1317, %v503, 0
          %3602 = vmatprep.subr.bf16.mxu0 0
          %3603 = vmatpush1.bf16.msra.mxu0 %v3600
          %3604 = vmatprep.subr.bf16.mxu0 0
          %3605 = vmatpush1.bf16.msra.mxu0 0
          %3606 = vmatprep.subr.bf16.mxu0 0
          %3607 = vmatpush1.bf16.msra.mxu0 0
          %3608 = vmatprep.subr.bf16.mxu0 0
          %3609 = vmatpush1.bf16.msra.mxu0 0
          %3610 = vmatprep.subr.bf16.mxu0 0
          %3611 = vmatpush1.bf16.msra.mxu0 0
          %3612 = vmatprep.subr.bf16.mxu0 0
          %3613 = vmatpush1.bf16.msra.mxu0 0
          %3614 = vmatprep.subr.bf16.mxu0 0
          %3615 = vmatpush1.bf16.msra.mxu0 0
          %3616 = vmatprep.subr.bf16.mxu0 0
          %3617 = vmatpush1.bf16.msra.mxu0 0
          %3618 = vmatprep.subr.bf16.mxu0 0
          %3619 = vmatpush1.bf16.msra.mxu0 0
          %3620 = vmatprep.subr.bf16.mxu0 0
          %3621 = vmatpush1.bf16.msra.mxu0 0
          %3622 = vmatprep.subr.bf16.mxu0 0
          %3623 = vmatpush1.bf16.msra.mxu0 0
          %3624 = vmatprep.subr.bf16.mxu0 0
          %3625 = vmatpush1.bf16.msra.mxu0 0
          %3626 = vmatprep.subr.bf16.mxu0 0
          %3627 = vmatpush1.bf16.msra.mxu0 0
          %3628 = vmatprep.subr.bf16.mxu0 0
          %3629 = vmatpush1.bf16.msra.mxu0 0
          %3630 = vmatprep.subr.bf16.mxu0 0
          %3631 = vmatpush1.bf16.msra.mxu0 0
          %3632 = vmatprep.subr.bf16.mxu0 0
          %3633 = vmatpush1.bf16.msra.mxu0 0
          %3634 = vmatprep.mubr.bf16.mxu0 0
          %3635 = vmatmul.mubr.bf16.gmra.mrb[0].mxu0 %v3576
          %v3636 = vpop.f32.mrb[0].mxu0
          %v3637 = vadd.f32 0.0, %v3636
          %v3638 = vpop.f32.mrb[0].mxu0
          %v3639 = vpop.f32.mrb[0].mxu0
          %v3640 = vadd.f32 0.0, %v3639
          %v3641 = vpop.f32.mrb[0].mxu0
          %3642 = vmatprep.mubr.bf16.mxu0 0
          %3643 = vmatmul.mubr.bf16.gmra.mrb[0].mxu0 %v3579
          %v3644 = vpop.f32.mrb[0].mxu0
          %v3645 = vadd.f32 0.0, %v3644
          %v3646 = vpop.f32.mrb[0].mxu0
          %v3647 = vpop.f32.mrb[0].mxu0
          %v3648 = vadd.f32 0.0, %v3647
          %v3649 = vpop.f32.mrb[0].mxu0
          %3650 = vmatprep.mubr.bf16.mxu0 0
          %3651 = vmatmul.mubr.bf16.gmra.mrb[0].mxu0 %v3582
          %v3652 = vpop.f32.mrb[0].mxu0
          %v3653 = vadd.f32 0.0, %v3652
          %v3654 = vpop.f32.mrb[0].mxu0
          %v3655 = vpop.f32.mrb[0].mxu0
          %v3656 = vadd.f32 0.0, %v3655
          %v3657 = vpop.f32.mrb[0].mxu0
          %3658 = vmatprep.mubr.bf16.mxu0 0
          %3659 = vmatmul.mubr.bf16.gmra.mrb[0].mxu0 %v3585
          %v3660 = vpop.f32.mrb[0].mxu0
          %v3661 = vadd.f32 0.0, %v3660
          %v3662 = vpop.f32.mrb[0].mxu0
          %v3663 = vpop.f32.mrb[0].mxu0
          %v3664 = vadd.f32 0.0, %v3663
          %v3665 = vpop.f32.mrb[0].mxu0
          %3666 = vmatprep.mubr.bf16.mxu0 0
          %3667 = vmatmul.mubr.bf16.gmra.mrb[0].mxu0 %v3588
          %v3668 = vpop.f32.mrb[0].mxu0
          %v3669 = vadd.f32 0.0, %v3668
          %v3670 = vpop.f32.mrb[0].mxu0
          %v3671 = vpop.f32.mrb[0].mxu0
          %v3672 = vadd.f32 0.0, %v3671
          %v3673 = vpop.f32.mrb[0].mxu0
          %3674 = vmatprep.mubr.bf16.mxu0 0
          %3675 = vmatmul.mubr.bf16.gmra.mrb[0].mxu0 %v3591
          %v3676 = vpop.f32.mrb[0].mxu0
          %v3677 = vadd.f32 0.0, %v3676
          %v3678 = vpop.f32.mrb[0].mxu0
          %v3679 = vpop.f32.mrb[0].mxu0
          %v3680 = vadd.f32 0.0, %v3679
          %v3681 = vpop.f32.mrb[0].mxu0
          %3682 = vmatprep.mubr.bf16.mxu0 0
          %3683 = vmatmul.mubr.bf16.gmra.mrb[0].mxu0 %v3594
          %v3684 = vpop.f32.mrb[0].mxu0
          %v3685 = vadd.f32 0.0, %v3684
          %v3686 = vpop.f32.mrb[0].mxu0
          %v3687 = vpop.f32.mrb[0].mxu0
          %v3688 = vadd.f32 0.0, %v3687
          %v3689 = vpop.f32.mrb[0].mxu0
          %3690 = vmatprep.mubr.bf16.mxu0 0
          %3691 = vmatmul.mubr.bf16.gmra.mrb[0].mxu0 %v3597
          %v3692 = vpop.f32.mrb[0].mxu0
          %v3693 = vadd.f32 0.0, %v3692
          %v3694 = vpop.f32.mrb[0].mxu0
          %v3695 = vpop.f32.mrb[0].mxu0
          %v3696 = vadd.f32 0.0, %v3695
          %v3697 = vpop.f32.mrb[0].mxu0
          %3698 = vdwg.mxu0
          %v3700 = vlaneseq
          %v3701 = vshrl.u32 %v3700, 7
          %v3702 = vsub.s32 0, %v3701
          %v3703 = vrot.slane %v508, %v3702
          %v3705 = vmul.f32 %v3637, %v3703
          %v3706 = vmul.f32 %v3640, %v3703
          %v3707 = vmul.f32 %v3645, %v3703
          %v3708 = vmul.f32 %v3648, %v3703
          %v3709 = vmul.f32 %v3653, %v3703
          %v3710 = vmul.f32 %v3656, %v3703
          %v3711 = vmul.f32 %v3661, %v3703
          %v3712 = vmul.f32 %v3664, %v3703
          %v3713 = vmul.f32 %v3669, %v3703
          %v3714 = vmul.f32 %v3672, %v3703
          %v3715 = vmul.f32 %v3677, %v3703
          %v3716 = vmul.f32 %v3680, %v3703
          %v3717 = vmul.f32 %v3685, %v3703
          %v3718 = vmul.f32 %v3688, %v3703
          %v3719 = vmul.f32 %v3693, %v3703
          %v3720 = vmul.f32 %v3696, %v3703
          %v3722 = vlaneseq
          %v3723 = vshrl.u32 %v3722, 7
          %v3724 = vsub.s32 0, %v3723
          %v3725 = vrot.slane %v509, %v3724
          %v3727 = vadd.f32 %v3705, %v3725
          %v3728 = vadd.f32 %v3706, %v3725
          %v3729 = vadd.f32 %v3707, %v3725
          %v3730 = vadd.f32 %v3708, %v3725
          %v3731 = vadd.f32 %v3709, %v3725
          %v3732 = vadd.f32 %v3710, %v3725
          %v3733 = vadd.f32 %v3711, %v3725
          %v3734 = vadd.f32 %v3712, %v3725
          %v3735 = vadd.f32 %v3713, %v3725
          %v3736 = vadd.f32 %v3714, %v3725
          %v3737 = vadd.f32 %v3715, %v3725
          %v3738 = vadd.f32 %v3716, %v3725
          %v3739 = vadd.f32 %v3717, %v3725
          %v3740 = vadd.f32 %v3718, %v3725
          %v3741 = vadd.f32 %v3719, %v3725
          %v3742 = vadd.f32 %v3720, %v3725
          %s3743 = smul.u32 %s1042, 2
          %s3744 = smul.addr %s3743, 4
          %s3745 = scalar_lea.vmem %s341, %s3744 [#allocation3]
          %v3746 = vld [vmem:[%s3745] sm:$0xf]
          %v3747 = vld [vmem:[%s3745 + $0x4] sm:$0xf]
          %v3748 = vld [vmem:[%s3745 + $0x8] sm:$0xf]
          %v3749 = vld [vmem:[%s3745 + $0xc] sm:$0xf]
          %v3750 = vld [vmem:[%s3745 + $0x10] sm:$0xf]
          %v3751 = vld [vmem:[%s3745 + $0x14] sm:$0xf]
          %v3752 = vld [vmem:[%s3745 + $0x18] sm:$0xf]
          %v3753 = vld [vmem:[%s3745 + $0x1c] sm:$0xf]
          %v3754 = vld [vmem:[%s3745 + $0x20] sm:$0xf]
          %v3755 = vld [vmem:[%s3745 + $0x24] sm:$0xf]
          %v3756 = vld [vmem:[%s3745 + $0x28] sm:$0xf]
          %v3757 = vld [vmem:[%s3745 + $0x2c] sm:$0xf]
          %v3758 = vld [vmem:[%s3745 + $0x30] sm:$0xf]
          %v3759 = vld [vmem:[%s3745 + $0x34] sm:$0xf]
          %v3760 = vld [vmem:[%s3745 + $0x38] sm:$0xf]
          %v3761 = vld [vmem:[%s3745 + $0x3c] sm:$0xf]
          %v3762 = vunpack.c.l.bf16 %v3746
          %v3763 = vunpack.c.l.bf16 %v3747
          %v3764 = vunpack.c.l.bf16 %v3748
          %v3765 = vunpack.c.l.bf16 %v3749
          %v3766 = vunpack.c.l.bf16 %v3750
          %v3767 = vunpack.c.l.bf16 %v3751
          %v3768 = vunpack.c.l.bf16 %v3752
          %v3769 = vunpack.c.l.bf16 %v3753
          %v3770 = vunpack.c.l.bf16 %v3754
          %v3771 = vunpack.c.l.bf16 %v3755
          %v3772 = vunpack.c.l.bf16 %v3756
          %v3773 = vunpack.c.l.bf16 %v3757
          %v3774 = vunpack.c.l.bf16 %v3758
          %v3775 = vunpack.c.l.bf16 %v3759
          %v3776 = vunpack.c.l.bf16 %v3760
          %v3777 = vunpack.c.l.bf16 %v3761
          %v3778 = vadd.f32 %v3727, %v3762
          %v3779 = vadd.f32 %v3728, %v3763
          %v3780 = vadd.f32 %v3729, %v3764
          %v3781 = vadd.f32 %v3730, %v3765
          %v3782 = vadd.f32 %v3731, %v3766
          %v3783 = vadd.f32 %v3732, %v3767
          %v3784 = vadd.f32 %v3733, %v3768
          %v3785 = vadd.f32 %v3734, %v3769
          %v3786 = vadd.f32 %v3735, %v3770
          %v3787 = vadd.f32 %v3736, %v3771
          %v3788 = vadd.f32 %v3737, %v3772
          %v3789 = vadd.f32 %v3738, %v3773
          %v3790 = vadd.f32 %v3739, %v3774
          %v3791 = vadd.f32 %v3740, %v3775
          %v3792 = vadd.f32 %v3741, %v3776
          %v3793 = vadd.f32 %v3742, %v3777
          %v3794 = vmax.f32 %v3778, 0.0
          %v3795 = vmax.f32 %v3779, 0.0
          %v3796 = vmax.f32 %v3780, 0.0
          %v3797 = vmax.f32 %v3781, 0.0
          %v3798 = vmax.f32 %v3782, 0.0
          %v3799 = vmax.f32 %v3783, 0.0
          %v3800 = vmax.f32 %v3784, 0.0
          %v3801 = vmax.f32 %v3785, 0.0
          %v3802 = vmax.f32 %v3786, 0.0
          %v3803 = vmax.f32 %v3787, 0.0
          %v3804 = vmax.f32 %v3788, 0.0
          %v3805 = vmax.f32 %v3789, 0.0
          %v3806 = vmax.f32 %v3790, 0.0
          %v3807 = vmax.f32 %v3791, 0.0
          %v3808 = vmax.f32 %v3792, 0.0
          %v3809 = vmax.f32 %v3793, 0.0
          %v3810 = vpack.c.bf16 %v3795, %v3794
          %v3811 = vpack.c.bf16 %v3797, %v3796
          %v3812 = vpack.c.bf16 %v3799, %v3798
          %v3813 = vpack.c.bf16 %v3801, %v3800
          %v3814 = vpack.c.bf16 %v3803, %v3802
          %v3815 = vpack.c.bf16 %v3805, %v3804
          %v3816 = vpack.c.bf16 %v3807, %v3806
          %v3817 = vpack.c.bf16 %v3809, %v3808
          %v3826 = vunpack.c.l.b16 %v3810
          %v3827 = vunpack.c.h.b16 %v3810
          %v3828 = vunpack.c.l.b16 %v3811
          %v3829 = vunpack.c.h.b16 %v3811
          %v3830 = vunpack.c.l.b16 %v3812
          %v3831 = vunpack.c.h.b16 %v3812
          %v3832 = vunpack.c.l.b16 %v3813
          %v3833 = vunpack.c.h.b16 %v3813
          %v3834 = vunpack.c.l.b16 %v3814
          %v3835 = vunpack.c.h.b16 %v3814
          %v3836 = vunpack.c.l.b16 %v3815
          %v3837 = vunpack.c.h.b16 %v3815
          %v3838 = vunpack.c.l.b16 %v3816
          %v3839 = vunpack.c.h.b16 %v3816
          %v3840 = vunpack.c.l.b16 %v3817
          %v3841 = vunpack.c.h.b16 %v3817
          %v3842 = vpack.c.b16 %v3826, %v3826
          %v3843 = vpack.c.b16 %v3827, %v3827
          %v3844 = vpack.c.b16 %v3828, %v3828
          %v3845 = vpack.c.b16 %v3829, %v3829
          %v3846 = vpack.c.b16 %v3830, %v3830
          %v3847 = vpack.c.b16 %v3831, %v3831
          %v3848 = vpack.c.b16 %v3832, %v3832
          %v3849 = vpack.c.b16 %v3833, %v3833
          %v3850 = vpack.c.b16 %v3834, %v3834
          %v3851 = vpack.c.b16 %v3835, %v3835
          %v3852 = vpack.c.b16 %v3836, %v3836
          %v3853 = vpack.c.b16 %v3837, %v3837
          %v3854 = vpack.c.b16 %v3838, %v3838
          %v3855 = vpack.c.b16 %v3839, %v3839
          %v3856 = vpack.c.b16 %v3840, %v3840
          %v3857 = vpack.c.b16 %v3841, %v3841
          %s3874 = smul.addr %s3743, 4
          %s3875 = scalar_lea.vmem %s377, %s3874 [#allocation6]
          %vm3876 = vcmask 125952
          %3877 = vst.msk [vmem:[%s3875] sm:$0xf] %vm3876, %v3842
          %3878 = vst.msk [vmem:[%s3875 + $0x4] sm:$0xf] %vm3876, %v3843
          %3879 = vst.msk [vmem:[%s3875 + $0x8] sm:$0xf] %vm3876, %v3844
          %3880 = vst.msk [vmem:[%s3875 + $0xc] sm:$0xf] %vm3876, %v3845
          %3881 = vst.msk [vmem:[%s3875 + $0x10] sm:$0xf] %vm3876, %v3846
          %3882 = vst.msk [vmem:[%s3875 + $0x14] sm:$0xf] %vm3876, %v3847
          %3883 = vst.msk [vmem:[%s3875 + $0x18] sm:$0xf] %vm3876, %v3848
          %3884 = vst.msk [vmem:[%s3875 + $0x1c] sm:$0xf] %vm3876, %v3849
          %3885 = vst.msk [vmem:[%s3875 + $0x20] sm:$0xf] %vm3876, %v3850
          %3886 = vst.msk [vmem:[%s3875 + $0x24] sm:$0xf] %vm3876, %v3851
          %3887 = vst.msk [vmem:[%s3875 + $0x28] sm:$0xf] %vm3876, %v3852
          %3888 = vst.msk [vmem:[%s3875 + $0x2c] sm:$0xf] %vm3876, %v3853
          %3889 = vst.msk [vmem:[%s3875 + $0x30] sm:$0xf] %vm3876, %v3854
          %3890 = vst.msk [vmem:[%s3875 + $0x34] sm:$0xf] %vm3876, %v3855
          %3891 = vst.msk [vmem:[%s3875 + $0x38] sm:$0xf] %vm3876, %v3856
          %3892 = vst.msk [vmem:[%s3875 + $0x3c] sm:$0xf] %vm3876, %v3857
        $region76: #{tpu_custom_call.1} parent=59 // loop_footer
          %s1041 = sadd.s32 1, %s1037
        $region77: #{tpu_custom_call.1} parent=59 // loop_footer_branch
          %1036 = sbr.rel target = $region73
        $region78: #{tpu_custom_call.1} parent=59 // loop_exit
          _
        %s3893 = sand.u32 %s250, 1
        %s3894 = scalar_lea.sflag [#allocation5], %s3893
        %s3895 = sand.u32 %s250, 1
        %s3896 = smul.addr %s3895, 128
        %s3897 = scalar_lea.vmem [#allocation6], %s3896
        // Predicated region
        $region79: #{tpu_custom_call.1} parent=59 // pred_check
          %p3898 = pneg %p260
        $region80: #{tpu_custom_call.1} parent=59 // pred_check_branch
          %3900 = sbr.rel (%p3898) target = $region82
        $region81: #{tpu_custom_call.1} parent=59 // pred_region
          %s3902 = ssub.s32 2048, 2048
          %3903 = vsyncadd %s3894, %s3902
          %s3904 = smul.addr %s27, 32
          %s3905 = smul.addr %s3904, 64
          %s3906 = scalar_lea.hbm %s10, %s3905
          %s3907 = sshll.u32 %s3897, 4
          %s3908 = int_to_ptr.vmem [resolvable:$true] %s3907
          %3913 = dma.vmem_to_hbm [thread:$0]  %s3908, 2048, %s3906, %s3894, 64, 64, 4
        $region82: #{tpu_custom_call.1} parent=59 // pred_fallthru
          _
      $region60: #{tpu_custom_call.1} parent=5 // pred_fallthru
        _
      %p3914 = scmp.le.s32.totalorder 2, %s22
      // Predicated region
      $region83: #{tpu_custom_call.1} parent=5 // pred_check
        %p3915 = pneg %p3914
      $region84: #{tpu_custom_call.1} parent=5 // pred_check_branch
        %3917 = sbr.rel (%p3915) target = $region86
      $region85: #{tpu_custom_call.1} parent=5 // pred_region
        %s3918 = ssub.s32 %s22, 2
        // Predicated region
        $region87: #{tpu_custom_call.1} parent=85 // pred_check
          %p3919 = pneg %p266
        $region88: #{tpu_custom_call.1} parent=85 // pred_check_branch
          %3921 = sbr.rel (%p3919) target = $region90
        $region89: #{tpu_custom_call.1} parent=85 // pred_region
          %s3922 = sand.u32 %s251, 1
          %s3923 = scalar_lea.sflag [#allocation5], %s3922
          %s3924 = sand.u32 %s251, 1
          %s3925 = smul.addr %s3924, 128
          %s3926 = scalar_lea.vmem [#allocation6], %s3925
          %3927 = dma.done %s3923, 2048
        $region90: #{tpu_custom_call.1} parent=85 // pred_fallthru
          _
      $region86: #{tpu_custom_call.1} parent=5 // pred_fallthru
        _
    $region6: #{tpu_custom_call.1} parent=1 // loop_footer
      %s26 = sadd.s32 1, %s22
    $region7: #{tpu_custom_call.1} parent=1 // loop_footer_branch
      %21 = sbr.rel target = $region3
    $region8: #{tpu_custom_call.1} parent=1 // loop_exit
      _
    %3928 = vsyncpa [#allocation4], 1
    %s3929 = scalar_lea.sflag [#allocation4], 1
    %3930 = vsyncpa %s3929, 1
    %3931 = vsyncpa [#allocation5], 1
    %s3932 = scalar_lea.sflag [#allocation5], 1
    %3933 = vsyncpa %s3932, 1

// kernel: tpu_custom_call.1
$region0: #{tpu_custom_call.1}
  #allocation0 [shape = 'u32[]', space=smem, size = 0x4, offset = 0x4, fixed_abs, tag = 'smem constant byte address 0x4 - core index']
  #allocation1 [shape = 'u32[144,128]{1,0:T(1,128)}', space=vmem, size = 0x12000, scoped, tag = 'internal scratch']
  #allocation2 [shape = 'bf16[1,18,18,4]{3,2,1,0:T(8,128)(2,1)}', space=vmem, size = 0x1b000, scoped, tag = 'scratch operand']
  %s0 = inlined_call_operand.hbm [shape: bf16[2,16,16,16], index: 0, kind: input, shape index: {}]
  %s1 = inlined_call_operand.vmem [shape: bf16[16,4], index: 1, kind: input, shape index: {}]
  %s2 = inlined_call_operand.vmem [shape: f32[1,4], index: 2, kind: input, shape index: {}]
  %s3 = inlined_call_operand.vmem [shape: f32[1,4], index: 3, kind: input, shape index: {}]
  %s4 = inlined_call_operand.vmem [shape: bf16[9,4,4], index: 4, kind: input, shape index: {}]
  %s5 = inlined_call_operand.vmem [shape: f32[1,4], index: 5, kind: input, shape index: {}]
  %s6 = inlined_call_operand.vmem [shape: f32[1,4], index: 6, kind: input, shape index: {}]
  %s7 = inlined_call_operand.vmem [shape: bf16[4,16], index: 7, kind: input, shape index: {}]
  %s8 = inlined_call_operand.vmem [shape: f32[1,16], index: 8, kind: input, shape index: {}]
  %s9 = inlined_call_operand.vmem [shape: f32[1,16], index: 9, kind: input, shape index: {}]
  %s10 = inlined_call_operand.hbm [shape: bf16[2,16,16,16], index: 10, kind: output, shape index: {}]
  %s11 = sld [smem:[#allocation0]]
  $region91: #{tpu_custom_call.1} parent=0
    _
  %s13 = ssub.s32 1, %s11
  %s14 = scalar_select 0, %s13, %s11
  $region1: #{tpu_custom_call.1} parent=0
    #allocation3 [shape = 'u8[131072]{0}', space=vmem, size = 0x20000, scoped, tag = 'input window, operand 0']
    #allocation4 [shape = 's32[2]{0}', space=sflag, size = 0x8, scoped, tag = 'scoped memory for tpu_custom_call.1']
    #allocation5 [shape = 's32[2]{0}', space=sflag, size = 0x8, scoped, tag = 'scoped memory for tpu_custom_call.1']
    #allocation6 [shape = 'u8[131072]{0}', space=vmem, size = 0x20000, scoped, tag = 'output window, operand 0']
    %15 = vsyncpa [#allocation4], 0
    %s16 = scalar_lea.sflag [#allocation4], 1
    %17 = vsyncpa %s16, 0
    %18 = vsyncpa [#allocation5], 0
    %s19 = scalar_lea.sflag [#allocation5], 1
    %20 = vsyncpa %s19, 0
    loop: start=0, step=1, limit=4
    $region2: #{tpu_custom_call.1} parent=1 // loop_pre_header
      _
    $region3: #{tpu_custom_call.1} parent=1 // loop_header
      %s22 = sphi 0, %s26
      %p23 = scmp.ge.s32.totalorder %s22, 4
      %s32 = sphi 0, %s34
      %s35 = sphi 0, %s32
      %s36 = sphi 0, %s35
      %s52 = sphi 0, %s36
      %s56 = sphi 0, %s56
      %s58 = sphi 0, %s56
      %s59 = sphi 0, %s58
      %s73 = sphi 0, %s59
      %s77 = sphi 0, %s77
      %s79 = sphi 0, %s77
      %s80 = sphi 0, %s79
      %s94 = sphi 0, %s80
      %s98 = sphi 0, %s98
      %s100 = sphi 0, %s98
      %s101 = sphi 0, %s100
      %s115 = sphi 0, %s101
      %s119 = sphi 0, %s119
      %s121 = sphi 0, %s119
      %s122 = sphi 0, %s121
      %s136 = sphi 0, %s122
      %s140 = sphi 0, %s140
      %s142 = sphi 0, %s140
      %s143 = sphi 0, %s142
      %s157 = sphi 0, %s143
      %s161 = sphi 0, %s161
      %s163 = sphi 0, %s161
      %s164 = sphi 0, %s163
      %s178 = sphi 0, %s164
      %s182 = sphi 0, %s182
      %s184 = sphi 0, %s182
      %s185 = sphi 0, %s184
      %s199 = sphi 0, %s185
      %s203 = sphi 0, %s203
      %s205 = sphi 0, %s203
      %s206 = sphi 0, %s205
      %s220 = sphi 0, %s206
      %s224 = sphi 0, %s224
      %s226 = sphi 0, %s224
      %s227 = sphi 0, %s226
      %s241 = sphi 0, %s227
      %s247 = sphi 0, %s249
      %s250 = sphi 0, %s247
      %s251 = sphi 0, %s250
      %s267 = sphi 0, %s251
    $region4: #{tpu_custom_call.1} parent=1 // loop_header_branch
      %25 = sbr.rel (%p23) target = $region8
    $region5: #{tpu_custom_call.1} parent=1 // loop_body
      %s27 = ssub.s32 %s22, 1
      %s28 = ssub.s32 %s22, 2
      %s29 = sadd.s32 %s22, 1
      %s30 = ssub.s32 %s22, %s29
      %p31 = scmp.eq.s32.totalorder %s30, 0
      %s33 = sadd.s32 %s32, 1
      %s34 = scalar_select %p31, %s32, %s33
      %p37 = pneg %p31
      %p38 = scmp.eq.s32.totalorder %s22, 1
      %p39 = por %p37, %p38
      %p40 = scmp.ne.s32.totalorder %s32, %s35
      %p41 = scmp.eq.s32.totalorder %s22, 0
      %p42 = por %p40, %p41
      %p43 = scmp.ne.s32.totalorder %s32, %s35
      %p44 = scmp.eq.s32.totalorder %s27, 1
      %p45 = por %p43, %p44
      %p46 = scmp.ne.s32.totalorder %s35, %s36
      %p47 = scmp.eq.s32.totalorder %s27, 0
      %p48 = por %p46, %p47
      %p49 = scmp.ne.s32.totalorder %s35, %s36
      %p50 = scmp.eq.s32.totalorder %s28, 1
      %p51 = por %p49, %p50
      %p53 = scmp.ne.s32.totalorder %s36, %s52
      %p54 = scmp.eq.s32.totalorder %s28, 0
      %p55 = por %p53, %p54
      %s57 = sadd.s32 %s56, 1
      %p60 = scmp.eq.s32.totalorder %s22, 1
      %p61 = scmp.ne.s32.totalorder %s56, %s58
      %p62 = scmp.eq.s32.totalorder %s22, 0
      %p63 = por %p61, %p62
      %p64 = scmp.ne.s32.totalorder %s56, %s58
      %p65 = scmp.eq.s32.totalorder %s27, 1
      %p66 = por %p64, %p65
      %p67 = scmp.ne.s32.totalorder %s58, %s59
      %p68 = scmp.eq.s32.totalorder %s27, 0
      %p69 = por %p67, %p68
      %p70 = scmp.ne.s32.totalorder %s58, %s59
      %p71 = scmp.eq.s32.totalorder %s28, 1
      %p72 = por %p70, %p71
      %p74 = scmp.ne.s32.totalorder %s59, %s73
      %p75 = scmp.eq.s32.totalorder %s28, 0
      %p76 = por %p74, %p75
      %s78 = sadd.s32 %s77, 1
      %p81 = scmp.eq.s32.totalorder %s22, 1
      %p82 = scmp.ne.s32.totalorder %s77, %s79
      %p83 = scmp.eq.s32.totalorder %s22, 0
      %p84 = por %p82, %p83
      %p85 = scmp.ne.s32.totalorder %s77, %s79
      %p86 = scmp.eq.s32.totalorder %s27, 1
      %p87 = por %p85, %p86
      %p88 = scmp.ne.s32.totalorder %s79, %s80
      %p89 = scmp.eq.s32.totalorder %s27, 0
      %p90 = por %p88, %p89
      %p91 = scmp.ne.s32.totalorder %s79, %s80
      %p92 = scmp.eq.s32.totalorder %s28, 1
      %p93 = por %p91, %p92
      %p95 = scmp.ne.s32.totalorder %s80, %s94
      %p96 = scmp.eq.s32.totalorder %s28, 0
      %p97 = por %p95, %p96
      %s99 = sadd.s32 %s98, 1
      %p102 = scmp.eq.s32.totalorder %s22, 1
      %p103 = scmp.ne.s32.totalorder %s98, %s100
      %p104 = scmp.eq.s32.totalorder %s22, 0
      %p105 = por %p103, %p104
      %p106 = scmp.ne.s32.totalorder %s98, %s100
      %p107 = scmp.eq.s32.totalorder %s27, 1
      %p108 = por %p106, %p107
      %p109 = scmp.ne.s32.totalorder %s100, %s101
      %p110 = scmp.eq.s32.totalorder %s27, 0
      %p111 = por %p109, %p110
      %p112 = scmp.ne.s32.totalorder %s100, %s101
      %p113 = scmp.eq.s32.totalorder %s28, 1
      %p114 = por %p112, %p113
      %p116 = scmp.ne.s32.totalorder %s101, %s115
      %p117 = scmp.eq.s32.totalorder %s28, 0
      %p118 = por %p116, %p117
      %s120 = sadd.s32 %s119, 1
      %p123 = scmp.eq.s32.totalorder %s22, 1
      %p124 = scmp.ne.s32.totalorder %s119, %s121
      %p125 = scmp.eq.s32.totalorder %s22, 0
      %p126 = por %p124, %p125
      %p127 = scmp.ne.s32.totalorder %s119, %s121
      %p128 = scmp.eq.s32.totalorder %s27, 1
      %p129 = por %p127, %p128
      %p130 = scmp.ne.s32.totalorder %s121, %s122
      %p131 = scmp.eq.s32.totalorder %s27, 0
      %p132 = por %p130, %p131
      %p133 = scmp.ne.s32.totalorder %s121, %s122
      %p134 = scmp.eq.s32.totalorder %s28, 1
      %p135 = por %p133, %p134
      %p137 = scmp.ne.s32.totalorder %s122, %s136
      %p138 = scmp.eq.s32.totalorder %s28, 0
      %p139 = por %p137, %p138
      %s141 = sadd.s32 %s140, 1
      %p144 = scmp.eq.s32.totalorder %s22, 1
      %p145 = scmp.ne.s32.totalorder %s140, %s142
      %p146 = scmp.eq.s32.totalorder %s22, 0
      %p147 = por %p145, %p146
      %p148 = scmp.ne.s32.totalorder %s140, %s142
      %p149 = scmp.eq.s32.totalorder %s27, 1
      %p150 = por %p148, %p149
      %p151 = scmp.ne.s32.totalorder %s142, %s143
      %p152 = scmp.eq.s32.totalorder %s27, 0
      %p153 = por %p151, %p152
      %p154 = scmp.ne.s32.totalorder %s142, %s143
      %p155 = scmp.eq.s32.totalorder %s28, 1
      %p156 = por %p154, %p155
      %p158 = scmp.ne.s32.totalorder %s143, %s157
      %p159 = scmp.eq.s32.totalorder %s28, 0
      %p160 = por %p158, %p159
      %s162 = sadd.s32 %s161, 1
      %p165 = scmp.eq.s32.totalorder %s22, 1
      %p166 = scmp.ne.s32.totalorder %s161, %s163
      %p167 = scmp.eq.s32.totalorder %s22, 0
      %p168 = por %p166, %p167
      %p169 = scmp.ne.s32.totalorder %s161, %s163
      %p170 = scmp.eq.s32.totalorder %s27, 1
      %p171 = por %p169, %p170
      %p172 = scmp.ne.s32.totalorder %s163, %s164
      %p173 = scmp.eq.s32.totalorder %s27, 0
      %p174 = por %p172, %p173
      %p175 = scmp.ne.s32.totalorder %s163, %s164
      %p176 = scmp.eq.s32.totalorder %s28, 1
      %p177 = por %p175, %p176
      %p179 = scmp.ne.s32.totalorder %s164, %s178
      %p180 = scmp.eq.s32.totalorder %s28, 0
      %p181 = por %p179, %p180
      %s183 = sadd.s32 %s182, 1
      %p186 = scmp.eq.s32.totalorder %s22, 1
      %p187 = scmp.ne.s32.totalorder %s182, %s184
      %p188 = scmp.eq.s32.totalorder %s22, 0
      %p189 = por %p187, %p188
      %p190 = scmp.ne.s32.totalorder %s182, %s184
      %p191 = scmp.eq.s32.totalorder %s27, 1
      %p192 = por %p190, %p191
      %p193 = scmp.ne.s32.totalorder %s184, %s185
      %p194 = scmp.eq.s32.totalorder %s27, 0
      %p195 = por %p193, %p194
      %p196 = scmp.ne.s32.totalorder %s184, %s185
      %p197 = scmp.eq.s32.totalorder %s28, 1
      %p198 = por %p196, %p197
      %p200 = scmp.ne.s32.totalorder %s185, %s199
      %p201 = scmp.eq.s32.totalorder %s28, 0
      %p202 = por %p200, %p201
      %s204 = sadd.s32 %s203, 1
      %p207 = scmp.eq.s32.totalorder %s22, 1
      %p208 = scmp.ne.s32.totalorder %s203, %s205
      %p209 = scmp.eq.s32.totalorder %s22, 0
      %p210 = por %p208, %p209
      %p211 = scmp.ne.s32.totalorder %s203, %s205
      %p212 = scmp.eq.s32.totalorder %s27, 1
      %p213 = por %p211, %p212
      %p214 = scmp.ne.s32.totalorder %s205, %s206
      %p215 = scmp.eq.s32.totalorder %s27, 0
      %p216 = por %p214, %p215
      %p217 = scmp.ne.s32.totalorder %s205, %s206
      %p218 = scmp.eq.s32.totalorder %s28, 1
      %p219 = por %p217, %p218
      %p221 = scmp.ne.s32.totalorder %s206, %s220
      %p222 = scmp.eq.s32.totalorder %s28, 0
      %p223 = por %p221, %p222
      %s225 = sadd.s32 %s224, 1
      %p228 = scmp.eq.s32.totalorder %s22, 1
      %p229 = scmp.ne.s32.totalorder %s224, %s226
      %p230 = scmp.eq.s32.totalorder %s22, 0
      %p231 = por %p229, %p230
      %p232 = scmp.ne.s32.totalorder %s224, %s226
      %p233 = scmp.eq.s32.totalorder %s27, 1
      %p234 = por %p232, %p233
      %p235 = scmp.ne.s32.totalorder %s226, %s227
      %p236 = scmp.eq.s32.totalorder %s27, 0
      %p237 = por %p235, %p236
      %p238 = scmp.ne.s32.totalorder %s226, %s227
      %p239 = scmp.eq.s32.totalorder %s28, 1
      %p240 = por %p238, %p239
      %p242 = scmp.ne.s32.totalorder %s227, %s241
      %p243 = scmp.eq.s32.totalorder %s28, 0
      %p244 = por %p242, %p243
      %s245 = ssub.s32 %s22, %s29
      %p246 = scmp.eq.s32.totalorder %s245, 0
      %s248 = sadd.s32 %s247, 1
      %s249 = scalar_select %p246, %s247, %s248
      %p252 = pneg %p246
      %p253 = scmp.eq.s32.totalorder %s22, 1
      %p254 = por %p252, %p253
      %p255 = scmp.ne.s32.totalorder %s247, %s250
      %p256 = scmp.eq.s32.totalorder %s22, 0
      %p257 = por %p255, %p256
      %p258 = scmp.ne.s32.totalorder %s247, %s250
      %p259 = scmp.eq.s32.totalorder %s27, 1
      %p260 = por %p258, %p259
      %p261 = scmp.ne.s32.totalorder %s250, %s251
      %p262 = scmp.eq.s32.totalorder %s27, 0
      %p263 = por %p261, %p262
      %p264 = scmp.ne.s32.totalorder %s250, %s251
      %p265 = scmp.eq.s32.totalorder %s28, 1
      %p266 = por %p264, %p265
      %p268 = scmp.ne.s32.totalorder %s251, %s267
      %p269 = scmp.eq.s32.totalorder %s28, 0
      %p270 = por %p268, %p269
      %p271 = scmp.le.s32.totalorder 1, %s22
      %p272 = scmp.lt.s32.totalorder %s22, 3
      %p273 = pnand %p271, %p272
      %p274 = pneg %p273
      // Predicated region
      $region9: #{tpu_custom_call.1} parent=5 // pred_check
        _
      $region10: #{tpu_custom_call.1} parent=5 // pred_check_branch
        %276 = sbr.rel (%p273) target = $region12
      $region11: #{tpu_custom_call.1} parent=5 // pred_region
        %s277 = ssub.s32 %s22, 1
        // Predicated region
        $region13: #{tpu_custom_call.1} parent=11 // pred_check
          %p278 = pneg %p69
        $region14: #{tpu_custom_call.1} parent=11 // pred_check_branch
          %280 = sbr.rel (%p278) target = $region16
        $region15: #{tpu_custom_call.1} parent=11 // pred_region
          _
        $region16: #{tpu_custom_call.1} parent=11 // pred_fallthru
          _
        // Predicated region
        $region17: #{tpu_custom_call.1} parent=11 // pred_check
          %p281 = pneg %p90
        $region18: #{tpu_custom_call.1} parent=11 // pred_check_branch
          %283 = sbr.rel (%p281) target = $region20
        $region19: #{tpu_custom_call.1} parent=11 // pred_region
          _
        $region20: #{tpu_custom_call.1} parent=11 // pred_fallthru
          _
        // Predicated region
        $region21: #{tpu_custom_call.1} parent=11 // pred_check
          %p284 = pneg %p111
        $region22: #{tpu_custom_call.1} parent=11 // pred_check_branch
          %286 = sbr.rel (%p284) target = $region24
        $region23: #{tpu_custom_call.1} parent=11 // pred_region
          _
        $region24: #{tpu_custom_call.1} parent=11 // pred_fallthru
          _
        // Predicated region
        $region25: #{tpu_custom_call.1} parent=11 // pred_check
          %p287 = pneg %p132
        $region26: #{tpu_custom_call.1} parent=11 // pred_check_branch
          %289 = sbr.rel (%p287) target = $region28
        $region27: #{tpu_custom_call.1} parent=11 // pred_region
          _
        $region28: #{tpu_custom_call.1} parent=11 // pred_fallthru
          _
        // Predicated region
        $region29: #{tpu_custom_call.1} parent=11 // pred_check
          %p290 = pneg %p153
        $region30: #{tpu_custom_call.1} parent=11 // pred_check_branch
          %292 = sbr.rel (%p290) target = $region32
        $region31: #{tpu_custom_call.1} parent=11 // pred_region
          _
        $region32: #{tpu_custom_call.1} parent=11 // pred_fallthru
          _
        // Predicated region
        $region33: #{tpu_custom_call.1} parent=11 // pred_check
          %p293 = pneg %p174
        $region34: #{tpu_custom_call.1} parent=11 // pred_check_branch
          %295 = sbr.rel (%p293) target = $region36
        $region35: #{tpu_custom_call.1} parent=11 // pred_region
          _
        $region36: #{tpu_custom_call.1} parent=11 // pred_fallthru
          _
        // Predicated region
        $region37: #{tpu_custom_call.1} parent=11 // pred_check
          %p296 = pneg %p195
        $region38: #{tpu_custom_call.1} parent=11 // pred_check_branch
          %298 = sbr.rel (%p296) target = $region40
        $region39: #{tpu_custom_call.1} parent=11 // pred_region
          _
        $region40: #{tpu_custom_call.1} parent=11 // pred_fallthru
          _
        // Predicated region
        $region41: #{tpu_custom_call.1} parent=11 // pred_check
          %p299 = pneg %p216
        $region42: #{tpu_custom_call.1} parent=11 // pred_check_branch
          %301 = sbr.rel (%p299) target = $region44
        $region43: #{tpu_custom_call.1} parent=11 // pred_region
          _
        $region44: #{tpu_custom_call.1} parent=11 // pred_fallthru
          _
        // Predicated region
        $region45: #{tpu_custom_call.1} parent=11 // pred_check
          %p302 = pneg %p237
        $region46: #{tpu_custom_call.1} parent=11 // pred_check_branch
          %304 = sbr.rel (%p302) target = $region48
        $region47: #{tpu_custom_call.1} parent=11 // pred_region
          _
        $region48: #{tpu_custom_call.1} parent=11 // pred_fallthru
          _
      $region12: #{tpu_custom_call.1} parent=5 // pred_fallthru
        _
      %p305 = scmp.lt.s32.totalorder %s22, 2
      // Predicated region
      $region49: #{tpu_custom_call.1} parent=5 // pred_check
        %p306 = pneg %p305
      $region50: #{tpu_custom_call.1} parent=5 // pred_check_branch
        %308 = sbr.rel (%p306) target = $region52
      $region51: #{tpu_custom_call.1} parent=5 // pred_region
        // Predicated region
        $region53: #{tpu_custom_call.1} parent=51 // pred_check
          %p309 = pneg %p42
        $region54: #{tpu_custom_call.1} parent=51 // pred_check_branch
          %311 = sbr.rel (%p309) target = $region56
        $region55: #{tpu_custom_call.1} parent=51 // pred_region
          %s312 = sand.u32 %s32, 1
          %s313 = scalar_lea.sflag [#allocation4], %s312
          %s314 = sand.u32 %s32, 1
          %s315 = smul.addr %s314, 128
          %s316 = scalar_lea.vmem [#allocation3], %s315
          %s318 = ssub.s32 2048, 2048
          %319 = vsyncadd %s313, %s318
          %s320 = smul.addr %s22, 32
          %s321 = smul.addr %s320, 64
          %s322 = scalar_lea.hbm %s0, %s321
          %s323 = sshll.u32 %s316, 4
          %s324 = int_to_ptr.vmem [resolvable:$true] %s323
          %329 = dma.hbm_to_vmem [thread:$0]  %s322, 2048, %s324, %s313, 64, 64, 4
        $region56: #{tpu_custom_call.1} parent=51 // pred_fallthru
          _
      $region52: #{tpu_custom_call.1} parent=5 // pred_fallthru
        _
      %p330 = scmp.le.s32.totalorder 1, %s22
      %p331 = scmp.lt.s32.totalorder %s22, 3
      %p332 = pnand %p330, %p331
      %p333 = pneg %p332
      // Predicated region
      $region57: #{tpu_custom_call.1} parent=5 // pred_check
        _
      $region58: #{tpu_custom_call.1} parent=5 // pred_check_branch
        %335 = sbr.rel (%p332) target = $region60
      $region59: #{tpu_custom_call.1} parent=5 // pred_region
        %s336 = ssub.s32 %s22, 1
        %s337 = sand.u32 %s35, 1
        %s338 = scalar_lea.sflag [#allocation4], %s337
        %s339 = sand.u32 %s35, 1
        %s340 = smul.addr %s339, 128
        %s341 = scalar_lea.vmem [#allocation3], %s340
        // Predicated region
        $region61: #{tpu_custom_call.1} parent=59 // pred_check
          %p342 = pneg %p48
        $region62: #{tpu_custom_call.1} parent=59 // pred_check_branch
          %344 = sbr.rel (%p342) target = $region64
        $region63: #{tpu_custom_call.1} parent=59 // pred_region
          %345 = dma.done %s338, 2048
        $region64: #{tpu_custom_call.1} parent=59 // pred_fallthru
          _
        %s346 = sand.u32 %s35, 1
        %s347 = scalar_lea.sflag [#allocation4], %s346
        %s348 = sand.u32 %s35, 1
        %s349 = smul.addr %s348, 128
        %s350 = scalar_lea.vmem [#allocation3], %s349
        %p351 = pneg %p48
        %p352 = pneg %p45
        %p353 = pneg %p69
        %p354 = pneg %p66
        %p355 = pneg %p90
        %p356 = pneg %p87
        %p357 = pneg %p111
        %p358 = pneg %p108
        %p359 = pneg %p132
        %p360 = pneg %p129
        %p361 = pneg %p153
        %p362 = pneg %p150
        %p363 = pneg %p174
        %p364 = pneg %p171
        %p365 = pneg %p195
        %p366 = pneg %p192
        %p367 = pneg %p216
        %p368 = pneg %p213
        %p369 = pneg %p237
        %p370 = pneg %p234
        %p371 = pneg %p263
        %p372 = pneg %p260
        %s373 = sand.u32 %s250, 1
        %s374 = scalar_lea.sflag [#allocation5], %s373
        %s375 = sand.u32 %s250, 1
        %s376 = smul.addr %s375, 128
        %s377 = scalar_lea.vmem [#allocation6], %s376
        %vm379 = vcmask 27648
        %380 = vst.msk [vmem:[#allocation2] sm:$0xf] %vm379, 0
        %381 = vst.msk [vmem:[#allocation2 + $0x4] sm:$0xf] %vm379, 0
        %vm382 = vcmask 24576
        %383 = vst.msk [vmem:[#allocation2 + $0x8] sm:$0x1] %vm382, 0
        %s384 = scalar_lea.vmem [#allocation2], 204
        %385 = vst.msk [vmem:[%s384] sm:$0xf] %vm379, 0
        %386 = vst.msk [vmem:[%s384 + $0x4] sm:$0xf] %vm379, 0
        %387 = vst.msk [vmem:[%s384 + $0x8] sm:$0x1] %vm382, 0
        %vm388 = vcmask 24576
        %vm389 = vsmask.f32 256
        %vm390 = vmand %vm388, %vm389
        %v391 = vld [vmem:[#allocation2] sm:$0x1]
        %v392 = vsel %vm390, 0, %v391
        %393 = vst [vmem:[#allocation2] sm:$0x1] %v392
        %v394 = vld [vmem:[#allocation2 + $0xc] sm:$0x1]
        %v395 = vsel %vm390, 0, %v394
        %396 = vst [vmem:[#allocation2 + $0xc] sm:$0x1] %v395
        %v397 = vld [vmem:[#allocation2 + $0x18] sm:$0x1]
        %v398 = vsel %vm390, 0, %v397
        %399 = vst [vmem:[#allocation2 + $0x18] sm:$0x1] %v398
        %v400 = vld [vmem:[#allocation2 + $0x24] sm:$0x1]
        %v401 = vsel %vm390, 0, %v400
        %402 = vst [vmem:[#allocation2 + $0x24] sm:$0x1] %v401
        %v403 = vld [vmem:[#allocation2 + $0x30] sm:$0x1]
        %v404 = vsel %vm390, 0, %v403
        %405 = vst [vmem:[#allocation2 + $0x30] sm:$0x1] %v404
        %v406 = vld [vmem:[#allocation2 + $0x3c] sm:$0x1]
        %v407 = vsel %vm390, 0, %v406
        %408 = vst [vmem:[#allocation2 + $0x3c] sm:$0x1] %v407
        %v409 = vld [vmem:[#allocation2 + $0x48] sm:$0x1]
        %v410 = vsel %vm390, 0, %v409
        %411 = vst [vmem:[#allocation2 + $0x48] sm:$0x1] %v410
        %v412 = vld [vmem:[#allocation2 + $0x54] sm:$0x1]
        %v413 = vsel %vm390, 0, %v412
        %414 = vst [vmem:[#allocation2 + $0x54] sm:$0x1] %v413
        %v415 = vld [vmem:[#allocation2 + $0x60] sm:$0x1]
        %v416 = vsel %vm390, 0, %v415
        %417 = vst [vmem:[#allocation2 + $0x60] sm:$0x1] %v416
        %v418 = vld [vmem:[#allocation2 + $0x6c] sm:$0x1]
        %v419 = vsel %vm390, 0, %v418
        %420 = vst [vmem:[#allocation2 + $0x6c] sm:$0x1] %v419
        %v421 = vld [vmem:[#allocation2 + $0x78] sm:$0x1]
        %v422 = vsel %vm390, 0, %v421
        %423 = vst [vmem:[#allocation2 + $0x78] sm:$0x1] %v422
        %v424 = vld [vmem:[#allocation2 + $0x84] sm:$0x1]
        %v425 = vsel %vm390, 0, %v424
        %426 = vst [vmem:[#allocation2 + $0x84] sm:$0x1] %v425
        %v427 = vld [vmem:[#allocation2 + $0x90] sm:$0x1]
        %v428 = vsel %vm390, 0, %v427
        %429 = vst [vmem:[#allocation2 + $0x90] sm:$0x1] %v428
        %v430 = vld [vmem:[#allocation2 + $0x9c] sm:$0x1]
        %v431 = vsel %vm390, 0, %v430
        %432 = vst [vmem:[#allocation2 + $0x9c] sm:$0x1] %v431
        %v433 = vld [vmem:[#allocation2 + $0xa8] sm:$0x1]
        %v434 = vsel %vm390, 0, %v433
        %435 = vst [vmem:[#allocation2 + $0xa8] sm:$0x1] %v434
        %v436 = vld [vmem:[#allocation2 + $0xb4] sm:$0x1]
        %v437 = vsel %vm390, 0, %v436
        %438 = vst [vmem:[#allocation2 + $0xb4] sm:$0x1] %v437
        %v439 = vld [vmem:[#allocation2 + $0xc0] sm:$0x1]
        %v440 = vsel %vm390, 0, %v439
        %441 = vst [vmem:[#allocation2 + $0xc0] sm:$0x1] %v440
        %v442 = vld [vmem:[#allocation2 + $0xcc] sm:$0x1]
        %v443 = vsel %vm390, 0, %v442
        %444 = vst [vmem:[#allocation2 + $0xcc] sm:$0x1] %v443
        %vm445 = vsmask.f32 7938
        %vm446 = vmand %vm388, %vm445
        %v447 = vld [vmem:[#allocation2 + $0x8] sm:$0x1]
        %v448 = vsel %vm446, 0, %v447
        %449 = vst [vmem:[#allocation2 + $0x8] sm:$0x1] %v448
        %v450 = vld [vmem:[#allocation2 + $0x14] sm:$0x1]
        %v451 = vsel %vm446, 0, %v450
        %452 = vst [vmem:[#allocation2 + $0x14] sm:$0x1] %v451
        %v453 = vld [vmem:[#allocation2 + $0x20] sm:$0x1]
        %v454 = vsel %vm446, 0, %v453
        %455 = vst [vmem:[#allocation2 + $0x20] sm:$0x1] %v454
        %v456 = vld [vmem:[#allocation2 + $0x2c] sm:$0x1]
        %v457 = vsel %vm446, 0, %v456
        %458 = vst [vmem:[#allocation2 + $0x2c] sm:$0x1] %v457
        %v459 = vld [vmem:[#allocation2 + $0x38] sm:$0x1]
        %v460 = vsel %vm446, 0, %v459
        %461 = vst [vmem:[#allocation2 + $0x38] sm:$0x1] %v460
        %v462 = vld [vmem:[#allocation2 + $0x44] sm:$0x1]
        %v463 = vsel %vm446, 0, %v462
        %464 = vst [vmem:[#allocation2 + $0x44] sm:$0x1] %v463
        %v465 = vld [vmem:[#allocation2 + $0x50] sm:$0x1]
        %v466 = vsel %vm446, 0, %v465
        %467 = vst [vmem:[#allocation2 + $0x50] sm:$0x1] %v466
        %v468 = vld [vmem:[#allocation2 + $0x5c] sm:$0x1]
        %v469 = vsel %vm446, 0, %v468
        %470 = vst [vmem:[#allocation2 + $0x5c] sm:$0x1] %v469
        %v471 = vld [vmem:[#allocation2 + $0x68] sm:$0x1]
        %v472 = vsel %vm446, 0, %v471
        %473 = vst [vmem:[#allocation2 + $0x68] sm:$0x1] %v472
        %v474 = vld [vmem:[#allocation2 + $0x74] sm:$0x1]
        %v475 = vsel %vm446, 0, %v474
        %476 = vst [vmem:[#allocation2 + $0x74] sm:$0x1] %v475
        %v477 = vld [vmem:[#allocation2 + $0x80] sm:$0x1]
        %v478 = vsel %vm446, 0, %v477
        %479 = vst [vmem:[#allocation2 + $0x80] sm:$0x1] %v478
        %v480 = vld [vmem:[#allocation2 + $0x8c] sm:$0x1]
        %v481 = vsel %vm446, 0, %v480
        %482 = vst [vmem:[#allocation2 + $0x8c] sm:$0x1] %v481
        %v483 = vld [vmem:[#allocation2 + $0x98] sm:$0x1]
        %v484 = vsel %vm446, 0, %v483
        %485 = vst [vmem:[#allocation2 + $0x98] sm:$0x1] %v484
        %v486 = vld [vmem:[#allocation2 + $0xa4] sm:$0x1]
        %v487 = vsel %vm446, 0, %v486
        %488 = vst [vmem:[#allocation2 + $0xa4] sm:$0x1] %v487
        %v489 = vld [vmem:[#allocation2 + $0xb0] sm:$0x1]
        %v490 = vsel %vm446, 0, %v489
        %491 = vst [vmem:[#allocation2 + $0xb0] sm:$0x1] %v490
        %v492 = vld [vmem:[#allocation2 + $0xbc] sm:$0x1]
        %v493 = vsel %vm446, 0, %v492
        %494 = vst [vmem:[#allocation2 + $0xbc] sm:$0x1] %v493
        %v495 = vld [vmem:[#allocation2 + $0xc8] sm:$0x1]
        %v496 = vsel %vm446, 0, %v495
        %497 = vst [vmem:[#allocation2 + $0xc8] sm:$0x1] %v496
        %v498 = vld [vmem:[#allocation2 + $0xd4] sm:$0x1]
        %v499 = vsel %vm446, 0, %v498
        %500 = vst [vmem:[#allocation2 + $0xd4] sm:$0x1] %v499
        %v501 = vld [vmem:[%s1] sm:$0xf]
        %v502 = vld [vmem:[%s1 + $0x4] sm:$0xf]
        %v503 = vld [vmem:[%s7] sm:$0x3]
        %v504 = vld [vmem:[%s2] sm:$0x1]
        %v505 = vld [vmem:[%s3] sm:$0x1]
        %v506 = vld [vmem:[%s5] sm:$0x1]
        %v507 = vld [vmem:[%s6] sm:$0x1]
        %v508 = vld [vmem:[%s8] sm:$0x1]
        %v509 = vld [vmem:[%s9] sm:$0x1]
        loop: start=0, step=1, limit=2
        $region65: #{tpu_custom_call.1} parent=59 // loop_pre_header
          _
        $region66: #{tpu_custom_call.1} parent=59 // loop_header
          %s511 = sphi 0, %s515
          %p512 = scmp.ge.s32.totalorder %s511, 2
        $region67: #{tpu_custom_call.1} parent=59 // loop_header_branch
          %514 = sbr.rel (%p512) target = $region71
        $region68: #{tpu_custom_call.1} parent=59 // loop_body
          %s516 = smul.u32 %s511, 8
          %s517 = smul.u32 %s516, 2
          %s518 = smul.addr %s517, 4
          %s519 = scalar_lea.vmem %s341, %s518 [#allocation3]
          %v520 = vld [vmem:[%s519] sm:$0xf]
          %v521 = vld [vmem:[%s519 + $0x4] sm:$0xf]
          %v522 = vld [vmem:[%s519 + $0x8] sm:$0xf]
          %v523 = vld [vmem:[%s519 + $0xc] sm:$0xf]
          %v524 = vld [vmem:[%s519 + $0x10] sm:$0xf]
          %v525 = vld [vmem:[%s519 + $0x14] sm:$0xf]
          %v526 = vld [vmem:[%s519 + $0x18] sm:$0xf]
          %v527 = vld [vmem:[%s519 + $0x1c] sm:$0xf]
          %v528 = vld [vmem:[%s519 + $0x20] sm:$0xf]
          %v529 = vld [vmem:[%s519 + $0x24] sm:$0xf]
          %v530 = vld [vmem:[%s519 + $0x28] sm:$0xf]
          %v531 = vld [vmem:[%s519 + $0x2c] sm:$0xf]
          %v532 = vld [vmem:[%s519 + $0x30] sm:$0xf]
          %v533 = vld [vmem:[%s519 + $0x34] sm:$0xf]
          %v534 = vld [vmem:[%s519 + $0x38] sm:$0xf]
          %v535 = vld [vmem:[%s519 + $0x3c] sm:$0xf]
          %v552 = vunpack.c.l.b16 %v520
          %v553 = vunpack.c.l.b16 %v521
          %v554 = vunpack.c.l.b16 %v522
          %v555 = vunpack.c.l.b16 %v523
          %v556 = vunpack.c.l.b16 %v524
          %v557 = vunpack.c.l.b16 %v525
          %v558 = vunpack.c.l.b16 %v526
          %v559 = vunpack.c.l.b16 %v527
          %v560 = vunpack.c.l.b16 %v528
          %v561 = vunpack.c.l.b16 %v529
          %v562 = vunpack.c.l.b16 %v530
          %v563 = vunpack.c.l.b16 %v531
          %v564 = vunpack.c.l.b16 %v532
          %v565 = vunpack.c.l.b16 %v533
          %v566 = vunpack.c.l.b16 %v534
          %v567 = vunpack.c.l.b16 %v535
          %v568 = vpack.c.b16 %v553, %v552
          %v569 = vpack.c.b16 %v555, %v554
          %v570 = vpack.c.b16 %v557, %v556
          %v571 = vpack.c.b16 %v559, %v558
          %v572 = vpack.c.b16 %v561, %v560
          %v573 = vpack.c.b16 %v563, %v562
          %v574 = vpack.c.b16 %v565, %v564
          %v575 = vpack.c.b16 %v567, %v566
          %v578 = vunpack.c.l.b16 %v501
          %v579 = vunpack.c.l.b16 %v502
          %v580 = vpack.c.b16 %v579, %v578
          %vm582 = vcmask 130048
          %v584 = vsel %vm582, %v568, 0
          %v587 = vsel %vm582, %v569, 0
          %v590 = vsel %vm582, %v570, 0
          %v593 = vsel %vm582, %v571, 0
          %v596 = vsel %vm582, %v572, 0
          %v599 = vsel %vm582, %v573, 0
          %v602 = vsel %vm582, %v574, 0
          %v605 = vsel %vm582, %v575, 0
          %607 = vmatprep.subr.bf16.mxu0 0
          %608 = vmatpush1.bf16.msra.mxu0 %v580
          %609 = vmatprep.subr.bf16.mxu0 0
          %610 = vmatpush1.bf16.msra.mxu0 0
          %611 = vmatprep.subr.bf16.mxu0 0
          %612 = vmatpush1.bf16.msra.mxu0 0
          %613 = vmatprep.subr.bf16.mxu0 0
          %614 = vmatpush1.bf16.msra.mxu0 0
          %615 = vmatprep.subr.bf16.mxu0 0
          %616 = vmatpush1.bf16.msra.mxu0 0
          %617 = vmatprep.subr.bf16.mxu0 0
          %618 = vmatpush1.bf16.msra.mxu0 0
          %619 = vmatprep.subr.bf16.mxu0 0
          %620 = vmatpush1.bf16.msra.mxu0 0
          %621 = vmatprep.subr.bf16.mxu0 0
          %622 = vmatpush1.bf16.msra.mxu0 0
          %623 = vmatprep.subr.bf16.mxu0 0
          %624 = vmatpush1.bf16.msra.mxu0 0
          %625 = vmatprep.subr.bf16.mxu0 0
          %626 = vmatpush1.bf16.msra.mxu0 0
          %627 = vmatprep.subr.bf16.mxu0 0
          %628 = vmatpush1.bf16.msra.mxu0 0
          %629 = vmatprep.subr.bf16.mxu0 0
          %630 = vmatpush1.bf16.msra.mxu0 0
          %631 = vmatprep.subr.bf16.mxu0 0
          %632 = vmatpush1.bf16.msra.mxu0 0
          %633 = vmatprep.subr.bf16.mxu0 0
          %634 = vmatpush1.bf16.msra.mxu0 0
          %635 = vmatprep.subr.bf16.mxu0 0
          %636 = vmatpush1.bf16.msra.mxu0 0
          %637 = vmatprep.subr.bf16.mxu0 0
          %638 = vmatpush1.bf16.msra.mxu0 0
          %639 = vmatprep.mubr.bf16.mxu0 0
          %640 = vmatmul.mubr.bf16.gmra.mrb[0].mxu0 %v584
          %v641 = vpop.f32.mrb[0].mxu0
          %v642 = vadd.f32 0.0, %v641
          %v643 = vpop.f32.mrb[0].mxu0
          %v644 = vpop.f32.mrb[0].mxu0
          %v645 = vadd.f32 0.0, %v644
          %v646 = vpop.f32.mrb[0].mxu0
          %647 = vmatprep.mubr.bf16.mxu0 0
          %648 = vmatmul.mubr.bf16.gmra.mrb[0].mxu0 %v587
          %v649 = vpop.f32.mrb[0].mxu0
          %v650 = vadd.f32 0.0, %v649
          %v651 = vpop.f32.mrb[0].mxu0
          %v652 = vpop.f32.mrb[0].mxu0
          %v653 = vadd.f32 0.0, %v652
          %v654 = vpop.f32.mrb[0].mxu0
          %655 = vmatprep.mubr.bf16.mxu0 0
          %656 = vmatmul.mubr.bf16.gmra.mrb[0].mxu0 %v590
          %v657 = vpop.f32.mrb[0].mxu0
          %v658 = vadd.f32 0.0, %v657
          %v659 = vpop.f32.mrb[0].mxu0
          %v660 = vpop.f32.mrb[0].mxu0
          %v661 = vadd.f32 0.0, %v660
          %v662 = vpop.f32.mrb[0].mxu0
          %663 = vmatprep.mubr.bf16.mxu0 0
          %664 = vmatmul.mubr.bf16.gmra.mrb[0].mxu0 %v593
          %v665 = vpop.f32.mrb[0].mxu0
          %v666 = vadd.f32 0.0, %v665
          %v667 = vpop.f32.mrb[0].mxu0
          %v668 = vpop.f32.mrb[0].mxu0
          %v669 = vadd.f32 0.0, %v668
          %v670 = vpop.f32.mrb[0].mxu0
          %671 = vmatprep.mubr.bf16.mxu0 0
          %672 = vmatmul.mubr.bf16.gmra.mrb[0].mxu0 %v596
          %v673 = vpop.f32.mrb[0].mxu0
          %v674 = vadd.f32 0.0, %v673
          %v675 = vpop.f32.mrb[0].mxu0
          %v676 = vpop.f32.mrb[0].mxu0
          %v677 = vadd.f32 0.0, %v676
          %v678 = vpop.f32.mrb[0].mxu0
          %679 = vmatprep.mubr.bf16.mxu0 0
          %680 = vmatmul.mubr.bf16.gmra.mrb[0].mxu0 %v599
          %v681 = vpop.f32.mrb[0].mxu0
          %v682 = vadd.f32 0.0, %v681
          %v683 = vpop.f32.mrb[0].mxu0
          %v684 = vpop.f32.mrb[0].mxu0
          %v685 = vadd.f32 0.0, %v684
          %v686 = vpop.f32.mrb[0].mxu0
          %687 = vmatprep.mubr.bf16.mxu0 0
          %688 = vmatmul.mubr.bf16.gmra.mrb[0].mxu0 %v602
          %v689 = vpop.f32.mrb[0].mxu0
          %v690 = vadd.f32 0.0, %v689
          %v691 = vpop.f32.mrb[0].mxu0
          %v692 = vpop.f32.mrb[0].mxu0
          %v693 = vadd.f32 0.0, %v692
          %v694 = vpop.f32.mrb[0].mxu0
          %695 = vmatprep.mubr.bf16.mxu0 0
          %696 = vmatmul.mubr.bf16.gmra.mrb[0].mxu0 %v605
          %v697 = vpop.f32.mrb[0].mxu0
          %v698 = vadd.f32 0.0, %v697
          %v699 = vpop.f32.mrb[0].mxu0
          %v700 = vpop.f32.mrb[0].mxu0
          %v701 = vadd.f32 0.0, %v700
          %v702 = vpop.f32.mrb[0].mxu0
          %703 = vdwg.mxu0
          %v705 = vlaneseq
          %v706 = vshrl.u32 %v705, 7
          %v707 = vsub.s32 0, %v706
          %v708 = vrot.slane %v504, %v707
          %v710 = vmul.f32 %v642, %v708
          %v711 = vmul.f32 %v645, %v708
          %v712 = vmul.f32 %v650, %v708
          %v713 = vmul.f32 %v653, %v708
          %v714 = vmul.f32 %v658, %v708
          %v715 = vmul.f32 %v661, %v708
          %v716 = vmul.f32 %v666, %v708
          %v717 = vmul.f32 %v669, %v708
          %v718 = vmul.f32 %v674, %v708
          %v719 = vmul.f32 %v677, %v708
          %v720 = vmul.f32 %v682, %v708
          %v721 = vmul.f32 %v685, %v708
          %v722 = vmul.f32 %v690, %v708
          %v723 = vmul.f32 %v693, %v708
          %v724 = vmul.f32 %v698, %v708
          %v725 = vmul.f32 %v701, %v708
          %v727 = vlaneseq
          %v728 = vshrl.u32 %v727, 7
          %v729 = vsub.s32 0, %v728
          %v730 = vrot.slane %v505, %v729
          %v732 = vadd.f32 %v710, %v730
          %v733 = vadd.f32 %v711, %v730
          %v734 = vadd.f32 %v712, %v730
          %v735 = vadd.f32 %v713, %v730
          %v736 = vadd.f32 %v714, %v730
          %v737 = vadd.f32 %v715, %v730
          %v738 = vadd.f32 %v716, %v730
          %v739 = vadd.f32 %v717, %v730
          %v740 = vadd.f32 %v718, %v730
          %v741 = vadd.f32 %v719, %v730
          %v742 = vadd.f32 %v720, %v730
          %v743 = vadd.f32 %v721, %v730
          %v744 = vadd.f32 %v722, %v730
          %v745 = vadd.f32 %v723, %v730
          %v746 = vadd.f32 %v724, %v730
          %v747 = vadd.f32 %v725, %v730
          %v748 = vmax.f32 %v732, 0.0
          %v749 = vmax.f32 %v733, 0.0
          %v750 = vmax.f32 %v734, 0.0
          %v751 = vmax.f32 %v735, 0.0
          %v752 = vmax.f32 %v736, 0.0
          %v753 = vmax.f32 %v737, 0.0
          %v754 = vmax.f32 %v738, 0.0
          %v755 = vmax.f32 %v739, 0.0
          %v756 = vmax.f32 %v740, 0.0
          %v757 = vmax.f32 %v741, 0.0
          %v758 = vmax.f32 %v742, 0.0
          %v759 = vmax.f32 %v743, 0.0
          %v760 = vmax.f32 %v744, 0.0
          %v761 = vmax.f32 %v745, 0.0
          %v762 = vmax.f32 %v746, 0.0
          %v763 = vmax.f32 %v747, 0.0
          %v764 = vpack.c.bf16 %v749, %v748
          %v765 = vpack.c.bf16 %v751, %v750
          %v766 = vpack.c.bf16 %v753, %v752
          %v767 = vpack.c.bf16 %v755, %v754
          %v768 = vpack.c.bf16 %v757, %v756
          %v769 = vpack.c.bf16 %v759, %v758
          %v770 = vpack.c.bf16 %v761, %v760
          %v771 = vpack.c.bf16 %v763, %v762
          %s772 = sadd.s32 %s516, 1
          %v781 = vunpack.c.l.b16 %v764
          %v782 = vunpack.c.h.b16 %v764
          %v783 = vunpack.c.l.b16 %v765
          %v784 = vunpack.c.h.b16 %v765
          %v785 = vunpack.c.l.b16 %v766
          %v786 = vunpack.c.h.b16 %v766
          %v787 = vunpack.c.l.b16 %v767
          %v788 = vunpack.c.h.b16 %v767
          %v789 = vunpack.c.l.b16 %v768
          %v790 = vunpack.c.h.b16 %v768
          %v791 = vunpack.c.l.b16 %v769
          %v792 = vunpack.c.h.b16 %v769
          %v793 = vunpack.c.l.b16 %v770
          %v794 = vunpack.c.h.b16 %v770
          %v795 = vunpack.c.l.b16 %v771
          %v796 = vunpack.c.h.b16 %v771
          %v797 = vpack.c.b16 %v781, %v781
          %v798 = vpack.c.b16 %v782, %v782
          %v799 = vpack.c.b16 %v783, %v783
          %v800 = vpack.c.b16 %v784, %v784
          %v801 = vpack.c.b16 %v785, %v785
          %v802 = vpack.c.b16 %v786, %v786
          %v803 = vpack.c.b16 %v787, %v787
          %v804 = vpack.c.b16 %v788, %v788
          %v805 = vpack.c.b16 %v789, %v789
          %v806 = vpack.c.b16 %v790, %v790
          %v807 = vpack.c.b16 %v791, %v791
          %v808 = vpack.c.b16 %v792, %v792
          %v809 = vpack.c.b16 %v793, %v793
          %v810 = vpack.c.b16 %v794, %v794
          %v811 = vpack.c.b16 %v795, %v795
          %v812 = vpack.c.b16 %v796, %v796
          %vm813 = vsmask.f32 4368
          %vm814 = vmor %vm389, %vm813
          %v816 = vshrl.u32 %v797, 16
          %v818 = vrot.slane %v816, 7
          %v819 = vshll.u32 %v797, 16
          %v821 = vor.u32 %v818, %v819
          %v822 = vrot.slane %v818, 4
          %v824 = vshrl.u32 %v798, 16
          %v826 = vrot.slane %v824, 7
          %v827 = vshll.u32 %v798, 16
          %v829 = vor.u32 %v826, %v827
          %v830 = vsel %vm814, %v822, %v829
          %v831 = vrot.slane %v826, 4
          %v833 = vshrl.u32 %v799, 16
          %v835 = vrot.slane %v833, 7
          %v836 = vshll.u32 %v799, 16
          %v838 = vor.u32 %v835, %v836
          %v839 = vrot.slane %v835, 4
          %v841 = vshrl.u32 %v800, 16
          %v843 = vrot.slane %v841, 7
          %v844 = vshll.u32 %v800, 16
          %v846 = vor.u32 %v843, %v844
          %v847 = vsel %vm814, %v839, %v846
          %v848 = vrot.slane %v843, 4
          %v850 = vshrl.u32 %v801, 16
          %v852 = vrot.slane %v850, 7
          %v853 = vshll.u32 %v801, 16
          %v855 = vor.u32 %v852, %v853
          %v856 = vrot.slane %v852, 4
          %v858 = vshrl.u32 %v802, 16
          %v860 = vrot.slane %v858, 7
          %v861 = vshll.u32 %v802, 16
          %v863 = vor.u32 %v860, %v861
          %v864 = vsel %vm814, %v856, %v863
          %v865 = vrot.slane %v860, 4
          %v867 = vshrl.u32 %v803, 16
          %v869 = vrot.slane %v867, 7
          %v870 = vshll.u32 %v803, 16
          %v872 = vor.u32 %v869, %v870
          %v873 = vrot.slane %v869, 4
          %v875 = vshrl.u32 %v804, 16
          %v877 = vrot.slane %v875, 7
          %v878 = vshll.u32 %v804, 16
          %v880 = vor.u32 %v877, %v878
          %v881 = vsel %vm814, %v873, %v880
          %v882 = vrot.slane %v877, 4
          %v884 = vshrl.u32 %v805, 16
          %v886 = vrot.slane %v884, 7
          %v887 = vshll.u32 %v805, 16
          %v889 = vor.u32 %v886, %v887
          %v890 = vrot.slane %v886, 4
          %v892 = vshrl.u32 %v806, 16
          %v894 = vrot.slane %v892, 7
          %v895 = vshll.u32 %v806, 16
          %v897 = vor.u32 %v894, %v895
          %v898 = vsel %vm814, %v890, %v897
          %v899 = vrot.slane %v894, 4
          %v901 = vshrl.u32 %v807, 16
          %v903 = vrot.slane %v901, 7
          %v904 = vshll.u32 %v807, 16
          %v906 = vor.u32 %v903, %v904
          %v907 = vrot.slane %v903, 4
          %v909 = vshrl.u32 %v808, 16
          %v911 = vrot.slane %v909, 7
          %v912 = vshll.u32 %v808, 16
          %v914 = vor.u32 %v911, %v912
          %v915 = vsel %vm814, %v907, %v914
          %v916 = vrot.slane %v911, 4
          %v918 = vshrl.u32 %v809, 16
          %v920 = vrot.slane %v918, 7
          %v921 = vshll.u32 %v809, 16
          %v923 = vor.u32 %v920, %v921
          %v924 = vrot.slane %v920, 4
          %v926 = vshrl.u32 %v810, 16
          %v928 = vrot.slane %v926, 7
          %v929 = vshll.u32 %v810, 16
          %v931 = vor.u32 %v928, %v929
          %v932 = vsel %vm814, %v924, %v931
          %v933 = vrot.slane %v928, 4
          %v935 = vshrl.u32 %v811, 16
          %v937 = vrot.slane %v935, 7
          %v938 = vshll.u32 %v811, 16
          %v940 = vor.u32 %v937, %v938
          %v941 = vrot.slane %v937, 4
          %v943 = vshrl.u32 %v812, 16
          %v945 = vrot.slane %v943, 7
          %v946 = vshll.u32 %v812, 16
          %v948 = vor.u32 %v945, %v946
          %v949 = vsel %vm814, %v941, %v948
          %v950 = vrot.slane %v945, 4
          %s975 = smul.u32 %s772, 3
          %s976 = smul.addr %s975, 4
          %s977 = scalar_lea.vmem [#allocation2], %s976
          %vm978 = vcmask 27648
          %vm979 = vmand %vm978, %vm445
          %v980 = vld [vmem:[%s977] sm:$0xf]
          %v981 = vsel %vm979, %v821, %v980
          %982 = vst [vmem:[%s977] sm:$0xf] %v981
          %983 = vst.msk [vmem:[%s977 + $0x4] sm:$0xf] %vm379, %v830
          %v984 = vld [vmem:[%s977 + $0x8] sm:$0x1]
          %v985 = vsel %vm390, %v831, %v984
          %986 = vst [vmem:[%s977 + $0x8] sm:$0x1] %v985
          %v987 = vld [vmem:[%s977 + $0xc] sm:$0xf]
          %v988 = vsel %vm979, %v838, %v987
          %989 = vst [vmem:[%s977 + $0xc] sm:$0xf] %v988
          %990 = vst.msk [vmem:[%s977 + $0x10] sm:$0xf] %vm379, %v847
          %v991 = vld [vmem:[%s977 + $0x14] sm:$0x1]
          %v992 = vsel %vm390, %v848, %v991
          %993 = vst [vmem:[%s977 + $0x14] sm:$0x1] %v992
          %v994 = vld [vmem:[%s977 + $0x18] sm:$0xf]
          %v995 = vsel %vm979, %v855, %v994
          %996 = vst [vmem:[%s977 + $0x18] sm:$0xf] %v995
          %997 = vst.msk [vmem:[%s977 + $0x1c] sm:$0xf] %vm379, %v864
          %v998 = vld [vmem:[%s977 + $0x20] sm:$0x1]
          %v999 = vsel %vm390, %v865, %v998
          %1000 = vst [vmem:[%s977 + $0x20] sm:$0x1] %v999
          %v1001 = vld [vmem:[%s977 + $0x24] sm:$0xf]
          %v1002 = vsel %vm979, %v872, %v1001
          %1003 = vst [vmem:[%s977 + $0x24] sm:$0xf] %v1002
          %1004 = vst.msk [vmem:[%s977 + $0x28] sm:$0xf] %vm379, %v881
          %v1005 = vld [vmem:[%s977 + $0x2c] sm:$0x1]
          %v1006 = vsel %vm390, %v882, %v1005
          %1007 = vst [vmem:[%s977 + $0x2c] sm:$0x1] %v1006
          %v1008 = vld [vmem:[%s977 + $0x30] sm:$0xf]
          %v1009 = vsel %vm979, %v889, %v1008
          %1010 = vst [vmem:[%s977 + $0x30] sm:$0xf] %v1009
          %1011 = vst.msk [vmem:[%s977 + $0x34] sm:$0xf] %vm379, %v898
          %v1012 = vld [vmem:[%s977 + $0x38] sm:$0x1]
          %v1013 = vsel %vm390, %v899, %v1012
          %1014 = vst [vmem:[%s977 + $0x38] sm:$0x1] %v1013
          %v1015 = vld [vmem:[%s977 + $0x3c] sm:$0xf]
          %v1016 = vsel %vm979, %v906, %v1015
          %1017 = vst [vmem:[%s977 + $0x3c] sm:$0xf] %v1016
          %1018 = vst.msk [vmem:[%s977 + $0x40] sm:$0xf] %vm379, %v915
          %v1019 = vld [vmem:[%s977 + $0x44] sm:$0x1]
          %v1020 = vsel %vm390, %v916, %v1019
          %1021 = vst [vmem:[%s977 + $0x44] sm:$0x1] %v1020
          %v1022 = vld [vmem:[%s977 + $0x48] sm:$0xf]
          %v1023 = vsel %vm979, %v923, %v1022
          %1024 = vst [vmem:[%s977 + $0x48] sm:$0xf] %v1023
          %1025 = vst.msk [vmem:[%s977 + $0x4c] sm:$0xf] %vm379, %v932
          %v1026 = vld [vmem:[%s977 + $0x50] sm:$0x1]
          %v1027 = vsel %vm390, %v933, %v1026
          %1028 = vst [vmem:[%s977 + $0x50] sm:$0x1] %v1027
          %v1029 = vld [vmem:[%s977 + $0x54] sm:$0xf]
          %v1030 = vsel %vm979, %v940, %v1029
          %1031 = vst [vmem:[%s977 + $0x54] sm:$0xf] %v1030
          %1032 = vst.msk [vmem:[%s977 + $0x58] sm:$0xf] %vm379, %v949
          %v1033 = vld [vmem:[%s977 + $0x5c] sm:$0x1]
          %v1034 = vsel %vm390, %v950, %v1033
          %1035 = vst [vmem:[%s977 + $0x5c] sm:$0x1] %v1034
        $region69: #{tpu_custom_call.1} parent=59 // loop_footer
          %s515 = sadd.s32 1, %s511
        $region70: #{tpu_custom_call.1} parent=59 // loop_footer_branch
          %510 = sbr.rel target = $region66
        $region71: #{tpu_custom_call.1} parent=59 // loop_exit
          _
        loop: start=0, step=1, limit=2
        $region72: #{tpu_custom_call.1} parent=59 // loop_pre_header
          _
        $region73: #{tpu_custom_call.1} parent=59 // loop_header
          %s1037 = sphi 0, %s1041
          %p1038 = scmp.ge.s32.totalorder %s1037, 2
        $region74: #{tpu_custom_call.1} parent=59 // loop_header_branch
          %1040 = sbr.rel (%p1038) target = $region78
        $region75: #{tpu_custom_call.1} parent=59 // loop_body
          %s1042 = smul.u32 %s1037, 8
          %s1043 = smul.u32 %s1042, 3
          %s1044 = smul.addr %s1043, 4
          %s1045 = scalar_lea.vmem [#allocation2], %s1044
          %v1046 = vld [vmem:[%s1045] sm:$0xf]
          %v1047 = vld [vmem:[%s1045 + $0x4] sm:$0xf]
          %v1048 = vld [vmem:[%s1045 + $0xc] sm:$0xf]
          %v1049 = vld [vmem:[%s1045 + $0x10] sm:$0xf]
          %v1050 = vld [vmem:[%s1045 + $0x18] sm:$0xf]
          %v1051 = vld [vmem:[%s1045 + $0x1c] sm:$0xf]
          %v1052 = vld [vmem:[%s1045 + $0x24] sm:$0xf]
          %v1053 = vld [vmem:[%s1045 + $0x28] sm:$0xf]
          %v1054 = vld [vmem:[%s1045 + $0x30] sm:$0xf]
          %v1055 = vld [vmem:[%s1045 + $0x34] sm:$0xf]
          %v1056 = vld [vmem:[%s1045 + $0x3c] sm:$0xf]
          %v1057 = vld [vmem:[%s1045 + $0x40] sm:$0xf]
          %v1058 = vld [vmem:[%s1045 + $0x48] sm:$0xf]
          %v1059 = vld [vmem:[%s1045 + $0x4c] sm:$0xf]
          %v1060 = vld [vmem:[%s1045 + $0x54] sm:$0xf]
          %v1061 = vld [vmem:[%s1045 + $0x58] sm:$0xf]
          %v1062 = vld [vmem:[%s4] sm:$0x3]
          %v1063 = vld [vmem:[%s1045 + $0x8] sm:$0x1]
          %v1064 = vld [vmem:[%s1045 + $0x14] sm:$0x1]
          %v1065 = vld [vmem:[%s1045 + $0x20] sm:$0x1]
          %v1066 = vld [vmem:[%s1045 + $0x2c] sm:$0x1]
          %v1067 = vld [vmem:[%s1045 + $0x38] sm:$0x1]
          %v1068 = vld [vmem:[%s1045 + $0x44] sm:$0x1]
          %v1069 = vld [vmem:[%s1045 + $0x50] sm:$0x1]
          %v1070 = vld [vmem:[%s1045 + $0x5c] sm:$0x1]
          %vm1071 = vsmask.f32 3328
          %vm1072 = vsmask.f32 7440
          %vm1073 = vmor %vm1071, %vm1072
          %v1075 = vshrl.u32 %v1046, 16
          %v1077 = vrot.slane %v1075, 4
          %v1078 = vshll.u32 %v1046, 16
          %v1080 = vrot.slane %v1078, 5
          %v1081 = vor.u32 %v1077, %v1080
          %v1082 = vrot.slane %v1081, 4
          %v1084 = vshll.u32 %v1047, 16
          %v1086 = vrot.slane %v1084, 5
          %v1087 = vsel %vm1073, %v1082, %v1086
          %v1088 = vshrl.u32 %v1047, 16
          %v1090 = vrot.slane %v1088, 4
          %v1091 = vor.u32 %v1090, %v1086
          %v1092 = vrot.slane %v1091, 4
          %v1094 = vshll.u32 %v1063, 16
          %v1096 = vrot.slane %v1094, 5
          %v1097 = vsel %vm1073, %v1092, %v1096
          %v1099 = vshrl.u32 %v1048, 16
          %v1101 = vrot.slane %v1099, 4
          %v1102 = vshll.u32 %v1048, 16
          %v1104 = vrot.slane %v1102, 5
          %v1105 = vor.u32 %v1101, %v1104
          %v1106 = vrot.slane %v1105, 4
          %v1108 = vshll.u32 %v1049, 16
          %v1110 = vrot.slane %v1108, 5
          %v1111 = vsel %vm1073, %v1106, %v1110
          %v1112 = vshrl.u32 %v1049, 16
          %v1114 = vrot.slane %v1112, 4
          %v1115 = vor.u32 %v1114, %v1110
          %v1116 = vrot.slane %v1115, 4
          %v1118 = vshll.u32 %v1064, 16
          %v1120 = vrot.slane %v1118, 5
          %v1121 = vsel %vm1073, %v1116, %v1120
          %v1123 = vshrl.u32 %v1050, 16
          %v1125 = vrot.slane %v1123, 4
          %v1126 = vshll.u32 %v1050, 16
          %v1128 = vrot.slane %v1126, 5
          %v1129 = vor.u32 %v1125, %v1128
          %v1130 = vrot.slane %v1129, 4
          %v1132 = vshll.u32 %v1051, 16
          %v1134 = vrot.slane %v1132, 5
          %v1135 = vsel %vm1073, %v1130, %v1134
          %v1136 = vshrl.u32 %v1051, 16
          %v1138 = vrot.slane %v1136, 4
          %v1139 = vor.u32 %v1138, %v1134
          %v1140 = vrot.slane %v1139, 4
          %v1142 = vshll.u32 %v1065, 16
          %v1144 = vrot.slane %v1142, 5
          %v1145 = vsel %vm1073, %v1140, %v1144
          %v1147 = vshrl.u32 %v1052, 16
          %v1149 = vrot.slane %v1147, 4
          %v1150 = vshll.u32 %v1052, 16
          %v1152 = vrot.slane %v1150, 5
          %v1153 = vor.u32 %v1149, %v1152
          %v1154 = vrot.slane %v1153, 4
          %v1156 = vshll.u32 %v1053, 16
          %v1158 = vrot.slane %v1156, 5
          %v1159 = vsel %vm1073, %v1154, %v1158
          %v1160 = vshrl.u32 %v1053, 16
          %v1162 = vrot.slane %v1160, 4
          %v1163 = vor.u32 %v1162, %v1158
          %v1164 = vrot.slane %v1163, 4
          %v1166 = vshll.u32 %v1066, 16
          %v1168 = vrot.slane %v1166, 5
          %v1169 = vsel %vm1073, %v1164, %v1168
          %v1171 = vshrl.u32 %v1054, 16
          %v1173 = vrot.slane %v1171, 4
          %v1174 = vshll.u32 %v1054, 16
          %v1176 = vrot.slane %v1174, 5
          %v1177 = vor.u32 %v1173, %v1176
          %v1178 = vrot.slane %v1177, 4
          %v1180 = vshll.u32 %v1055, 16
          %v1182 = vrot.slane %v1180, 5
          %v1183 = vsel %vm1073, %v1178, %v1182
          %v1184 = vshrl.u32 %v1055, 16
          %v1186 = vrot.slane %v1184, 4
          %v1187 = vor.u32 %v1186, %v1182
          %v1188 = vrot.slane %v1187, 4
          %v1190 = vshll.u32 %v1067, 16
          %v1192 = vrot.slane %v1190, 5
          %v1193 = vsel %vm1073, %v1188, %v1192
          %v1195 = vshrl.u32 %v1056, 16
          %v1197 = vrot.slane %v1195, 4
          %v1198 = vshll.u32 %v1056, 16
          %v1200 = vrot.slane %v1198, 5
          %v1201 = vor.u32 %v1197, %v1200
          %v1202 = vrot.slane %v1201, 4
          %v1204 = vshll.u32 %v1057, 16
          %v1206 = vrot.slane %v1204, 5
          %v1207 = vsel %vm1073, %v1202, %v1206
          %v1208 = vshrl.u32 %v1057, 16
          %v1210 = vrot.slane %v1208, 4
          %v1211 = vor.u32 %v1210, %v1206
          %v1212 = vrot.slane %v1211, 4
          %v1214 = vshll.u32 %v1068, 16
          %v1216 = vrot.slane %v1214, 5
          %v1217 = vsel %vm1073, %v1212, %v1216
          %v1219 = vshrl.u32 %v1058, 16
          %v1221 = vrot.slane %v1219, 4
          %v1222 = vshll.u32 %v1058, 16
          %v1224 = vrot.slane %v1222, 5
          %v1225 = vor.u32 %v1221, %v1224
          %v1226 = vrot.slane %v1225, 4
          %v1228 = vshll.u32 %v1059, 16
          %v1230 = vrot.slane %v1228, 5
          %v1231 = vsel %vm1073, %v1226, %v1230
          %v1232 = vshrl.u32 %v1059, 16
          %v1234 = vrot.slane %v1232, 4
          %v1235 = vor.u32 %v1234, %v1230
          %v1236 = vrot.slane %v1235, 4
          %v1238 = vshll.u32 %v1069, 16
          %v1240 = vrot.slane %v1238, 5
          %v1241 = vsel %vm1073, %v1236, %v1240
          %v1243 = vshrl.u32 %v1060, 16
          %v1245 = vrot.slane %v1243, 4
          %v1246 = vshll.u32 %v1060, 16
          %v1248 = vrot.slane %v1246, 5
          %v1249 = vor.u32 %v1245, %v1248
          %v1250 = vrot.slane %v1249, 4
          %v1252 = vshll.u32 %v1061, 16
          %v1254 = vrot.slane %v1252, 5
          %v1255 = vsel %vm1073, %v1250, %v1254
          %v1256 = vshrl.u32 %v1061, 16
          %v1258 = vrot.slane %v1256, 4
          %v1259 = vor.u32 %v1258, %v1254
          %v1260 = vrot.slane %v1259, 4
          %v1262 = vshll.u32 %v1070, 16
          %v1264 = vrot.slane %v1262, 5
          %v1265 = vsel %vm1073, %v1260, %v1264
          %s1266 = scalar_lea.vmem %s4, 2
          %v1267 = vld [vmem:[%s1266] sm:$0x3]
          %v1268 = vunpack.c.l.b16 %v1087
          %v1269 = vunpack.c.l.b16 %v1097
          %v1270 = vunpack.c.l.b16 %v1111
          %v1271 = vunpack.c.l.b16 %v1121
          %v1272 = vunpack.c.l.b16 %v1135
          %v1273 = vunpack.c.l.b16 %v1145
          %v1274 = vunpack.c.l.b16 %v1159
          %v1275 = vunpack.c.l.b16 %v1169
          %v1276 = vunpack.c.l.b16 %v1183
          %v1277 = vunpack.c.l.b16 %v1193
          %v1278 = vunpack.c.l.b16 %v1207
          %v1279 = vunpack.c.l.b16 %v1217
          %v1280 = vunpack.c.l.b16 %v1231
          %v1281 = vunpack.c.l.b16 %v1241
          %v1282 = vunpack.c.l.b16 %v1255
          %v1283 = vunpack.c.l.b16 %v1265
          %v1284 = vpack.c.b16 %v1269, %v1268
          %v1285 = vpack.c.b16 %v1271, %v1270
          %v1286 = vpack.c.b16 %v1273, %v1272
          %v1287 = vpack.c.b16 %v1275, %v1274
          %v1288 = vpack.c.b16 %v1277, %v1276
          %v1289 = vpack.c.b16 %v1279, %v1278
          %v1290 = vpack.c.b16 %v1281, %v1280
          %v1291 = vpack.c.b16 %v1283, %v1282
          %vm1292 = vcmask 31744
          %v1294 = vsel %vm1292, %v1284, 0
          %v1297 = vsel %vm1292, %v1285, 0
          %v1300 = vsel %vm1292, %v1286, 0
          %v1303 = vsel %vm1292, %v1287, 0
          %v1306 = vsel %vm1292, %v1288, 0
          %v1309 = vsel %vm1292, %v1289, 0
          %v1312 = vsel %vm1292, %v1290, 0
          %v1315 = vsel %vm1292, %v1291, 0
          %vm1317 = vcmask 1041408
          %v1319 = vsel %vm1317, %v1267, 0
          %1321 = vmatprep.subr.bf16.mxu0 0
          %1322 = vmatpush1.bf16.msra.mxu0 %v1319
          %1323 = vmatprep.subr.bf16.mxu0 0
          %1324 = vmatpush1.bf16.msra.mxu0 0
          %1325 = vmatprep.subr.bf16.mxu0 0
          %1326 = vmatpush1.bf16.msra.mxu0 0
          %1327 = vmatprep.subr.bf16.mxu0 0
          %1328 = vmatpush1.bf16.msra.mxu0 0
          %1329 = vmatprep.subr.bf16.mxu0 0
          %1330 = vmatpush1.bf16.msra.mxu0 0
          %1331 = vmatprep.subr.bf16.mxu0 0
          %1332 = vmatpush1.bf16.msra.mxu0 0
          %1333 = vmatprep.subr.bf16.mxu0 0
          %1334 = vmatpush1.bf16.msra.mxu0 0
          %1335 = vmatprep.subr.bf16.mxu0 0
          %1336 = vmatpush1.bf16.msra.mxu0 0
          %1337 = vmatprep.subr.bf16.mxu0 0
          %1338 = vmatpush1.bf16.msra.mxu0 0
          %1339 = vmatprep.subr.bf16.mxu0 0
          %1340 = vmatpush1.bf16.msra.mxu0 0
          %1341 = vmatprep.subr.bf16.mxu0 0
          %1342 = vmatpush1.bf16.msra.mxu0 0
          %1343 = vmatprep.subr.bf16.mxu0 0
          %1344 = vmatpush1.bf16.msra.mxu0 0
          %1345 = vmatprep.subr.bf16.mxu0 0
          %1346 = vmatpush1.bf16.msra.mxu0 0
          %1347 = vmatprep.subr.bf16.mxu0 0
          %1348 = vmatpush1.bf16.msra.mxu0 0
          %1349 = vmatprep.subr.bf16.mxu0 0
          %1350 = vmatpush1.bf16.msra.mxu0 0
          %1351 = vmatprep.subr.bf16.mxu0 0
          %1352 = vmatpush1.bf16.msra.mxu0 0
          %1353 = vmatprep.mubr.bf16.mxu0 0
          %1354 = vmatmul.mubr.bf16.gmra.mrb[0].mxu0 %v1294
          %v1355 = vpop.f32.mrb[0].mxu0
          %v1356 = vadd.f32 0.0, %v1355
          %v1357 = vpop.f32.mrb[0].mxu0
          %v1358 = vpop.f32.mrb[0].mxu0
          %v1359 = vadd.f32 0.0, %v1358
          %v1360 = vpop.f32.mrb[0].mxu0
          %1361 = vmatprep.mubr.bf16.mxu0 0
          %1362 = vmatmul.mubr.bf16.gmra.mrb[0].mxu0 %v1297
          %v1363 = vpop.f32.mrb[0].mxu0
          %v1364 = vadd.f32 0.0, %v1363
          %v1365 = vpop.f32.mrb[0].mxu0
          %v1366 = vpop.f32.mrb[0].mxu0
          %v1367 = vadd.f32 0.0, %v1366
          %v1368 = vpop.f32.mrb[0].mxu0
          %1369 = vmatprep.mubr.bf16.mxu0 0
          %1370 = vmatmul.mubr.bf16.gmra.mrb[0].mxu0 %v1300
          %v1371 = vpop.f32.mrb[0].mxu0
          %v1372 = vadd.f32 0.0, %v1371
          %v1373 = vpop.f32.mrb[0].mxu0
          %v1374 = vpop.f32.mrb[0].mxu0
          %v1375 = vadd.f32 0.0, %v1374
          %v1376 = vpop.f32.mrb[0].mxu0
          %1377 = vmatprep.mubr.bf16.mxu0 0
          %1378 = vmatmul.mubr.bf16.gmra.mrb[0].mxu0 %v1303
          %v1379 = vpop.f32.mrb[0].mxu0
          %v1380 = vadd.f32 0.0, %v1379
          %v1381 = vpop.f32.mrb[0].mxu0
          %v1382 = vpop.f32.mrb[0].mxu0
          %v1383 = vadd.f32 0.0, %v1382
          %v1384 = vpop.f32.mrb[0].mxu0
          %1385 = vmatprep.mubr.bf16.mxu0 0
          %1386 = vmatmul.mubr.bf16.gmra.mrb[0].mxu0 %v1306
          %v1387 = vpop.f32.mrb[0].mxu0
          %v1388 = vadd.f32 0.0, %v1387
          %v1389 = vpop.f32.mrb[0].mxu0
          %v1390 = vpop.f32.mrb[0].mxu0
          %v1391 = vadd.f32 0.0, %v1390
          %v1392 = vpop.f32.mrb[0].mxu0
          %1393 = vmatprep.mubr.bf16.mxu0 0
          %1394 = vmatmul.mubr.bf16.gmra.mrb[0].mxu0 %v1309
          %v1395 = vpop.f32.mrb[0].mxu0
          %v1396 = vadd.f32 0.0, %v1395
          %v1397 = vpop.f32.mrb[0].mxu0
          %v1398 = vpop.f32.mrb[0].mxu0
          %v1399 = vadd.f32 0.0, %v1398
          %v1400 = vpop.f32.mrb[0].mxu0
          %1401 = vmatprep.mubr.bf16.mxu0 0
          %1402 = vmatmul.mubr.bf16.gmra.mrb[0].mxu0 %v1312
          %v1403 = vpop.f32.mrb[0].mxu0
          %v1404 = vadd.f32 0.0, %v1403
          %v1405 = vpop.f32.mrb[0].mxu0
          %v1406 = vpop.f32.mrb[0].mxu0
          %v1407 = vadd.f32 0.0, %v1406
          %v1408 = vpop.f32.mrb[0].mxu0
          %1409 = vmatprep.mubr.bf16.mxu0 0
          %1410 = vmatmul.mubr.bf16.gmra.mrb[0].mxu0 %v1315
          %v1411 = vpop.f32.mrb[0].mxu0
          %v1412 = vadd.f32 0.0, %v1411
          %v1413 = vpop.f32.mrb[0].mxu0
          %v1414 = vpop.f32.mrb[0].mxu0
          %v1415 = vadd.f32 0.0, %v1414
          %v1416 = vpop.f32.mrb[0].mxu0
          %1417 = vdwg.mxu0
          %v1434 = vunpack.c.l.b16 %v1046
          %v1435 = vunpack.c.l.b16 %v1047
          %v1436 = vunpack.c.l.b16 %v1048
          %v1437 = vunpack.c.l.b16 %v1049
          %v1438 = vunpack.c.l.b16 %v1050
          %v1439 = vunpack.c.l.b16 %v1051
          %v1440 = vunpack.c.l.b16 %v1052
          %v1441 = vunpack.c.l.b16 %v1053
          %v1442 = vunpack.c.l.b16 %v1054
          %v1443 = vunpack.c.l.b16 %v1055
          %v1444 = vunpack.c.l.b16 %v1056
          %v1445 = vunpack.c.l.b16 %v1057
          %v1446 = vunpack.c.l.b16 %v1058
          %v1447 = vunpack.c.l.b16 %v1059
          %v1448 = vunpack.c.l.b16 %v1060
          %v1449 = vunpack.c.l.b16 %v1061
          %v1450 = vpack.c.b16 %v1435, %v1434
          %v1451 = vpack.c.b16 %v1437, %v1436
          %v1452 = vpack.c.b16 %v1439, %v1438
          %v1453 = vpack.c.b16 %v1441, %v1440
          %v1454 = vpack.c.b16 %v1443, %v1442
          %v1455 = vpack.c.b16 %v1445, %v1444
          %v1456 = vpack.c.b16 %v1447, %v1446
          %v1457 = vpack.c.b16 %v1449, %v1448
          %v1459 = vsel %vm1292, %v1450, 0
          %v1462 = vsel %vm1292, %v1451, 0
          %v1465 = vsel %vm1292, %v1452, 0
          %v1468 = vsel %vm1292, %v1453, 0
          %v1471 = vsel %vm1292, %v1454, 0
          %v1474 = vsel %vm1292, %v1455, 0
          %v1477 = vsel %vm1292, %v1456, 0
          %v1480 = vsel %vm1292, %v1457, 0
          %v1483 = vsel %vm1317, %v1062, 0
          %1485 = vmatprep.subr.bf16.mxu0 0
          %1486 = vmatpush1.bf16.msra.mxu0 %v1483
          %1487 = vmatprep.subr.bf16.mxu0 0
          %1488 = vmatpush1.bf16.msra.mxu0 0
          %1489 = vmatprep.subr.bf16.mxu0 0
          %1490 = vmatpush1.bf16.msra.mxu0 0
          %1491 = vmatprep.subr.bf16.mxu0 0
          %1492 = vmatpush1.bf16.msra.mxu0 0
          %1493 = vmatprep.subr.bf16.mxu0 0
          %1494 = vmatpush1.bf16.msra.mxu0 0
          %1495 = vmatprep.subr.bf16.mxu0 0
          %1496 = vmatpush1.bf16.msra.mxu0 0
          %1497 = vmatprep.subr.bf16.mxu0 0
          %1498 = vmatpush1.bf16.msra.mxu0 0
          %1499 = vmatprep.subr.bf16.mxu0 0
          %1500 = vmatpush1.bf16.msra.mxu0 0
          %1501 = vmatprep.subr.bf16.mxu0 0
          %1502 = vmatpush1.bf16.msra.mxu0 0
          %1503 = vmatprep.subr.bf16.mxu0 0
          %1504 = vmatpush1.bf16.msra.mxu0 0
          %1505 = vmatprep.subr.bf16.mxu0 0
          %1506 = vmatpush1.bf16.msra.mxu0 0
          %1507 = vmatprep.subr.bf16.mxu0 0
          %1508 = vmatpush1.bf16.msra.mxu0 0
          %1509 = vmatprep.subr.bf16.mxu0 0
          %1510 = vmatpush1.bf16.msra.mxu0 0
          %1511 = vmatprep.subr.bf16.mxu0 0
          %1512 = vmatpush1.bf16.msra.mxu0 0
          %1513 = vmatprep.subr.bf16.mxu0 0
          %1514 = vmatpush1.bf16.msra.mxu0 0
          %1515 = vmatprep.subr.bf16.mxu0 0
          %1516 = vmatpush1.bf16.msra.mxu0 0
          %1517 = vmatprep.mubr.bf16.mxu0 0
          %1518 = vmatmul.mubr.bf16.gmra.mrb[0].mxu0 %v1459
          %v1519 = vpop.f32.mrb[0].mxu0
          %v1520 = vadd.f32 %v1356, %v1519
          %v1521 = vpop.f32.mrb[0].mxu0
          %v1522 = vpop.f32.mrb[0].mxu0
          %v1523 = vadd.f32 %v1359, %v1522
          %v1524 = vpop.f32.mrb[0].mxu0
          %1525 = vmatprep.mubr.bf16.mxu0 0
          %1526 = vmatmul.mubr.bf16.gmra.mrb[0].mxu0 %v1462
          %v1527 = vpop.f32.mrb[0].mxu0
          %v1528 = vadd.f32 %v1364, %v1527
          %v1529 = vpop.f32.mrb[0].mxu0
          %v1530 = vpop.f32.mrb[0].mxu0
          %v1531 = vadd.f32 %v1367, %v1530
          %v1532 = vpop.f32.mrb[0].mxu0
          %1533 = vmatprep.mubr.bf16.mxu0 0
          %1534 = vmatmul.mubr.bf16.gmra.mrb[0].mxu0 %v1465
          %v1535 = vpop.f32.mrb[0].mxu0
          %v1536 = vadd.f32 %v1372, %v1535
          %v1537 = vpop.f32.mrb[0].mxu0
          %v1538 = vpop.f32.mrb[0].mxu0
          %v1539 = vadd.f32 %v1375, %v1538
          %v1540 = vpop.f32.mrb[0].mxu0
          %1541 = vmatprep.mubr.bf16.mxu0 0
          %1542 = vmatmul.mubr.bf16.gmra.mrb[0].mxu0 %v1468
          %v1543 = vpop.f32.mrb[0].mxu0
          %v1544 = vadd.f32 %v1380, %v1543
          %v1545 = vpop.f32.mrb[0].mxu0
          %v1546 = vpop.f32.mrb[0].mxu0
          %v1547 = vadd.f32 %v1383, %v1546
          %v1548 = vpop.f32.mrb[0].mxu0
          %1549 = vmatprep.mubr.bf16.mxu0 0
          %1550 = vmatmul.mubr.bf16.gmra.mrb[0].mxu0 %v1471
          %v1551 = vpop.f32.mrb[0].mxu0
          %v1552 = vadd.f32 %v1388, %v1551
          %v1553 = vpop.f32.mrb[0].mxu0
          %v1554 = vpop.f32.mrb[0].mxu0
          %v1555 = vadd.f32 %v1391, %v1554
          %v1556 = vpop.f32.mrb[0].mxu0
          %1557 = vmatprep.mubr.bf16.mxu0 0
          %1558 = vmatmul.mubr.bf16.gmra.mrb[0].mxu0 %v1474
          %v1559 = vpop.f32.mrb[0].mxu0
          %v1560 = vadd.f32 %v1396, %v1559
          %v1561 = vpop.f32.mrb[0].mxu0
          %v1562 = vpop.f32.mrb[0].mxu0
          %v1563 = vadd.f32 %v1399, %v1562
          %v1564 = vpop.f32.mrb[0].mxu0
          %1565 = vmatprep.mubr.bf16.mxu0 0
          %1566 = vmatmul.mubr.bf16.gmra.mrb[0].mxu0 %v1477
          %v1567 = vpop.f32.mrb[0].mxu0
          %v1568 = vadd.f32 %v1404, %v1567
          %v1569 = vpop.f32.mrb[0].mxu0
          %v1570 = vpop.f32.mrb[0].mxu0
          %v1571 = vadd.f32 %v1407, %v1570
          %v1572 = vpop.f32.mrb[0].mxu0
          %1573 = vmatprep.mubr.bf16.mxu0 0
          %1574 = vmatmul.mubr.bf16.gmra.mrb[0].mxu0 %v1480
          %v1575 = vpop.f32.mrb[0].mxu0
          %v1576 = vadd.f32 %v1412, %v1575
          %v1577 = vpop.f32.mrb[0].mxu0
          %v1578 = vpop.f32.mrb[0].mxu0
          %v1579 = vadd.f32 %v1415, %v1578
          %v1580 = vpop.f32.mrb[0].mxu0
          %1581 = vdwg.mxu0
          %v1582 = vld [vmem:[%s1045] sm:$0xe]
          %v1583 = vld [vmem:[%s1045 + $0xc] sm:$0xe]
          %v1584 = vld [vmem:[%s1045 + $0x18] sm:$0xe]
          %v1585 = vld [vmem:[%s1045 + $0x24] sm:$0xe]
          %v1586 = vld [vmem:[%s1045 + $0x30] sm:$0xe]
          %v1587 = vld [vmem:[%s1045 + $0x3c] sm:$0xe]
          %v1588 = vld [vmem:[%s1045 + $0x48] sm:$0xe]
          %v1589 = vld [vmem:[%s1045 + $0x54] sm:$0xe]
          %vm1606 = vcmask 1042432
          %vm1607 = vcmask 1046532
          %vm1608 = vmor %vm1606, %vm1607
          %v1609 = vrot.slane %v1582, 5
          %v1610 = vrot.slane %v1609, 4
          %v1611 = vrot.slane %v1047, 5
          %v1612 = vsel %vm1608, %v1610, %v1611
          %v1613 = vrot.slane %v1611, 4
          %v1614 = vrot.slane %v1063, 5
          %v1615 = vsel %vm1608, %v1613, %v1614
          %v1616 = vrot.slane %v1583, 5
          %v1617 = vrot.slane %v1616, 4
          %v1618 = vrot.slane %v1049, 5
          %v1619 = vsel %vm1608, %v1617, %v1618
          %v1620 = vrot.slane %v1618, 4
          %v1621 = vrot.slane %v1064, 5
          %v1622 = vsel %vm1608, %v1620, %v1621
          %v1623 = vrot.slane %v1584, 5
          %v1624 = vrot.slane %v1623, 4
          %v1625 = vrot.slane %v1051, 5
          %v1626 = vsel %vm1608, %v1624, %v1625
          %v1627 = vrot.slane %v1625, 4
          %v1628 = vrot.slane %v1065, 5
          %v1629 = vsel %vm1608, %v1627, %v1628
          %v1630 = vrot.slane %v1585, 5
          %v1631 = vrot.slane %v1630, 4
          %v1632 = vrot.slane %v1053, 5
          %v1633 = vsel %vm1608, %v1631, %v1632
          %v1634 = vrot.slane %v1632, 4
          %v1635 = vrot.slane %v1066, 5
          %v1636 = vsel %vm1608, %v1634, %v1635
          %v1637 = vrot.slane %v1586, 5
          %v1638 = vrot.slane %v1637, 4
          %v1639 = vrot.slane %v1055, 5
          %v1640 = vsel %vm1608, %v1638, %v1639
          %v1641 = vrot.slane %v1639, 4
          %v1642 = vrot.slane %v1067, 5
          %v1643 = vsel %vm1608, %v1641, %v1642
          %v1644 = vrot.slane %v1587, 5
          %v1645 = vrot.slane %v1644, 4
          %v1646 = vrot.slane %v1057, 5
          %v1647 = vsel %vm1608, %v1645, %v1646
          %v1648 = vrot.slane %v1646, 4
          %v1649 = vrot.slane %v1068, 5
          %v1650 = vsel %vm1608, %v1648, %v1649
          %v1651 = vrot.slane %v1588, 5
          %v1652 = vrot.slane %v1651, 4
          %v1653 = vrot.slane %v1059, 5
          %v1654 = vsel %vm1608, %v1652, %v1653
          %v1655 = vrot.slane %v1653, 4
          %v1656 = vrot.slane %v1069, 5
          %v1657 = vsel %vm1608, %v1655, %v1656
          %v1658 = vrot.slane %v1589, 5
          %v1659 = vrot.slane %v1658, 4
          %v1660 = vrot.slane %v1061, 5
          %v1661 = vsel %vm1608, %v1659, %v1660
          %v1662 = vrot.slane %v1660, 4
          %v1663 = vrot.slane %v1070, 5
          %v1664 = vsel %vm1608, %v1662, %v1663
          %s1665 = scalar_lea.vmem %s4, 4
          %v1666 = vld [vmem:[%s1665] sm:$0x3]
          %v1667 = vunpack.c.l.b16 %v1612
          %v1668 = vunpack.c.l.b16 %v1615
          %v1669 = vunpack.c.l.b16 %v1619
          %v1670 = vunpack.c.l.b16 %v1622
          %v1671 = vunpack.c.l.b16 %v1626
          %v1672 = vunpack.c.l.b16 %v1629
          %v1673 = vunpack.c.l.b16 %v1633
          %v1674 = vunpack.c.l.b16 %v1636
          %v1675 = vunpack.c.l.b16 %v1640
          %v1676 = vunpack.c.l.b16 %v1643
          %v1677 = vunpack.c.l.b16 %v1647
          %v1678 = vunpack.c.l.b16 %v1650
          %v1679 = vunpack.c.l.b16 %v1654
          %v1680 = vunpack.c.l.b16 %v1657
          %v1681 = vunpack.c.l.b16 %v1661
          %v1682 = vunpack.c.l.b16 %v1664
          %v1683 = vpack.c.b16 %v1668, %v1667
          %v1684 = vpack.c.b16 %v1670, %v1669
          %v1685 = vpack.c.b16 %v1672, %v1671
          %v1686 = vpack.c.b16 %v1674, %v1673
          %v1687 = vpack.c.b16 %v1676, %v1675
          %v1688 = vpack.c.b16 %v1678, %v1677
          %v1689 = vpack.c.b16 %v1680, %v1679
          %v1690 = vpack.c.b16 %v1682, %v1681
          %v1692 = vsel %vm1292, %v1683, 0
          %v1695 = vsel %vm1292, %v1684, 0
          %v1698 = vsel %vm1292, %v1685, 0
          %v1701 = vsel %vm1292, %v1686, 0
          %v1704 = vsel %vm1292, %v1687, 0
          %v1707 = vsel %vm1292, %v1688, 0
          %v1710 = vsel %vm1292, %v1689, 0
          %v1713 = vsel %vm1292, %v1690, 0
          %v1716 = vsel %vm1317, %v1666, 0
          %1718 = vmatprep.subr.bf16.mxu0 0
          %1719 = vmatpush1.bf16.msra.mxu0 %v1716
          %1720 = vmatprep.subr.bf16.mxu0 0
          %1721 = vmatpush1.bf16.msra.mxu0 0
          %1722 = vmatprep.subr.bf16.mxu0 0
          %1723 = vmatpush1.bf16.msra.mxu0 0
          %1724 = vmatprep.subr.bf16.mxu0 0
          %1725 = vmatpush1.bf16.msra.mxu0 0
          %1726 = vmatprep.subr.bf16.mxu0 0
          %1727 = vmatpush1.bf16.msra.mxu0 0
          %1728 = vmatprep.subr.bf16.mxu0 0
          %1729 = vmatpush1.bf16.msra.mxu0 0
          %1730 = vmatprep.subr.bf16.mxu0 0
          %1731 = vmatpush1.bf16.msra.mxu0 0
          %1732 = vmatprep.subr.bf16.mxu0 0
          %1733 = vmatpush1.bf16.msra.mxu0 0
          %1734 = vmatprep.subr.bf16.mxu0 0
          %1735 = vmatpush1.bf16.msra.mxu0 0
          %1736 = vmatprep.subr.bf16.mxu0 0
          %1737 = vmatpush1.bf16.msra.mxu0 0
          %1738 = vmatprep.subr.bf16.mxu0 0
          %1739 = vmatpush1.bf16.msra.mxu0 0
          %1740 = vmatprep.subr.bf16.mxu0 0
          %1741 = vmatpush1.bf16.msra.mxu0 0
          %1742 = vmatprep.subr.bf16.mxu0 0
          %1743 = vmatpush1.bf16.msra.mxu0 0
          %1744 = vmatprep.subr.bf16.mxu0 0
          %1745 = vmatpush1.bf16.msra.mxu0 0
          %1746 = vmatprep.subr.bf16.mxu0 0
          %1747 = vmatpush1.bf16.msra.mxu0 0
          %1748 = vmatprep.subr.bf16.mxu0 0
          %1749 = vmatpush1.bf16.msra.mxu0 0
          %1750 = vmatprep.mubr.bf16.mxu0 0
          %1751 = vmatmul.mubr.bf16.gmra.mrb[0].mxu0 %v1692
          %v1752 = vpop.f32.mrb[0].mxu0
          %v1753 = vadd.f32 0.0, %v1752
          %v1754 = vpop.f32.mrb[0].mxu0
          %v1755 = vpop.f32.mrb[0].mxu0
          %v1756 = vadd.f32 0.0, %v1755
          %v1757 = vpop.f32.mrb[0].mxu0
          %1758 = vmatprep.mubr.bf16.mxu0 0
          %1759 = vmatmul.mubr.bf16.gmra.mrb[0].mxu0 %v1695
          %v1760 = vpop.f32.mrb[0].mxu0
          %v1761 = vadd.f32 0.0, %v1760
          %v1762 = vpop.f32.mrb[0].mxu0
          %v1763 = vpop.f32.mrb[0].mxu0
          %v1764 = vadd.f32 0.0, %v1763
          %v1765 = vpop.f32.mrb[0].mxu0
          %1766 = vmatprep.mubr.bf16.mxu0 0
          %1767 = vmatmul.mubr.bf16.gmra.mrb[0].mxu0 %v1698
          %v1768 = vpop.f32.mrb[0].mxu0
          %v1769 = vadd.f32 0.0, %v1768
          %v1770 = vpop.f32.mrb[0].mxu0
          %v1771 = vpop.f32.mrb[0].mxu0
          %v1772 = vadd.f32 0.0, %v1771
          %v1773 = vpop.f32.mrb[0].mxu0
          %1774 = vmatprep.mubr.bf16.mxu0 0
          %1775 = vmatmul.mubr.bf16.gmra.mrb[0].mxu0 %v1701
          %v1776 = vpop.f32.mrb[0].mxu0
          %v1777 = vadd.f32 0.0, %v1776
          %v1778 = vpop.f32.mrb[0].mxu0
          %v1779 = vpop.f32.mrb[0].mxu0
          %v1780 = vadd.f32 0.0, %v1779
          %v1781 = vpop.f32.mrb[0].mxu0
          %1782 = vmatprep.mubr.bf16.mxu0 0
          %1783 = vmatmul.mubr.bf16.gmra.mrb[0].mxu0 %v1704
          %v1784 = vpop.f32.mrb[0].mxu0
          %v1785 = vadd.f32 0.0, %v1784
          %v1786 = vpop.f32.mrb[0].mxu0
          %v1787 = vpop.f32.mrb[0].mxu0
          %v1788 = vadd.f32 0.0, %v1787
          %v1789 = vpop.f32.mrb[0].mxu0
          %1790 = vmatprep.mubr.bf16.mxu0 0
          %1791 = vmatmul.mubr.bf16.gmra.mrb[0].mxu0 %v1707
          %v1792 = vpop.f32.mrb[0].mxu0
          %v1793 = vadd.f32 0.0, %v1792
          %v1794 = vpop.f32.mrb[0].mxu0
          %v1795 = vpop.f32.mrb[0].mxu0
          %v1796 = vadd.f32 0.0, %v1795
          %v1797 = vpop.f32.mrb[0].mxu0
          %1798 = vmatprep.mubr.bf16.mxu0 0
          %1799 = vmatmul.mubr.bf16.gmra.mrb[0].mxu0 %v1710
          %v1800 = vpop.f32.mrb[0].mxu0
          %v1801 = vadd.f32 0.0, %v1800
          %v1802 = vpop.f32.mrb[0].mxu0
          %v1803 = vpop.f32.mrb[0].mxu0
          %v1804 = vadd.f32 0.0, %v1803
          %v1805 = vpop.f32.mrb[0].mxu0
          %1806 = vmatprep.mubr.bf16.mxu0 0
          %1807 = vmatmul.mubr.bf16.gmra.mrb[0].mxu0 %v1713
          %v1808 = vpop.f32.mrb[0].mxu0
          %v1809 = vadd.f32 0.0, %v1808
          %v1810 = vpop.f32.mrb[0].mxu0
          %v1811 = vpop.f32.mrb[0].mxu0
          %v1812 = vadd.f32 0.0, %v1811
          %v1813 = vpop.f32.mrb[0].mxu0
          %1814 = vdwg.mxu0
          %v1815 = vadd.f32 %v1520, %v1753
          %v1816 = vadd.f32 %v1523, %v1756
          %v1817 = vadd.f32 %v1528, %v1761
          %v1818 = vadd.f32 %v1531, %v1764
          %v1819 = vadd.f32 %v1536, %v1769
          %v1820 = vadd.f32 %v1539, %v1772
          %v1821 = vadd.f32 %v1544, %v1777
          %v1822 = vadd.f32 %v1547, %v1780
          %v1823 = vadd.f32 %v1552, %v1785
          %v1824 = vadd.f32 %v1555, %v1788
          %v1825 = vadd.f32 %v1560, %v1793
          %v1826 = vadd.f32 %v1563, %v1796
          %v1827 = vadd.f32 %v1568, %v1801
          %v1828 = vadd.f32 %v1571, %v1804
          %v1829 = vadd.f32 %v1576, %v1809
          %v1830 = vadd.f32 %v1579, %v1812
          %s1831 = sadd.s32 %s1042, 1
          %s1832 = smul.u32 %s1831, 3
          %s1833 = smul.addr %s1832, 4
          %s1834 = scalar_lea.vmem [#allocation2], %s1833
          %v1835 = vld [vmem:[%s1834] sm:$0xf]
          %v1836 = vld [vmem:[%s1834 + $0x4] sm:$0xf]
          %v1837 = vld [vmem:[%s1834 + $0xc] sm:$0xf]
          %v1838 = vld [vmem:[%s1834 + $0x10] sm:$0xf]
          %v1839 = vld [vmem:[%s1834 + $0x18] sm:$0xf]
          %v1840 = vld [vmem:[%s1834 + $0x1c] sm:$0xf]
          %v1841 = vld [vmem:[%s1834 + $0x24] sm:$0xf]
          %v1842 = vld [vmem:[%s1834 + $0x28] sm:$0xf]
          %v1843 = vld [vmem:[%s1834 + $0x30] sm:$0xf]
          %v1844 = vld [vmem:[%s1834 + $0x34] sm:$0xf]
          %v1845 = vld [vmem:[%s1834 + $0x3c] sm:$0xf]
          %v1846 = vld [vmem:[%s1834 + $0x40] sm:$0xf]
          %v1847 = vld [vmem:[%s1834 + $0x48] sm:$0xf]
          %v1848 = vld [vmem:[%s1834 + $0x4c] sm:$0xf]
          %v1849 = vld [vmem:[%s1834 + $0x54] sm:$0xf]
          %v1850 = vld [vmem:[%s1834 + $0x58] sm:$0xf]
          %s1851 = scalar_lea.vmem %s4, 6
          %v1852 = vld [vmem:[%s1851] sm:$0x3]
          %v1869 = vunpack.c.l.b16 %v1835
          %v1870 = vunpack.c.l.b16 %v1836
          %v1871 = vunpack.c.l.b16 %v1837
          %v1872 = vunpack.c.l.b16 %v1838
          %v1873 = vunpack.c.l.b16 %v1839
          %v1874 = vunpack.c.l.b16 %v1840
          %v1875 = vunpack.c.l.b16 %v1841
          %v1876 = vunpack.c.l.b16 %v1842
          %v1877 = vunpack.c.l.b16 %v1843
          %v1878 = vunpack.c.l.b16 %v1844
          %v1879 = vunpack.c.l.b16 %v1845
          %v1880 = vunpack.c.l.b16 %v1846
          %v1881 = vunpack.c.l.b16 %v1847
          %v1882 = vunpack.c.l.b16 %v1848
          %v1883 = vunpack.c.l.b16 %v1849
          %v1884 = vunpack.c.l.b16 %v1850
          %v1885 = vpack.c.b16 %v1870, %v1869
          %v1886 = vpack.c.b16 %v1872, %v1871
          %v1887 = vpack.c.b16 %v1874, %v1873
          %v1888 = vpack.c.b16 %v1876, %v1875
          %v1889 = vpack.c.b16 %v1878, %v1877
          %v1890 = vpack.c.b16 %v1880, %v1879
          %v1891 = vpack.c.b16 %v1882, %v1881
          %v1892 = vpack.c.b16 %v1884, %v1883
          %v1894 = vsel %vm1292, %v1885, 0
          %v1897 = vsel %vm1292, %v1886, 0
          %v1900 = vsel %vm1292, %v1887, 0
          %v1903 = vsel %vm1292, %v1888, 0
          %v1906 = vsel %vm1292, %v1889, 0
          %v1909 = vsel %vm1292, %v1890, 0
          %v1912 = vsel %vm1292, %v1891, 0
          %v1915 = vsel %vm1292, %v1892, 0
          %v1918 = vsel %vm1317, %v1852, 0
          %1920 = vmatprep.subr.bf16.mxu0 0
          %1921 = vmatpush1.bf16.msra.mxu0 %v1918
          %1922 = vmatprep.subr.bf16.mxu0 0
          %1923 = vmatpush1.bf16.msra.mxu0 0
          %1924 = vmatprep.subr.bf16.mxu0 0
          %1925 = vmatpush1.bf16.msra.mxu0 0
          %1926 = vmatprep.subr.bf16.mxu0 0
          %1927 = vmatpush1.bf16.msra.mxu0 0
          %1928 = vmatprep.subr.bf16.mxu0 0
          %1929 = vmatpush1.bf16.msra.mxu0 0
          %1930 = vmatprep.subr.bf16.mxu0 0
          %1931 = vmatpush1.bf16.msra.mxu0 0
          %1932 = vmatprep.subr.bf16.mxu0 0
          %1933 = vmatpush1.bf16.msra.mxu0 0
          %1934 = vmatprep.subr.bf16.mxu0 0
          %1935 = vmatpush1.bf16.msra.mxu0 0
          %1936 = vmatprep.subr.bf16.mxu0 0
          %1937 = vmatpush1.bf16.msra.mxu0 0
          %1938 = vmatprep.subr.bf16.mxu0 0
          %1939 = vmatpush1.bf16.msra.mxu0 0
          %1940 = vmatprep.subr.bf16.mxu0 0
          %1941 = vmatpush1.bf16.msra.mxu0 0
          %1942 = vmatprep.subr.bf16.mxu0 0
          %1943 = vmatpush1.bf16.msra.mxu0 0
          %1944 = vmatprep.subr.bf16.mxu0 0
          %1945 = vmatpush1.bf16.msra.mxu0 0
          %1946 = vmatprep.subr.bf16.mxu0 0
          %1947 = vmatpush1.bf16.msra.mxu0 0
          %1948 = vmatprep.subr.bf16.mxu0 0
          %1949 = vmatpush1.bf16.msra.mxu0 0
          %1950 = vmatprep.subr.bf16.mxu0 0
          %1951 = vmatpush1.bf16.msra.mxu0 0
          %1952 = vmatprep.mubr.bf16.mxu0 0
          %1953 = vmatmul.mubr.bf16.gmra.mrb[0].mxu0 %v1894
          %v1954 = vpop.f32.mrb[0].mxu0
          %v1955 = vadd.f32 0.0, %v1954
          %v1956 = vpop.f32.mrb[0].mxu0
          %v1957 = vpop.f32.mrb[0].mxu0
          %v1958 = vadd.f32 0.0, %v1957
          %v1959 = vpop.f32.mrb[0].mxu0
          %1960 = vmatprep.mubr.bf16.mxu0 0
          %1961 = vmatmul.mubr.bf16.gmra.mrb[0].mxu0 %v1897
          %v1962 = vpop.f32.mrb[0].mxu0
          %v1963 = vadd.f32 0.0, %v1962
          %v1964 = vpop.f32.mrb[0].mxu0
          %v1965 = vpop.f32.mrb[0].mxu0
          %v1966 = vadd.f32 0.0, %v1965
          %v1967 = vpop.f32.mrb[0].mxu0
          %1968 = vmatprep.mubr.bf16.mxu0 0
          %1969 = vmatmul.mubr.bf16.gmra.mrb[0].mxu0 %v1900
          %v1970 = vpop.f32.mrb[0].mxu0
          %v1971 = vadd.f32 0.0, %v1970
          %v1972 = vpop.f32.mrb[0].mxu0
          %v1973 = vpop.f32.mrb[0].mxu0
          %v1974 = vadd.f32 0.0, %v1973
          %v1975 = vpop.f32.mrb[0].mxu0
          %1976 = vmatprep.mubr.bf16.mxu0 0
          %1977 = vmatmul.mubr.bf16.gmra.mrb[0].mxu0 %v1903
          %v1978 = vpop.f32.mrb[0].mxu0
          %v1979 = vadd.f32 0.0, %v1978
          %v1980 = vpop.f32.mrb[0].mxu0
          %v1981 = vpop.f32.mrb[0].mxu0
          %v1982 = vadd.f32 0.0, %v1981
          %v1983 = vpop.f32.mrb[0].mxu0
          %1984 = vmatprep.mubr.bf16.mxu0 0
          %1985 = vmatmul.mubr.bf16.gmra.mrb[0].mxu0 %v1906
          %v1986 = vpop.f32.mrb[0].mxu0
          %v1987 = vadd.f32 0.0, %v1986
          %v1988 = vpop.f32.mrb[0].mxu0
          %v1989 = vpop.f32.mrb[0].mxu0
          %v1990 = vadd.f32 0.0, %v1989
          %v1991 = vpop.f32.mrb[0].mxu0
          %1992 = vmatprep.mubr.bf16.mxu0 0
          %1993 = vmatmul.mubr.bf16.gmra.mrb[0].mxu0 %v1909
          %v1994 = vpop.f32.mrb[0].mxu0
          %v1995 = vadd.f32 0.0, %v1994
          %v1996 = vpop.f32.mrb[0].mxu0
          %v1997 = vpop.f32.mrb[0].mxu0
          %v1998 = vadd.f32 0.0, %v1997
          %v1999 = vpop.f32.mrb[0].mxu0
          %2000 = vmatprep.mubr.bf16.mxu0 0
          %2001 = vmatmul.mubr.bf16.gmra.mrb[0].mxu0 %v1912
          %v2002 = vpop.f32.mrb[0].mxu0
          %v2003 = vadd.f32 0.0, %v2002
          %v2004 = vpop.f32.mrb[0].mxu0
          %v2005 = vpop.f32.mrb[0].mxu0
          %v2006 = vadd.f32 0.0, %v2005
          %v2007 = vpop.f32.mrb[0].mxu0
          %2008 = vmatprep.mubr.bf16.mxu0 0
          %2009 = vmatmul.mubr.bf16.gmra.mrb[0].mxu0 %v1915
          %v2010 = vpop.f32.mrb[0].mxu0
          %v2011 = vadd.f32 0.0, %v2010
          %v2012 = vpop.f32.mrb[0].mxu0
          %v2013 = vpop.f32.mrb[0].mxu0
          %v2014 = vadd.f32 0.0, %v2013
          %v2015 = vpop.f32.mrb[0].mxu0
          %2016 = vdwg.mxu0
          %v2017 = vadd.f32 %v1815, %v1955
          %v2018 = vadd.f32 %v1816, %v1958
          %v2019 = vadd.f32 %v1817, %v1963
          %v2020 = vadd.f32 %v1818, %v1966
          %v2021 = vadd.f32 %v1819, %v1971
          %v2022 = vadd.f32 %v1820, %v1974
          %v2023 = vadd.f32 %v1821, %v1979
          %v2024 = vadd.f32 %v1822, %v1982
          %v2025 = vadd.f32 %v1823, %v1987
          %v2026 = vadd.f32 %v1824, %v1990
          %v2027 = vadd.f32 %v1825, %v1995
          %v2028 = vadd.f32 %v1826, %v1998
          %v2029 = vadd.f32 %v1827, %v2003
          %v2030 = vadd.f32 %v1828, %v2006
          %v2031 = vadd.f32 %v1829, %v2011
          %v2032 = vadd.f32 %v1830, %v2014
          %v2033 = vld [vmem:[%s1834] sm:$0xf]
          %v2034 = vld [vmem:[%s1834 + $0x4] sm:$0xf]
          %v2035 = vld [vmem:[%s1834 + $0x8] sm:$0x1]
          %v2036 = vld [vmem:[%s1834 + $0xc] sm:$0xf]
          %v2037 = vld [vmem:[%s1834 + $0x10] sm:$0xf]
          %v2038 = vld [vmem:[%s1834 + $0x14] sm:$0x1]
          %v2039 = vld [vmem:[%s1834 + $0x18] sm:$0xf]
          %v2040 = vld [vmem:[%s1834 + $0x1c] sm:$0xf]
          %v2041 = vld [vmem:[%s1834 + $0x20] sm:$0x1]
          %v2042 = vld [vmem:[%s1834 + $0x24] sm:$0xf]
          %v2043 = vld [vmem:[%s1834 + $0x28] sm:$0xf]
          %v2044 = vld [vmem:[%s1834 + $0x2c] sm:$0x1]
          %v2045 = vld [vmem:[%s1834 + $0x30] sm:$0xf]
          %v2046 = vld [vmem:[%s1834 + $0x34] sm:$0xf]
          %v2047 = vld [vmem:[%s1834 + $0x38] sm:$0x1]
          %v2048 = vld [vmem:[%s1834 + $0x3c] sm:$0xf]
          %v2049 = vld [vmem:[%s1834 + $0x40] sm:$0xf]
          %v2050 = vld [vmem:[%s1834 + $0x44] sm:$0x1]
          %v2051 = vld [vmem:[%s1834 + $0x48] sm:$0xf]
          %v2052 = vld [vmem:[%s1834 + $0x4c] sm:$0xf]
          %v2053 = vld [vmem:[%s1834 + $0x50] sm:$0x1]
          %v2054 = vld [vmem:[%s1834 + $0x54] sm:$0xf]
          %v2055 = vld [vmem:[%s1834 + $0x58] sm:$0xf]
          %v2056 = vld [vmem:[%s1834 + $0x5c] sm:$0x1]
          %v2058 = vshrl.u32 %v2033, 16
          %v2060 = vrot.slane %v2058, 4
          %v2061 = vshll.u32 %v2033, 16
          %v2063 = vrot.slane %v2061, 5
          %v2064 = vor.u32 %v2060, %v2063
          %v2065 = vrot.slane %v2064, 4
          %v2067 = vshll.u32 %v2034, 16
          %v2069 = vrot.slane %v2067, 5
          %v2070 = vsel %vm1073, %v2065, %v2069
          %v2071 = vshrl.u32 %v2034, 16
          %v2073 = vrot.slane %v2071, 4
          %v2074 = vor.u32 %v2073, %v2069
          %v2075 = vrot.slane %v2074, 4
          %v2077 = vshll.u32 %v2035, 16
          %v2079 = vrot.slane %v2077, 5
          %v2080 = vsel %vm1073, %v2075, %v2079
          %v2082 = vshrl.u32 %v2036, 16
          %v2084 = vrot.slane %v2082, 4
          %v2085 = vshll.u32 %v2036, 16
          %v2087 = vrot.slane %v2085, 5
          %v2088 = vor.u32 %v2084, %v2087
          %v2089 = vrot.slane %v2088, 4
          %v2091 = vshll.u32 %v2037, 16
          %v2093 = vrot.slane %v2091, 5
          %v2094 = vsel %vm1073, %v2089, %v2093
          %v2095 = vshrl.u32 %v2037, 16
          %v2097 = vrot.slane %v2095, 4
          %v2098 = vor.u32 %v2097, %v2093
          %v2099 = vrot.slane %v2098, 4
          %v2101 = vshll.u32 %v2038, 16
          %v2103 = vrot.slane %v2101, 5
          %v2104 = vsel %vm1073, %v2099, %v2103
          %v2106 = vshrl.u32 %v2039, 16
          %v2108 = vrot.slane %v2106, 4
          %v2109 = vshll.u32 %v2039, 16
          %v2111 = vrot.slane %v2109, 5
          %v2112 = vor.u32 %v2108, %v2111
          %v2113 = vrot.slane %v2112, 4
          %v2115 = vshll.u32 %v2040, 16
          %v2117 = vrot.slane %v2115, 5
          %v2118 = vsel %vm1073, %v2113, %v2117
          %v2119 = vshrl.u32 %v2040, 16
          %v2121 = vrot.slane %v2119, 4
          %v2122 = vor.u32 %v2121, %v2117
          %v2123 = vrot.slane %v2122, 4
          %v2125 = vshll.u32 %v2041, 16
          %v2127 = vrot.slane %v2125, 5
          %v2128 = vsel %vm1073, %v2123, %v2127
          %v2130 = vshrl.u32 %v2042, 16
          %v2132 = vrot.slane %v2130, 4
          %v2133 = vshll.u32 %v2042, 16
          %v2135 = vrot.slane %v2133, 5
          %v2136 = vor.u32 %v2132, %v2135
          %v2137 = vrot.slane %v2136, 4
          %v2139 = vshll.u32 %v2043, 16
          %v2141 = vrot.slane %v2139, 5
          %v2142 = vsel %vm1073, %v2137, %v2141
          %v2143 = vshrl.u32 %v2043, 16
          %v2145 = vrot.slane %v2143, 4
          %v2146 = vor.u32 %v2145, %v2141
          %v2147 = vrot.slane %v2146, 4
          %v2149 = vshll.u32 %v2044, 16
          %v2151 = vrot.slane %v2149, 5
          %v2152 = vsel %vm1073, %v2147, %v2151
          %v2154 = vshrl.u32 %v2045, 16
          %v2156 = vrot.slane %v2154, 4
          %v2157 = vshll.u32 %v2045, 16
          %v2159 = vrot.slane %v2157, 5
          %v2160 = vor.u32 %v2156, %v2159
          %v2161 = vrot.slane %v2160, 4
          %v2163 = vshll.u32 %v2046, 16
          %v2165 = vrot.slane %v2163, 5
          %v2166 = vsel %vm1073, %v2161, %v2165
          %v2167 = vshrl.u32 %v2046, 16
          %v2169 = vrot.slane %v2167, 4
          %v2170 = vor.u32 %v2169, %v2165
          %v2171 = vrot.slane %v2170, 4
          %v2173 = vshll.u32 %v2047, 16
          %v2175 = vrot.slane %v2173, 5
          %v2176 = vsel %vm1073, %v2171, %v2175
          %v2178 = vshrl.u32 %v2048, 16
          %v2180 = vrot.slane %v2178, 4
          %v2181 = vshll.u32 %v2048, 16
          %v2183 = vrot.slane %v2181, 5
          %v2184 = vor.u32 %v2180, %v2183
          %v2185 = vrot.slane %v2184, 4
          %v2187 = vshll.u32 %v2049, 16
          %v2189 = vrot.slane %v2187, 5
          %v2190 = vsel %vm1073, %v2185, %v2189
          %v2191 = vshrl.u32 %v2049, 16
          %v2193 = vrot.slane %v2191, 4
          %v2194 = vor.u32 %v2193, %v2189
          %v2195 = vrot.slane %v2194, 4
          %v2197 = vshll.u32 %v2050, 16
          %v2199 = vrot.slane %v2197, 5
          %v2200 = vsel %vm1073, %v2195, %v2199
          %v2202 = vshrl.u32 %v2051, 16
          %v2204 = vrot.slane %v2202, 4
          %v2205 = vshll.u32 %v2051, 16
          %v2207 = vrot.slane %v2205, 5
          %v2208 = vor.u32 %v2204, %v2207
          %v2209 = vrot.slane %v2208, 4
          %v2211 = vshll.u32 %v2052, 16
          %v2213 = vrot.slane %v2211, 5
          %v2214 = vsel %vm1073, %v2209, %v2213
          %v2215 = vshrl.u32 %v2052, 16
          %v2217 = vrot.slane %v2215, 4
          %v2218 = vor.u32 %v2217, %v2213
          %v2219 = vrot.slane %v2218, 4
          %v2221 = vshll.u32 %v2053, 16
          %v2223 = vrot.slane %v2221, 5
          %v2224 = vsel %vm1073, %v2219, %v2223
          %v2226 = vshrl.u32 %v2054, 16
          %v2228 = vrot.slane %v2226, 4
          %v2229 = vshll.u32 %v2054, 16
          %v2231 = vrot.slane %v2229, 5
          %v2232 = vor.u32 %v2228, %v2231
          %v2233 = vrot.slane %v2232, 4
          %v2235 = vshll.u32 %v2055, 16
          %v2237 = vrot.slane %v2235, 5
          %v2238 = vsel %vm1073, %v2233, %v2237
          %v2239 = vshrl.u32 %v2055, 16
          %v2241 = vrot.slane %v2239, 4
          %v2242 = vor.u32 %v2241, %v2237
          %v2243 = vrot.slane %v2242, 4
          %v2245 = vshll.u32 %v2056, 16
          %v2247 = vrot.slane %v2245, 5
          %v2248 = vsel %vm1073, %v2243, %v2247
          %s2249 = scalar_lea.vmem %s4, 8
          %v2250 = vld [vmem:[%s2249] sm:$0x3]
          %v2251 = vunpack.c.l.b16 %v2070
          %v2252 = vunpack.c.l.b16 %v2080
          %v2253 = vunpack.c.l.b16 %v2094
          %v2254 = vunpack.c.l.b16 %v2104
          %v2255 = vunpack.c.l.b16 %v2118
          %v2256 = vunpack.c.l.b16 %v2128
          %v2257 = vunpack.c.l.b16 %v2142
          %v2258 = vunpack.c.l.b16 %v2152
          %v2259 = vunpack.c.l.b16 %v2166
          %v2260 = vunpack.c.l.b16 %v2176
          %v2261 = vunpack.c.l.b16 %v2190
          %v2262 = vunpack.c.l.b16 %v2200
          %v2263 = vunpack.c.l.b16 %v2214
          %v2264 = vunpack.c.l.b16 %v2224
          %v2265 = vunpack.c.l.b16 %v2238
          %v2266 = vunpack.c.l.b16 %v2248
          %v2267 = vpack.c.b16 %v2252, %v2251
          %v2268 = vpack.c.b16 %v2254, %v2253
          %v2269 = vpack.c.b16 %v2256, %v2255
          %v2270 = vpack.c.b16 %v2258, %v2257
          %v2271 = vpack.c.b16 %v2260, %v2259
          %v2272 = vpack.c.b16 %v2262, %v2261
          %v2273 = vpack.c.b16 %v2264, %v2263
          %v2274 = vpack.c.b16 %v2266, %v2265
          %v2276 = vsel %vm1292, %v2267, 0
          %v2279 = vsel %vm1292, %v2268, 0
          %v2282 = vsel %vm1292, %v2269, 0
          %v2285 = vsel %vm1292, %v2270, 0
          %v2288 = vsel %vm1292, %v2271, 0
          %v2291 = vsel %vm1292, %v2272, 0
          %v2294 = vsel %vm1292, %v2273, 0
          %v2297 = vsel %vm1292, %v2274, 0
          %v2300 = vsel %vm1317, %v2250, 0
          %2302 = vmatprep.subr.bf16.mxu0 0
          %2303 = vmatpush1.bf16.msra.mxu0 %v2300
          %2304 = vmatprep.subr.bf16.mxu0 0
          %2305 = vmatpush1.bf16.msra.mxu0 0
          %2306 = vmatprep.subr.bf16.mxu0 0
          %2307 = vmatpush1.bf16.msra.mxu0 0
          %2308 = vmatprep.subr.bf16.mxu0 0
          %2309 = vmatpush1.bf16.msra.mxu0 0
          %2310 = vmatprep.subr.bf16.mxu0 0
          %2311 = vmatpush1.bf16.msra.mxu0 0
          %2312 = vmatprep.subr.bf16.mxu0 0
          %2313 = vmatpush1.bf16.msra.mxu0 0
          %2314 = vmatprep.subr.bf16.mxu0 0
          %2315 = vmatpush1.bf16.msra.mxu0 0
          %2316 = vmatprep.subr.bf16.mxu0 0
          %2317 = vmatpush1.bf16.msra.mxu0 0
          %2318 = vmatprep.subr.bf16.mxu0 0
          %2319 = vmatpush1.bf16.msra.mxu0 0
          %2320 = vmatprep.subr.bf16.mxu0 0
          %2321 = vmatpush1.bf16.msra.mxu0 0
          %2322 = vmatprep.subr.bf16.mxu0 0
          %2323 = vmatpush1.bf16.msra.mxu0 0
          %2324 = vmatprep.subr.bf16.mxu0 0
          %2325 = vmatpush1.bf16.msra.mxu0 0
          %2326 = vmatprep.subr.bf16.mxu0 0
          %2327 = vmatpush1.bf16.msra.mxu0 0
          %2328 = vmatprep.subr.bf16.mxu0 0
          %2329 = vmatpush1.bf16.msra.mxu0 0
          %2330 = vmatprep.subr.bf16.mxu0 0
          %2331 = vmatpush1.bf16.msra.mxu0 0
          %2332 = vmatprep.subr.bf16.mxu0 0
          %2333 = vmatpush1.bf16.msra.mxu0 0
          %2334 = vmatprep.mubr.bf16.mxu0 0
          %2335 = vmatmul.mubr.bf16.gmra.mrb[0].mxu0 %v2276
          %v2336 = vpop.f32.mrb[0].mxu0
          %v2337 = vadd.f32 0.0, %v2336
          %v2338 = vpop.f32.mrb[0].mxu0
          %v2339 = vpop.f32.mrb[0].mxu0
          %v2340 = vadd.f32 0.0, %v2339
          %v2341 = vpop.f32.mrb[0].mxu0
          %2342 = vmatprep.mubr.bf16.mxu0 0
          %2343 = vmatmul.mubr.bf16.gmra.mrb[0].mxu0 %v2279
          %v2344 = vpop.f32.mrb[0].mxu0
          %v2345 = vadd.f32 0.0, %v2344
          %v2346 = vpop.f32.mrb[0].mxu0
          %v2347 = vpop.f32.mrb[0].mxu0
          %v2348 = vadd.f32 0.0, %v2347
          %v2349 = vpop.f32.mrb[0].mxu0
          %2350 = vmatprep.mubr.bf16.mxu0 0
          %2351 = vmatmul.mubr.bf16.gmra.mrb[0].mxu0 %v2282
          %v2352 = vpop.f32.mrb[0].mxu0
          %v2353 = vadd.f32 0.0, %v2352
          %v2354 = vpop.f32.mrb[0].mxu0
          %v2355 = vpop.f32.mrb[0].mxu0
          %v2356 = vadd.f32 0.0, %v2355
          %v2357 = vpop.f32.mrb[0].mxu0
          %2358 = vmatprep.mubr.bf16.mxu0 0
          %2359 = vmatmul.mubr.bf16.gmra.mrb[0].mxu0 %v2285
          %v2360 = vpop.f32.mrb[0].mxu0
          %v2361 = vadd.f32 0.0, %v2360
          %v2362 = vpop.f32.mrb[0].mxu0
          %v2363 = vpop.f32.mrb[0].mxu0
          %v2364 = vadd.f32 0.0, %v2363
          %v2365 = vpop.f32.mrb[0].mxu0
          %2366 = vmatprep.mubr.bf16.mxu0 0
          %2367 = vmatmul.mubr.bf16.gmra.mrb[0].mxu0 %v2288
          %v2368 = vpop.f32.mrb[0].mxu0
          %v2369 = vadd.f32 0.0, %v2368
          %v2370 = vpop.f32.mrb[0].mxu0
          %v2371 = vpop.f32.mrb[0].mxu0
          %v2372 = vadd.f32 0.0, %v2371
          %v2373 = vpop.f32.mrb[0].mxu0
          %2374 = vmatprep.mubr.bf16.mxu0 0
          %2375 = vmatmul.mubr.bf16.gmra.mrb[0].mxu0 %v2291
          %v2376 = vpop.f32.mrb[0].mxu0
          %v2377 = vadd.f32 0.0, %v2376
          %v2378 = vpop.f32.mrb[0].mxu0
          %v2379 = vpop.f32.mrb[0].mxu0
          %v2380 = vadd.f32 0.0, %v2379
          %v2381 = vpop.f32.mrb[0].mxu0
          %2382 = vmatprep.mubr.bf16.mxu0 0
          %2383 = vmatmul.mubr.bf16.gmra.mrb[0].mxu0 %v2294
          %v2384 = vpop.f32.mrb[0].mxu0
          %v2385 = vadd.f32 0.0, %v2384
          %v2386 = vpop.f32.mrb[0].mxu0
          %v2387 = vpop.f32.mrb[0].mxu0
          %v2388 = vadd.f32 0.0, %v2387
          %v2389 = vpop.f32.mrb[0].mxu0
          %2390 = vmatprep.mubr.bf16.mxu0 0
          %2391 = vmatmul.mubr.bf16.gmra.mrb[0].mxu0 %v2297
          %v2392 = vpop.f32.mrb[0].mxu0
          %v2393 = vadd.f32 0.0, %v2392
          %v2394 = vpop.f32.mrb[0].mxu0
          %v2395 = vpop.f32.mrb[0].mxu0
          %v2396 = vadd.f32 0.0, %v2395
          %v2397 = vpop.f32.mrb[0].mxu0
          %2398 = vdwg.mxu0
          %v2399 = vadd.f32 %v2017, %v2337
          %v2400 = vadd.f32 %v2018, %v2340
          %v2401 = vadd.f32 %v2019, %v2345
          %v2402 = vadd.f32 %v2020, %v2348
          %v2403 = vadd.f32 %v2021, %v2353
          %v2404 = vadd.f32 %v2022, %v2356
          %v2405 = vadd.f32 %v2023, %v2361
          %v2406 = vadd.f32 %v2024, %v2364
          %v2407 = vadd.f32 %v2025, %v2369
          %v2408 = vadd.f32 %v2026, %v2372
          %v2409 = vadd.f32 %v2027, %v2377
          %v2410 = vadd.f32 %v2028, %v2380
          %v2411 = vadd.f32 %v2029, %v2385
          %v2412 = vadd.f32 %v2030, %v2388
          %v2413 = vadd.f32 %v2031, %v2393
          %v2414 = vadd.f32 %v2032, %v2396
          %v2415 = vld [vmem:[%s1834] sm:$0xe]
          %v2416 = vld [vmem:[%s1834 + $0xc] sm:$0xe]
          %v2417 = vld [vmem:[%s1834 + $0x18] sm:$0xe]
          %v2418 = vld [vmem:[%s1834 + $0x24] sm:$0xe]
          %v2419 = vld [vmem:[%s1834 + $0x30] sm:$0xe]
          %v2420 = vld [vmem:[%s1834 + $0x3c] sm:$0xe]
          %v2421 = vld [vmem:[%s1834 + $0x48] sm:$0xe]
          %v2422 = vld [vmem:[%s1834 + $0x54] sm:$0xe]
          %v2447 = vrot.slane %v2415, 5
          %v2448 = vrot.slane %v2447, 4
          %v2449 = vrot.slane %v2034, 5
          %v2450 = vsel %vm1608, %v2448, %v2449
          %v2451 = vrot.slane %v2449, 4
          %v2452 = vrot.slane %v2035, 5
          %v2453 = vsel %vm1608, %v2451, %v2452
          %v2454 = vrot.slane %v2416, 5
          %v2455 = vrot.slane %v2454, 4
          %v2456 = vrot.slane %v2037, 5
          %v2457 = vsel %vm1608, %v2455, %v2456
          %v2458 = vrot.slane %v2456, 4
          %v2459 = vrot.slane %v2038, 5
          %v2460 = vsel %vm1608, %v2458, %v2459
          %v2461 = vrot.slane %v2417, 5
          %v2462 = vrot.slane %v2461, 4
          %v2463 = vrot.slane %v2040, 5
          %v2464 = vsel %vm1608, %v2462, %v2463
          %v2465 = vrot.slane %v2463, 4
          %v2466 = vrot.slane %v2041, 5
          %v2467 = vsel %vm1608, %v2465, %v2466
          %v2468 = vrot.slane %v2418, 5
          %v2469 = vrot.slane %v2468, 4
          %v2470 = vrot.slane %v2043, 5
          %v2471 = vsel %vm1608, %v2469, %v2470
          %v2472 = vrot.slane %v2470, 4
          %v2473 = vrot.slane %v2044, 5
          %v2474 = vsel %vm1608, %v2472, %v2473
          %v2475 = vrot.slane %v2419, 5
          %v2476 = vrot.slane %v2475, 4
          %v2477 = vrot.slane %v2046, 5
          %v2478 = vsel %vm1608, %v2476, %v2477
          %v2479 = vrot.slane %v2477, 4
          %v2480 = vrot.slane %v2047, 5
          %v2481 = vsel %vm1608, %v2479, %v2480
          %v2482 = vrot.slane %v2420, 5
          %v2483 = vrot.slane %v2482, 4
          %v2484 = vrot.slane %v2049, 5
          %v2485 = vsel %vm1608, %v2483, %v2484
          %v2486 = vrot.slane %v2484, 4
          %v2487 = vrot.slane %v2050, 5
          %v2488 = vsel %vm1608, %v2486, %v2487
          %v2489 = vrot.slane %v2421, 5
          %v2490 = vrot.slane %v2489, 4
          %v2491 = vrot.slane %v2052, 5
          %v2492 = vsel %vm1608, %v2490, %v2491
          %v2493 = vrot.slane %v2491, 4
          %v2494 = vrot.slane %v2053, 5
          %v2495 = vsel %vm1608, %v2493, %v2494
          %v2496 = vrot.slane %v2422, 5
          %v2497 = vrot.slane %v2496, 4
          %v2498 = vrot.slane %v2055, 5
          %v2499 = vsel %vm1608, %v2497, %v2498
          %v2500 = vrot.slane %v2498, 4
          %v2501 = vrot.slane %v2056, 5
          %v2502 = vsel %vm1608, %v2500, %v2501
          %s2503 = scalar_lea.vmem %s4, 10
          %v2504 = vld [vmem:[%s2503] sm:$0x3]
          %v2505 = vunpack.c.l.b16 %v2450
          %v2506 = vunpack.c.l.b16 %v2453
          %v2507 = vunpack.c.l.b16 %v2457
          %v2508 = vunpack.c.l.b16 %v2460
          %v2509 = vunpack.c.l.b16 %v2464
          %v2510 = vunpack.c.l.b16 %v2467
          %v2511 = vunpack.c.l.b16 %v2471
          %v2512 = vunpack.c.l.b16 %v2474
          %v2513 = vunpack.c.l.b16 %v2478
          %v2514 = vunpack.c.l.b16 %v2481
          %v2515 = vunpack.c.l.b16 %v2485
          %v2516 = vunpack.c.l.b16 %v2488
          %v2517 = vunpack.c.l.b16 %v2492
          %v2518 = vunpack.c.l.b16 %v2495
          %v2519 = vunpack.c.l.b16 %v2499
          %v2520 = vunpack.c.l.b16 %v2502
          %v2521 = vpack.c.b16 %v2506, %v2505
          %v2522 = vpack.c.b16 %v2508, %v2507
          %v2523 = vpack.c.b16 %v2510, %v2509
          %v2524 = vpack.c.b16 %v2512, %v2511
          %v2525 = vpack.c.b16 %v2514, %v2513
          %v2526 = vpack.c.b16 %v2516, %v2515
          %v2527 = vpack.c.b16 %v2518, %v2517
          %v2528 = vpack.c.b16 %v2520, %v2519
          %v2530 = vsel %vm1292, %v2521, 0
          %v2533 = vsel %vm1292, %v2522, 0
          %v2536 = vsel %vm1292, %v2523, 0
          %v2539 = vsel %vm1292, %v2524, 0
          %v2542 = vsel %vm1292, %v2525, 0
          %v2545 = vsel %vm1292, %v2526, 0
          %v2548 = vsel %vm1292, %v2527, 0
          %v2551 = vsel %vm1292, %v2528, 0
          %v2554 = vsel %vm1317, %v2504, 0
          %2556 = vmatprep.subr.bf16.mxu0 0
          %2557 = vmatpush1.bf16.msra.mxu0 %v2554
          %2558 = vmatprep.subr.bf16.mxu0 0
          %2559 = vmatpush1.bf16.msra.mxu0 0
          %2560 = vmatprep.subr.bf16.mxu0 0
          %2561 = vmatpush1.bf16.msra.mxu0 0
          %2562 = vmatprep.subr.bf16.mxu0 0
          %2563 = vmatpush1.bf16.msra.mxu0 0
          %2564 = vmatprep.subr.bf16.mxu0 0
          %2565 = vmatpush1.bf16.msra.mxu0 0
          %2566 = vmatprep.subr.bf16.mxu0 0
          %2567 = vmatpush1.bf16.msra.mxu0 0
          %2568 = vmatprep.subr.bf16.mxu0 0
          %2569 = vmatpush1.bf16.msra.mxu0 0
          %2570 = vmatprep.subr.bf16.mxu0 0
          %2571 = vmatpush1.bf16.msra.mxu0 0
          %2572 = vmatprep.subr.bf16.mxu0 0
          %2573 = vmatpush1.bf16.msra.mxu0 0
          %2574 = vmatprep.subr.bf16.mxu0 0
          %2575 = vmatpush1.bf16.msra.mxu0 0
          %2576 = vmatprep.subr.bf16.mxu0 0
          %2577 = vmatpush1.bf16.msra.mxu0 0
          %2578 = vmatprep.subr.bf16.mxu0 0
          %2579 = vmatpush1.bf16.msra.mxu0 0
          %2580 = vmatprep.subr.bf16.mxu0 0
          %2581 = vmatpush1.bf16.msra.mxu0 0
          %2582 = vmatprep.subr.bf16.mxu0 0
          %2583 = vmatpush1.bf16.msra.mxu0 0
          %2584 = vmatprep.subr.bf16.mxu0 0
          %2585 = vmatpush1.bf16.msra.mxu0 0
          %2586 = vmatprep.subr.bf16.mxu0 0
          %2587 = vmatpush1.bf16.msra.mxu0 0
          %2588 = vmatprep.mubr.bf16.mxu0 0
          %2589 = vmatmul.mubr.bf16.gmra.mrb[0].mxu0 %v2530
          %v2590 = vpop.f32.mrb[0].mxu0
          %v2591 = vadd.f32 0.0, %v2590
          %v2592 = vpop.f32.mrb[0].mxu0
          %v2593 = vpop.f32.mrb[0].mxu0
          %v2594 = vadd.f32 0.0, %v2593
          %v2595 = vpop.f32.mrb[0].mxu0
          %2596 = vmatprep.mubr.bf16.mxu0 0
          %2597 = vmatmul.mubr.bf16.gmra.mrb[0].mxu0 %v2533
          %v2598 = vpop.f32.mrb[0].mxu0
          %v2599 = vadd.f32 0.0, %v2598
          %v2600 = vpop.f32.mrb[0].mxu0
          %v2601 = vpop.f32.mrb[0].mxu0
          %v2602 = vadd.f32 0.0, %v2601
          %v2603 = vpop.f32.mrb[0].mxu0
          %2604 = vmatprep.mubr.bf16.mxu0 0
          %2605 = vmatmul.mubr.bf16.gmra.mrb[0].mxu0 %v2536
          %v2606 = vpop.f32.mrb[0].mxu0
          %v2607 = vadd.f32 0.0, %v2606
          %v2608 = vpop.f32.mrb[0].mxu0
          %v2609 = vpop.f32.mrb[0].mxu0
          %v2610 = vadd.f32 0.0, %v2609
          %v2611 = vpop.f32.mrb[0].mxu0
          %2612 = vmatprep.mubr.bf16.mxu0 0
          %2613 = vmatmul.mubr.bf16.gmra.mrb[0].mxu0 %v2539
          %v2614 = vpop.f32.mrb[0].mxu0
          %v2615 = vadd.f32 0.0, %v2614
          %v2616 = vpop.f32.mrb[0].mxu0
          %v2617 = vpop.f32.mrb[0].mxu0
          %v2618 = vadd.f32 0.0, %v2617
          %v2619 = vpop.f32.mrb[0].mxu0
          %2620 = vmatprep.mubr.bf16.mxu0 0
          %2621 = vmatmul.mubr.bf16.gmra.mrb[0].mxu0 %v2542
          %v2622 = vpop.f32.mrb[0].mxu0
          %v2623 = vadd.f32 0.0, %v2622
          %v2624 = vpop.f32.mrb[0].mxu0
          %v2625 = vpop.f32.mrb[0].mxu0
          %v2626 = vadd.f32 0.0, %v2625
          %v2627 = vpop.f32.mrb[0].mxu0
          %2628 = vmatprep.mubr.bf16.mxu0 0
          %2629 = vmatmul.mubr.bf16.gmra.mrb[0].mxu0 %v2545
          %v2630 = vpop.f32.mrb[0].mxu0
          %v2631 = vadd.f32 0.0, %v2630
          %v2632 = vpop.f32.mrb[0].mxu0
          %v2633 = vpop.f32.mrb[0].mxu0
          %v2634 = vadd.f32 0.0, %v2633
          %v2635 = vpop.f32.mrb[0].mxu0
          %2636 = vmatprep.mubr.bf16.mxu0 0
          %2637 = vmatmul.mubr.bf16.gmra.mrb[0].mxu0 %v2548
          %v2638 = vpop.f32.mrb[0].mxu0
          %v2639 = vadd.f32 0.0, %v2638
          %v2640 = vpop.f32.mrb[0].mxu0
          %v2641 = vpop.f32.mrb[0].mxu0
          %v2642 = vadd.f32 0.0, %v2641
          %v2643 = vpop.f32.mrb[0].mxu0
          %2644 = vmatprep.mubr.bf16.mxu0 0
          %2645 = vmatmul.mubr.bf16.gmra.mrb[0].mxu0 %v2551
          %v2646 = vpop.f32.mrb[0].mxu0
          %v2647 = vadd.f32 0.0, %v2646
          %v2648 = vpop.f32.mrb[0].mxu0
          %v2649 = vpop.f32.mrb[0].mxu0
          %v2650 = vadd.f32 0.0, %v2649
          %v2651 = vpop.f32.mrb[0].mxu0
          %2652 = vdwg.mxu0
          %v2653 = vadd.f32 %v2399, %v2591
          %v2654 = vadd.f32 %v2400, %v2594
          %v2655 = vadd.f32 %v2401, %v2599
          %v2656 = vadd.f32 %v2402, %v2602
          %v2657 = vadd.f32 %v2403, %v2607
          %v2658 = vadd.f32 %v2404, %v2610
          %v2659 = vadd.f32 %v2405, %v2615
          %v2660 = vadd.f32 %v2406, %v2618
          %v2661 = vadd.f32 %v2407, %v2623
          %v2662 = vadd.f32 %v2408, %v2626
          %v2663 = vadd.f32 %v2409, %v2631
          %v2664 = vadd.f32 %v2410, %v2634
          %v2665 = vadd.f32 %v2411, %v2639
          %v2666 = vadd.f32 %v2412, %v2642
          %v2667 = vadd.f32 %v2413, %v2647
          %v2668 = vadd.f32 %v2414, %v2650
          %s2669 = sadd.s32 %s1042, 2
          %s2670 = smul.u32 %s2669, 3
          %s2671 = smul.addr %s2670, 4
          %s2672 = scalar_lea.vmem [#allocation2], %s2671
          %v2673 = vld [vmem:[%s2672] sm:$0xf]
          %v2674 = vld [vmem:[%s2672 + $0x4] sm:$0xf]
          %v2675 = vld [vmem:[%s2672 + $0xc] sm:$0xf]
          %v2676 = vld [vmem:[%s2672 + $0x10] sm:$0xf]
          %v2677 = vld [vmem:[%s2672 + $0x18] sm:$0xf]
          %v2678 = vld [vmem:[%s2672 + $0x1c] sm:$0xf]
          %v2679 = vld [vmem:[%s2672 + $0x24] sm:$0xf]
          %v2680 = vld [vmem:[%s2672 + $0x28] sm:$0xf]
          %v2681 = vld [vmem:[%s2672 + $0x30] sm:$0xf]
          %v2682 = vld [vmem:[%s2672 + $0x34] sm:$0xf]
          %v2683 = vld [vmem:[%s2672 + $0x3c] sm:$0xf]
          %v2684 = vld [vmem:[%s2672 + $0x40] sm:$0xf]
          %v2685 = vld [vmem:[%s2672 + $0x48] sm:$0xf]
          %v2686 = vld [vmem:[%s2672 + $0x4c] sm:$0xf]
          %v2687 = vld [vmem:[%s2672 + $0x54] sm:$0xf]
          %v2688 = vld [vmem:[%s2672 + $0x58] sm:$0xf]
          %s2689 = scalar_lea.vmem %s4, 12
          %v2690 = vld [vmem:[%s2689] sm:$0x3]
          %v2707 = vunpack.c.l.b16 %v2673
          %v2708 = vunpack.c.l.b16 %v2674
          %v2709 = vunpack.c.l.b16 %v2675
          %v2710 = vunpack.c.l.b16 %v2676
          %v2711 = vunpack.c.l.b16 %v2677
          %v2712 = vunpack.c.l.b16 %v2678
          %v2713 = vunpack.c.l.b16 %v2679
          %v2714 = vunpack.c.l.b16 %v2680
          %v2715 = vunpack.c.l.b16 %v2681
          %v2716 = vunpack.c.l.b16 %v2682
          %v2717 = vunpack.c.l.b16 %v2683
          %v2718 = vunpack.c.l.b16 %v2684
          %v2719 = vunpack.c.l.b16 %v2685
          %v2720 = vunpack.c.l.b16 %v2686
          %v2721 = vunpack.c.l.b16 %v2687
          %v2722 = vunpack.c.l.b16 %v2688
          %v2723 = vpack.c.b16 %v2708, %v2707
          %v2724 = vpack.c.b16 %v2710, %v2709
          %v2725 = vpack.c.b16 %v2712, %v2711
          %v2726 = vpack.c.b16 %v2714, %v2713
          %v2727 = vpack.c.b16 %v2716, %v2715
          %v2728 = vpack.c.b16 %v2718, %v2717
          %v2729 = vpack.c.b16 %v2720, %v2719
          %v2730 = vpack.c.b16 %v2722, %v2721
          %v2732 = vsel %vm1292, %v2723, 0
          %v2735 = vsel %vm1292, %v2724, 0
          %v2738 = vsel %vm1292, %v2725, 0
          %v2741 = vsel %vm1292, %v2726, 0
          %v2744 = vsel %vm1292, %v2727, 0
          %v2747 = vsel %vm1292, %v2728, 0
          %v2750 = vsel %vm1292, %v2729, 0
          %v2753 = vsel %vm1292, %v2730, 0
          %v2756 = vsel %vm1317, %v2690, 0
          %2758 = vmatprep.subr.bf16.mxu0 0
          %2759 = vmatpush1.bf16.msra.mxu0 %v2756
          %2760 = vmatprep.subr.bf16.mxu0 0
          %2761 = vmatpush1.bf16.msra.mxu0 0
          %2762 = vmatprep.subr.bf16.mxu0 0
          %2763 = vmatpush1.bf16.msra.mxu0 0
          %2764 = vmatprep.subr.bf16.mxu0 0
          %2765 = vmatpush1.bf16.msra.mxu0 0
          %2766 = vmatprep.subr.bf16.mxu0 0
          %2767 = vmatpush1.bf16.msra.mxu0 0
          %2768 = vmatprep.subr.bf16.mxu0 0
          %2769 = vmatpush1.bf16.msra.mxu0 0
          %2770 = vmatprep.subr.bf16.mxu0 0
          %2771 = vmatpush1.bf16.msra.mxu0 0
          %2772 = vmatprep.subr.bf16.mxu0 0
          %2773 = vmatpush1.bf16.msra.mxu0 0
          %2774 = vmatprep.subr.bf16.mxu0 0
          %2775 = vmatpush1.bf16.msra.mxu0 0
          %2776 = vmatprep.subr.bf16.mxu0 0
          %2777 = vmatpush1.bf16.msra.mxu0 0
          %2778 = vmatprep.subr.bf16.mxu0 0
          %2779 = vmatpush1.bf16.msra.mxu0 0
          %2780 = vmatprep.subr.bf16.mxu0 0
          %2781 = vmatpush1.bf16.msra.mxu0 0
          %2782 = vmatprep.subr.bf16.mxu0 0
          %2783 = vmatpush1.bf16.msra.mxu0 0
          %2784 = vmatprep.subr.bf16.mxu0 0
          %2785 = vmatpush1.bf16.msra.mxu0 0
          %2786 = vmatprep.subr.bf16.mxu0 0
          %2787 = vmatpush1.bf16.msra.mxu0 0
          %2788 = vmatprep.subr.bf16.mxu0 0
          %2789 = vmatpush1.bf16.msra.mxu0 0
          %2790 = vmatprep.mubr.bf16.mxu0 0
          %2791 = vmatmul.mubr.bf16.gmra.mrb[0].mxu0 %v2732
          %v2792 = vpop.f32.mrb[0].mxu0
          %v2793 = vadd.f32 0.0, %v2792
          %v2794 = vpop.f32.mrb[0].mxu0
          %v2795 = vpop.f32.mrb[0].mxu0
          %v2796 = vadd.f32 0.0, %v2795
          %v2797 = vpop.f32.mrb[0].mxu0
          %2798 = vmatprep.mubr.bf16.mxu0 0
          %2799 = vmatmul.mubr.bf16.gmra.mrb[0].mxu0 %v2735
          %v2800 = vpop.f32.mrb[0].mxu0
          %v2801 = vadd.f32 0.0, %v2800
          %v2802 = vpop.f32.mrb[0].mxu0
          %v2803 = vpop.f32.mrb[0].mxu0
          %v2804 = vadd.f32 0.0, %v2803
          %v2805 = vpop.f32.mrb[0].mxu0
          %2806 = vmatprep.mubr.bf16.mxu0 0
          %2807 = vmatmul.mubr.bf16.gmra.mrb[0].mxu0 %v2738
          %v2808 = vpop.f32.mrb[0].mxu0
          %v2809 = vadd.f32 0.0, %v2808
          %v2810 = vpop.f32.mrb[0].mxu0
          %v2811 = vpop.f32.mrb[0].mxu0
          %v2812 = vadd.f32 0.0, %v2811
          %v2813 = vpop.f32.mrb[0].mxu0
          %2814 = vmatprep.mubr.bf16.mxu0 0
          %2815 = vmatmul.mubr.bf16.gmra.mrb[0].mxu0 %v2741
          %v2816 = vpop.f32.mrb[0].mxu0
          %v2817 = vadd.f32 0.0, %v2816
          %v2818 = vpop.f32.mrb[0].mxu0
          %v2819 = vpop.f32.mrb[0].mxu0
          %v2820 = vadd.f32 0.0, %v2819
          %v2821 = vpop.f32.mrb[0].mxu0
          %2822 = vmatprep.mubr.bf16.mxu0 0
          %2823 = vmatmul.mubr.bf16.gmra.mrb[0].mxu0 %v2744
          %v2824 = vpop.f32.mrb[0].mxu0
          %v2825 = vadd.f32 0.0, %v2824
          %v2826 = vpop.f32.mrb[0].mxu0
          %v2827 = vpop.f32.mrb[0].mxu0
          %v2828 = vadd.f32 0.0, %v2827
          %v2829 = vpop.f32.mrb[0].mxu0
          %2830 = vmatprep.mubr.bf16.mxu0 0
          %2831 = vmatmul.mubr.bf16.gmra.mrb[0].mxu0 %v2747
          %v2832 = vpop.f32.mrb[0].mxu0
          %v2833 = vadd.f32 0.0, %v2832
          %v2834 = vpop.f32.mrb[0].mxu0
          %v2835 = vpop.f32.mrb[0].mxu0
          %v2836 = vadd.f32 0.0, %v2835
          %v2837 = vpop.f32.mrb[0].mxu0
          %2838 = vmatprep.mubr.bf16.mxu0 0
          %2839 = vmatmul.mubr.bf16.gmra.mrb[0].mxu0 %v2750
          %v2840 = vpop.f32.mrb[0].mxu0
          %v2841 = vadd.f32 0.0, %v2840
          %v2842 = vpop.f32.mrb[0].mxu0
          %v2843 = vpop.f32.mrb[0].mxu0
          %v2844 = vadd.f32 0.0, %v2843
          %v2845 = vpop.f32.mrb[0].mxu0
          %2846 = vmatprep.mubr.bf16.mxu0 0
          %2847 = vmatmul.mubr.bf16.gmra.mrb[0].mxu0 %v2753
          %v2848 = vpop.f32.mrb[0].mxu0
          %v2849 = vadd.f32 0.0, %v2848
          %v2850 = vpop.f32.mrb[0].mxu0
          %v2851 = vpop.f32.mrb[0].mxu0
          %v2852 = vadd.f32 0.0, %v2851
          %v2853 = vpop.f32.mrb[0].mxu0
          %2854 = vdwg.mxu0
          %v2855 = vadd.f32 %v2653, %v2793
          %v2856 = vadd.f32 %v2654, %v2796
          %v2857 = vadd.f32 %v2655, %v2801
          %v2858 = vadd.f32 %v2656, %v2804
          %v2859 = vadd.f32 %v2657, %v2809
          %v2860 = vadd.f32 %v2658, %v2812
          %v2861 = vadd.f32 %v2659, %v2817
          %v2862 = vadd.f32 %v2660, %v2820
          %v2863 = vadd.f32 %v2661, %v2825
          %v2864 = vadd.f32 %v2662, %v2828
          %v2865 = vadd.f32 %v2663, %v2833
          %v2866 = vadd.f32 %v2664, %v2836
          %v2867 = vadd.f32 %v2665, %v2841
          %v2868 = vadd.f32 %v2666, %v2844
          %v2869 = vadd.f32 %v2667, %v2849
          %v2870 = vadd.f32 %v2668, %v2852
          %v2871 = vld [vmem:[%s2672] sm:$0xf]
          %v2872 = vld [vmem:[%s2672 + $0x4] sm:$0xf]
          %v2873 = vld [vmem:[%s2672 + $0x8] sm:$0x1]
          %v2874 = vld [vmem:[%s2672 + $0xc] sm:$0xf]
          %v2875 = vld [vmem:[%s2672 + $0x10] sm:$0xf]
          %v2876 = vld [vmem:[%s2672 + $0x14] sm:$0x1]
          %v2877 = vld [vmem:[%s2672 + $0x18] sm:$0xf]
          %v2878 = vld [vmem:[%s2672 + $0x1c] sm:$0xf]
          %v2879 = vld [vmem:[%s2672 + $0x20] sm:$0x1]
          %v2880 = vld [vmem:[%s2672 + $0x24] sm:$0xf]
          %v2881 = vld [vmem:[%s2672 + $0x28] sm:$0xf]
          %v2882 = vld [vmem:[%s2672 + $0x2c] sm:$0x1]
          %v2883 = vld [vmem:[%s2672 + $0x30] sm:$0xf]
          %v2884 = vld [vmem:[%s2672 + $0x34] sm:$0xf]
          %v2885 = vld [vmem:[%s2672 + $0x38] sm:$0x1]
          %v2886 = vld [vmem:[%s2672 + $0x3c] sm:$0xf]
          %v2887 = vld [vmem:[%s2672 + $0x40] sm:$0xf]
          %v2888 = vld [vmem:[%s2672 + $0x44] sm:$0x1]
          %v2889 = vld [vmem:[%s2672 + $0x48] sm:$0xf]
          %v2890 = vld [vmem:[%s2672 + $0x4c] sm:$0xf]
          %v2891 = vld [vmem:[%s2672 + $0x50] sm:$0x1]
          %v2892 = vld [vmem:[%s2672 + $0x54] sm:$0xf]
          %v2893 = vld [vmem:[%s2672 + $0x58] sm:$0xf]
          %v2894 = vld [vmem:[%s2672 + $0x5c] sm:$0x1]
          %v2896 = vshrl.u32 %v2871, 16
          %v2898 = vrot.slane %v2896, 4
          %v2899 = vshll.u32 %v2871, 16
          %v2901 = vrot.slane %v2899, 5
          %v2902 = vor.u32 %v2898, %v2901
          %v2903 = vrot.slane %v2902, 4
          %v2905 = vshll.u32 %v2872, 16
          %v2907 = vrot.slane %v2905, 5
          %v2908 = vsel %vm1073, %v2903, %v2907
          %v2909 = vshrl.u32 %v2872, 16
          %v2911 = vrot.slane %v2909, 4
          %v2912 = vor.u32 %v2911, %v2907
          %v2913 = vrot.slane %v2912, 4
          %v2915 = vshll.u32 %v2873, 16
          %v2917 = vrot.slane %v2915, 5
          %v2918 = vsel %vm1073, %v2913, %v2917
          %v2920 = vshrl.u32 %v2874, 16
          %v2922 = vrot.slane %v2920, 4
          %v2923 = vshll.u32 %v2874, 16
          %v2925 = vrot.slane %v2923, 5
          %v2926 = vor.u32 %v2922, %v2925
          %v2927 = vrot.slane %v2926, 4
          %v2929 = vshll.u32 %v2875, 16
          %v2931 = vrot.slane %v2929, 5
          %v2932 = vsel %vm1073, %v2927, %v2931
          %v2933 = vshrl.u32 %v2875, 16
          %v2935 = vrot.slane %v2933, 4
          %v2936 = vor.u32 %v2935, %v2931
          %v2937 = vrot.slane %v2936, 4
          %v2939 = vshll.u32 %v2876, 16
          %v2941 = vrot.slane %v2939, 5
          %v2942 = vsel %vm1073, %v2937, %v2941
          %v2944 = vshrl.u32 %v2877, 16
          %v2946 = vrot.slane %v2944, 4
          %v2947 = vshll.u32 %v2877, 16
          %v2949 = vrot.slane %v2947, 5
          %v2950 = vor.u32 %v2946, %v2949
          %v2951 = vrot.slane %v2950, 4
          %v2953 = vshll.u32 %v2878, 16
          %v2955 = vrot.slane %v2953, 5
          %v2956 = vsel %vm1073, %v2951, %v2955
          %v2957 = vshrl.u32 %v2878, 16
          %v2959 = vrot.slane %v2957, 4
          %v2960 = vor.u32 %v2959, %v2955
          %v2961 = vrot.slane %v2960, 4
          %v2963 = vshll.u32 %v2879, 16
          %v2965 = vrot.slane %v2963, 5
          %v2966 = vsel %vm1073, %v2961, %v2965
          %v2968 = vshrl.u32 %v2880, 16
          %v2970 = vrot.slane %v2968, 4
          %v2971 = vshll.u32 %v2880, 16
          %v2973 = vrot.slane %v2971, 5
          %v2974 = vor.u32 %v2970, %v2973
          %v2975 = vrot.slane %v2974, 4
          %v2977 = vshll.u32 %v2881, 16
          %v2979 = vrot.slane %v2977, 5
          %v2980 = vsel %vm1073, %v2975, %v2979
          %v2981 = vshrl.u32 %v2881, 16
          %v2983 = vrot.slane %v2981, 4
          %v2984 = vor.u32 %v2983, %v2979
          %v2985 = vrot.slane %v2984, 4
          %v2987 = vshll.u32 %v2882, 16
          %v2989 = vrot.slane %v2987, 5
          %v2990 = vsel %vm1073, %v2985, %v2989
          %v2992 = vshrl.u32 %v2883, 16
          %v2994 = vrot.slane %v2992, 4
          %v2995 = vshll.u32 %v2883, 16
          %v2997 = vrot.slane %v2995, 5
          %v2998 = vor.u32 %v2994, %v2997
          %v2999 = vrot.slane %v2998, 4
          %v3001 = vshll.u32 %v2884, 16
          %v3003 = vrot.slane %v3001, 5
          %v3004 = vsel %vm1073, %v2999, %v3003
          %v3005 = vshrl.u32 %v2884, 16
          %v3007 = vrot.slane %v3005, 4
          %v3008 = vor.u32 %v3007, %v3003
          %v3009 = vrot.slane %v3008, 4
          %v3011 = vshll.u32 %v2885, 16
          %v3013 = vrot.slane %v3011, 5
          %v3014 = vsel %vm1073, %v3009, %v3013
          %v3016 = vshrl.u32 %v2886, 16
          %v3018 = vrot.slane %v3016, 4
          %v3019 = vshll.u32 %v2886, 16
          %v3021 = vrot.slane %v3019, 5
          %v3022 = vor.u32 %v3018, %v3021
          %v3023 = vrot.slane %v3022, 4
          %v3025 = vshll.u32 %v2887, 16
          %v3027 = vrot.slane %v3025, 5
          %v3028 = vsel %vm1073, %v3023, %v3027
          %v3029 = vshrl.u32 %v2887, 16
          %v3031 = vrot.slane %v3029, 4
          %v3032 = vor.u32 %v3031, %v3027
          %v3033 = vrot.slane %v3032, 4
          %v3035 = vshll.u32 %v2888, 16
          %v3037 = vrot.slane %v3035, 5
          %v3038 = vsel %vm1073, %v3033, %v3037
          %v3040 = vshrl.u32 %v2889, 16
          %v3042 = vrot.slane %v3040, 4
          %v3043 = vshll.u32 %v2889, 16
          %v3045 = vrot.slane %v3043, 5
          %v3046 = vor.u32 %v3042, %v3045
          %v3047 = vrot.slane %v3046, 4
          %v3049 = vshll.u32 %v2890, 16
          %v3051 = vrot.slane %v3049, 5
          %v3052 = vsel %vm1073, %v3047, %v3051
          %v3053 = vshrl.u32 %v2890, 16
          %v3055 = vrot.slane %v3053, 4
          %v3056 = vor.u32 %v3055, %v3051
          %v3057 = vrot.slane %v3056, 4
          %v3059 = vshll.u32 %v2891, 16
          %v3061 = vrot.slane %v3059, 5
          %v3062 = vsel %vm1073, %v3057, %v3061
          %v3064 = vshrl.u32 %v2892, 16
          %v3066 = vrot.slane %v3064, 4
          %v3067 = vshll.u32 %v2892, 16
          %v3069 = vrot.slane %v3067, 5
          %v3070 = vor.u32 %v3066, %v3069
          %v3071 = vrot.slane %v3070, 4
          %v3073 = vshll.u32 %v2893, 16
          %v3075 = vrot.slane %v3073, 5
          %v3076 = vsel %vm1073, %v3071, %v3075
          %v3077 = vshrl.u32 %v2893, 16
          %v3079 = vrot.slane %v3077, 4
          %v3080 = vor.u32 %v3079, %v3075
          %v3081 = vrot.slane %v3080, 4
          %v3083 = vshll.u32 %v2894, 16
          %v3085 = vrot.slane %v3083, 5
          %v3086 = vsel %vm1073, %v3081, %v3085
          %s3087 = scalar_lea.vmem %s4, 14
          %v3088 = vld [vmem:[%s3087] sm:$0x3]
          %v3089 = vunpack.c.l.b16 %v2908
          %v3090 = vunpack.c.l.b16 %v2918
          %v3091 = vunpack.c.l.b16 %v2932
          %v3092 = vunpack.c.l.b16 %v2942
          %v3093 = vunpack.c.l.b16 %v2956
          %v3094 = vunpack.c.l.b16 %v2966
          %v3095 = vunpack.c.l.b16 %v2980
          %v3096 = vunpack.c.l.b16 %v2990
          %v3097 = vunpack.c.l.b16 %v3004
          %v3098 = vunpack.c.l.b16 %v3014
          %v3099 = vunpack.c.l.b16 %v3028
          %v3100 = vunpack.c.l.b16 %v3038
          %v3101 = vunpack.c.l.b16 %v3052
          %v3102 = vunpack.c.l.b16 %v3062
          %v3103 = vunpack.c.l.b16 %v3076
          %v3104 = vunpack.c.l.b16 %v3086
          %v3105 = vpack.c.b16 %v3090, %v3089
          %v3106 = vpack.c.b16 %v3092, %v3091
          %v3107 = vpack.c.b16 %v3094, %v3093
          %v3108 = vpack.c.b16 %v3096, %v3095
          %v3109 = vpack.c.b16 %v3098, %v3097
          %v3110 = vpack.c.b16 %v3100, %v3099
          %v3111 = vpack.c.b16 %v3102, %v3101
          %v3112 = vpack.c.b16 %v3104, %v3103
          %v3114 = vsel %vm1292, %v3105, 0
          %v3117 = vsel %vm1292, %v3106, 0
          %v3120 = vsel %vm1292, %v3107, 0
          %v3123 = vsel %vm1292, %v3108, 0
          %v3126 = vsel %vm1292, %v3109, 0
          %v3129 = vsel %vm1292, %v3110, 0
          %v3132 = vsel %vm1292, %v3111, 0
          %v3135 = vsel %vm1292, %v3112, 0
          %v3138 = vsel %vm1317, %v3088, 0
          %3140 = vmatprep.subr.bf16.mxu0 0
          %3141 = vmatpush1.bf16.msra.mxu0 %v3138
          %3142 = vmatprep.subr.bf16.mxu0 0
          %3143 = vmatpush1.bf16.msra.mxu0 0
          %3144 = vmatprep.subr.bf16.mxu0 0
          %3145 = vmatpush1.bf16.msra.mxu0 0
          %3146 = vmatprep.subr.bf16.mxu0 0
          %3147 = vmatpush1.bf16.msra.mxu0 0
          %3148 = vmatprep.subr.bf16.mxu0 0
          %3149 = vmatpush1.bf16.msra.mxu0 0
          %3150 = vmatprep.subr.bf16.mxu0 0
          %3151 = vmatpush1.bf16.msra.mxu0 0
          %3152 = vmatprep.subr.bf16.mxu0 0
          %3153 = vmatpush1.bf16.msra.mxu0 0
          %3154 = vmatprep.subr.bf16.mxu0 0
          %3155 = vmatpush1.bf16.msra.mxu0 0
          %3156 = vmatprep.subr.bf16.mxu0 0
          %3157 = vmatpush1.bf16.msra.mxu0 0
          %3158 = vmatprep.subr.bf16.mxu0 0
          %3159 = vmatpush1.bf16.msra.mxu0 0
          %3160 = vmatprep.subr.bf16.mxu0 0
          %3161 = vmatpush1.bf16.msra.mxu0 0
          %3162 = vmatprep.subr.bf16.mxu0 0
          %3163 = vmatpush1.bf16.msra.mxu0 0
          %3164 = vmatprep.subr.bf16.mxu0 0
          %3165 = vmatpush1.bf16.msra.mxu0 0
          %3166 = vmatprep.subr.bf16.mxu0 0
          %3167 = vmatpush1.bf16.msra.mxu0 0
          %3168 = vmatprep.subr.bf16.mxu0 0
          %3169 = vmatpush1.bf16.msra.mxu0 0
          %3170 = vmatprep.subr.bf16.mxu0 0
          %3171 = vmatpush1.bf16.msra.mxu0 0
          %3172 = vmatprep.mubr.bf16.mxu0 0
          %3173 = vmatmul.mubr.bf16.gmra.mrb[0].mxu0 %v3114
          %v3174 = vpop.f32.mrb[0].mxu0
          %v3175 = vadd.f32 0.0, %v3174
          %v3176 = vpop.f32.mrb[0].mxu0
          %v3177 = vpop.f32.mrb[0].mxu0
          %v3178 = vadd.f32 0.0, %v3177
          %v3179 = vpop.f32.mrb[0].mxu0
          %3180 = vmatprep.mubr.bf16.mxu0 0
          %3181 = vmatmul.mubr.bf16.gmra.mrb[0].mxu0 %v3117
          %v3182 = vpop.f32.mrb[0].mxu0
          %v3183 = vadd.f32 0.0, %v3182
          %v3184 = vpop.f32.mrb[0].mxu0
          %v3185 = vpop.f32.mrb[0].mxu0
          %v3186 = vadd.f32 0.0, %v3185
          %v3187 = vpop.f32.mrb[0].mxu0
          %3188 = vmatprep.mubr.bf16.mxu0 0
          %3189 = vmatmul.mubr.bf16.gmra.mrb[0].mxu0 %v3120
          %v3190 = vpop.f32.mrb[0].mxu0
          %v3191 = vadd.f32 0.0, %v3190
          %v3192 = vpop.f32.mrb[0].mxu0
          %v3193 = vpop.f32.mrb[0].mxu0
          %v3194 = vadd.f32 0.0, %v3193
          %v3195 = vpop.f32.mrb[0].mxu0
          %3196 = vmatprep.mubr.bf16.mxu0 0
          %3197 = vmatmul.mubr.bf16.gmra.mrb[0].mxu0 %v3123
          %v3198 = vpop.f32.mrb[0].mxu0
          %v3199 = vadd.f32 0.0, %v3198
          %v3200 = vpop.f32.mrb[0].mxu0
          %v3201 = vpop.f32.mrb[0].mxu0
          %v3202 = vadd.f32 0.0, %v3201
          %v3203 = vpop.f32.mrb[0].mxu0
          %3204 = vmatprep.mubr.bf16.mxu0 0
          %3205 = vmatmul.mubr.bf16.gmra.mrb[0].mxu0 %v3126
          %v3206 = vpop.f32.mrb[0].mxu0
          %v3207 = vadd.f32 0.0, %v3206
          %v3208 = vpop.f32.mrb[0].mxu0
          %v3209 = vpop.f32.mrb[0].mxu0
          %v3210 = vadd.f32 0.0, %v3209
          %v3211 = vpop.f32.mrb[0].mxu0
          %3212 = vmatprep.mubr.bf16.mxu0 0
          %3213 = vmatmul.mubr.bf16.gmra.mrb[0].mxu0 %v3129
          %v3214 = vpop.f32.mrb[0].mxu0
          %v3215 = vadd.f32 0.0, %v3214
          %v3216 = vpop.f32.mrb[0].mxu0
          %v3217 = vpop.f32.mrb[0].mxu0
          %v3218 = vadd.f32 0.0, %v3217
          %v3219 = vpop.f32.mrb[0].mxu0
          %3220 = vmatprep.mubr.bf16.mxu0 0
          %3221 = vmatmul.mubr.bf16.gmra.mrb[0].mxu0 %v3132
          %v3222 = vpop.f32.mrb[0].mxu0
          %v3223 = vadd.f32 0.0, %v3222
          %v3224 = vpop.f32.mrb[0].mxu0
          %v3225 = vpop.f32.mrb[0].mxu0
          %v3226 = vadd.f32 0.0, %v3225
          %v3227 = vpop.f32.mrb[0].mxu0
          %3228 = vmatprep.mubr.bf16.mxu0 0
          %3229 = vmatmul.mubr.bf16.gmra.mrb[0].mxu0 %v3135
          %v3230 = vpop.f32.mrb[0].mxu0
          %v3231 = vadd.f32 0.0, %v3230
          %v3232 = vpop.f32.mrb[0].mxu0
          %v3233 = vpop.f32.mrb[0].mxu0
          %v3234 = vadd.f32 0.0, %v3233
          %v3235 = vpop.f32.mrb[0].mxu0
          %3236 = vdwg.mxu0
          %v3237 = vadd.f32 %v2855, %v3175
          %v3238 = vadd.f32 %v2856, %v3178
          %v3239 = vadd.f32 %v2857, %v3183
          %v3240 = vadd.f32 %v2858, %v3186
          %v3241 = vadd.f32 %v2859, %v3191
          %v3242 = vadd.f32 %v2860, %v3194
          %v3243 = vadd.f32 %v2861, %v3199
          %v3244 = vadd.f32 %v2862, %v3202
          %v3245 = vadd.f32 %v2863, %v3207
          %v3246 = vadd.f32 %v2864, %v3210
          %v3247 = vadd.f32 %v2865, %v3215
          %v3248 = vadd.f32 %v2866, %v3218
          %v3249 = vadd.f32 %v2867, %v3223
          %v3250 = vadd.f32 %v2868, %v3226
          %v3251 = vadd.f32 %v2869, %v3231
          %v3252 = vadd.f32 %v2870, %v3234
          %v3253 = vld [vmem:[%s2672] sm:$0xe]
          %v3254 = vld [vmem:[%s2672 + $0xc] sm:$0xe]
          %v3255 = vld [vmem:[%s2672 + $0x18] sm:$0xe]
          %v3256 = vld [vmem:[%s2672 + $0x24] sm:$0xe]
          %v3257 = vld [vmem:[%s2672 + $0x30] sm:$0xe]
          %v3258 = vld [vmem:[%s2672 + $0x3c] sm:$0xe]
          %v3259 = vld [vmem:[%s2672 + $0x48] sm:$0xe]
          %v3260 = vld [vmem:[%s2672 + $0x54] sm:$0xe]
          %v3285 = vrot.slane %v3253, 5
          %v3286 = vrot.slane %v3285, 4
          %v3287 = vrot.slane %v2872, 5
          %v3288 = vsel %vm1608, %v3286, %v3287
          %v3289 = vrot.slane %v3287, 4
          %v3290 = vrot.slane %v2873, 5
          %v3291 = vsel %vm1608, %v3289, %v3290
          %v3292 = vrot.slane %v3254, 5
          %v3293 = vrot.slane %v3292, 4
          %v3294 = vrot.slane %v2875, 5
          %v3295 = vsel %vm1608, %v3293, %v3294
          %v3296 = vrot.slane %v3294, 4
          %v3297 = vrot.slane %v2876, 5
          %v3298 = vsel %vm1608, %v3296, %v3297
          %v3299 = vrot.slane %v3255, 5
          %v3300 = vrot.slane %v3299, 4
          %v3301 = vrot.slane %v2878, 5
          %v3302 = vsel %vm1608, %v3300, %v3301
          %v3303 = vrot.slane %v3301, 4
          %v3304 = vrot.slane %v2879, 5
          %v3305 = vsel %vm1608, %v3303, %v3304
          %v3306 = vrot.slane %v3256, 5
          %v3307 = vrot.slane %v3306, 4
          %v3308 = vrot.slane %v2881, 5
          %v3309 = vsel %vm1608, %v3307, %v3308
          %v3310 = vrot.slane %v3308, 4
          %v3311 = vrot.slane %v2882, 5
          %v3312 = vsel %vm1608, %v3310, %v3311
          %v3313 = vrot.slane %v3257, 5
          %v3314 = vrot.slane %v3313, 4
          %v3315 = vrot.slane %v2884, 5
          %v3316 = vsel %vm1608, %v3314, %v3315
          %v3317 = vrot.slane %v3315, 4
          %v3318 = vrot.slane %v2885, 5
          %v3319 = vsel %vm1608, %v3317, %v3318
          %v3320 = vrot.slane %v3258, 5
          %v3321 = vrot.slane %v3320, 4
          %v3322 = vrot.slane %v2887, 5
          %v3323 = vsel %vm1608, %v3321, %v3322
          %v3324 = vrot.slane %v3322, 4
          %v3325 = vrot.slane %v2888, 5
          %v3326 = vsel %vm1608, %v3324, %v3325
          %v3327 = vrot.slane %v3259, 5
          %v3328 = vrot.slane %v3327, 4
          %v3329 = vrot.slane %v2890, 5
          %v3330 = vsel %vm1608, %v3328, %v3329
          %v3331 = vrot.slane %v3329, 4
          %v3332 = vrot.slane %v2891, 5
          %v3333 = vsel %vm1608, %v3331, %v3332
          %v3334 = vrot.slane %v3260, 5
          %v3335 = vrot.slane %v3334, 4
          %v3336 = vrot.slane %v2893, 5
          %v3337 = vsel %vm1608, %v3335, %v3336
          %v3338 = vrot.slane %v3336, 4
          %v3339 = vrot.slane %v2894, 5
          %v3340 = vsel %vm1608, %v3338, %v3339
          %s3341 = scalar_lea.vmem %s4, 16
          %v3342 = vld [vmem:[%s3341] sm:$0x3]
          %v3343 = vunpack.c.l.b16 %v3288
          %v3344 = vunpack.c.l.b16 %v3291
          %v3345 = vunpack.c.l.b16 %v3295
          %v3346 = vunpack.c.l.b16 %v3298
          %v3347 = vunpack.c.l.b16 %v3302
          %v3348 = vunpack.c.l.b16 %v3305
          %v3349 = vunpack.c.l.b16 %v3309
          %v3350 = vunpack.c.l.b16 %v3312
          %v3351 = vunpack.c.l.b16 %v3316
          %v3352 = vunpack.c.l.b16 %v3319
          %v3353 = vunpack.c.l.b16 %v3323
          %v3354 = vunpack.c.l.b16 %v3326
          %v3355 = vunpack.c.l.b16 %v3330
          %v3356 = vunpack.c.l.b16 %v3333
          %v3357 = vunpack.c.l.b16 %v3337
          %v3358 = vunpack.c.l.b16 %v3340
          %v3359 = vpack.c.b16 %v3344, %v3343
          %v3360 = vpack.c.b16 %v3346, %v3345
          %v3361 = vpack.c.b16 %v3348, %v3347
          %v3362 = vpack.c.b16 %v3350, %v3349
          %v3363 = vpack.c.b16 %v3352, %v3351
          %v3364 = vpack.c.b16 %v3354, %v3353
          %v3365 = vpack.c.b16 %v3356, %v3355
          %v3366 = vpack.c.b16 %v3358, %v3357
          %v3368 = vsel %vm1292, %v3359, 0
          %v3371 = vsel %vm1292, %v3360, 0
          %v3374 = vsel %vm1292, %v3361, 0
          %v3377 = vsel %vm1292, %v3362, 0
          %v3380 = vsel %vm1292, %v3363, 0
          %v3383 = vsel %vm1292, %v3364, 0
          %v3386 = vsel %vm1292, %v3365, 0
          %v3389 = vsel %vm1292, %v3366, 0
          %v3392 = vsel %vm1317, %v3342, 0
          %3394 = vmatprep.subr.bf16.mxu0 0
          %3395 = vmatpush1.bf16.msra.mxu0 %v3392
          %3396 = vmatprep.subr.bf16.mxu0 0
          %3397 = vmatpush1.bf16.msra.mxu0 0
          %3398 = vmatprep.subr.bf16.mxu0 0
          %3399 = vmatpush1.bf16.msra.mxu0 0
          %3400 = vmatprep.subr.bf16.mxu0 0
          %3401 = vmatpush1.bf16.msra.mxu0 0
          %3402 = vmatprep.subr.bf16.mxu0 0
          %3403 = vmatpush1.bf16.msra.mxu0 0
          %3404 = vmatprep.subr.bf16.mxu0 0
          %3405 = vmatpush1.bf16.msra.mxu0 0
          %3406 = vmatprep.subr.bf16.mxu0 0
          %3407 = vmatpush1.bf16.msra.mxu0 0
          %3408 = vmatprep.subr.bf16.mxu0 0
          %3409 = vmatpush1.bf16.msra.mxu0 0
          %3410 = vmatprep.subr.bf16.mxu0 0
          %3411 = vmatpush1.bf16.msra.mxu0 0
          %3412 = vmatprep.subr.bf16.mxu0 0
          %3413 = vmatpush1.bf16.msra.mxu0 0
          %3414 = vmatprep.subr.bf16.mxu0 0
          %3415 = vmatpush1.bf16.msra.mxu0 0
          %3416 = vmatprep.subr.bf16.mxu0 0
          %3417 = vmatpush1.bf16.msra.mxu0 0
          %3418 = vmatprep.subr.bf16.mxu0 0
          %3419 = vmatpush1.bf16.msra.mxu0 0
          %3420 = vmatprep.subr.bf16.mxu0 0
          %3421 = vmatpush1.bf16.msra.mxu0 0
          %3422 = vmatprep.subr.bf16.mxu0 0
          %3423 = vmatpush1.bf16.msra.mxu0 0
          %3424 = vmatprep.subr.bf16.mxu0 0
          %3425 = vmatpush1.bf16.msra.mxu0 0
          %3426 = vmatprep.mubr.bf16.mxu0 0
          %3427 = vmatmul.mubr.bf16.gmra.mrb[0].mxu0 %v3368
          %v3428 = vpop.f32.mrb[0].mxu0
          %v3429 = vadd.f32 0.0, %v3428
          %v3430 = vpop.f32.mrb[0].mxu0
          %v3431 = vpop.f32.mrb[0].mxu0
          %v3432 = vadd.f32 0.0, %v3431
          %v3433 = vpop.f32.mrb[0].mxu0
          %3434 = vmatprep.mubr.bf16.mxu0 0
          %3435 = vmatmul.mubr.bf16.gmra.mrb[0].mxu0 %v3371
          %v3436 = vpop.f32.mrb[0].mxu0
          %v3437 = vadd.f32 0.0, %v3436
          %v3438 = vpop.f32.mrb[0].mxu0
          %v3439 = vpop.f32.mrb[0].mxu0
          %v3440 = vadd.f32 0.0, %v3439
          %v3441 = vpop.f32.mrb[0].mxu0
          %3442 = vmatprep.mubr.bf16.mxu0 0
          %3443 = vmatmul.mubr.bf16.gmra.mrb[0].mxu0 %v3374
          %v3444 = vpop.f32.mrb[0].mxu0
          %v3445 = vadd.f32 0.0, %v3444
          %v3446 = vpop.f32.mrb[0].mxu0
          %v3447 = vpop.f32.mrb[0].mxu0
          %v3448 = vadd.f32 0.0, %v3447
          %v3449 = vpop.f32.mrb[0].mxu0
          %3450 = vmatprep.mubr.bf16.mxu0 0
          %3451 = vmatmul.mubr.bf16.gmra.mrb[0].mxu0 %v3377
          %v3452 = vpop.f32.mrb[0].mxu0
          %v3453 = vadd.f32 0.0, %v3452
          %v3454 = vpop.f32.mrb[0].mxu0
          %v3455 = vpop.f32.mrb[0].mxu0
          %v3456 = vadd.f32 0.0, %v3455
          %v3457 = vpop.f32.mrb[0].mxu0
          %3458 = vmatprep.mubr.bf16.mxu0 0
          %3459 = vmatmul.mubr.bf16.gmra.mrb[0].mxu0 %v3380
          %v3460 = vpop.f32.mrb[0].mxu0
          %v3461 = vadd.f32 0.0, %v3460
          %v3462 = vpop.f32.mrb[0].mxu0
          %v3463 = vpop.f32.mrb[0].mxu0
          %v3464 = vadd.f32 0.0, %v3463
          %v3465 = vpop.f32.mrb[0].mxu0
          %3466 = vmatprep.mubr.bf16.mxu0 0
          %3467 = vmatmul.mubr.bf16.gmra.mrb[0].mxu0 %v3383
          %v3468 = vpop.f32.mrb[0].mxu0
          %v3469 = vadd.f32 0.0, %v3468
          %v3470 = vpop.f32.mrb[0].mxu0
          %v3471 = vpop.f32.mrb[0].mxu0
          %v3472 = vadd.f32 0.0, %v3471
          %v3473 = vpop.f32.mrb[0].mxu0
          %3474 = vmatprep.mubr.bf16.mxu0 0
          %3475 = vmatmul.mubr.bf16.gmra.mrb[0].mxu0 %v3386
          %v3476 = vpop.f32.mrb[0].mxu0
          %v3477 = vadd.f32 0.0, %v3476
          %v3478 = vpop.f32.mrb[0].mxu0
          %v3479 = vpop.f32.mrb[0].mxu0
          %v3480 = vadd.f32 0.0, %v3479
          %v3481 = vpop.f32.mrb[0].mxu0
          %3482 = vmatprep.mubr.bf16.mxu0 0
          %3483 = vmatmul.mubr.bf16.gmra.mrb[0].mxu0 %v3389
          %v3484 = vpop.f32.mrb[0].mxu0
          %v3485 = vadd.f32 0.0, %v3484
          %v3486 = vpop.f32.mrb[0].mxu0
          %v3487 = vpop.f32.mrb[0].mxu0
          %v3488 = vadd.f32 0.0, %v3487
          %v3489 = vpop.f32.mrb[0].mxu0
          %3490 = vdwg.mxu0
          %v3491 = vadd.f32 %v3237, %v3429
          %v3492 = vadd.f32 %v3238, %v3432
          %v3493 = vadd.f32 %v3239, %v3437
          %v3494 = vadd.f32 %v3240, %v3440
          %v3495 = vadd.f32 %v3241, %v3445
          %v3496 = vadd.f32 %v3242, %v3448
          %v3497 = vadd.f32 %v3243, %v3453
          %v3498 = vadd.f32 %v3244, %v3456
          %v3499 = vadd.f32 %v3245, %v3461
          %v3500 = vadd.f32 %v3246, %v3464
          %v3501 = vadd.f32 %v3247, %v3469
          %v3502 = vadd.f32 %v3248, %v3472
          %v3503 = vadd.f32 %v3249, %v3477
          %v3504 = vadd.f32 %v3250, %v3480
          %v3505 = vadd.f32 %v3251, %v3485
          %v3506 = vadd.f32 %v3252, %v3488
          %v3508 = vlaneseq
          %v3509 = vshrl.u32 %v3508, 7
          %v3510 = vsub.s32 0, %v3509
          %v3511 = vrot.slane %v506, %v3510
          %v3513 = vmul.f32 %v3491, %v3511
          %v3514 = vmul.f32 %v3492, %v3511
          %v3515 = vmul.f32 %v3493, %v3511
          %v3516 = vmul.f32 %v3494, %v3511
          %v3517 = vmul.f32 %v3495, %v3511
          %v3518 = vmul.f32 %v3496, %v3511
          %v3519 = vmul.f32 %v3497, %v3511
          %v3520 = vmul.f32 %v3498, %v3511
          %v3521 = vmul.f32 %v3499, %v3511
          %v3522 = vmul.f32 %v3500, %v3511
          %v3523 = vmul.f32 %v3501, %v3511
          %v3524 = vmul.f32 %v3502, %v3511
          %v3525 = vmul.f32 %v3503, %v3511
          %v3526 = vmul.f32 %v3504, %v3511
          %v3527 = vmul.f32 %v3505, %v3511
          %v3528 = vmul.f32 %v3506, %v3511
          %v3530 = vlaneseq
          %v3531 = vshrl.u32 %v3530, 7
          %v3532 = vsub.s32 0, %v3531
          %v3533 = vrot.slane %v507, %v3532
          %v3535 = vadd.f32 %v3513, %v3533
          %v3536 = vadd.f32 %v3514, %v3533
          %v3537 = vadd.f32 %v3515, %v3533
          %v3538 = vadd.f32 %v3516, %v3533
          %v3539 = vadd.f32 %v3517, %v3533
          %v3540 = vadd.f32 %v3518, %v3533
          %v3541 = vadd.f32 %v3519, %v3533
          %v3542 = vadd.f32 %v3520, %v3533
          %v3543 = vadd.f32 %v3521, %v3533
          %v3544 = vadd.f32 %v3522, %v3533
          %v3545 = vadd.f32 %v3523, %v3533
          %v3546 = vadd.f32 %v3524, %v3533
          %v3547 = vadd.f32 %v3525, %v3533
          %v3548 = vadd.f32 %v3526, %v3533
          %v3549 = vadd.f32 %v3527, %v3533
          %v3550 = vadd.f32 %v3528, %v3533
          %v3551 = vmax.f32 %v3535, 0.0
          %v3552 = vmax.f32 %v3536, 0.0
          %v3553 = vmax.f32 %v3537, 0.0
          %v3554 = vmax.f32 %v3538, 0.0
          %v3555 = vmax.f32 %v3539, 0.0
          %v3556 = vmax.f32 %v3540, 0.0
          %v3557 = vmax.f32 %v3541, 0.0
          %v3558 = vmax.f32 %v3542, 0.0
          %v3559 = vmax.f32 %v3543, 0.0
          %v3560 = vmax.f32 %v3544, 0.0
          %v3561 = vmax.f32 %v3545, 0.0
          %v3562 = vmax.f32 %v3546, 0.0
          %v3563 = vmax.f32 %v3547, 0.0
          %v3564 = vmax.f32 %v3548, 0.0
          %v3565 = vmax.f32 %v3549, 0.0
          %v3566 = vmax.f32 %v3550, 0.0
          %v3567 = vpack.c.bf16 %v3552, %v3551
          %v3568 = vpack.c.bf16 %v3554, %v3553
          %v3569 = vpack.c.bf16 %v3556, %v3555
          %v3570 = vpack.c.bf16 %v3558, %v3557
          %v3571 = vpack.c.bf16 %v3560, %v3559
          %v3572 = vpack.c.bf16 %v3562, %v3561
          %v3573 = vpack.c.bf16 %v3564, %v3563
          %v3574 = vpack.c.bf16 %v3566, %v3565
          %v3576 = vsel %vm1292, %v3567, 0
          %v3579 = vsel %vm1292, %v3568, 0
          %v3582 = vsel %vm1292, %v3569, 0
          %v3585 = vsel %vm1292, %v3570, 0
          %v3588 = vsel %vm1292, %v3571, 0
          %v3591 = vsel %vm1292, %v3572, 0
          %v3594 = vsel %vm1292, %v3573, 0
          %v3597 = vsel %vm1292, %v3574, 0
          %v3600 = vsel %vm1317, %v503, 0
          %3602 = vmatprep.subr.bf16.mxu0 0
          %3603 = vmatpush1.bf16.msra.mxu0 %v3600
          %3604 = vmatprep.subr.bf16.mxu0 0
          %3605 = vmatpush1.bf16.msra.mxu0 0
          %3606 = vmatprep.subr.bf16.mxu0 0
          %3607 = vmatpush1.bf16.msra.mxu0 0
          %3608 = vmatprep.subr.bf16.mxu0 0
          %3609 = vmatpush1.bf16.msra.mxu0 0
          %3610 = vmatprep.subr.bf16.mxu0 0
          %3611 = vmatpush1.bf16.msra.mxu0 0
          %3612 = vmatprep.subr.bf16.mxu0 0
          %3613 = vmatpush1.bf16.msra.mxu0 0
          %3614 = vmatprep.subr.bf16.mxu0 0
          %3615 = vmatpush1.bf16.msra.mxu0 0
          %3616 = vmatprep.subr.bf16.mxu0 0
          %3617 = vmatpush1.bf16.msra.mxu0 0
          %3618 = vmatprep.subr.bf16.mxu0 0
          %3619 = vmatpush1.bf16.msra.mxu0 0
          %3620 = vmatprep.subr.bf16.mxu0 0
          %3621 = vmatpush1.bf16.msra.mxu0 0
          %3622 = vmatprep.subr.bf16.mxu0 0
          %3623 = vmatpush1.bf16.msra.mxu0 0
          %3624 = vmatprep.subr.bf16.mxu0 0
          %3625 = vmatpush1.bf16.msra.mxu0 0
          %3626 = vmatprep.subr.bf16.mxu0 0
          %3627 = vmatpush1.bf16.msra.mxu0 0
          %3628 = vmatprep.subr.bf16.mxu0 0
          %3629 = vmatpush1.bf16.msra.mxu0 0
          %3630 = vmatprep.subr.bf16.mxu0 0
          %3631 = vmatpush1.bf16.msra.mxu0 0
          %3632 = vmatprep.subr.bf16.mxu0 0
          %3633 = vmatpush1.bf16.msra.mxu0 0
          %3634 = vmatprep.mubr.bf16.mxu0 0
          %3635 = vmatmul.mubr.bf16.gmra.mrb[0].mxu0 %v3576
          %v3636 = vpop.f32.mrb[0].mxu0
          %v3637 = vadd.f32 0.0, %v3636
          %v3638 = vpop.f32.mrb[0].mxu0
          %v3639 = vpop.f32.mrb[0].mxu0
          %v3640 = vadd.f32 0.0, %v3639
          %v3641 = vpop.f32.mrb[0].mxu0
          %3642 = vmatprep.mubr.bf16.mxu0 0
          %3643 = vmatmul.mubr.bf16.gmra.mrb[0].mxu0 %v3579
          %v3644 = vpop.f32.mrb[0].mxu0
          %v3645 = vadd.f32 0.0, %v3644
          %v3646 = vpop.f32.mrb[0].mxu0
          %v3647 = vpop.f32.mrb[0].mxu0
          %v3648 = vadd.f32 0.0, %v3647
          %v3649 = vpop.f32.mrb[0].mxu0
          %3650 = vmatprep.mubr.bf16.mxu0 0
          %3651 = vmatmul.mubr.bf16.gmra.mrb[0].mxu0 %v3582
          %v3652 = vpop.f32.mrb[0].mxu0
          %v3653 = vadd.f32 0.0, %v3652
          %v3654 = vpop.f32.mrb[0].mxu0
          %v3655 = vpop.f32.mrb[0].mxu0
          %v3656 = vadd.f32 0.0, %v3655
          %v3657 = vpop.f32.mrb[0].mxu0
          %3658 = vmatprep.mubr.bf16.mxu0 0
          %3659 = vmatmul.mubr.bf16.gmra.mrb[0].mxu0 %v3585
          %v3660 = vpop.f32.mrb[0].mxu0
          %v3661 = vadd.f32 0.0, %v3660
          %v3662 = vpop.f32.mrb[0].mxu0
          %v3663 = vpop.f32.mrb[0].mxu0
          %v3664 = vadd.f32 0.0, %v3663
          %v3665 = vpop.f32.mrb[0].mxu0
          %3666 = vmatprep.mubr.bf16.mxu0 0
          %3667 = vmatmul.mubr.bf16.gmra.mrb[0].mxu0 %v3588
          %v3668 = vpop.f32.mrb[0].mxu0
          %v3669 = vadd.f32 0.0, %v3668
          %v3670 = vpop.f32.mrb[0].mxu0
          %v3671 = vpop.f32.mrb[0].mxu0
          %v3672 = vadd.f32 0.0, %v3671
          %v3673 = vpop.f32.mrb[0].mxu0
          %3674 = vmatprep.mubr.bf16.mxu0 0
          %3675 = vmatmul.mubr.bf16.gmra.mrb[0].mxu0 %v3591
          %v3676 = vpop.f32.mrb[0].mxu0
          %v3677 = vadd.f32 0.0, %v3676
          %v3678 = vpop.f32.mrb[0].mxu0
          %v3679 = vpop.f32.mrb[0].mxu0
          %v3680 = vadd.f32 0.0, %v3679
          %v3681 = vpop.f32.mrb[0].mxu0
          %3682 = vmatprep.mubr.bf16.mxu0 0
          %3683 = vmatmul.mubr.bf16.gmra.mrb[0].mxu0 %v3594
          %v3684 = vpop.f32.mrb[0].mxu0
          %v3685 = vadd.f32 0.0, %v3684
          %v3686 = vpop.f32.mrb[0].mxu0
          %v3687 = vpop.f32.mrb[0].mxu0
          %v3688 = vadd.f32 0.0, %v3687
          %v3689 = vpop.f32.mrb[0].mxu0
          %3690 = vmatprep.mubr.bf16.mxu0 0
          %3691 = vmatmul.mubr.bf16.gmra.mrb[0].mxu0 %v3597
          %v3692 = vpop.f32.mrb[0].mxu0
          %v3693 = vadd.f32 0.0, %v3692
          %v3694 = vpop.f32.mrb[0].mxu0
          %v3695 = vpop.f32.mrb[0].mxu0
          %v3696 = vadd.f32 0.0, %v3695
          %v3697 = vpop.f32.mrb[0].mxu0
          %3698 = vdwg.mxu0
          %v3700 = vlaneseq
          %v3701 = vshrl.u32 %v3700, 7
          %v3702 = vsub.s32 0, %v3701
          %v3703 = vrot.slane %v508, %v3702
          %v3705 = vmul.f32 %v3637, %v3703
          %v3706 = vmul.f32 %v3640, %v3703
          %v3707 = vmul.f32 %v3645, %v3703
          %v3708 = vmul.f32 %v3648, %v3703
          %v3709 = vmul.f32 %v3653, %v3703
          %v3710 = vmul.f32 %v3656, %v3703
          %v3711 = vmul.f32 %v3661, %v3703
          %v3712 = vmul.f32 %v3664, %v3703
          %v3713 = vmul.f32 %v3669, %v3703
          %v3714 = vmul.f32 %v3672, %v3703
          %v3715 = vmul.f32 %v3677, %v3703
          %v3716 = vmul.f32 %v3680, %v3703
          %v3717 = vmul.f32 %v3685, %v3703
          %v3718 = vmul.f32 %v3688, %v3703
          %v3719 = vmul.f32 %v3693, %v3703
          %v3720 = vmul.f32 %v3696, %v3703
          %v3722 = vlaneseq
          %v3723 = vshrl.u32 %v3722, 7
          %v3724 = vsub.s32 0, %v3723
          %v3725 = vrot.slane %v509, %v3724
          %v3727 = vadd.f32 %v3705, %v3725
          %v3728 = vadd.f32 %v3706, %v3725
          %v3729 = vadd.f32 %v3707, %v3725
          %v3730 = vadd.f32 %v3708, %v3725
          %v3731 = vadd.f32 %v3709, %v3725
          %v3732 = vadd.f32 %v3710, %v3725
          %v3733 = vadd.f32 %v3711, %v3725
          %v3734 = vadd.f32 %v3712, %v3725
          %v3735 = vadd.f32 %v3713, %v3725
          %v3736 = vadd.f32 %v3714, %v3725
          %v3737 = vadd.f32 %v3715, %v3725
          %v3738 = vadd.f32 %v3716, %v3725
          %v3739 = vadd.f32 %v3717, %v3725
          %v3740 = vadd.f32 %v3718, %v3725
          %v3741 = vadd.f32 %v3719, %v3725
          %v3742 = vadd.f32 %v3720, %v3725
          %s3743 = smul.u32 %s1042, 2
          %s3744 = smul.addr %s3743, 4
          %s3745 = scalar_lea.vmem %s341, %s3744 [#allocation3]
          %v3746 = vld [vmem:[%s3745] sm:$0xf]
          %v3747 = vld [vmem:[%s3745 + $0x4] sm:$0xf]
          %v3748 = vld [vmem:[%s3745 + $0x8] sm:$0xf]
          %v3749 = vld [vmem:[%s3745 + $0xc] sm:$0xf]
          %v3750 = vld [vmem:[%s3745 + $0x10] sm:$0xf]
          %v3751 = vld [vmem:[%s3745 + $0x14] sm:$0xf]
          %v3752 = vld [vmem:[%s3745 + $0x18] sm:$0xf]
          %v3753 = vld [vmem:[%s3745 + $0x1c] sm:$0xf]
          %v3754 = vld [vmem:[%s3745 + $0x20] sm:$0xf]
          %v3755 = vld [vmem:[%s3745 + $0x24] sm:$0xf]
          %v3756 = vld [vmem:[%s3745 + $0x28] sm:$0xf]
          %v3757 = vld [vmem:[%s3745 + $0x2c] sm:$0xf]
          %v3758 = vld [vmem:[%s3745 + $0x30] sm:$0xf]
          %v3759 = vld [vmem:[%s3745 + $0x34] sm:$0xf]
          %v3760 = vld [vmem:[%s3745 + $0x38] sm:$0xf]
          %v3761 = vld [vmem:[%s3745 + $0x3c] sm:$0xf]
          %v3762 = vunpack.c.l.bf16 %v3746
          %v3763 = vunpack.c.l.bf16 %v3747
          %v3764 = vunpack.c.l.bf16 %v3748
          %v3765 = vunpack.c.l.bf16 %v3749
          %v3766 = vunpack.c.l.bf16 %v3750
          %v3767 = vunpack.c.l.bf16 %v3751
          %v3768 = vunpack.c.l.bf16 %v3752
          %v3769 = vunpack.c.l.bf16 %v3753
          %v3770 = vunpack.c.l.bf16 %v3754
          %v3771 = vunpack.c.l.bf16 %v3755
          %v3772 = vunpack.c.l.bf16 %v3756
          %v3773 = vunpack.c.l.bf16 %v3757
          %v3774 = vunpack.c.l.bf16 %v3758
          %v3775 = vunpack.c.l.bf16 %v3759
          %v3776 = vunpack.c.l.bf16 %v3760
          %v3777 = vunpack.c.l.bf16 %v3761
          %v3778 = vadd.f32 %v3727, %v3762
          %v3779 = vadd.f32 %v3728, %v3763
          %v3780 = vadd.f32 %v3729, %v3764
          %v3781 = vadd.f32 %v3730, %v3765
          %v3782 = vadd.f32 %v3731, %v3766
          %v3783 = vadd.f32 %v3732, %v3767
          %v3784 = vadd.f32 %v3733, %v3768
          %v3785 = vadd.f32 %v3734, %v3769
          %v3786 = vadd.f32 %v3735, %v3770
          %v3787 = vadd.f32 %v3736, %v3771
          %v3788 = vadd.f32 %v3737, %v3772
          %v3789 = vadd.f32 %v3738, %v3773
          %v3790 = vadd.f32 %v3739, %v3774
          %v3791 = vadd.f32 %v3740, %v3775
          %v3792 = vadd.f32 %v3741, %v3776
          %v3793 = vadd.f32 %v3742, %v3777
          %v3794 = vmax.f32 %v3778, 0.0
          %v3795 = vmax.f32 %v3779, 0.0
          %v3796 = vmax.f32 %v3780, 0.0
          %v3797 = vmax.f32 %v3781, 0.0
          %v3798 = vmax.f32 %v3782, 0.0
          %v3799 = vmax.f32 %v3783, 0.0
          %v3800 = vmax.f32 %v3784, 0.0
          %v3801 = vmax.f32 %v3785, 0.0
          %v3802 = vmax.f32 %v3786, 0.0
          %v3803 = vmax.f32 %v3787, 0.0
          %v3804 = vmax.f32 %v3788, 0.0
          %v3805 = vmax.f32 %v3789, 0.0
          %v3806 = vmax.f32 %v3790, 0.0
          %v3807 = vmax.f32 %v3791, 0.0
          %v3808 = vmax.f32 %v3792, 0.0
          %v3809 = vmax.f32 %v3793, 0.0
          %v3810 = vpack.c.bf16 %v3795, %v3794
          %v3811 = vpack.c.bf16 %v3797, %v3796
          %v3812 = vpack.c.bf16 %v3799, %v3798
          %v3813 = vpack.c.bf16 %v3801, %v3800
          %v3814 = vpack.c.bf16 %v3803, %v3802
          %v3815 = vpack.c.bf16 %v3805, %v3804
          %v3816 = vpack.c.bf16 %v3807, %v3806
          %v3817 = vpack.c.bf16 %v3809, %v3808
          %v3826 = vunpack.c.l.b16 %v3810
          %v3827 = vunpack.c.h.b16 %v3810
          %v3828 = vunpack.c.l.b16 %v3811
          %v3829 = vunpack.c.h.b16 %v3811
          %v3830 = vunpack.c.l.b16 %v3812
          %v3831 = vunpack.c.h.b16 %v3812
          %v3832 = vunpack.c.l.b16 %v3813
          %v3833 = vunpack.c.h.b16 %v3813
          %v3834 = vunpack.c.l.b16 %v3814
          %v3835 = vunpack.c.h.b16 %v3814
          %v3836 = vunpack.c.l.b16 %v3815
          %v3837 = vunpack.c.h.b16 %v3815
          %v3838 = vunpack.c.l.b16 %v3816
          %v3839 = vunpack.c.h.b16 %v3816
          %v3840 = vunpack.c.l.b16 %v3817
          %v3841 = vunpack.c.h.b16 %v3817
          %v3842 = vpack.c.b16 %v3826, %v3826
          %v3843 = vpack.c.b16 %v3827, %v3827
          %v3844 = vpack.c.b16 %v3828, %v3828
          %v3845 = vpack.c.b16 %v3829, %v3829
          %v3846 = vpack.c.b16 %v3830, %v3830
          %v3847 = vpack.c.b16 %v3831, %v3831
          %v3848 = vpack.c.b16 %v3832, %v3832
          %v3849 = vpack.c.b16 %v3833, %v3833
          %v3850 = vpack.c.b16 %v3834, %v3834
          %v3851 = vpack.c.b16 %v3835, %v3835
          %v3852 = vpack.c.b16 %v3836, %v3836
          %v3853 = vpack.c.b16 %v3837, %v3837
          %v3854 = vpack.c.b16 %v3838, %v3838
          %v3855 = vpack.c.b16 %v3839, %v3839
          %v3856 = vpack.c.b16 %v3840, %v3840
          %v3857 = vpack.c.b16 %v3841, %v3841
          %s3874 = smul.addr %s3743, 4
          %s3875 = scalar_lea.vmem %s377, %s3874 [#allocation6]
          %vm3876 = vcmask 125952
          %3877 = vst.msk [vmem:[%s3875] sm:$0xf] %vm3876, %v3842
          %3878 = vst.msk [vmem:[%s3875 + $0x4] sm:$0xf] %vm3876, %v3843
          %3879 = vst.msk [vmem:[%s3875 + $0x8] sm:$0xf] %vm3876, %v3844
          %3880 = vst.msk [vmem:[%s3875 + $0xc] sm:$0xf] %vm3876, %v3845
          %3881 = vst.msk [vmem:[%s3875 + $0x10] sm:$0xf] %vm3876, %v3846
          %3882 = vst.msk [vmem:[%s3875 + $0x14] sm:$0xf] %vm3876, %v3847
          %3883 = vst.msk [vmem:[%s3875 + $0x18] sm:$0xf] %vm3876, %v3848
          %3884 = vst.msk [vmem:[%s3875 + $0x1c] sm:$0xf] %vm3876, %v3849
          %3885 = vst.msk [vmem:[%s3875 + $0x20] sm:$0xf] %vm3876, %v3850
          %3886 = vst.msk [vmem:[%s3875 + $0x24] sm:$0xf] %vm3876, %v3851
          %3887 = vst.msk [vmem:[%s3875 + $0x28] sm:$0xf] %vm3876, %v3852
          %3888 = vst.msk [vmem:[%s3875 + $0x2c] sm:$0xf] %vm3876, %v3853
          %3889 = vst.msk [vmem:[%s3875 + $0x30] sm:$0xf] %vm3876, %v3854
          %3890 = vst.msk [vmem:[%s3875 + $0x34] sm:$0xf] %vm3876, %v3855
          %3891 = vst.msk [vmem:[%s3875 + $0x38] sm:$0xf] %vm3876, %v3856
          %3892 = vst.msk [vmem:[%s3875 + $0x3c] sm:$0xf] %vm3876, %v3857
        $region76: #{tpu_custom_call.1} parent=59 // loop_footer
          %s1041 = sadd.s32 1, %s1037
        $region77: #{tpu_custom_call.1} parent=59 // loop_footer_branch
          %1036 = sbr.rel target = $region73
        $region78: #{tpu_custom_call.1} parent=59 // loop_exit
          _
        %s3893 = sand.u32 %s250, 1
        %s3894 = scalar_lea.sflag [#allocation5], %s3893
        %s3895 = sand.u32 %s250, 1
        %s3896 = smul.addr %s3895, 128
        %s3897 = scalar_lea.vmem [#allocation6], %s3896
        // Predicated region
        $region79: #{tpu_custom_call.1} parent=59 // pred_check
          %p3898 = pneg %p260
        $region80: #{tpu_custom_call.1} parent=59 // pred_check_branch
          %3900 = sbr.rel (%p3898) target = $region82
        $region81: #{tpu_custom_call.1} parent=59 // pred_region
          %s3902 = ssub.s32 2048, 2048
          %3903 = vsyncadd %s3894, %s3902
          %s3904 = smul.addr %s27, 32
          %s3905 = smul.addr %s3904, 64
          %s3906 = scalar_lea.hbm %s10, %s3905
          %s3907 = sshll.u32 %s3897, 4
          %s3908 = int_to_ptr.vmem [resolvable:$true] %s3907
          %3913 = dma.vmem_to_hbm [thread:$0]  %s3908, 2048, %s3906, %s3894, 64, 64, 4
        $region82: #{tpu_custom_call.1} parent=59 // pred_fallthru
          _
      $region60: #{tpu_custom_call.1} parent=5 // pred_fallthru
        _
      %p3914 = scmp.le.s32.totalorder 2, %s22
      // Predicated region
      $region83: #{tpu_custom_call.1} parent=5 // pred_check
        %p3915 = pneg %p3914
      $region84: #{tpu_custom_call.1} parent=5 // pred_check_branch
        %3917 = sbr.rel (%p3915) target = $region86
      $region85: #{tpu_custom_call.1} parent=5 // pred_region
        %s3918 = ssub.s32 %s22, 2
        // Predicated region
        $region87: #{tpu_custom_call.1} parent=85 // pred_check
          %p3919 = pneg %p266
        $region88: #{tpu_custom_call.1} parent=85 // pred_check_branch
          %3921 = sbr.rel (%p3919) target = $region90
        $region89: #{tpu_custom_call.1} parent=85 // pred_region
          %s3922 = sand.u32 %s251, 1
          %s3923 = scalar_lea.sflag [#allocation5], %s3922
          %s3924 = sand.u32 %s251, 1
          %s3925 = smul.addr %s3924, 128
          %s3926 = scalar_lea.vmem [#allocation6], %s3925
          %3927 = dma.done %s3923, 2048
        $region90: #{tpu_custom_call.1} parent=85 // pred_fallthru
          _
      $region86: #{tpu_custom_call.1} parent=5 // pred_fallthru
        _
    $region6: #{tpu_custom_call.1} parent=1 // loop_footer
      %s26 = sadd.s32 1, %s22
    $region7: #{tpu_custom_call.1} parent=1 // loop_footer_branch
      %21 = sbr.rel target = $region3
    $region8: #{tpu_custom_call.1} parent=1 // loop_exit
      _
    %3928 = vsyncpa [#allocation4], 1
    %s3929 = scalar_lea.sflag [#allocation4], 1
    %3930 = vsyncpa %s3929, 1
    %3931 = vsyncpa [#allocation5], 1
    %s3932 = scalar_lea.sflag [#allocation5], 1
    %3933 = vsyncpa %s3932, 1

</llo_original>
